<compile_context>
chip_gen: v6e
topology: v6e:2x2x1
jax: 0.10.0
libtpu: 0.0.40
codegen_flags: <defaults>
</compile_context>

<pallas_src>
import functools

import jax
import jax.numpy as jnp
from jax.experimental import pallas as pl
from jax.experimental.pallas import tpu as pltpu

# ----------------------------- small config -----------------------------------
VOCAB = 50
MAX_POS = 16
TYPE_VOCAB = 2
HIDDEN = 32
NUM_HEADS = 4
HEAD_DIM = HIDDEN // NUM_HEADS
INTERMEDIATE = 64
NUM_LAYERS = 4
NUM_LABELS = 3
BATCH = 2
SEQ = 8
BS = BATCH * SEQ
LAYERS_FOR_CLS = [2]          # indices into hidden_states (0 = embedding output)
LN_EPS = 1e-12
ATTN_SCALE = 1.0 / (HEAD_DIM ** 0.5)

VMEM = pltpu.MemorySpace.VMEM
SMEM = pltpu.MemorySpace.SMEM


# ----------------------------- in-kernel helpers -------------------------------
def _layernorm(x, g, b):
    mu = jnp.mean(x, axis=-1, keepdims=True)
    xc = x - mu
    var = jnp.mean(xc * xc, axis=-1, keepdims=True)
    return xc * jax.lax.rsqrt(var + LN_EPS) * g + b


def _gelu(x):
    # TODO(synk): BERT uses exact erf-GELU; tanh-approx GELU used here (EUP path).
    c = 0.7978845608028654
    return 0.5 * x * (1.0 + jnp.tanh(c * (x + 0.044715 * x * x * x)))


# ----------------------------- single fused kernel -----------------------------
def _fused_forward_kernel(emb_ref, mask_ref, emb_ln_ref,
                          wqkv_ref, bqkv_ref, wo_ref, w1_ref, b1_ref, w2_ref,
                          hvec_ref, cls_w_ref, cls_b_ref, lab_ref,
                          hs_ref, logits_ref, loss_ref, *, cls_layers):
    f32 = jnp.float32

    # Additive attention mask built in-kernel from the int mask: (B, 1, S).
    mask_add = ((1.0 - mask_ref[...].astype(f32)) * -1e9)[:, None, :]

    # Embedding LayerNorm seeds the resident activation; this is hidden_states[0].
    x = _layernorm(emb_ref[...], emb_ln_ref[0:1, :], emb_ln_ref[1:2, :])
    hs_ref[0] = x
    hidden = [x]

    # All encoder layers unrolled inside one kernel invocation.  Weight refs are
    # indexed with static layer indices, so each operand is read from VMEM once;
    # the activation stays in registers/VMEM-values between layers.
    for l in range(NUM_LAYERS):
        hv = hvec_ref[l]                       # (6, H): bo, ln1_g, ln1_b, b2, ln2_g, ln2_b
        bo, ln1_g, ln1_b = hv[0:1, :], hv[1:2, :], hv[2:3, :]
        b2, ln2_g, ln2_b = hv[3:4, :], hv[4:5, :], hv[5:6, :]

        # Fused QKV projection: one (BS, H) @ (H, 3H) MXU pass, f32 throughout.
        qkv = jnp.dot(x, wqkv_ref[l], preferred_element_type=f32) + bqkv_ref[l]

        # Attention: batch dim batched on the MXU, heads unrolled (4x); the context
        # is assembled in registers via lane-concat — no scratch, no partial stores.
        ctx_heads = []
        for h in range(NUM_HEADS):
            c0 = h * HEAD_DIM
            q_h = qkv[:, c0:c0 + HEAD_DIM].reshape(BATCH, SEQ, HEAD_DIM)
            k_h = qkv[:, HIDDEN + c0:HIDDEN + c0 + HEAD_DIM].reshape(BATCH, SEQ, HEAD_DIM)
            v_h = qkv[:, 2 * HIDDEN + c0:2 * HIDDEN + c0 + HEAD_DIM].reshape(BATCH, SEQ, HEAD_DIM)
            s = jax.lax.dot_general(q_h, k_h, (((2,), (2,)), ((0,), (0,))),
                                    preferred_element_type=f32) * ATTN_SCALE
            s = s + mask_add
            m = jnp.max(s, axis=-1, keepdims=True)          # softmax in f32
            p = jnp.exp(s - m)
            p = p / jnp.sum(p, axis=-1, keepdims=True)
            ctx_h = jax.lax.dot_general(p, v_h, (((2,), (1,)), ((0,), (0,))),
                                        preferred_element_type=f32)      # (B, S, HD)
            ctx_heads.append(ctx_h.reshape(BS, HEAD_DIM))
        ctx = jnp.concatenate(ctx_heads, axis=-1)                         # (BS, H)

        # Attention output projection + residual + LN1.
        attn_out = jnp.dot(ctx, wo_ref[l], preferred_element_type=f32) + bo
        x1 = _layernorm(attn_out + x, ln1_g, ln1_b)

        # FFN (GELU) + residual + LN2.
        ff = jnp.dot(x1, w1_ref[l], preferred_element_type=f32) + b1_ref[l]
        ff = _gelu(ff)
        ff = jnp.dot(ff, w2_ref[l], preferred_element_type=f32) + b2
        x2 = _layernorm(ff + x1, ln2_g, ln2_b)

        hs_ref[l + 1] = x2
        hidden.append(x2)
        x = x2

    # ---- fused classifier + CrossEntropy epilogue (no second pallas_call) ----
    def cls_rows(h):                           # CLS token (seq position 0) of each batch
        return jnp.concatenate([h[b * SEQ:b * SEQ + 1, :] for b in range(BATCH)], axis=0)

    cls_in = jnp.concatenate([cls_rows(hidden[i]) for i in cls_layers], axis=-1)  # (B, D_cls)
    logits = jnp.dot(cls_in, cls_w_ref[...], preferred_element_type=f32) + cls_b_ref[...]
    logits_ref[...] = logits

    m = jnp.max(logits, axis=-1, keepdims=True)
    lse = m + jnp.log(jnp.sum(jnp.exp(logits - m), axis=-1, keepdims=True))
    rows = jax.lax.broadcasted_iota(jnp.int32, (BATCH, NUM_LABELS), 0)
    cols = jax.lax.broadcasted_iota(jnp.int32, (BATCH, NUM_LABELS), 1)
    lab_mat = jnp.zeros((BATCH, NUM_LABELS), jnp.int32)
    for b in range(BATCH):                      # labels arrive as SMEM scalars
        lab_mat = jnp.where(rows == b, lab_ref[b], lab_mat)
    onehot = (cols == lab_mat).astype(f32)
    # TODO(synk): torch CrossEntropyLoss ignore_index=-100 is not handled (labels are 0..2 here).
    nll = lse - jnp.sum(logits * onehot, axis=-1, keepdims=True)          # (B, 1)
    loss_ref[...] = jnp.mean(nll, axis=0, keepdims=True)                  # (1, 1)


def fused_forward(emb2d, attn_mask, labels_b, prep, cls_layers):
    kernel = functools.partial(_fused_forward_kernel, cls_layers=cls_layers)
    vmem = pl.BlockSpec(memory_space=VMEM)
    # No grid: the whole model is one kernel invocation; on v7x the second TensorCore
    # is idle (layers are sequential) — a batch-parallel grid axis would be the path
    # to use it if BATCH grows.
    return pl.pallas_call(
        kernel,
        out_shape=(
            jax.ShapeDtypeStruct((NUM_LAYERS + 1, BS, HIDDEN), jnp.float32),  # hidden states
            jax.ShapeDtypeStruct((BATCH, NUM_LABELS), jnp.float32),           # logits
            jax.ShapeDtypeStruct((1, 1), jnp.float32),                        # loss
        ),
        in_specs=[vmem] * 12 + [pl.BlockSpec(memory_space=SMEM)],
        out_specs=(vmem, vmem, vmem),
    )(emb2d, attn_mask, prep['emb_ln'],
      prep['wqkv'], prep['bqkv'], prep['wo'], prep['w1'], prep['b1'], prep['w2'],
      prep['hvec'], prep['cls_w'], prep['cls_b'], labels_b)


# ----------------------------- params -------------------------------------------
def init_params(key):
    keys = iter(jax.random.split(key, 16 * NUM_LAYERS + 16))

    def norm(shape):
        return (0.02 * jax.random.normal(next(keys), shape)).astype(jnp.float32)

    p = {
        'word_emb': norm((VOCAB, HIDDEN)),
        'pos_emb': norm((MAX_POS, HIDDEN)),
        'type_emb': norm((TYPE_VOCAB, HIDDEN)),
        'emb_ln_g': jnp.ones((HIDDEN,), jnp.float32),
        'emb_ln_b': jnp.zeros((HIDDEN,), jnp.float32),
        'layers': [],
        'cls_w': norm((HIDDEN * (1 + len(LAYERS_FOR_CLS)), NUM_LABELS)),
        'cls_b': jnp.zeros((NUM_LABELS,), jnp.float32),
    }
    for _ in range(NUM_LAYERS):
        p['layers'].append(dict(
            wq=norm((HIDDEN, HIDDEN)), bq=jnp.zeros((HIDDEN,), jnp.float32),
            wk=norm((HIDDEN, HIDDEN)), bk=jnp.zeros((HIDDEN,), jnp.float32),
            wv=norm((HIDDEN, HIDDEN)), bv=jnp.zeros((HIDDEN,), jnp.float32),
            wo=norm((HIDDEN, HIDDEN)), bo=jnp.zeros((HIDDEN,), jnp.float32),
            ln1_g=jnp.ones((HIDDEN,), jnp.float32), ln1_b=jnp.zeros((HIDDEN,), jnp.float32),
            w1=norm((HIDDEN, INTERMEDIATE)), b1=jnp.zeros((INTERMEDIATE,), jnp.float32),
            w2=norm((INTERMEDIATE, HIDDEN)), b2=jnp.zeros((HIDDEN,), jnp.float32),
            ln2_g=jnp.ones((HIDDEN,), jnp.float32), ln2_b=jnp.zeros((HIDDEN,), jnp.float32),
        ))
    return p


def prepare_params(params):
    """One-time (outside-jit) stacking/packing of the per-layer weights."""
    layers = params['layers']

    def stack(fn):
        return jnp.stack([fn(lp) for lp in layers]).astype(jnp.float32)

    return dict(
        word_emb=params['word_emb'],
        pos_emb=params['pos_emb'],
        type_emb=params['type_emb'],
        emb_ln=jnp.stack([params['emb_ln_g'], params['emb_ln_b']]),           # (2, H)
        wqkv=stack(lambda lp: jnp.concatenate([lp['wq'], lp['wk'], lp['wv']], axis=1)),  # (L,H,3H)
        bqkv=stack(lambda lp: jnp.concatenate([lp['bq'], lp['bk'], lp['bv']])[None, :]), # (L,1,3H)
        wo=stack(lambda lp: lp['wo']),                                        # (L, H, H)
        w1=stack(lambda lp: lp['w1']),                                        # (L, H, I)
        b1=stack(lambda lp: lp['b1'][None, :]),                               # (L, 1, I)
        w2=stack(lambda lp: lp['w2']),                                        # (L, I, H)
        hvec=stack(lambda lp: jnp.stack([lp['bo'], lp['ln1_g'], lp['ln1_b'],
                                         lp['b2'], lp['ln2_g'], lp['ln2_b']])),  # (L, 6, H)
        cls_w=params['cls_w'],                                                # (D_cls, 3)
        cls_b=params['cls_b'][None, :],                                       # (1, 3)
    )


# ----------------------------- model forward ------------------------------------
@functools.partial(jax.jit, static_argnames=('only_intermediate_representation',))
def aleph_bert_per_word_forward(prep, labels, input_ids, token_type_ids,
                                attention_mask, *,
                                only_intermediate_representation=False):
    B, S = input_ids.shape
    assert (B, S) == (BATCH, SEQ)

    # Embedding table gathers stay in XLA (data-dependent gather); everything
    # downstream (embedding LN, 4 encoder layers, classifier, CE loss) is ONE kernel.
    pos_ids = jnp.arange(S)
    emb = (prep['word_emb'][input_ids]
           + prep['pos_emb'][pos_ids][None, :, :]
           + prep['type_emb'][token_type_ids])                               # (B, S, H)

    # Same semantics as the torch module: last hidden state first, then the
    # requested intermediate hidden states (layers_for_cls), CLS token only.
    if only_intermediate_representation:
        cls_layers = (LAYERS_FOR_CLS[0],)
    else:
        cls_layers = (NUM_LAYERS,) + tuple(LAYERS_FOR_CLS)

    hs, logits2d, loss11 = fused_forward(
        emb.reshape(B * S, HIDDEN),
        attention_mask.astype(jnp.int32),
        labels[:, 0].astype(jnp.int32),
        prep, cls_layers)

    hidden_states = tuple(hs[i].reshape(B, S, HIDDEN) for i in range(NUM_LAYERS + 1))
    logits = logits2d[:, None, :]                                            # (B, 1, 3)
    loss = loss11[0, 0]
    return loss, logits, hidden_states


# ----------------------------- main ----------------------------------------------
if __name__ == "__main__":
    key = jax.random.PRNGKey(0)
    pkey, k_ids, k_lbl = jax.random.split(key, 3)

    params = init_params(pkey)
    prep = prepare_params(params)        # one-time packing outside the jitted forward

    input_ids = jax.random.randint(k_ids, (BATCH, SEQ), 0, VOCAB, dtype=jnp.int32)
    token_type_ids = jnp.zeros((BATCH, SEQ), dtype=jnp.int32)
    attention_mask = jnp.ones((BATCH, SEQ), dtype=jnp.int32)
    labels = jax.random.randint(k_lbl, (BATCH, SEQ), 0, NUM_LABELS, dtype=jnp.int32)

    loss, logits, hidden_states = aleph_bert_per_word_forward(
        prep, labels, input_ids, token_type_ids, attention_mask,
        only_intermediate_representation=False)

    jax.block_until_ready((loss, logits))
    assert logits.shape == (BATCH, 1, NUM_LABELS)
    assert len(hidden_states) == NUM_LAYERS + 1
    assert jnp.isfinite(loss)
    print("KERNEL_OK")
</pallas_src>

<mosaic_0001>
module attributes {stable_mosaic.version = 11 : i64} {
  func.func @_fused_forward_kernel(%arg0: memref<16x32xf32, #tpu.memory_space<vmem>>, %arg1: memref<2x8xi32, #tpu.memory_space<vmem>>, %arg2: memref<2x32xf32, #tpu.memory_space<vmem>>, %arg3: memref<4x32x96xf32, #tpu.memory_space<vmem>>, %arg4: memref<4x1x96xf32, #tpu.memory_space<vmem>>, %arg5: memref<4x32x32xf32, #tpu.memory_space<vmem>>, %arg6: memref<4x32x64xf32, #tpu.memory_space<vmem>>, %arg7: memref<4x1x64xf32, #tpu.memory_space<vmem>>, %arg8: memref<4x64x32xf32, #tpu.memory_space<vmem>>, %arg9: memref<4x6x32xf32, #tpu.memory_space<vmem>>, %arg10: memref<64x3xf32, #tpu.memory_space<vmem>>, %arg11: memref<1x3xf32, #tpu.memory_space<vmem>>, %arg12: memref<2xi32, #tpu.memory_space<smem>>, %arg13: memref<5x16x32xf32, #tpu.memory_space<vmem>>, %arg14: memref<2x3xf32, #tpu.memory_space<vmem>>, %arg15: memref<1x1xf32, #tpu.memory_space<vmem>>) attributes {dimension_semantics = [], scalar_prefetch = 0 : i64, scratch_operands = 0 : i64, tpu.core_type = #tpu.core_type<tc>} {
    %c0 = arith.constant 0 : index
    %c0_0 = arith.constant 0 : index
    %0 = vector.load %arg1[%c0, %c0_0] : memref<2x8xi32, #tpu.memory_space<vmem>>, vector<2x8xi32>
    %1 = arith.sitofp %0 : vector<2x8xi32> to vector<2x8xf32>
    %cst = arith.constant 1.000000e+00 : f32
    %2 = vector.broadcast %cst : f32 to vector<2x8xf32>
    %3 = arith.subf %2, %1 : vector<2x8xf32>
    %cst_1 = arith.constant -1.000000e+09 : f32
    %4 = vector.broadcast %cst_1 : f32 to vector<2x8xf32>
    %5 = arith.mulf %3, %4 : vector<2x8xf32>
    %6 = vector.shape_cast %5 : vector<2x8xf32> to vector<2x1x8xf32>
    %c0_2 = arith.constant 0 : index
    %c0_3 = arith.constant 0 : index
    %7 = vector.load %arg0[%c0_2, %c0_3] : memref<16x32xf32, #tpu.memory_space<vmem>>, vector<16x32xf32>
    %c0_4 = arith.constant 0 : index
    %c0_5 = arith.constant 0 : index
    %8 = vector.load %arg2[%c0_4, %c0_5] : memref<2x32xf32, #tpu.memory_space<vmem>>, vector<1x32xf32>
    %c1 = arith.constant 1 : index
    %c0_6 = arith.constant 0 : index
    %9 = vector.load %arg2[%c1, %c0_6] : memref<2x32xf32, #tpu.memory_space<vmem>>, vector<1x32xf32>
    %cst_7 = arith.constant dense<0.000000e+00> : vector<16xf32>
    %10 = vector.multi_reduction <add>, %7, %cst_7 [1] : vector<16x32xf32> to vector<16xf32>
    %11 = vector.shape_cast %10 : vector<16xf32> to vector<16x1xf32>
    %cst_8 = arith.constant 3.200000e+01 : f32
    %12 = vector.broadcast %cst_8 : f32 to vector<16x1xf32>
    %13 = arith.divf %11, %12 : vector<16x1xf32>
    %14 = vector.broadcast %13 : vector<16x1xf32> to vector<16x32xf32>
    %15 = arith.subf %7, %14 : vector<16x32xf32>
    %16 = arith.mulf %15, %15 : vector<16x32xf32>
    %cst_9 = arith.constant dense<0.000000e+00> : vector<16xf32>
    %17 = vector.multi_reduction <add>, %16, %cst_9 [1] : vector<16x32xf32> to vector<16xf32>
    %18 = vector.shape_cast %17 : vector<16xf32> to vector<16x1xf32>
    %cst_10 = arith.constant 3.200000e+01 : f32
    %19 = vector.broadcast %cst_10 : f32 to vector<16x1xf32>
    %20 = arith.divf %18, %19 : vector<16x1xf32>
    %cst_11 = arith.constant 9.99999996E-13 : f32
    %21 = vector.broadcast %cst_11 : f32 to vector<16x1xf32>
    %22 = arith.addf %20, %21 : vector<16x1xf32>
    %23 = math.rsqrt %22 : vector<16x1xf32>
    %24 = vector.broadcast %23 : vector<16x1xf32> to vector<16x32xf32>
    %25 = arith.mulf %15, %24 : vector<16x32xf32>
    %26 = vector.broadcast %8 : vector<1x32xf32> to vector<16x32xf32>
    %27 = arith.mulf %25, %26 : vector<16x32xf32>
    %28 = vector.broadcast %9 : vector<1x32xf32> to vector<16x32xf32>
    %29 = arith.addf %27, %28 : vector<16x32xf32>
    %c0_12 = arith.constant 0 : index
    %c0_13 = arith.constant 0 : index
    %c0_14 = arith.constant 0 : index
    %30 = vector.load %arg13[%c0_12, %c0_13, %c0_14] : memref<5x16x32xf32, #tpu.memory_space<vmem>>, vector<1x16x32xf32>
    %31 = vector.shape_cast %30 : vector<1x16x32xf32> to vector<16x32xf32>
    %32 = vector.shape_cast %29 : vector<16x32xf32> to vector<1x16x32xf32>
    tpu.vector_store %arg13[%c0_12, %c0_13, %c0_14], %32 {strides = array<i32>} : memref<5x16x32xf32, #tpu.memory_space<vmem>>, vector<1x16x32xf32>,
    %c0_15 = arith.constant 0 : index
    %c0_16 = arith.constant 0 : index
    %c0_17 = arith.constant 0 : index
    %33 = vector.load %arg9[%c0_15, %c0_16, %c0_17] : memref<4x6x32xf32, #tpu.memory_space<vmem>>, vector<1x6x32xf32>
    %34 = vector.shape_cast %33 : vector<1x6x32xf32> to vector<6x32xf32>
    %35 = vector.extract_strided_slice %34 {offsets = [0, 0], sizes = [1, 32], strides = [1, 1]} : vector<6x32xf32> to vector<1x32xf32>
    %36 = vector.extract_strided_slice %34 {offsets = [1, 0], sizes = [1, 32], strides = [1, 1]} : vector<6x32xf32> to vector<1x32xf32>
    %37 = vector.extract_strided_slice %34 {offsets = [2, 0], sizes = [1, 32], strides = [1, 1]} : vector<6x32xf32> to vector<1x32xf32>
    %38 = vector.extract_strided_slice %34 {offsets = [3, 0], sizes = [1, 32], strides = [1, 1]} : vector<6x32xf32> to vector<1x32xf32>
    %39 = vector.extract_strided_slice %34 {offsets = [4, 0], sizes = [1, 32], strides = [1, 1]} : vector<6x32xf32> to vector<1x32xf32>
    %40 = vector.extract_strided_slice %34 {offsets = [5, 0], sizes = [1, 32], strides = [1, 1]} : vector<6x32xf32> to vector<1x32xf32>
    %c0_18 = arith.constant 0 : index
    %c0_19 = arith.constant 0 : index
    %c0_20 = arith.constant 0 : index
    %41 = vector.load %arg3[%c0_18, %c0_19, %c0_20] : memref<4x32x96xf32, #tpu.memory_space<vmem>>, vector<1x32x96xf32>
    %42 = vector.shape_cast %41 : vector<1x32x96xf32> to vector<32x96xf32>
    %cst_21 = arith.constant dense<0.000000e+00> : vector<16x96xf32>
    %43 = tpu.matmul %29, %42, %cst_21 {dimension_numbers = #tpu.dot_dimension_numbers<[1], [0], [0], [1], [0, 0, 1, 1], [], []>} : vector<16x32xf32>, vector<32x96xf32>, vector<16x96xf32> -> vector<16x96xf32>
    %c0_22 = arith.constant 0 : index
    %c0_23 = arith.constant 0 : index
    %c0_24 = arith.constant 0 : index
    %44 = vector.load %arg4[%c0_22, %c0_23, %c0_24] : memref<4x1x96xf32, #tpu.memory_space<vmem>>, vector<1x1x96xf32>
    %45 = vector.shape_cast %44 : vector<1x1x96xf32> to vector<1x96xf32>
    %46 = vector.broadcast %45 : vector<1x96xf32> to vector<16x96xf32>
    %47 = arith.addf %43, %46 : vector<16x96xf32>
    %48 = vector.extract_strided_slice %47 {offsets = [0, 0], sizes = [16, 8], strides = [1, 1]} : vector<16x96xf32> to vector<16x8xf32>
    %49 = vector.shape_cast %48 : vector<16x8xf32> to vector<2x8x8xf32>
    %50 = vector.extract_strided_slice %47 {offsets = [0, 32], sizes = [16, 8], strides = [1, 1]} : vector<16x96xf32> to vector<16x8xf32>
    %51 = vector.shape_cast %50 : vector<16x8xf32> to vector<2x8x8xf32>
    %52 = vector.extract_strided_slice %47 {offsets = [0, 64], sizes = [16, 8], strides = [1, 1]} : vector<16x96xf32> to vector<16x8xf32>
    %53 = vector.shape_cast %52 : vector<16x8xf32> to vector<2x8x8xf32>
    %cst_25 = arith.constant dense<0.000000e+00> : vector<2x8x8xf32>
    %54 = tpu.matmul %49, %51, %cst_25 {dimension_numbers = #tpu.dot_dimension_numbers<[2], [2], [1], [1], [0, 0, 0, 1, 1, 1], [0], [0]>} : vector<2x8x8xf32>, vector<2x8x8xf32>, vector<2x8x8xf32> -> vector<2x8x8xf32>
    %cst_26 = arith.constant 0.353553385 : f32
    %55 = vector.broadcast %cst_26 : f32 to vector<2x8x8xf32>
    %56 = arith.mulf %54, %55 : vector<2x8x8xf32>
    %57 = vector.broadcast %6 : vector<2x1x8xf32> to vector<2x8x8xf32>
    %58 = arith.addf %56, %57 : vector<2x8x8xf32>
    %cst_27 = arith.constant dense<0xFF800000> : vector<2x8xf32>
    %59 = vector.multi_reduction <maximumf>, %58, %cst_27 [2] : vector<2x8x8xf32> to vector<2x8xf32>
    %60 = vector.shape_cast %59 : vector<2x8xf32> to vector<2x8x1xf32>
    %61 = vector.broadcast %60 : vector<2x8x1xf32> to vector<2x8x8xf32>
    %62 = arith.subf %58, %61 : vector<2x8x8xf32>
    %63 = math.exp %62 : vector<2x8x8xf32>
    %cst_28 = arith.constant dense<0.000000e+00> : vector<2x8xf32>
    %64 = vector.multi_reduction <add>, %63, %cst_28 [2] : vector<2x8x8xf32> to vector<2x8xf32>
    %65 = vector.shape_cast %64 : vector<2x8xf32> to vector<2x8x1xf32>
    %66 = vector.broadcast %65 : vector<2x8x1xf32> to vector<2x8x8xf32>
    %67 = arith.divf %63, %66 : vector<2x8x8xf32>
    %cst_29 = arith.constant dense<0.000000e+00> : vector<2x8x8xf32>
    %68 = tpu.matmul %67, %53, %cst_29 {dimension_numbers = #tpu.dot_dimension_numbers<[2], [1], [1], [2], [0, 0, 0, 1, 1, 2], [0], [0]>} : vector<2x8x8xf32>, vector<2x8x8xf32>, vector<2x8x8xf32> -> vector<2x8x8xf32>
    %69 = vector.shape_cast %68 : vector<2x8x8xf32> to vector<16x8xf32>
    %70 = vector.extract_strided_slice %47 {offsets = [0, 8], sizes = [16, 8], strides = [1, 1]} : vector<16x96xf32> to vector<16x8xf32>
    %71 = vector.shape_cast %70 : vector<16x8xf32> to vector<2x8x8xf32>
    %72 = vector.extract_strided_slice %47 {offsets = [0, 40], sizes = [16, 8], strides = [1, 1]} : vector<16x96xf32> to vector<16x8xf32>
    %73 = vector.shape_cast %72 : vector<16x8xf32> to vector<2x8x8xf32>
    %74 = vector.extract_strided_slice %47 {offsets = [0, 72], sizes = [16, 8], strides = [1, 1]} : vector<16x96xf32> to vector<16x8xf32>
    %75 = vector.shape_cast %74 : vector<16x8xf32> to vector<2x8x8xf32>
    %cst_30 = arith.constant dense<0.000000e+00> : vector<2x8x8xf32>
    %76 = tpu.matmul %71, %73, %cst_30 {dimension_numbers = #tpu.dot_dimension_numbers<[2], [2], [1], [1], [0, 0, 0, 1, 1, 1], [0], [0]>} : vector<2x8x8xf32>, vector<2x8x8xf32>, vector<2x8x8xf32> -> vector<2x8x8xf32>
    %cst_31 = arith.constant 0.353553385 : f32
    %77 = vector.broadcast %cst_31 : f32 to vector<2x8x8xf32>
    %78 = arith.mulf %76, %77 : vector<2x8x8xf32>
    %79 = vector.broadcast %6 : vector<2x1x8xf32> to vector<2x8x8xf32>
    %80 = arith.addf %78, %79 : vector<2x8x8xf32>
    %cst_32 = arith.constant dense<0xFF800000> : vector<2x8xf32>
    %81 = vector.multi_reduction <maximumf>, %80, %cst_32 [2] : vector<2x8x8xf32> to vector<2x8xf32>
    %82 = vector.shape_cast %81 : vector<2x8xf32> to vector<2x8x1xf32>
    %83 = vector.broadcast %82 : vector<2x8x1xf32> to vector<2x8x8xf32>
    %84 = arith.subf %80, %83 : vector<2x8x8xf32>
    %85 = math.exp %84 : vector<2x8x8xf32>
    %cst_33 = arith.constant dense<0.000000e+00> : vector<2x8xf32>
    %86 = vector.multi_reduction <add>, %85, %cst_33 [2] : vector<2x8x8xf32> to vector<2x8xf32>
    %87 = vector.shape_cast %86 : vector<2x8xf32> to vector<2x8x1xf32>
    %88 = vector.broadcast %87 : vector<2x8x1xf32> to vector<2x8x8xf32>
    %89 = arith.divf %85, %88 : vector<2x8x8xf32>
    %cst_34 = arith.constant dense<0.000000e+00> : vector<2x8x8xf32>
    %90 = tpu.matmul %89, %75, %cst_34 {dimension_numbers = #tpu.dot_dimension_numbers<[2], [1], [1], [2], [0, 0, 0, 1, 1, 2], [0], [0]>} : vector<2x8x8xf32>, vector<2x8x8xf32>, vector<2x8x8xf32> -> vector<2x8x8xf32>
    %91 = vector.shape_cast %90 : vector<2x8x8xf32> to vector<16x8xf32>
    %92 = vector.extract_strided_slice %47 {offsets = [0, 16], sizes = [16, 8], strides = [1, 1]} : vector<16x96xf32> to vector<16x8xf32>
    %93 = vector.shape_cast %92 : vector<16x8xf32> to vector<2x8x8xf32>
    %94 = vector.extract_strided_slice %47 {offsets = [0, 48], sizes = [16, 8], strides = [1, 1]} : vector<16x96xf32> to vector<16x8xf32>
    %95 = vector.shape_cast %94 : vector<16x8xf32> to vector<2x8x8xf32>
    %96 = vector.extract_strided_slice %47 {offsets = [0, 80], sizes = [16, 8], strides = [1, 1]} : vector<16x96xf32> to vector<16x8xf32>
    %97 = vector.shape_cast %96 : vector<16x8xf32> to vector<2x8x8xf32>
    %cst_35 = arith.constant dense<0.000000e+00> : vector<2x8x8xf32>
    %98 = tpu.matmul %93, %95, %cst_35 {dimension_numbers = #tpu.dot_dimension_numbers<[2], [2], [1], [1], [0, 0, 0, 1, 1, 1], [0], [0]>} : vector<2x8x8xf32>, vector<2x8x8xf32>, vector<2x8x8xf32> -> vector<2x8x8xf32>
    %cst_36 = arith.constant 0.353553385 : f32
    %99 = vector.broadcast %cst_36 : f32 to vector<2x8x8xf32>
    %100 = arith.mulf %98, %99 : vector<2x8x8xf32>
    %101 = vector.broadcast %6 : vector<2x1x8xf32> to vector<2x8x8xf32>
    %102 = arith.addf %100, %101 : vector<2x8x8xf32>
    %cst_37 = arith.constant dense<0xFF800000> : vector<2x8xf32>
    %103 = vector.multi_reduction <maximumf>, %102, %cst_37 [2] : vector<2x8x8xf32> to vector<2x8xf32>
    %104 = vector.shape_cast %103 : vector<2x8xf32> to vector<2x8x1xf32>
    %105 = vector.broadcast %104 : vector<2x8x1xf32> to vector<2x8x8xf32>
    %106 = arith.subf %102, %105 : vector<2x8x8xf32>
    %107 = math.exp %106 : vector<2x8x8xf32>
    %cst_38 = arith.constant dense<0.000000e+00> : vector<2x8xf32>
    %108 = vector.multi_reduction <add>, %107, %cst_38 [2] : vector<2x8x8xf32> to vector<2x8xf32>
    %109 = vector.shape_cast %108 : vector<2x8xf32> to vector<2x8x1xf32>
    %110 = vector.broadcast %109 : vector<2x8x1xf32> to vector<2x8x8xf32>
    %111 = arith.divf %107, %110 : vector<2x8x8xf32>
    %cst_39 = arith.constant dense<0.000000e+00> : vector<2x8x8xf32>
    %112 = tpu.matmul %111, %97, %cst_39 {dimension_numbers = #tpu.dot_dimension_numbers<[2], [1], [1], [2], [0, 0, 0, 1, 1, 2], [0], [0]>} : vector<2x8x8xf32>, vector<2x8x8xf32>, vector<2x8x8xf32> -> vector<2x8x8xf32>
    %113 = vector.shape_cast %112 : vector<2x8x8xf32> to vector<16x8xf32>
    %114 = vector.extract_strided_slice %47 {offsets = [0, 24], sizes = [16, 8], strides = [1, 1]} : vector<16x96xf32> to vector<16x8xf32>
    %115 = vector.shape_cast %114 : vector<16x8xf32> to vector<2x8x8xf32>
    %116 = vector.extract_strided_slice %47 {offsets = [0, 56], sizes = [16, 8], strides = [1, 1]} : vector<16x96xf32> to vector<16x8xf32>
    %117 = vector.shape_cast %116 : vector<16x8xf32> to vector<2x8x8xf32>
    %118 = vector.extract_strided_slice %47 {offsets = [0, 88], sizes = [16, 8], strides = [1, 1]} : vector<16x96xf32> to vector<16x8xf32>
    %119 = vector.shape_cast %118 : vector<16x8xf32> to vector<2x8x8xf32>
    %cst_40 = arith.constant dense<0.000000e+00> : vector<2x8x8xf32>
    %120 = tpu.matmul %115, %117, %cst_40 {dimension_numbers = #tpu.dot_dimension_numbers<[2], [2], [1], [1], [0, 0, 0, 1, 1, 1], [0], [0]>} : vector<2x8x8xf32>, vector<2x8x8xf32>, vector<2x8x8xf32> -> vector<2x8x8xf32>
    %cst_41 = arith.constant 0.353553385 : f32
    %121 = vector.broadcast %cst_41 : f32 to vector<2x8x8xf32>
    %122 = arith.mulf %120, %121 : vector<2x8x8xf32>
    %123 = vector.broadcast %6 : vector<2x1x8xf32> to vector<2x8x8xf32>
    %124 = arith.addf %122, %123 : vector<2x8x8xf32>
    %cst_42 = arith.constant dense<0xFF800000> : vector<2x8xf32>
    %125 = vector.multi_reduction <maximumf>, %124, %cst_42 [2] : vector<2x8x8xf32> to vector<2x8xf32>
    %126 = vector.shape_cast %125 : vector<2x8xf32> to vector<2x8x1xf32>
    %127 = vector.broadcast %126 : vector<2x8x1xf32> to vector<2x8x8xf32>
    %128 = arith.subf %124, %127 : vector<2x8x8xf32>
    %129 = math.exp %128 : vector<2x8x8xf32>
    %cst_43 = arith.constant dense<0.000000e+00> : vector<2x8xf32>
    %130 = vector.multi_reduction <add>, %129, %cst_43 [2] : vector<2x8x8xf32> to vector<2x8xf32>
    %131 = vector.shape_cast %130 : vector<2x8xf32> to vector<2x8x1xf32>
    %132 = vector.broadcast %131 : vector<2x8x1xf32> to vector<2x8x8xf32>
    %133 = arith.divf %129, %132 : vector<2x8x8xf32>
    %cst_44 = arith.constant dense<0.000000e+00> : vector<2x8x8xf32>
    %134 = tpu.matmul %133, %119, %cst_44 {dimension_numbers = #tpu.dot_dimension_numbers<[2], [1], [1], [2], [0, 0, 0, 1, 1, 2], [0], [0]>} : vector<2x8x8xf32>, vector<2x8x8xf32>, vector<2x8x8xf32> -> vector<2x8x8xf32>
    %135 = vector.shape_cast %134 : vector<2x8x8xf32> to vector<16x8xf32>
    %136 = tpu.concatenate %69, %91, %113, %135 in 1 : vector<16x8xf32>, vector<16x8xf32>, vector<16x8xf32>, vector<16x8xf32> -> vector<16x32xf32>
    %c0_45 = arith.constant 0 : index
    %c0_46 = arith.constant 0 : index
    %c0_47 = arith.constant 0 : index
    %137 = vector.load %arg5[%c0_45, %c0_46, %c0_47] : memref<4x32x32xf32, #tpu.memory_space<vmem>>, vector<1x32x32xf32>
    %138 = vector.shape_cast %137 : vector<1x32x32xf32> to vector<32x32xf32>
    %cst_48 = arith.constant dense<0.000000e+00> : vector<16x32xf32>
    %139 = tpu.matmul %136, %138, %cst_48 {dimension_numbers = #tpu.dot_dimension_numbers<[1], [0], [0], [1], [0, 0, 1, 1], [], []>} : vector<16x32xf32>, vector<32x32xf32>, vector<16x32xf32> -> vector<16x32xf32>
    %140 = vector.broadcast %35 : vector<1x32xf32> to vector<16x32xf32>
    %141 = arith.addf %139, %140 : vector<16x32xf32>
    %142 = arith.addf %141, %29 : vector<16x32xf32>
    %cst_49 = arith.constant dense<0.000000e+00> : vector<16xf32>
    %143 = vector.multi_reduction <add>, %142, %cst_49 [1] : vector<16x32xf32> to vector<16xf32>
    %144 = vector.shape_cast %143 : vector<16xf32> to vector<16x1xf32>
    %cst_50 = arith.constant 3.200000e+01 : f32
    %145 = vector.broadcast %cst_50 : f32 to vector<16x1xf32>
    %146 = arith.divf %144, %145 : vector<16x1xf32>
    %147 = vector.broadcast %146 : vector<16x1xf32> to vector<16x32xf32>
    %148 = arith.subf %142, %147 : vector<16x32xf32>
    %149 = arith.mulf %148, %148 : vector<16x32xf32>
    %cst_51 = arith.constant dense<0.000000e+00> : vector<16xf32>
    %150 = vector.multi_reduction <add>, %149, %cst_51 [1] : vector<16x32xf32> to vector<16xf32>
    %151 = vector.shape_cast %150 : vector<16xf32> to vector<16x1xf32>
    %cst_52 = arith.constant 3.200000e+01 : f32
    %152 = vector.broadcast %cst_52 : f32 to vector<16x1xf32>
    %153 = arith.divf %151, %152 : vector<16x1xf32>
    %cst_53 = arith.constant 9.99999996E-13 : f32
    %154 = vector.broadcast %cst_53 : f32 to vector<16x1xf32>
    %155 = arith.addf %153, %154 : vector<16x1xf32>
    %156 = math.rsqrt %155 : vector<16x1xf32>
    %157 = vector.broadcast %156 : vector<16x1xf32> to vector<16x32xf32>
    %158 = arith.mulf %148, %157 : vector<16x32xf32>
    %159 = vector.broadcast %36 : vector<1x32xf32> to vector<16x32xf32>
    %160 = arith.mulf %158, %159 : vector<16x32xf32>
    %161 = vector.broadcast %37 : vector<1x32xf32> to vector<16x32xf32>
    %162 = arith.addf %160, %161 : vector<16x32xf32>
    %c0_54 = arith.constant 0 : index
    %c0_55 = arith.constant 0 : index
    %c0_56 = arith.constant 0 : index
    %163 = vector.load %arg6[%c0_54, %c0_55, %c0_56] : memref<4x32x64xf32, #tpu.memory_space<vmem>>, vector<1x32x64xf32>
    %164 = vector.shape_cast %163 : vector<1x32x64xf32> to vector<32x64xf32>
    %cst_57 = arith.constant dense<0.000000e+00> : vector<16x64xf32>
    %165 = tpu.matmul %162, %164, %cst_57 {dimension_numbers = #tpu.dot_dimension_numbers<[1], [0], [0], [1], [0, 0, 1, 1], [], []>} : vector<16x32xf32>, vector<32x64xf32>, vector<16x64xf32> -> vector<16x64xf32>
    %c0_58 = arith.constant 0 : index
    %c0_59 = arith.constant 0 : index
    %c0_60 = arith.constant 0 : index
    %166 = vector.load %arg7[%c0_58, %c0_59, %c0_60] : memref<4x1x64xf32, #tpu.memory_space<vmem>>, vector<1x1x64xf32>
    %167 = vector.shape_cast %166 : vector<1x1x64xf32> to vector<1x64xf32>
    %168 = vector.broadcast %167 : vector<1x64xf32> to vector<16x64xf32>
    %169 = arith.addf %165, %168 : vector<16x64xf32>
    %cst_61 = arith.constant 5.000000e-01 : f32
    %170 = vector.broadcast %cst_61 : f32 to vector<16x64xf32>
    %171 = arith.mulf %170, %169 : vector<16x64xf32>
    %cst_62 = arith.constant 4.471500e-02 : f32
    %172 = vector.broadcast %cst_62 : f32 to vector<16x64xf32>
    %173 = arith.mulf %172, %169 : vector<16x64xf32>
    %174 = arith.mulf %173, %169 : vector<16x64xf32>
    %175 = arith.mulf %174, %169 : vector<16x64xf32>
    %176 = arith.addf %169, %175 : vector<16x64xf32>
    %cst_63 = arith.constant 0.797884583 : f32
    %177 = vector.broadcast %cst_63 : f32 to vector<16x64xf32>
    %178 = arith.mulf %177, %176 : vector<16x64xf32>
    %179 = math.tanh %178 : vector<16x64xf32>
    %cst_64 = arith.constant 1.000000e+00 : f32
    %180 = vector.broadcast %cst_64 : f32 to vector<16x64xf32>
    %181 = arith.addf %180, %179 : vector<16x64xf32>
    %182 = arith.mulf %171, %181 : vector<16x64xf32>
    %c0_65 = arith.constant 0 : index
    %c0_66 = arith.constant 0 : index
    %c0_67 = arith.constant 0 : index
    %183 = vector.load %arg8[%c0_65, %c0_66, %c0_67] : memref<4x64x32xf32, #tpu.memory_space<vmem>>, vector<1x64x32xf32>
    %184 = vector.shape_cast %183 : vector<1x64x32xf32> to vector<64x32xf32>
    %cst_68 = arith.constant dense<0.000000e+00> : vector<16x32xf32>
    %185 = tpu.matmul %182, %184, %cst_68 {dimension_numbers = #tpu.dot_dimension_numbers<[1], [0], [0], [1], [0, 0, 1, 1], [], []>} : vector<16x64xf32>, vector<64x32xf32>, vector<16x32xf32> -> vector<16x32xf32>
    %186 = vector.broadcast %38 : vector<1x32xf32> to vector<16x32xf32>
    %187 = arith.addf %185, %186 : vector<16x32xf32>
    %188 = arith.addf %187, %162 : vector<16x32xf32>
    %cst_69 = arith.constant dense<0.000000e+00> : vector<16xf32>
    %189 = vector.multi_reduction <add>, %188, %cst_69 [1] : vector<16x32xf32> to vector<16xf32>
    %190 = vector.shape_cast %189 : vector<16xf32> to vector<16x1xf32>
    %cst_70 = arith.constant 3.200000e+01 : f32
    %191 = vector.broadcast %cst_70 : f32 to vector<16x1xf32>
    %192 = arith.divf %190, %191 : vector<16x1xf32>
    %193 = vector.broadcast %192 : vector<16x1xf32> to vector<16x32xf32>
    %194 = arith.subf %188, %193 : vector<16x32xf32>
    %195 = arith.mulf %194, %194 : vector<16x32xf32>
    %cst_71 = arith.constant dense<0.000000e+00> : vector<16xf32>
    %196 = vector.multi_reduction <add>, %195, %cst_71 [1] : vector<16x32xf32> to vector<16xf32>
    %197 = vector.shape_cast %196 : vector<16xf32> to vector<16x1xf32>
    %cst_72 = arith.constant 3.200000e+01 : f32
    %198 = vector.broadcast %cst_72 : f32 to vector<16x1xf32>
    %199 = arith.divf %197, %198 : vector<16x1xf32>
    %cst_73 = arith.constant 9.99999996E-13 : f32
    %200 = vector.broadcast %cst_73 : f32 to vector<16x1xf32>
    %201 = arith.addf %199, %200 : vector<16x1xf32>
    %202 = math.rsqrt %201 : vector<16x1xf32>
    %203 = vector.broadcast %202 : vector<16x1xf32> to vector<16x32xf32>
    %204 = arith.mulf %194, %203 : vector<16x32xf32>
    %205 = vector.broadcast %39 : vector<1x32xf32> to vector<16x32xf32>
    %206 = arith.mulf %204, %205 : vector<16x32xf32>
    %207 = vector.broadcast %40 : vector<1x32xf32> to vector<16x32xf32>
    %208 = arith.addf %206, %207 : vector<16x32xf32>
    %c1_74 = arith.constant 1 : index
    %c0_75 = arith.constant 0 : index
    %c0_76 = arith.constant 0 : index
    %209 = vector.load %arg13[%c1_74, %c0_75, %c0_76] : memref<5x16x32xf32, #tpu.memory_space<vmem>>, vector<1x16x32xf32>
    %210 = vector.shape_cast %209 : vector<1x16x32xf32> to vector<16x32xf32>
    %211 = vector.shape_cast %208 : vector<16x32xf32> to vector<1x16x32xf32>
    tpu.vector_store %arg13[%c1_74, %c0_75, %c0_76], %211 {strides = array<i32>} : memref<5x16x32xf32, #tpu.memory_space<vmem>>, vector<1x16x32xf32>,
    %c1_77 = arith.constant 1 : index
    %c0_78 = arith.constant 0 : index
    %c0_79 = arith.constant 0 : index
    %212 = vector.load %arg9[%c1_77, %c0_78, %c0_79] : memref<4x6x32xf32, #tpu.memory_space<vmem>>, vector<1x6x32xf32>
    %213 = vector.shape_cast %212 : vector<1x6x32xf32> to vector<6x32xf32>
    %214 = vector.extract_strided_slice %213 {offsets = [0, 0], sizes = [1, 32], strides = [1, 1]} : vector<6x32xf32> to vector<1x32xf32>
    %215 = vector.extract_strided_slice %213 {offsets = [1, 0], sizes = [1, 32], strides = [1, 1]} : vector<6x32xf32> to vector<1x32xf32>
    %216 = vector.extract_strided_slice %213 {offsets = [2, 0], sizes = [1, 32], strides = [1, 1]} : vector<6x32xf32> to vector<1x32xf32>
    %217 = vector.extract_strided_slice %213 {offsets = [3, 0], sizes = [1, 32], strides = [1, 1]} : vector<6x32xf32> to vector<1x32xf32>
    %218 = vector.extract_strided_slice %213 {offsets = [4, 0], sizes = [1, 32], strides = [1, 1]} : vector<6x32xf32> to vector<1x32xf32>
    %219 = vector.extract_strided_slice %213 {offsets = [5, 0], sizes = [1, 32], strides = [1, 1]} : vector<6x32xf32> to vector<1x32xf32>
    %c1_80 = arith.constant 1 : index
    %c0_81 = arith.constant 0 : index
    %c0_82 = arith.constant 0 : index
    %220 = vector.load %arg3[%c1_80, %c0_81, %c0_82] : memref<4x32x96xf32, #tpu.memory_space<vmem>>, vector<1x32x96xf32>
    %221 = vector.shape_cast %220 : vector<1x32x96xf32> to vector<32x96xf32>
    %cst_83 = arith.constant dense<0.000000e+00> : vector<16x96xf32>
    %222 = tpu.matmul %208, %221, %cst_83 {dimension_numbers = #tpu.dot_dimension_numbers<[1], [0], [0], [1], [0, 0, 1, 1], [], []>} : vector<16x32xf32>, vector<32x96xf32>, vector<16x96xf32> -> vector<16x96xf32>
    %c1_84 = arith.constant 1 : index
    %c0_85 = arith.constant 0 : index
    %c0_86 = arith.constant 0 : index
    %223 = vector.load %arg4[%c1_84, %c0_85, %c0_86] : memref<4x1x96xf32, #tpu.memory_space<vmem>>, vector<1x1x96xf32>
    %224 = vector.shape_cast %223 : vector<1x1x96xf32> to vector<1x96xf32>
    %225 = vector.broadcast %224 : vector<1x96xf32> to vector<16x96xf32>
    %226 = arith.addf %222, %225 : vector<16x96xf32>
    %227 = vector.extract_strided_slice %226 {offsets = [0, 0], sizes = [16, 8], strides = [1, 1]} : vector<16x96xf32> to vector<16x8xf32>
    %228 = vector.shape_cast %227 : vector<16x8xf32> to vector<2x8x8xf32>
    %229 = vector.extract_strided_slice %226 {offsets = [0, 32], sizes = [16, 8], strides = [1, 1]} : vector<16x96xf32> to vector<16x8xf32>
    %230 = vector.shape_cast %229 : vector<16x8xf32> to vector<2x8x8xf32>
    %231 = vector.extract_strided_slice %226 {offsets = [0, 64], sizes = [16, 8], strides = [1, 1]} : vector<16x96xf32> to vector<16x8xf32>
    %232 = vector.shape_cast %231 : vector<16x8xf32> to vector<2x8x8xf32>
    %cst_87 = arith.constant dense<0.000000e+00> : vector<2x8x8xf32>
    %233 = tpu.matmul %228, %230, %cst_87 {dimension_numbers = #tpu.dot_dimension_numbers<[2], [2], [1], [1], [0, 0, 0, 1, 1, 1], [0], [0]>} : vector<2x8x8xf32>, vector<2x8x8xf32>, vector<2x8x8xf32> -> vector<2x8x8xf32>
    %cst_88 = arith.constant 0.353553385 : f32
    %234 = vector.broadcast %cst_88 : f32 to vector<2x8x8xf32>
    %235 = arith.mulf %233, %234 : vector<2x8x8xf32>
    %236 = vector.broadcast %6 : vector<2x1x8xf32> to vector<2x8x8xf32>
    %237 = arith.addf %235, %236 : vector<2x8x8xf32>
    %cst_89 = arith.constant dense<0xFF800000> : vector<2x8xf32>
    %238 = vector.multi_reduction <maximumf>, %237, %cst_89 [2] : vector<2x8x8xf32> to vector<2x8xf32>
    %239 = vector.shape_cast %238 : vector<2x8xf32> to vector<2x8x1xf32>
    %240 = vector.broadcast %239 : vector<2x8x1xf32> to vector<2x8x8xf32>
    %241 = arith.subf %237, %240 : vector<2x8x8xf32>
    %242 = math.exp %241 : vector<2x8x8xf32>
    %cst_90 = arith.constant dense<0.000000e+00> : vector<2x8xf32>
    %243 = vector.multi_reduction <add>, %242, %cst_90 [2] : vector<2x8x8xf32> to vector<2x8xf32>
    %244 = vector.shape_cast %243 : vector<2x8xf32> to vector<2x8x1xf32>
    %245 = vector.broadcast %244 : vector<2x8x1xf32> to vector<2x8x8xf32>
    %246 = arith.divf %242, %245 : vector<2x8x8xf32>
    %cst_91 = arith.constant dense<0.000000e+00> : vector<2x8x8xf32>
    %247 = tpu.matmul %246, %232, %cst_91 {dimension_numbers = #tpu.dot_dimension_numbers<[2], [1], [1], [2], [0, 0, 0, 1, 1, 2], [0], [0]>} : vector<2x8x8xf32>, vector<2x8x8xf32>, vector<2x8x8xf32> -> vector<2x8x8xf32>
    %248 = vector.shape_cast %247 : vector<2x8x8xf32> to vector<16x8xf32>
    %249 = vector.extract_strided_slice %226 {offsets = [0, 8], sizes = [16, 8], strides = [1, 1]} : vector<16x96xf32> to vector<16x8xf32>
    %250 = vector.shape_cast %249 : vector<16x8xf32> to vector<2x8x8xf32>
    %251 = vector.extract_strided_slice %226 {offsets = [0, 40], sizes = [16, 8], strides = [1, 1]} : vector<16x96xf32> to vector<16x8xf32>
    %252 = vector.shape_cast %251 : vector<16x8xf32> to vector<2x8x8xf32>
    %253 = vector.extract_strided_slice %226 {offsets = [0, 72], sizes = [16, 8], strides = [1, 1]} : vector<16x96xf32> to vector<16x8xf32>
    %254 = vector.shape_cast %253 : vector<16x8xf32> to vector<2x8x8xf32>
    %cst_92 = arith.constant dense<0.000000e+00> : vector<2x8x8xf32>
    %255 = tpu.matmul %250, %252, %cst_92 {dimension_numbers = #tpu.dot_dimension_numbers<[2], [2], [1], [1], [0, 0, 0, 1, 1, 1], [0], [0]>} : vector<2x8x8xf32>, vector<2x8x8xf32>, vector<2x8x8xf32> -> vector<2x8x8xf32>
    %cst_93 = arith.constant 0.353553385 : f32
    %256 = vector.broadcast %cst_93 : f32 to vector<2x8x8xf32>
    %257 = arith.mulf %255, %256 : vector<2x8x8xf32>
    %258 = vector.broadcast %6 : vector<2x1x8xf32> to vector<2x8x8xf32>
    %259 = arith.addf %257, %258 : vector<2x8x8xf32>
    %cst_94 = arith.constant dense<0xFF800000> : vector<2x8xf32>
    %260 = vector.multi_reduction <maximumf>, %259, %cst_94 [2] : vector<2x8x8xf32> to vector<2x8xf32>
    %261 = vector.shape_cast %260 : vector<2x8xf32> to vector<2x8x1xf32>
    %262 = vector.broadcast %261 : vector<2x8x1xf32> to vector<2x8x8xf32>
    %263 = arith.subf %259, %262 : vector<2x8x8xf32>
    %264 = math.exp %263 : vector<2x8x8xf32>
    %cst_95 = arith.constant dense<0.000000e+00> : vector<2x8xf32>
    %265 = vector.multi_reduction <add>, %264, %cst_95 [2] : vector<2x8x8xf32> to vector<2x8xf32>
    %266 = vector.shape_cast %265 : vector<2x8xf32> to vector<2x8x1xf32>
    %267 = vector.broadcast %266 : vector<2x8x1xf32> to vector<2x8x8xf32>
    %268 = arith.divf %264, %267 : vector<2x8x8xf32>
    %cst_96 = arith.constant dense<0.000000e+00> : vector<2x8x8xf32>
    %269 = tpu.matmul %268, %254, %cst_96 {dimension_numbers = #tpu.dot_dimension_numbers<[2], [1], [1], [2], [0, 0, 0, 1, 1, 2], [0], [0]>} : vector<2x8x8xf32>, vector<2x8x8xf32>, vector<2x8x8xf32> -> vector<2x8x8xf32>
    %270 = vector.shape_cast %269 : vector<2x8x8xf32> to vector<16x8xf32>
    %271 = vector.extract_strided_slice %226 {offsets = [0, 16], sizes = [16, 8], strides = [1, 1]} : vector<16x96xf32> to vector<16x8xf32>
    %272 = vector.shape_cast %271 : vector<16x8xf32> to vector<2x8x8xf32>
    %273 = vector.extract_strided_slice %226 {offsets = [0, 48], sizes = [16, 8], strides = [1, 1]} : vector<16x96xf32> to vector<16x8xf32>
    %274 = vector.shape_cast %273 : vector<16x8xf32> to vector<2x8x8xf32>
    %275 = vector.extract_strided_slice %226 {offsets = [0, 80], sizes = [16, 8], strides = [1, 1]} : vector<16x96xf32> to vector<16x8xf32>
    %276 = vector.shape_cast %275 : vector<16x8xf32> to vector<2x8x8xf32>
    %cst_97 = arith.constant dense<0.000000e+00> : vector<2x8x8xf32>
    %277 = tpu.matmul %272, %274, %cst_97 {dimension_numbers = #tpu.dot_dimension_numbers<[2], [2], [1], [1], [0, 0, 0, 1, 1, 1], [0], [0]>} : vector<2x8x8xf32>, vector<2x8x8xf32>, vector<2x8x8xf32> -> vector<2x8x8xf32>
    %cst_98 = arith.constant 0.353553385 : f32
    %278 = vector.broadcast %cst_98 : f32 to vector<2x8x8xf32>
    %279 = arith.mulf %277, %278 : vector<2x8x8xf32>
    %280 = vector.broadcast %6 : vector<2x1x8xf32> to vector<2x8x8xf32>
    %281 = arith.addf %279, %280 : vector<2x8x8xf32>
    %cst_99 = arith.constant dense<0xFF800000> : vector<2x8xf32>
    %282 = vector.multi_reduction <maximumf>, %281, %cst_99 [2] : vector<2x8x8xf32> to vector<2x8xf32>
    %283 = vector.shape_cast %282 : vector<2x8xf32> to vector<2x8x1xf32>
    %284 = vector.broadcast %283 : vector<2x8x1xf32> to vector<2x8x8xf32>
    %285 = arith.subf %281, %284 : vector<2x8x8xf32>
    %286 = math.exp %285 : vector<2x8x8xf32>
    %cst_100 = arith.constant dense<0.000000e+00> : vector<2x8xf32>
    %287 = vector.multi_reduction <add>, %286, %cst_100 [2] : vector<2x8x8xf32> to vector<2x8xf32>
    %288 = vector.shape_cast %287 : vector<2x8xf32> to vector<2x8x1xf32>
    %289 = vector.broadcast %288 : vector<2x8x1xf32> to vector<2x8x8xf32>
    %290 = arith.divf %286, %289 : vector<2x8x8xf32>
    %cst_101 = arith.constant dense<0.000000e+00> : vector<2x8x8xf32>
    %291 = tpu.matmul %290, %276, %cst_101 {dimension_numbers = #tpu.dot_dimension_numbers<[2], [1], [1], [2], [0, 0, 0, 1, 1, 2], [0], [0]>} : vector<2x8x8xf32>, vector<2x8x8xf32>, vector<2x8x8xf32> -> vector<2x8x8xf32>
    %292 = vector.shape_cast %291 : vector<2x8x8xf32> to vector<16x8xf32>
    %293 = vector.extract_strided_slice %226 {offsets = [0, 24], sizes = [16, 8], strides = [1, 1]} : vector<16x96xf32> to vector<16x8xf32>
    %294 = vector.shape_cast %293 : vector<16x8xf32> to vector<2x8x8xf32>
    %295 = vector.extract_strided_slice %226 {offsets = [0, 56], sizes = [16, 8], strides = [1, 1]} : vector<16x96xf32> to vector<16x8xf32>
    %296 = vector.shape_cast %295 : vector<16x8xf32> to vector<2x8x8xf32>
    %297 = vector.extract_strided_slice %226 {offsets = [0, 88], sizes = [16, 8], strides = [1, 1]} : vector<16x96xf32> to vector<16x8xf32>
    %298 = vector.shape_cast %297 : vector<16x8xf32> to vector<2x8x8xf32>
    %cst_102 = arith.constant dense<0.000000e+00> : vector<2x8x8xf32>
    %299 = tpu.matmul %294, %296, %cst_102 {dimension_numbers = #tpu.dot_dimension_numbers<[2], [2], [1], [1], [0, 0, 0, 1, 1, 1], [0], [0]>} : vector<2x8x8xf32>, vector<2x8x8xf32>, vector<2x8x8xf32> -> vector<2x8x8xf32>
    %cst_103 = arith.constant 0.353553385 : f32
    %300 = vector.broadcast %cst_103 : f32 to vector<2x8x8xf32>
    %301 = arith.mulf %299, %300 : vector<2x8x8xf32>
    %302 = vector.broadcast %6 : vector<2x1x8xf32> to vector<2x8x8xf32>
    %303 = arith.addf %301, %302 : vector<2x8x8xf32>
    %cst_104 = arith.constant dense<0xFF800000> : vector<2x8xf32>
    %304 = vector.multi_reduction <maximumf>, %303, %cst_104 [2] : vector<2x8x8xf32> to vector<2x8xf32>
    %305 = vector.shape_cast %304 : vector<2x8xf32> to vector<2x8x1xf32>
    %306 = vector.broadcast %305 : vector<2x8x1xf32> to vector<2x8x8xf32>
    %307 = arith.subf %303, %306 : vector<2x8x8xf32>
    %308 = math.exp %307 : vector<2x8x8xf32>
    %cst_105 = arith.constant dense<0.000000e+00> : vector<2x8xf32>
    %309 = vector.multi_reduction <add>, %308, %cst_105 [2] : vector<2x8x8xf32> to vector<2x8xf32>
    %310 = vector.shape_cast %309 : vector<2x8xf32> to vector<2x8x1xf32>
    %311 = vector.broadcast %310 : vector<2x8x1xf32> to vector<2x8x8xf32>
    %312 = arith.divf %308, %311 : vector<2x8x8xf32>
    %cst_106 = arith.constant dense<0.000000e+00> : vector<2x8x8xf32>
    %313 = tpu.matmul %312, %298, %cst_106 {dimension_numbers = #tpu.dot_dimension_numbers<[2], [1], [1], [2], [0, 0, 0, 1, 1, 2], [0], [0]>} : vector<2x8x8xf32>, vector<2x8x8xf32>, vector<2x8x8xf32> -> vector<2x8x8xf32>
    %314 = vector.shape_cast %313 : vector<2x8x8xf32> to vector<16x8xf32>
    %315 = tpu.concatenate %248, %270, %292, %314 in 1 : vector<16x8xf32>, vector<16x8xf32>, vector<16x8xf32>, vector<16x8xf32> -> vector<16x32xf32>
    %c1_107 = arith.constant 1 : index
    %c0_108 = arith.constant 0 : index
    %c0_109 = arith.constant 0 : index
    %316 = vector.load %arg5[%c1_107, %c0_108, %c0_109] : memref<4x32x32xf32, #tpu.memory_space<vmem>>, vector<1x32x32xf32>
    %317 = vector.shape_cast %316 : vector<1x32x32xf32> to vector<32x32xf32>
    %cst_110 = arith.constant dense<0.000000e+00> : vector<16x32xf32>
    %318 = tpu.matmul %315, %317, %cst_110 {dimension_numbers = #tpu.dot_dimension_numbers<[1], [0], [0], [1], [0, 0, 1, 1], [], []>} : vector<16x32xf32>, vector<32x32xf32>, vector<16x32xf32> -> vector<16x32xf32>
    %319 = vector.broadcast %214 : vector<1x32xf32> to vector<16x32xf32>
    %320 = arith.addf %318, %319 : vector<16x32xf32>
    %321 = arith.addf %320, %208 : vector<16x32xf32>
    %cst_111 = arith.constant dense<0.000000e+00> : vector<16xf32>
    %322 = vector.multi_reduction <add>, %321, %cst_111 [1] : vector<16x32xf32> to vector<16xf32>
    %323 = vector.shape_cast %322 : vector<16xf32> to vector<16x1xf32>
    %cst_112 = arith.constant 3.200000e+01 : f32
    %324 = vector.broadcast %cst_112 : f32 to vector<16x1xf32>
    %325 = arith.divf %323, %324 : vector<16x1xf32>
    %326 = vector.broadcast %325 : vector<16x1xf32> to vector<16x32xf32>
    %327 = arith.subf %321, %326 : vector<16x32xf32>
    %328 = arith.mulf %327, %327 : vector<16x32xf32>
    %cst_113 = arith.constant dense<0.000000e+00> : vector<16xf32>
    %329 = vector.multi_reduction <add>, %328, %cst_113 [1] : vector<16x32xf32> to vector<16xf32>
    %330 = vector.shape_cast %329 : vector<16xf32> to vector<16x1xf32>
    %cst_114 = arith.constant 3.200000e+01 : f32
    %331 = vector.broadcast %cst_114 : f32 to vector<16x1xf32>
    %332 = arith.divf %330, %331 : vector<16x1xf32>
    %cst_115 = arith.constant 9.99999996E-13 : f32
    %333 = vector.broadcast %cst_115 : f32 to vector<16x1xf32>
    %334 = arith.addf %332, %333 : vector<16x1xf32>
    %335 = math.rsqrt %334 : vector<16x1xf32>
    %336 = vector.broadcast %335 : vector<16x1xf32> to vector<16x32xf32>
    %337 = arith.mulf %327, %336 : vector<16x32xf32>
    %338 = vector.broadcast %215 : vector<1x32xf32> to vector<16x32xf32>
    %339 = arith.mulf %337, %338 : vector<16x32xf32>
    %340 = vector.broadcast %216 : vector<1x32xf32> to vector<16x32xf32>
    %341 = arith.addf %339, %340 : vector<16x32xf32>
    %c1_116 = arith.constant 1 : index
    %c0_117 = arith.constant 0 : index
    %c0_118 = arith.constant 0 : index
    %342 = vector.load %arg6[%c1_116, %c0_117, %c0_118] : memref<4x32x64xf32, #tpu.memory_space<vmem>>, vector<1x32x64xf32>
    %343 = vector.shape_cast %342 : vector<1x32x64xf32> to vector<32x64xf32>
    %cst_119 = arith.constant dense<0.000000e+00> : vector<16x64xf32>
    %344 = tpu.matmul %341, %343, %cst_119 {dimension_numbers = #tpu.dot_dimension_numbers<[1], [0], [0], [1], [0, 0, 1, 1], [], []>} : vector<16x32xf32>, vector<32x64xf32>, vector<16x64xf32> -> vector<16x64xf32>
    %c1_120 = arith.constant 1 : index
    %c0_121 = arith.constant 0 : index
    %c0_122 = arith.constant 0 : index
    %345 = vector.load %arg7[%c1_120, %c0_121, %c0_122] : memref<4x1x64xf32, #tpu.memory_space<vmem>>, vector<1x1x64xf32>
    %346 = vector.shape_cast %345 : vector<1x1x64xf32> to vector<1x64xf32>
    %347 = vector.broadcast %346 : vector<1x64xf32> to vector<16x64xf32>
    %348 = arith.addf %344, %347 : vector<16x64xf32>
    %cst_123 = arith.constant 5.000000e-01 : f32
    %349 = vector.broadcast %cst_123 : f32 to vector<16x64xf32>
    %350 = arith.mulf %349, %348 : vector<16x64xf32>
    %cst_124 = arith.constant 4.471500e-02 : f32
    %351 = vector.broadcast %cst_124 : f32 to vector<16x64xf32>
    %352 = arith.mulf %351, %348 : vector<16x64xf32>
    %353 = arith.mulf %352, %348 : vector<16x64xf32>
    %354 = arith.mulf %353, %348 : vector<16x64xf32>
    %355 = arith.addf %348, %354 : vector<16x64xf32>
    %cst_125 = arith.constant 0.797884583 : f32
    %356 = vector.broadcast %cst_125 : f32 to vector<16x64xf32>
    %357 = arith.mulf %356, %355 : vector<16x64xf32>
    %358 = math.tanh %357 : vector<16x64xf32>
    %cst_126 = arith.constant 1.000000e+00 : f32
    %359 = vector.broadcast %cst_126 : f32 to vector<16x64xf32>
    %360 = arith.addf %359, %358 : vector<16x64xf32>
    %361 = arith.mulf %350, %360 : vector<16x64xf32>
    %c1_127 = arith.constant 1 : index
    %c0_128 = arith.constant 0 : index
    %c0_129 = arith.constant 0 : index
    %362 = vector.load %arg8[%c1_127, %c0_128, %c0_129] : memref<4x64x32xf32, #tpu.memory_space<vmem>>, vector<1x64x32xf32>
    %363 = vector.shape_cast %362 : vector<1x64x32xf32> to vector<64x32xf32>
    %cst_130 = arith.constant dense<0.000000e+00> : vector<16x32xf32>
    %364 = tpu.matmul %361, %363, %cst_130 {dimension_numbers = #tpu.dot_dimension_numbers<[1], [0], [0], [1], [0, 0, 1, 1], [], []>} : vector<16x64xf32>, vector<64x32xf32>, vector<16x32xf32> -> vector<16x32xf32>
    %365 = vector.broadcast %217 : vector<1x32xf32> to vector<16x32xf32>
    %366 = arith.addf %364, %365 : vector<16x32xf32>
    %367 = arith.addf %366, %341 : vector<16x32xf32>
    %cst_131 = arith.constant dense<0.000000e+00> : vector<16xf32>
    %368 = vector.multi_reduction <add>, %367, %cst_131 [1] : vector<16x32xf32> to vector<16xf32>
    %369 = vector.shape_cast %368 : vector<16xf32> to vector<16x1xf32>
    %cst_132 = arith.constant 3.200000e+01 : f32
    %370 = vector.broadcast %cst_132 : f32 to vector<16x1xf32>
    %371 = arith.divf %369, %370 : vector<16x1xf32>
    %372 = vector.broadcast %371 : vector<16x1xf32> to vector<16x32xf32>
    %373 = arith.subf %367, %372 : vector<16x32xf32>
    %374 = arith.mulf %373, %373 : vector<16x32xf32>
    %cst_133 = arith.constant dense<0.000000e+00> : vector<16xf32>
    %375 = vector.multi_reduction <add>, %374, %cst_133 [1] : vector<16x32xf32> to vector<16xf32>
    %376 = vector.shape_cast %375 : vector<16xf32> to vector<16x1xf32>
    %cst_134 = arith.constant 3.200000e+01 : f32
    %377 = vector.broadcast %cst_134 : f32 to vector<16x1xf32>
    %378 = arith.divf %376, %377 : vector<16x1xf32>
    %cst_135 = arith.constant 9.99999996E-13 : f32
    %379 = vector.broadcast %cst_135 : f32 to vector<16x1xf32>
    %380 = arith.addf %378, %379 : vector<16x1xf32>
    %381 = math.rsqrt %380 : vector<16x1xf32>
    %382 = vector.broadcast %381 : vector<16x1xf32> to vector<16x32xf32>
    %383 = arith.mulf %373, %382 : vector<16x32xf32>
    %384 = vector.broadcast %218 : vector<1x32xf32> to vector<16x32xf32>
    %385 = arith.mulf %383, %384 : vector<16x32xf32>
    %386 = vector.broadcast %219 : vector<1x32xf32> to vector<16x32xf32>
    %387 = arith.addf %385, %386 : vector<16x32xf32>
    %c2 = arith.constant 2 : index
    %c0_136 = arith.constant 0 : index
    %c0_137 = arith.constant 0 : index
    %388 = vector.load %arg13[%c2, %c0_136, %c0_137] : memref<5x16x32xf32, #tpu.memory_space<vmem>>, vector<1x16x32xf32>
    %389 = vector.shape_cast %388 : vector<1x16x32xf32> to vector<16x32xf32>
    %390 = vector.shape_cast %387 : vector<16x32xf32> to vector<1x16x32xf32>
    tpu.vector_store %arg13[%c2, %c0_136, %c0_137], %390 {strides = array<i32>} : memref<5x16x32xf32, #tpu.memory_space<vmem>>, vector<1x16x32xf32>,
    %c2_138 = arith.constant 2 : index
    %c0_139 = arith.constant 0 : index
    %c0_140 = arith.constant 0 : index
    %391 = vector.load %arg9[%c2_138, %c0_139, %c0_140] : memref<4x6x32xf32, #tpu.memory_space<vmem>>, vector<1x6x32xf32>
    %392 = vector.shape_cast %391 : vector<1x6x32xf32> to vector<6x32xf32>
    %393 = vector.extract_strided_slice %392 {offsets = [0, 0], sizes = [1, 32], strides = [1, 1]} : vector<6x32xf32> to vector<1x32xf32>
    %394 = vector.extract_strided_slice %392 {offsets = [1, 0], sizes = [1, 32], strides = [1, 1]} : vector<6x32xf32> to vector<1x32xf32>
    %395 = vector.extract_strided_slice %392 {offsets = [2, 0], sizes = [1, 32], strides = [1, 1]} : vector<6x32xf32> to vector<1x32xf32>
    %396 = vector.extract_strided_slice %392 {offsets = [3, 0], sizes = [1, 32], strides = [1, 1]} : vector<6x32xf32> to vector<1x32xf32>
    %397 = vector.extract_strided_slice %392 {offsets = [4, 0], sizes = [1, 32], strides = [1, 1]} : vector<6x32xf32> to vector<1x32xf32>
    %398 = vector.extract_strided_slice %392 {offsets = [5, 0], sizes = [1, 32], strides = [1, 1]} : vector<6x32xf32> to vector<1x32xf32>
    %c2_141 = arith.constant 2 : index
    %c0_142 = arith.constant 0 : index
    %c0_143 = arith.constant 0 : index
    %399 = vector.load %arg3[%c2_141, %c0_142, %c0_143] : memref<4x32x96xf32, #tpu.memory_space<vmem>>, vector<1x32x96xf32>
    %400 = vector.shape_cast %399 : vector<1x32x96xf32> to vector<32x96xf32>
    %cst_144 = arith.constant dense<0.000000e+00> : vector<16x96xf32>
    %401 = tpu.matmul %387, %400, %cst_144 {dimension_numbers = #tpu.dot_dimension_numbers<[1], [0], [0], [1], [0, 0, 1, 1], [], []>} : vector<16x32xf32>, vector<32x96xf32>, vector<16x96xf32> -> vector<16x96xf32>
    %c2_145 = arith.constant 2 : index
    %c0_146 = arith.constant 0 : index
    %c0_147 = arith.constant 0 : index
    %402 = vector.load %arg4[%c2_145, %c0_146, %c0_147] : memref<4x1x96xf32, #tpu.memory_space<vmem>>, vector<1x1x96xf32>
    %403 = vector.shape_cast %402 : vector<1x1x96xf32> to vector<1x96xf32>
    %404 = vector.broadcast %403 : vector<1x96xf32> to vector<16x96xf32>
    %405 = arith.addf %401, %404 : vector<16x96xf32>
    %406 = vector.extract_strided_slice %405 {offsets = [0, 0], sizes = [16, 8], strides = [1, 1]} : vector<16x96xf32> to vector<16x8xf32>
    %407 = vector.shape_cast %406 : vector<16x8xf32> to vector<2x8x8xf32>
    %408 = vector.extract_strided_slice %405 {offsets = [0, 32], sizes = [16, 8], strides = [1, 1]} : vector<16x96xf32> to vector<16x8xf32>
    %409 = vector.shape_cast %408 : vector<16x8xf32> to vector<2x8x8xf32>
    %410 = vector.extract_strided_slice %405 {offsets = [0, 64], sizes = [16, 8], strides = [1, 1]} : vector<16x96xf32> to vector<16x8xf32>
    %411 = vector.shape_cast %410 : vector<16x8xf32> to vector<2x8x8xf32>
    %cst_148 = arith.constant dense<0.000000e+00> : vector<2x8x8xf32>
    %412 = tpu.matmul %407, %409, %cst_148 {dimension_numbers = #tpu.dot_dimension_numbers<[2], [2], [1], [1], [0, 0, 0, 1, 1, 1], [0], [0]>} : vector<2x8x8xf32>, vector<2x8x8xf32>, vector<2x8x8xf32> -> vector<2x8x8xf32>
    %cst_149 = arith.constant 0.353553385 : f32
    %413 = vector.broadcast %cst_149 : f32 to vector<2x8x8xf32>
    %414 = arith.mulf %412, %413 : vector<2x8x8xf32>
    %415 = vector.broadcast %6 : vector<2x1x8xf32> to vector<2x8x8xf32>
    %416 = arith.addf %414, %415 : vector<2x8x8xf32>
    %cst_150 = arith.constant dense<0xFF800000> : vector<2x8xf32>
    %417 = vector.multi_reduction <maximumf>, %416, %cst_150 [2] : vector<2x8x8xf32> to vector<2x8xf32>
    %418 = vector.shape_cast %417 : vector<2x8xf32> to vector<2x8x1xf32>
    %419 = vector.broadcast %418 : vector<2x8x1xf32> to vector<2x8x8xf32>
    %420 = arith.subf %416, %419 : vector<2x8x8xf32>
    %421 = math.exp %420 : vector<2x8x8xf32>
    %cst_151 = arith.constant dense<0.000000e+00> : vector<2x8xf32>
    %422 = vector.multi_reduction <add>, %421, %cst_151 [2] : vector<2x8x8xf32> to vector<2x8xf32>
    %423 = vector.shape_cast %422 : vector<2x8xf32> to vector<2x8x1xf32>
    %424 = vector.broadcast %423 : vector<2x8x1xf32> to vector<2x8x8xf32>
    %425 = arith.divf %421, %424 : vector<2x8x8xf32>
    %cst_152 = arith.constant dense<0.000000e+00> : vector<2x8x8xf32>
    %426 = tpu.matmul %425, %411, %cst_152 {dimension_numbers = #tpu.dot_dimension_numbers<[2], [1], [1], [2], [0, 0, 0, 1, 1, 2], [0], [0]>} : vector<2x8x8xf32>, vector<2x8x8xf32>, vector<2x8x8xf32> -> vector<2x8x8xf32>
    %427 = vector.shape_cast %426 : vector<2x8x8xf32> to vector<16x8xf32>
    %428 = vector.extract_strided_slice %405 {offsets = [0, 8], sizes = [16, 8], strides = [1, 1]} : vector<16x96xf32> to vector<16x8xf32>
    %429 = vector.shape_cast %428 : vector<16x8xf32> to vector<2x8x8xf32>
    %430 = vector.extract_strided_slice %405 {offsets = [0, 40], sizes = [16, 8], strides = [1, 1]} : vector<16x96xf32> to vector<16x8xf32>
    %431 = vector.shape_cast %430 : vector<16x8xf32> to vector<2x8x8xf32>
    %432 = vector.extract_strided_slice %405 {offsets = [0, 72], sizes = [16, 8], strides = [1, 1]} : vector<16x96xf32> to vector<16x8xf32>
    %433 = vector.shape_cast %432 : vector<16x8xf32> to vector<2x8x8xf32>
    %cst_153 = arith.constant dense<0.000000e+00> : vector<2x8x8xf32>
    %434 = tpu.matmul %429, %431, %cst_153 {dimension_numbers = #tpu.dot_dimension_numbers<[2], [2], [1], [1], [0, 0, 0, 1, 1, 1], [0], [0]>} : vector<2x8x8xf32>, vector<2x8x8xf32>, vector<2x8x8xf32> -> vector<2x8x8xf32>
    %cst_154 = arith.constant 0.353553385 : f32
    %435 = vector.broadcast %cst_154 : f32 to vector<2x8x8xf32>
    %436 = arith.mulf %434, %435 : vector<2x8x8xf32>
    %437 = vector.broadcast %6 : vector<2x1x8xf32> to vector<2x8x8xf32>
    %438 = arith.addf %436, %437 : vector<2x8x8xf32>
    %cst_155 = arith.constant dense<0xFF800000> : vector<2x8xf32>
    %439 = vector.multi_reduction <maximumf>, %438, %cst_155 [2] : vector<2x8x8xf32> to vector<2x8xf32>
    %440 = vector.shape_cast %439 : vector<2x8xf32> to vector<2x8x1xf32>
    %441 = vector.broadcast %440 : vector<2x8x1xf32> to vector<2x8x8xf32>
    %442 = arith.subf %438, %441 : vector<2x8x8xf32>
    %443 = math.exp %442 : vector<2x8x8xf32>
    %cst_156 = arith.constant dense<0.000000e+00> : vector<2x8xf32>
    %444 = vector.multi_reduction <add>, %443, %cst_156 [2] : vector<2x8x8xf32> to vector<2x8xf32>
    %445 = vector.shape_cast %444 : vector<2x8xf32> to vector<2x8x1xf32>
    %446 = vector.broadcast %445 : vector<2x8x1xf32> to vector<2x8x8xf32>
    %447 = arith.divf %443, %446 : vector<2x8x8xf32>
    %cst_157 = arith.constant dense<0.000000e+00> : vector<2x8x8xf32>
    %448 = tpu.matmul %447, %433, %cst_157 {dimension_numbers = #tpu.dot_dimension_numbers<[2], [1], [1], [2], [0, 0, 0, 1, 1, 2], [0], [0]>} : vector<2x8x8xf32>, vector<2x8x8xf32>, vector<2x8x8xf32> -> vector<2x8x8xf32>
    %449 = vector.shape_cast %448 : vector<2x8x8xf32> to vector<16x8xf32>
    %450 = vector.extract_strided_slice %405 {offsets = [0, 16], sizes = [16, 8], strides = [1, 1]} : vector<16x96xf32> to vector<16x8xf32>
    %451 = vector.shape_cast %450 : vector<16x8xf32> to vector<2x8x8xf32>
    %452 = vector.extract_strided_slice %405 {offsets = [0, 48], sizes = [16, 8], strides = [1, 1]} : vector<16x96xf32> to vector<16x8xf32>
    %453 = vector.shape_cast %452 : vector<16x8xf32> to vector<2x8x8xf32>
    %454 = vector.extract_strided_slice %405 {offsets = [0, 80], sizes = [16, 8], strides = [1, 1]} : vector<16x96xf32> to vector<16x8xf32>
    %455 = vector.shape_cast %454 : vector<16x8xf32> to vector<2x8x8xf32>
    %cst_158 = arith.constant dense<0.000000e+00> : vector<2x8x8xf32>
    %456 = tpu.matmul %451, %453, %cst_158 {dimension_numbers = #tpu.dot_dimension_numbers<[2], [2], [1], [1], [0, 0, 0, 1, 1, 1], [0], [0]>} : vector<2x8x8xf32>, vector<2x8x8xf32>, vector<2x8x8xf32> -> vector<2x8x8xf32>
    %cst_159 = arith.constant 0.353553385 : f32
    %457 = vector.broadcast %cst_159 : f32 to vector<2x8x8xf32>
    %458 = arith.mulf %456, %457 : vector<2x8x8xf32>
    %459 = vector.broadcast %6 : vector<2x1x8xf32> to vector<2x8x8xf32>
    %460 = arith.addf %458, %459 : vector<2x8x8xf32>
    %cst_160 = arith.constant dense<0xFF800000> : vector<2x8xf32>
    %461 = vector.multi_reduction <maximumf>, %460, %cst_160 [2] : vector<2x8x8xf32> to vector<2x8xf32>
    %462 = vector.shape_cast %461 : vector<2x8xf32> to vector<2x8x1xf32>
    %463 = vector.broadcast %462 : vector<2x8x1xf32> to vector<2x8x8xf32>
    %464 = arith.subf %460, %463 : vector<2x8x8xf32>
    %465 = math.exp %464 : vector<2x8x8xf32>
    %cst_161 = arith.constant dense<0.000000e+00> : vector<2x8xf32>
    %466 = vector.multi_reduction <add>, %465, %cst_161 [2] : vector<2x8x8xf32> to vector<2x8xf32>
    %467 = vector.shape_cast %466 : vector<2x8xf32> to vector<2x8x1xf32>
    %468 = vector.broadcast %467 : vector<2x8x1xf32> to vector<2x8x8xf32>
    %469 = arith.divf %465, %468 : vector<2x8x8xf32>
    %cst_162 = arith.constant dense<0.000000e+00> : vector<2x8x8xf32>
    %470 = tpu.matmul %469, %455, %cst_162 {dimension_numbers = #tpu.dot_dimension_numbers<[2], [1], [1], [2], [0, 0, 0, 1, 1, 2], [0], [0]>} : vector<2x8x8xf32>, vector<2x8x8xf32>, vector<2x8x8xf32> -> vector<2x8x8xf32>
    %471 = vector.shape_cast %470 : vector<2x8x8xf32> to vector<16x8xf32>
    %472 = vector.extract_strided_slice %405 {offsets = [0, 24], sizes = [16, 8], strides = [1, 1]} : vector<16x96xf32> to vector<16x8xf32>
    %473 = vector.shape_cast %472 : vector<16x8xf32> to vector<2x8x8xf32>
    %474 = vector.extract_strided_slice %405 {offsets = [0, 56], sizes = [16, 8], strides = [1, 1]} : vector<16x96xf32> to vector<16x8xf32>
    %475 = vector.shape_cast %474 : vector<16x8xf32> to vector<2x8x8xf32>
    %476 = vector.extract_strided_slice %405 {offsets = [0, 88], sizes = [16, 8], strides = [1, 1]} : vector<16x96xf32> to vector<16x8xf32>
    %477 = vector.shape_cast %476 : vector<16x8xf32> to vector<2x8x8xf32>
    %cst_163 = arith.constant dense<0.000000e+00> : vector<2x8x8xf32>
    %478 = tpu.matmul %473, %475, %cst_163 {dimension_numbers = #tpu.dot_dimension_numbers<[2], [2], [1], [1], [0, 0, 0, 1, 1, 1], [0], [0]>} : vector<2x8x8xf32>, vector<2x8x8xf32>, vector<2x8x8xf32> -> vector<2x8x8xf32>
    %cst_164 = arith.constant 0.353553385 : f32
    %479 = vector.broadcast %cst_164 : f32 to vector<2x8x8xf32>
    %480 = arith.mulf %478, %479 : vector<2x8x8xf32>
    %481 = vector.broadcast %6 : vector<2x1x8xf32> to vector<2x8x8xf32>
    %482 = arith.addf %480, %481 : vector<2x8x8xf32>
    %cst_165 = arith.constant dense<0xFF800000> : vector<2x8xf32>
    %483 = vector.multi_reduction <maximumf>, %482, %cst_165 [2] : vector<2x8x8xf32> to vector<2x8xf32>
    %484 = vector.shape_cast %483 : vector<2x8xf32> to vector<2x8x1xf32>
    %485 = vector.broadcast %484 : vector<2x8x1xf32> to vector<2x8x8xf32>
    %486 = arith.subf %482, %485 : vector<2x8x8xf32>
    %487 = math.exp %486 : vector<2x8x8xf32>
    %cst_166 = arith.constant dense<0.000000e+00> : vector<2x8xf32>
    %488 = vector.multi_reduction <add>, %487, %cst_166 [2] : vector<2x8x8xf32> to vector<2x8xf32>
    %489 = vector.shape_cast %488 : vector<2x8xf32> to vector<2x8x1xf32>
    %490 = vector.broadcast %489 : vector<2x8x1xf32> to vector<2x8x8xf32>
    %491 = arith.divf %487, %490 : vector<2x8x8xf32>
    %cst_167 = arith.constant dense<0.000000e+00> : vector<2x8x8xf32>
    %492 = tpu.matmul %491, %477, %cst_167 {dimension_numbers = #tpu.dot_dimension_numbers<[2], [1], [1], [2], [0, 0, 0, 1, 1, 2], [0], [0]>} : vector<2x8x8xf32>, vector<2x8x8xf32>, vector<2x8x8xf32> -> vector<2x8x8xf32>
    %493 = vector.shape_cast %492 : vector<2x8x8xf32> to vector<16x8xf32>
    %494 = tpu.concatenate %427, %449, %471, %493 in 1 : vector<16x8xf32>, vector<16x8xf32>, vector<16x8xf32>, vector<16x8xf32> -> vector<16x32xf32>
    %c2_168 = arith.constant 2 : index
    %c0_169 = arith.constant 0 : index
    %c0_170 = arith.constant 0 : index
    %495 = vector.load %arg5[%c2_168, %c0_169, %c0_170] : memref<4x32x32xf32, #tpu.memory_space<vmem>>, vector<1x32x32xf32>
    %496 = vector.shape_cast %495 : vector<1x32x32xf32> to vector<32x32xf32>
    %cst_171 = arith.constant dense<0.000000e+00> : vector<16x32xf32>
    %497 = tpu.matmul %494, %496, %cst_171 {dimension_numbers = #tpu.dot_dimension_numbers<[1], [0], [0], [1], [0, 0, 1, 1], [], []>} : vector<16x32xf32>, vector<32x32xf32>, vector<16x32xf32> -> vector<16x32xf32>
    %498 = vector.broadcast %393 : vector<1x32xf32> to vector<16x32xf32>
    %499 = arith.addf %497, %498 : vector<16x32xf32>
    %500 = arith.addf %499, %387 : vector<16x32xf32>
    %cst_172 = arith.constant dense<0.000000e+00> : vector<16xf32>
    %501 = vector.multi_reduction <add>, %500, %cst_172 [1] : vector<16x32xf32> to vector<16xf32>
    %502 = vector.shape_cast %501 : vector<16xf32> to vector<16x1xf32>
    %cst_173 = arith.constant 3.200000e+01 : f32
    %503 = vector.broadcast %cst_173 : f32 to vector<16x1xf32>
    %504 = arith.divf %502, %503 : vector<16x1xf32>
    %505 = vector.broadcast %504 : vector<16x1xf32> to vector<16x32xf32>
    %506 = arith.subf %500, %505 : vector<16x32xf32>
    %507 = arith.mulf %506, %506 : vector<16x32xf32>
    %cst_174 = arith.constant dense<0.000000e+00> : vector<16xf32>
    %508 = vector.multi_reduction <add>, %507, %cst_174 [1] : vector<16x32xf32> to vector<16xf32>
    %509 = vector.shape_cast %508 : vector<16xf32> to vector<16x1xf32>
    %cst_175 = arith.constant 3.200000e+01 : f32
    %510 = vector.broadcast %cst_175 : f32 to vector<16x1xf32>
    %511 = arith.divf %509, %510 : vector<16x1xf32>
    %cst_176 = arith.constant 9.99999996E-13 : f32
    %512 = vector.broadcast %cst_176 : f32 to vector<16x1xf32>
    %513 = arith.addf %511, %512 : vector<16x1xf32>
    %514 = math.rsqrt %513 : vector<16x1xf32>
    %515 = vector.broadcast %514 : vector<16x1xf32> to vector<16x32xf32>
    %516 = arith.mulf %506, %515 : vector<16x32xf32>
    %517 = vector.broadcast %394 : vector<1x32xf32> to vector<16x32xf32>
    %518 = arith.mulf %516, %517 : vector<16x32xf32>
    %519 = vector.broadcast %395 : vector<1x32xf32> to vector<16x32xf32>
    %520 = arith.addf %518, %519 : vector<16x32xf32>
    %c2_177 = arith.constant 2 : index
    %c0_178 = arith.constant 0 : index
    %c0_179 = arith.constant 0 : index
    %521 = vector.load %arg6[%c2_177, %c0_178, %c0_179] : memref<4x32x64xf32, #tpu.memory_space<vmem>>, vector<1x32x64xf32>
    %522 = vector.shape_cast %521 : vector<1x32x64xf32> to vector<32x64xf32>
    %cst_180 = arith.constant dense<0.000000e+00> : vector<16x64xf32>
    %523 = tpu.matmul %520, %522, %cst_180 {dimension_numbers = #tpu.dot_dimension_numbers<[1], [0], [0], [1], [0, 0, 1, 1], [], []>} : vector<16x32xf32>, vector<32x64xf32>, vector<16x64xf32> -> vector<16x64xf32>
    %c2_181 = arith.constant 2 : index
    %c0_182 = arith.constant 0 : index
    %c0_183 = arith.constant 0 : index
    %524 = vector.load %arg7[%c2_181, %c0_182, %c0_183] : memref<4x1x64xf32, #tpu.memory_space<vmem>>, vector<1x1x64xf32>
    %525 = vector.shape_cast %524 : vector<1x1x64xf32> to vector<1x64xf32>
    %526 = vector.broadcast %525 : vector<1x64xf32> to vector<16x64xf32>
    %527 = arith.addf %523, %526 : vector<16x64xf32>
    %cst_184 = arith.constant 5.000000e-01 : f32
    %528 = vector.broadcast %cst_184 : f32 to vector<16x64xf32>
    %529 = arith.mulf %528, %527 : vector<16x64xf32>
    %cst_185 = arith.constant 4.471500e-02 : f32
    %530 = vector.broadcast %cst_185 : f32 to vector<16x64xf32>
    %531 = arith.mulf %530, %527 : vector<16x64xf32>
    %532 = arith.mulf %531, %527 : vector<16x64xf32>
    %533 = arith.mulf %532, %527 : vector<16x64xf32>
    %534 = arith.addf %527, %533 : vector<16x64xf32>
    %cst_186 = arith.constant 0.797884583 : f32
    %535 = vector.broadcast %cst_186 : f32 to vector<16x64xf32>
    %536 = arith.mulf %535, %534 : vector<16x64xf32>
    %537 = math.tanh %536 : vector<16x64xf32>
    %cst_187 = arith.constant 1.000000e+00 : f32
    %538 = vector.broadcast %cst_187 : f32 to vector<16x64xf32>
    %539 = arith.addf %538, %537 : vector<16x64xf32>
    %540 = arith.mulf %529, %539 : vector<16x64xf32>
    %c2_188 = arith.constant 2 : index
    %c0_189 = arith.constant 0 : index
    %c0_190 = arith.constant 0 : index
    %541 = vector.load %arg8[%c2_188, %c0_189, %c0_190] : memref<4x64x32xf32, #tpu.memory_space<vmem>>, vector<1x64x32xf32>
    %542 = vector.shape_cast %541 : vector<1x64x32xf32> to vector<64x32xf32>
    %cst_191 = arith.constant dense<0.000000e+00> : vector<16x32xf32>
    %543 = tpu.matmul %540, %542, %cst_191 {dimension_numbers = #tpu.dot_dimension_numbers<[1], [0], [0], [1], [0, 0, 1, 1], [], []>} : vector<16x64xf32>, vector<64x32xf32>, vector<16x32xf32> -> vector<16x32xf32>
    %544 = vector.broadcast %396 : vector<1x32xf32> to vector<16x32xf32>
    %545 = arith.addf %543, %544 : vector<16x32xf32>
    %546 = arith.addf %545, %520 : vector<16x32xf32>
    %cst_192 = arith.constant dense<0.000000e+00> : vector<16xf32>
    %547 = vector.multi_reduction <add>, %546, %cst_192 [1] : vector<16x32xf32> to vector<16xf32>
    %548 = vector.shape_cast %547 : vector<16xf32> to vector<16x1xf32>
    %cst_193 = arith.constant 3.200000e+01 : f32
    %549 = vector.broadcast %cst_193 : f32 to vector<16x1xf32>
    %550 = arith.divf %548, %549 : vector<16x1xf32>
    %551 = vector.broadcast %550 : vector<16x1xf32> to vector<16x32xf32>
    %552 = arith.subf %546, %551 : vector<16x32xf32>
    %553 = arith.mulf %552, %552 : vector<16x32xf32>
    %cst_194 = arith.constant dense<0.000000e+00> : vector<16xf32>
    %554 = vector.multi_reduction <add>, %553, %cst_194 [1] : vector<16x32xf32> to vector<16xf32>
    %555 = vector.shape_cast %554 : vector<16xf32> to vector<16x1xf32>
    %cst_195 = arith.constant 3.200000e+01 : f32
    %556 = vector.broadcast %cst_195 : f32 to vector<16x1xf32>
    %557 = arith.divf %555, %556 : vector<16x1xf32>
    %cst_196 = arith.constant 9.99999996E-13 : f32
    %558 = vector.broadcast %cst_196 : f32 to vector<16x1xf32>
    %559 = arith.addf %557, %558 : vector<16x1xf32>
    %560 = math.rsqrt %559 : vector<16x1xf32>
    %561 = vector.broadcast %560 : vector<16x1xf32> to vector<16x32xf32>
    %562 = arith.mulf %552, %561 : vector<16x32xf32>
    %563 = vector.broadcast %397 : vector<1x32xf32> to vector<16x32xf32>
    %564 = arith.mulf %562, %563 : vector<16x32xf32>
    %565 = vector.broadcast %398 : vector<1x32xf32> to vector<16x32xf32>
    %566 = arith.addf %564, %565 : vector<16x32xf32>
    %c3 = arith.constant 3 : index
    %c0_197 = arith.constant 0 : index
    %c0_198 = arith.constant 0 : index
    %567 = vector.load %arg13[%c3, %c0_197, %c0_198] : memref<5x16x32xf32, #tpu.memory_space<vmem>>, vector<1x16x32xf32>
    %568 = vector.shape_cast %567 : vector<1x16x32xf32> to vector<16x32xf32>
    %569 = vector.shape_cast %566 : vector<16x32xf32> to vector<1x16x32xf32>
    tpu.vector_store %arg13[%c3, %c0_197, %c0_198], %569 {strides = array<i32>} : memref<5x16x32xf32, #tpu.memory_space<vmem>>, vector<1x16x32xf32>,
    %c3_199 = arith.constant 3 : index
    %c0_200 = arith.constant 0 : index
    %c0_201 = arith.constant 0 : index
    %570 = vector.load %arg9[%c3_199, %c0_200, %c0_201] : memref<4x6x32xf32, #tpu.memory_space<vmem>>, vector<1x6x32xf32>
    %571 = vector.shape_cast %570 : vector<1x6x32xf32> to vector<6x32xf32>
    %572 = vector.extract_strided_slice %571 {offsets = [0, 0], sizes = [1, 32], strides = [1, 1]} : vector<6x32xf32> to vector<1x32xf32>
    %573 = vector.extract_strided_slice %571 {offsets = [1, 0], sizes = [1, 32], strides = [1, 1]} : vector<6x32xf32> to vector<1x32xf32>
    %574 = vector.extract_strided_slice %571 {offsets = [2, 0], sizes = [1, 32], strides = [1, 1]} : vector<6x32xf32> to vector<1x32xf32>
    %575 = vector.extract_strided_slice %571 {offsets = [3, 0], sizes = [1, 32], strides = [1, 1]} : vector<6x32xf32> to vector<1x32xf32>
    %576 = vector.extract_strided_slice %571 {offsets = [4, 0], sizes = [1, 32], strides = [1, 1]} : vector<6x32xf32> to vector<1x32xf32>
    %577 = vector.extract_strided_slice %571 {offsets = [5, 0], sizes = [1, 32], strides = [1, 1]} : vector<6x32xf32> to vector<1x32xf32>
    %c3_202 = arith.constant 3 : index
    %c0_203 = arith.constant 0 : index
    %c0_204 = arith.constant 0 : index
    %578 = vector.load %arg3[%c3_202, %c0_203, %c0_204] : memref<4x32x96xf32, #tpu.memory_space<vmem>>, vector<1x32x96xf32>
    %579 = vector.shape_cast %578 : vector<1x32x96xf32> to vector<32x96xf32>
    %cst_205 = arith.constant dense<0.000000e+00> : vector<16x96xf32>
    %580 = tpu.matmul %566, %579, %cst_205 {dimension_numbers = #tpu.dot_dimension_numbers<[1], [0], [0], [1], [0, 0, 1, 1], [], []>} : vector<16x32xf32>, vector<32x96xf32>, vector<16x96xf32> -> vector<16x96xf32>
    %c3_206 = arith.constant 3 : index
    %c0_207 = arith.constant 0 : index
    %c0_208 = arith.constant 0 : index
    %581 = vector.load %arg4[%c3_206, %c0_207, %c0_208] : memref<4x1x96xf32, #tpu.memory_space<vmem>>, vector<1x1x96xf32>
    %582 = vector.shape_cast %581 : vector<1x1x96xf32> to vector<1x96xf32>
    %583 = vector.broadcast %582 : vector<1x96xf32> to vector<16x96xf32>
    %584 = arith.addf %580, %583 : vector<16x96xf32>
    %585 = vector.extract_strided_slice %584 {offsets = [0, 0], sizes = [16, 8], strides = [1, 1]} : vector<16x96xf32> to vector<16x8xf32>
    %586 = vector.shape_cast %585 : vector<16x8xf32> to vector<2x8x8xf32>
    %587 = vector.extract_strided_slice %584 {offsets = [0, 32], sizes = [16, 8], strides = [1, 1]} : vector<16x96xf32> to vector<16x8xf32>
    %588 = vector.shape_cast %587 : vector<16x8xf32> to vector<2x8x8xf32>
    %589 = vector.extract_strided_slice %584 {offsets = [0, 64], sizes = [16, 8], strides = [1, 1]} : vector<16x96xf32> to vector<16x8xf32>
    %590 = vector.shape_cast %589 : vector<16x8xf32> to vector<2x8x8xf32>
    %cst_209 = arith.constant dense<0.000000e+00> : vector<2x8x8xf32>
    %591 = tpu.matmul %586, %588, %cst_209 {dimension_numbers = #tpu.dot_dimension_numbers<[2], [2], [1], [1], [0, 0, 0, 1, 1, 1], [0], [0]>} : vector<2x8x8xf32>, vector<2x8x8xf32>, vector<2x8x8xf32> -> vector<2x8x8xf32>
    %cst_210 = arith.constant 0.353553385 : f32
    %592 = vector.broadcast %cst_210 : f32 to vector<2x8x8xf32>
    %593 = arith.mulf %591, %592 : vector<2x8x8xf32>
    %594 = vector.broadcast %6 : vector<2x1x8xf32> to vector<2x8x8xf32>
    %595 = arith.addf %593, %594 : vector<2x8x8xf32>
    %cst_211 = arith.constant dense<0xFF800000> : vector<2x8xf32>
    %596 = vector.multi_reduction <maximumf>, %595, %cst_211 [2] : vector<2x8x8xf32> to vector<2x8xf32>
    %597 = vector.shape_cast %596 : vector<2x8xf32> to vector<2x8x1xf32>
    %598 = vector.broadcast %597 : vector<2x8x1xf32> to vector<2x8x8xf32>
    %599 = arith.subf %595, %598 : vector<2x8x8xf32>
    %600 = math.exp %599 : vector<2x8x8xf32>
    %cst_212 = arith.constant dense<0.000000e+00> : vector<2x8xf32>
    %601 = vector.multi_reduction <add>, %600, %cst_212 [2] : vector<2x8x8xf32> to vector<2x8xf32>
    %602 = vector.shape_cast %601 : vector<2x8xf32> to vector<2x8x1xf32>
    %603 = vector.broadcast %602 : vector<2x8x1xf32> to vector<2x8x8xf32>
    %604 = arith.divf %600, %603 : vector<2x8x8xf32>
    %cst_213 = arith.constant dense<0.000000e+00> : vector<2x8x8xf32>
    %605 = tpu.matmul %604, %590, %cst_213 {dimension_numbers = #tpu.dot_dimension_numbers<[2], [1], [1], [2], [0, 0, 0, 1, 1, 2], [0], [0]>} : vector<2x8x8xf32>, vector<2x8x8xf32>, vector<2x8x8xf32> -> vector<2x8x8xf32>
    %606 = vector.shape_cast %605 : vector<2x8x8xf32> to vector<16x8xf32>
    %607 = vector.extract_strided_slice %584 {offsets = [0, 8], sizes = [16, 8], strides = [1, 1]} : vector<16x96xf32> to vector<16x8xf32>
    %608 = vector.shape_cast %607 : vector<16x8xf32> to vector<2x8x8xf32>
    %609 = vector.extract_strided_slice %584 {offsets = [0, 40], sizes = [16, 8], strides = [1, 1]} : vector<16x96xf32> to vector<16x8xf32>
    %610 = vector.shape_cast %609 : vector<16x8xf32> to vector<2x8x8xf32>
    %611 = vector.extract_strided_slice %584 {offsets = [0, 72], sizes = [16, 8], strides = [1, 1]} : vector<16x96xf32> to vector<16x8xf32>
    %612 = vector.shape_cast %611 : vector<16x8xf32> to vector<2x8x8xf32>
    %cst_214 = arith.constant dense<0.000000e+00> : vector<2x8x8xf32>
    %613 = tpu.matmul %608, %610, %cst_214 {dimension_numbers = #tpu.dot_dimension_numbers<[2], [2], [1], [1], [0, 0, 0, 1, 1, 1], [0], [0]>} : vector<2x8x8xf32>, vector<2x8x8xf32>, vector<2x8x8xf32> -> vector<2x8x8xf32>
    %cst_215 = arith.constant 0.353553385 : f32
    %614 = vector.broadcast %cst_215 : f32 to vector<2x8x8xf32>
    %615 = arith.mulf %613, %614 : vector<2x8x8xf32>
    %616 = vector.broadcast %6 : vector<2x1x8xf32> to vector<2x8x8xf32>
    %617 = arith.addf %615, %616 : vector<2x8x8xf32>
    %cst_216 = arith.constant dense<0xFF800000> : vector<2x8xf32>
    %618 = vector.multi_reduction <maximumf>, %617, %cst_216 [2] : vector<2x8x8xf32> to vector<2x8xf32>
    %619 = vector.shape_cast %618 : vector<2x8xf32> to vector<2x8x1xf32>
    %620 = vector.broadcast %619 : vector<2x8x1xf32> to vector<2x8x8xf32>
    %621 = arith.subf %617, %620 : vector<2x8x8xf32>
    %622 = math.exp %621 : vector<2x8x8xf32>
    %cst_217 = arith.constant dense<0.000000e+00> : vector<2x8xf32>
    %623 = vector.multi_reduction <add>, %622, %cst_217 [2] : vector<2x8x8xf32> to vector<2x8xf32>
    %624 = vector.shape_cast %623 : vector<2x8xf32> to vector<2x8x1xf32>
    %625 = vector.broadcast %624 : vector<2x8x1xf32> to vector<2x8x8xf32>
    %626 = arith.divf %622, %625 : vector<2x8x8xf32>
    %cst_218 = arith.constant dense<0.000000e+00> : vector<2x8x8xf32>
    %627 = tpu.matmul %626, %612, %cst_218 {dimension_numbers = #tpu.dot_dimension_numbers<[2], [1], [1], [2], [0, 0, 0, 1, 1, 2], [0], [0]>} : vector<2x8x8xf32>, vector<2x8x8xf32>, vector<2x8x8xf32> -> vector<2x8x8xf32>
    %628 = vector.shape_cast %627 : vector<2x8x8xf32> to vector<16x8xf32>
    %629 = vector.extract_strided_slice %584 {offsets = [0, 16], sizes = [16, 8], strides = [1, 1]} : vector<16x96xf32> to vector<16x8xf32>
    %630 = vector.shape_cast %629 : vector<16x8xf32> to vector<2x8x8xf32>
    %631 = vector.extract_strided_slice %584 {offsets = [0, 48], sizes = [16, 8], strides = [1, 1]} : vector<16x96xf32> to vector<16x8xf32>
    %632 = vector.shape_cast %631 : vector<16x8xf32> to vector<2x8x8xf32>
    %633 = vector.extract_strided_slice %584 {offsets = [0, 80], sizes = [16, 8], strides = [1, 1]} : vector<16x96xf32> to vector<16x8xf32>
    %634 = vector.shape_cast %633 : vector<16x8xf32> to vector<2x8x8xf32>
    %cst_219 = arith.constant dense<0.000000e+00> : vector<2x8x8xf32>
    %635 = tpu.matmul %630, %632, %cst_219 {dimension_numbers = #tpu.dot_dimension_numbers<[2], [2], [1], [1], [0, 0, 0, 1, 1, 1], [0], [0]>} : vector<2x8x8xf32>, vector<2x8x8xf32>, vector<2x8x8xf32> -> vector<2x8x8xf32>
    %cst_220 = arith.constant 0.353553385 : f32
    %636 = vector.broadcast %cst_220 : f32 to vector<2x8x8xf32>
    %637 = arith.mulf %635, %636 : vector<2x8x8xf32>
    %638 = vector.broadcast %6 : vector<2x1x8xf32> to vector<2x8x8xf32>
    %639 = arith.addf %637, %638 : vector<2x8x8xf32>
    %cst_221 = arith.constant dense<0xFF800000> : vector<2x8xf32>
    %640 = vector.multi_reduction <maximumf>, %639, %cst_221 [2] : vector<2x8x8xf32> to vector<2x8xf32>
    %641 = vector.shape_cast %640 : vector<2x8xf32> to vector<2x8x1xf32>
    %642 = vector.broadcast %641 : vector<2x8x1xf32> to vector<2x8x8xf32>
    %643 = arith.subf %639, %642 : vector<2x8x8xf32>
    %644 = math.exp %643 : vector<2x8x8xf32>
    %cst_222 = arith.constant dense<0.000000e+00> : vector<2x8xf32>
    %645 = vector.multi_reduction <add>, %644, %cst_222 [2] : vector<2x8x8xf32> to vector<2x8xf32>
    %646 = vector.shape_cast %645 : vector<2x8xf32> to vector<2x8x1xf32>
    %647 = vector.broadcast %646 : vector<2x8x1xf32> to vector<2x8x8xf32>
    %648 = arith.divf %644, %647 : vector<2x8x8xf32>
    %cst_223 = arith.constant dense<0.000000e+00> : vector<2x8x8xf32>
    %649 = tpu.matmul %648, %634, %cst_223 {dimension_numbers = #tpu.dot_dimension_numbers<[2], [1], [1], [2], [0, 0, 0, 1, 1, 2], [0], [0]>} : vector<2x8x8xf32>, vector<2x8x8xf32>, vector<2x8x8xf32> -> vector<2x8x8xf32>
    %650 = vector.shape_cast %649 : vector<2x8x8xf32> to vector<16x8xf32>
    %651 = vector.extract_strided_slice %584 {offsets = [0, 24], sizes = [16, 8], strides = [1, 1]} : vector<16x96xf32> to vector<16x8xf32>
    %652 = vector.shape_cast %651 : vector<16x8xf32> to vector<2x8x8xf32>
    %653 = vector.extract_strided_slice %584 {offsets = [0, 56], sizes = [16, 8], strides = [1, 1]} : vector<16x96xf32> to vector<16x8xf32>
    %654 = vector.shape_cast %653 : vector<16x8xf32> to vector<2x8x8xf32>
    %655 = vector.extract_strided_slice %584 {offsets = [0, 88], sizes = [16, 8], strides = [1, 1]} : vector<16x96xf32> to vector<16x8xf32>
    %656 = vector.shape_cast %655 : vector<16x8xf32> to vector<2x8x8xf32>
    %cst_224 = arith.constant dense<0.000000e+00> : vector<2x8x8xf32>
    %657 = tpu.matmul %652, %654, %cst_224 {dimension_numbers = #tpu.dot_dimension_numbers<[2], [2], [1], [1], [0, 0, 0, 1, 1, 1], [0], [0]>} : vector<2x8x8xf32>, vector<2x8x8xf32>, vector<2x8x8xf32> -> vector<2x8x8xf32>
    %cst_225 = arith.constant 0.353553385 : f32
    %658 = vector.broadcast %cst_225 : f32 to vector<2x8x8xf32>
    %659 = arith.mulf %657, %658 : vector<2x8x8xf32>
    %660 = vector.broadcast %6 : vector<2x1x8xf32> to vector<2x8x8xf32>
    %661 = arith.addf %659, %660 : vector<2x8x8xf32>
    %cst_226 = arith.constant dense<0xFF800000> : vector<2x8xf32>
    %662 = vector.multi_reduction <maximumf>, %661, %cst_226 [2] : vector<2x8x8xf32> to vector<2x8xf32>
    %663 = vector.shape_cast %662 : vector<2x8xf32> to vector<2x8x1xf32>
    %664 = vector.broadcast %663 : vector<2x8x1xf32> to vector<2x8x8xf32>
    %665 = arith.subf %661, %664 : vector<2x8x8xf32>
    %666 = math.exp %665 : vector<2x8x8xf32>
    %cst_227 = arith.constant dense<0.000000e+00> : vector<2x8xf32>
    %667 = vector.multi_reduction <add>, %666, %cst_227 [2] : vector<2x8x8xf32> to vector<2x8xf32>
    %668 = vector.shape_cast %667 : vector<2x8xf32> to vector<2x8x1xf32>
    %669 = vector.broadcast %668 : vector<2x8x1xf32> to vector<2x8x8xf32>
    %670 = arith.divf %666, %669 : vector<2x8x8xf32>
    %cst_228 = arith.constant dense<0.000000e+00> : vector<2x8x8xf32>
    %671 = tpu.matmul %670, %656, %cst_228 {dimension_numbers = #tpu.dot_dimension_numbers<[2], [1], [1], [2], [0, 0, 0, 1, 1, 2], [0], [0]>} : vector<2x8x8xf32>, vector<2x8x8xf32>, vector<2x8x8xf32> -> vector<2x8x8xf32>
    %672 = vector.shape_cast %671 : vector<2x8x8xf32> to vector<16x8xf32>
    %673 = tpu.concatenate %606, %628, %650, %672 in 1 : vector<16x8xf32>, vector<16x8xf32>, vector<16x8xf32>, vector<16x8xf32> -> vector<16x32xf32>
    %c3_229 = arith.constant 3 : index
    %c0_230 = arith.constant 0 : index
    %c0_231 = arith.constant 0 : index
    %674 = vector.load %arg5[%c3_229, %c0_230, %c0_231] : memref<4x32x32xf32, #tpu.memory_space<vmem>>, vector<1x32x32xf32>
    %675 = vector.shape_cast %674 : vector<1x32x32xf32> to vector<32x32xf32>
    %cst_232 = arith.constant dense<0.000000e+00> : vector<16x32xf32>
    %676 = tpu.matmul %673, %675, %cst_232 {dimension_numbers = #tpu.dot_dimension_numbers<[1], [0], [0], [1], [0, 0, 1, 1], [], []>} : vector<16x32xf32>, vector<32x32xf32>, vector<16x32xf32> -> vector<16x32xf32>
    %677 = vector.broadcast %572 : vector<1x32xf32> to vector<16x32xf32>
    %678 = arith.addf %676, %677 : vector<16x32xf32>
    %679 = arith.addf %678, %566 : vector<16x32xf32>
    %cst_233 = arith.constant dense<0.000000e+00> : vector<16xf32>
    %680 = vector.multi_reduction <add>, %679, %cst_233 [1] : vector<16x32xf32> to vector<16xf32>
    %681 = vector.shape_cast %680 : vector<16xf32> to vector<16x1xf32>
    %cst_234 = arith.constant 3.200000e+01 : f32
    %682 = vector.broadcast %cst_234 : f32 to vector<16x1xf32>
    %683 = arith.divf %681, %682 : vector<16x1xf32>
    %684 = vector.broadcast %683 : vector<16x1xf32> to vector<16x32xf32>
    %685 = arith.subf %679, %684 : vector<16x32xf32>
    %686 = arith.mulf %685, %685 : vector<16x32xf32>
    %cst_235 = arith.constant dense<0.000000e+00> : vector<16xf32>
    %687 = vector.multi_reduction <add>, %686, %cst_235 [1] : vector<16x32xf32> to vector<16xf32>
    %688 = vector.shape_cast %687 : vector<16xf32> to vector<16x1xf32>
    %cst_236 = arith.constant 3.200000e+01 : f32
    %689 = vector.broadcast %cst_236 : f32 to vector<16x1xf32>
    %690 = arith.divf %688, %689 : vector<16x1xf32>
    %cst_237 = arith.constant 9.99999996E-13 : f32
    %691 = vector.broadcast %cst_237 : f32 to vector<16x1xf32>
    %692 = arith.addf %690, %691 : vector<16x1xf32>
    %693 = math.rsqrt %692 : vector<16x1xf32>
    %694 = vector.broadcast %693 : vector<16x1xf32> to vector<16x32xf32>
    %695 = arith.mulf %685, %694 : vector<16x32xf32>
    %696 = vector.broadcast %573 : vector<1x32xf32> to vector<16x32xf32>
    %697 = arith.mulf %695, %696 : vector<16x32xf32>
    %698 = vector.broadcast %574 : vector<1x32xf32> to vector<16x32xf32>
    %699 = arith.addf %697, %698 : vector<16x32xf32>
    %c3_238 = arith.constant 3 : index
    %c0_239 = arith.constant 0 : index
    %c0_240 = arith.constant 0 : index
    %700 = vector.load %arg6[%c3_238, %c0_239, %c0_240] : memref<4x32x64xf32, #tpu.memory_space<vmem>>, vector<1x32x64xf32>
    %701 = vector.shape_cast %700 : vector<1x32x64xf32> to vector<32x64xf32>
    %cst_241 = arith.constant dense<0.000000e+00> : vector<16x64xf32>
    %702 = tpu.matmul %699, %701, %cst_241 {dimension_numbers = #tpu.dot_dimension_numbers<[1], [0], [0], [1], [0, 0, 1, 1], [], []>} : vector<16x32xf32>, vector<32x64xf32>, vector<16x64xf32> -> vector<16x64xf32>
    %c3_242 = arith.constant 3 : index
    %c0_243 = arith.constant 0 : index
    %c0_244 = arith.constant 0 : index
    %703 = vector.load %arg7[%c3_242, %c0_243, %c0_244] : memref<4x1x64xf32, #tpu.memory_space<vmem>>, vector<1x1x64xf32>
    %704 = vector.shape_cast %703 : vector<1x1x64xf32> to vector<1x64xf32>
    %705 = vector.broadcast %704 : vector<1x64xf32> to vector<16x64xf32>
    %706 = arith.addf %702, %705 : vector<16x64xf32>
    %cst_245 = arith.constant 5.000000e-01 : f32
    %707 = vector.broadcast %cst_245 : f32 to vector<16x64xf32>
    %708 = arith.mulf %707, %706 : vector<16x64xf32>
    %cst_246 = arith.constant 4.471500e-02 : f32
    %709 = vector.broadcast %cst_246 : f32 to vector<16x64xf32>
    %710 = arith.mulf %709, %706 : vector<16x64xf32>
    %711 = arith.mulf %710, %706 : vector<16x64xf32>
    %712 = arith.mulf %711, %706 : vector<16x64xf32>
    %713 = arith.addf %706, %712 : vector<16x64xf32>
    %cst_247 = arith.constant 0.797884583 : f32
    %714 = vector.broadcast %cst_247 : f32 to vector<16x64xf32>
    %715 = arith.mulf %714, %713 : vector<16x64xf32>
    %716 = math.tanh %715 : vector<16x64xf32>
    %cst_248 = arith.constant 1.000000e+00 : f32
    %717 = vector.broadcast %cst_248 : f32 to vector<16x64xf32>
    %718 = arith.addf %717, %716 : vector<16x64xf32>
    %719 = arith.mulf %708, %718 : vector<16x64xf32>
    %c3_249 = arith.constant 3 : index
    %c0_250 = arith.constant 0 : index
    %c0_251 = arith.constant 0 : index
    %720 = vector.load %arg8[%c3_249, %c0_250, %c0_251] : memref<4x64x32xf32, #tpu.memory_space<vmem>>, vector<1x64x32xf32>
    %721 = vector.shape_cast %720 : vector<1x64x32xf32> to vector<64x32xf32>
    %cst_252 = arith.constant dense<0.000000e+00> : vector<16x32xf32>
    %722 = tpu.matmul %719, %721, %cst_252 {dimension_numbers = #tpu.dot_dimension_numbers<[1], [0], [0], [1], [0, 0, 1, 1], [], []>} : vector<16x64xf32>, vector<64x32xf32>, vector<16x32xf32> -> vector<16x32xf32>
    %723 = vector.broadcast %575 : vector<1x32xf32> to vector<16x32xf32>
    %724 = arith.addf %722, %723 : vector<16x32xf32>
    %725 = arith.addf %724, %699 : vector<16x32xf32>
    %cst_253 = arith.constant dense<0.000000e+00> : vector<16xf32>
    %726 = vector.multi_reduction <add>, %725, %cst_253 [1] : vector<16x32xf32> to vector<16xf32>
    %727 = vector.shape_cast %726 : vector<16xf32> to vector<16x1xf32>
    %cst_254 = arith.constant 3.200000e+01 : f32
    %728 = vector.broadcast %cst_254 : f32 to vector<16x1xf32>
    %729 = arith.divf %727, %728 : vector<16x1xf32>
    %730 = vector.broadcast %729 : vector<16x1xf32> to vector<16x32xf32>
    %731 = arith.subf %725, %730 : vector<16x32xf32>
    %732 = arith.mulf %731, %731 : vector<16x32xf32>
    %cst_255 = arith.constant dense<0.000000e+00> : vector<16xf32>
    %733 = vector.multi_reduction <add>, %732, %cst_255 [1] : vector<16x32xf32> to vector<16xf32>
    %734 = vector.shape_cast %733 : vector<16xf32> to vector<16x1xf32>
    %cst_256 = arith.constant 3.200000e+01 : f32
    %735 = vector.broadcast %cst_256 : f32 to vector<16x1xf32>
    %736 = arith.divf %734, %735 : vector<16x1xf32>
    %cst_257 = arith.constant 9.99999996E-13 : f32
    %737 = vector.broadcast %cst_257 : f32 to vector<16x1xf32>
    %738 = arith.addf %736, %737 : vector<16x1xf32>
    %739 = math.rsqrt %738 : vector<16x1xf32>
    %740 = vector.broadcast %739 : vector<16x1xf32> to vector<16x32xf32>
    %741 = arith.mulf %731, %740 : vector<16x32xf32>
    %742 = vector.broadcast %576 : vector<1x32xf32> to vector<16x32xf32>
    %743 = arith.mulf %741, %742 : vector<16x32xf32>
    %744 = vector.broadcast %577 : vector<1x32xf32> to vector<16x32xf32>
    %745 = arith.addf %743, %744 : vector<16x32xf32>
    %c4 = arith.constant 4 : index
    %c0_258 = arith.constant 0 : index
    %c0_259 = arith.constant 0 : index
    %746 = vector.load %arg13[%c4, %c0_258, %c0_259] : memref<5x16x32xf32, #tpu.memory_space<vmem>>, vector<1x16x32xf32>
    %747 = vector.shape_cast %746 : vector<1x16x32xf32> to vector<16x32xf32>
    %748 = vector.shape_cast %745 : vector<16x32xf32> to vector<1x16x32xf32>
    tpu.vector_store %arg13[%c4, %c0_258, %c0_259], %748 {strides = array<i32>} : memref<5x16x32xf32, #tpu.memory_space<vmem>>, vector<1x16x32xf32>,
    %749 = vector.extract_strided_slice %745 {offsets = [0, 0], sizes = [1, 32], strides = [1, 1]} : vector<16x32xf32> to vector<1x32xf32>
    %750 = vector.extract_strided_slice %745 {offsets = [8, 0], sizes = [1, 32], strides = [1, 1]} : vector<16x32xf32> to vector<1x32xf32>
    %751 = tpu.concatenate %749, %750 in 0 : vector<1x32xf32>, vector<1x32xf32> -> vector<2x32xf32>
    %752 = vector.extract_strided_slice %387 {offsets = [0, 0], sizes = [1, 32], strides = [1, 1]} : vector<16x32xf32> to vector<1x32xf32>
    %753 = vector.extract_strided_slice %387 {offsets = [8, 0], sizes = [1, 32], strides = [1, 1]} : vector<16x32xf32> to vector<1x32xf32>
    %754 = tpu.concatenate %752, %753 in 0 : vector<1x32xf32>, vector<1x32xf32> -> vector<2x32xf32>
    %755 = tpu.concatenate %751, %754 in 1 : vector<2x32xf32>, vector<2x32xf32> -> vector<2x64xf32>
    %c0_260 = arith.constant 0 : index
    %c0_261 = arith.constant 0 : index
    %756 = vector.load %arg10[%c0_260, %c0_261] : memref<64x3xf32, #tpu.memory_space<vmem>>, vector<64x3xf32>
    %cst_262 = arith.constant dense<0.000000e+00> : vector<2x3xf32>
    %757 = tpu.matmul %755, %756, %cst_262 {dimension_numbers = #tpu.dot_dimension_numbers<[1], [0], [0], [1], [0, 0, 1, 1], [], []>} : vector<2x64xf32>, vector<64x3xf32>, vector<2x3xf32> -> vector<2x3xf32>
    %c0_263 = arith.constant 0 : index
    %c0_264 = arith.constant 0 : index
    %758 = vector.load %arg11[%c0_263, %c0_264] : memref<1x3xf32, #tpu.memory_space<vmem>>, vector<1x3xf32>
    %759 = vector.broadcast %758 : vector<1x3xf32> to vector<2x3xf32>
    %760 = arith.addf %757, %759 : vector<2x3xf32>
    %c0_265 = arith.constant 0 : index
    %c0_266 = arith.constant 0 : index
    %761 = vector.load %arg14[%c0_265, %c0_266] : memref<2x3xf32, #tpu.memory_space<vmem>>, vector<2x3xf32>
    tpu.vector_store %arg14[%c0_265, %c0_266], %760 {strides = array<i32>} : memref<2x3xf32, #tpu.memory_space<vmem>>, vector<2x3xf32>,
    %cst_267 = arith.constant dense<0xFF800000> : vector<2xf32>
    %762 = vector.multi_reduction <maximumf>, %760, %cst_267 [1] : vector<2x3xf32> to vector<2xf32>
    %763 = vector.shape_cast %762 : vector<2xf32> to vector<2x1xf32>
    %764 = vector.broadcast %763 : vector<2x1xf32> to vector<2x3xf32>
    %765 = arith.subf %760, %764 : vector<2x3xf32>
    %766 = math.exp %765 : vector<2x3xf32>
    %cst_268 = arith.constant dense<0.000000e+00> : vector<2xf32>
    %767 = vector.multi_reduction <add>, %766, %cst_268 [1] : vector<2x3xf32> to vector<2xf32>
    %768 = vector.shape_cast %767 : vector<2xf32> to vector<2x1xf32>
    %769 = math.log %768 : vector<2x1xf32>
    %770 = arith.addf %763, %769 : vector<2x1xf32>
    %771 = tpu.iota {dimensions = array<i32: 0>} : vector<2x3xi32>
    %772 = tpu.iota {dimensions = array<i32: 1>} : vector<2x3xi32>
    %c0_i32 = arith.constant 0 : i32
    %773 = vector.broadcast %c0_i32 : i32 to vector<2x3xi32>
    %c0_i32_269 = arith.constant 0 : i32
    %774 = vector.broadcast %c0_i32_269 : i32 to vector<2x3xi32>
    %775 = arith.cmpi eq, %771, %774 : vector<2x3xi32>
    %c0_270 = arith.constant 0 : index
    %776 = memref.load %arg12[%c0_270] : memref<2xi32, #tpu.memory_space<smem>>
    %777 = vector.broadcast %776 : i32 to vector<2x3xi32>
    %778 = arith.select %775, %777, %773 : vector<2x3xi1>, vector<2x3xi32>
    %c1_i32 = arith.constant 1 : i32
    %779 = vector.broadcast %c1_i32 : i32 to vector<2x3xi32>
    %780 = arith.cmpi eq, %771, %779 : vector<2x3xi32>
    %c1_271 = arith.constant 1 : index
    %781 = memref.load %arg12[%c1_271] : memref<2xi32, #tpu.memory_space<smem>>
    %782 = vector.broadcast %781 : i32 to vector<2x3xi32>
    %783 = arith.select %780, %782, %778 : vector<2x3xi1>, vector<2x3xi32>
    %784 = arith.cmpi eq, %772, %783 : vector<2x3xi32>
    %785 = arith.extui %784 : vector<2x3xi1> to vector<2x3xi32>
    %786 = arith.sitofp %785 : vector<2x3xi32> to vector<2x3xf32>
    %787 = arith.mulf %760, %786 : vector<2x3xf32>
    %cst_272 = arith.constant dense<0.000000e+00> : vector<2xf32>
    %788 = vector.multi_reduction <add>, %787, %cst_272 [1] : vector<2x3xf32> to vector<2xf32>
    %789 = vector.shape_cast %788 : vector<2xf32> to vector<2x1xf32>
    %790 = arith.subf %770, %789 : vector<2x1xf32>
    %cst_273 = arith.constant dense<0.000000e+00> : vector<1xf32>
    %791 = vector.multi_reduction <add>, %790, %cst_273 [0] : vector<2x1xf32> to vector<1xf32>
    %792 = vector.shape_cast %791 : vector<1xf32> to vector<1x1xf32>
    %cst_274 = arith.constant 2.000000e+00 : f32
    %793 = vector.broadcast %cst_274 : f32 to vector<1x1xf32>
    %794 = arith.divf %792, %793 : vector<1x1xf32>
    %c0_275 = arith.constant 0 : index
    %c0_276 = arith.constant 0 : index
    %795 = vector.load %arg15[%c0_275, %c0_276] : memref<1x1xf32, #tpu.memory_space<vmem>>, vector<1x1xf32>
    tpu.vector_store %arg15[%c0_275, %c0_276], %794 {strides = array<i32>} : memref<1x1xf32, #tpu.memory_space<vmem>>, vector<1x1xf32>,
    return
  }
}

</mosaic_0001>

<llo_original>
// kernel: aleph_bert_per_word_forward.1
$region0: #{aleph_bert_per_word_forward.1}
  #allocation0 [shape = 'u32[]', space=smem, size = 0x4, offset = 0x4, fixed_abs, tag = 'smem constant byte address 0x4 - core index']
  #allocation1 [shape = 'u32[144,128]{1,0:T(1,128)}', space=vmem, size = 0x12000, scoped, tag = 'internal scratch']
  %s0 = inlined_call_operand.vmem [shape: f32[16,32], index: 0, kind: input, shape index: {}]
  %s1 = inlined_call_operand.vmem [shape: s32[2,8], index: 1, kind: input, shape index: {}]
  %s2 = inlined_call_operand.vmem [shape: f32[2,32], index: 2, kind: input, shape index: {}]
  %s3 = inlined_call_operand.vmem [shape: f32[4,32,96], index: 3, kind: input, shape index: {}]
  %s4 = inlined_call_operand.vmem [shape: f32[4,1,96], index: 4, kind: input, shape index: {}]
  %s5 = inlined_call_operand.vmem [shape: f32[4,32,32], index: 5, kind: input, shape index: {}]
  %s6 = inlined_call_operand.vmem [shape: f32[4,32,64], index: 6, kind: input, shape index: {}]
  %s7 = inlined_call_operand.vmem [shape: f32[4,1,64], index: 7, kind: input, shape index: {}]
  %s8 = inlined_call_operand.vmem [shape: f32[4,64,32], index: 8, kind: input, shape index: {}]
  %s9 = inlined_call_operand.vmem [shape: f32[4,6,32], index: 9, kind: input, shape index: {}]
  %s10 = inlined_call_operand.vmem [shape: f32[64,3], index: 10, kind: input, shape index: {}]
  %s11 = inlined_call_operand.vmem [shape: f32[1,3], index: 11, kind: input, shape index: {}]
  %s12 = inlined_call_operand.vmem [shape: s32[2], index: 12, kind: input, shape index: {}]
  %s13 = inlined_call_operand.vmem [shape: f32[5,16,32], index: 13, kind: output, shape index: {0}]
  %s14 = inlined_call_operand.hbm [shape: f32[2,3], index: 14, kind: output, shape index: {1}]
  %s15 = inlined_call_operand.hbm [shape: f32[1,1], index: 15, kind: output, shape index: {2}]
  %16 = xla_tuple %s13, %s14, %s15
  %s17 = sld [smem:[#allocation0]]
  $region82: #{aleph_bert_per_word_forward.1} parent=0
    _
  %s19 = ssub.s32 1, %s17
  %s20 = scalar_select 0, %s19, %s17
  $region1: #{aleph_bert_per_word_forward.1} parent=0
    #allocation2 [shape = 'u8[512]{0}', space=smem, size = 0x200, scoped, tag = 'input window, operand 12, single buffered']
    #allocation3 [shape = 's32[1]{0}', space=sflag, size = 0x4, scoped, tag = 'scoped memory for aleph_bert_per_word_forward.1']
    #allocation4 [shape = 's32[1]{0}', space=sflag, size = 0x4, scoped, tag = 'scoped memory for aleph_bert_per_word_forward.1']
    #allocation5 [shape = 'u8[1024]{0}', space=vmem, size = 0x400, scoped, tag = 'output window, operand 1, single buffered']
    #allocation6 [shape = 'u8[512]{0}', space=vmem, size = 0x400, scoped, tag = 'output window, operand 2, single buffered']
    #allocation7 [shape = 's32[1]{0}', space=sflag, size = 0x4, scoped, tag = 'scoped memory for aleph_bert_per_word_forward.1']
    %21 = vsyncpa [#allocation4], 0
    %22 = vsyncpa [#allocation3], 0
    %23 = vsyncpa [#allocation7], 0
    // Predicated region
    $region2: #{aleph_bert_per_word_forward.1} parent=1 // pred_check
      _
    $region3: #{aleph_bert_per_word_forward.1} parent=1 // pred_check_branch
      %25 = sbr.rel (0) target = $region5
    $region4: #{aleph_bert_per_word_forward.1} parent=1 // pred_region
      _
    $region5: #{aleph_bert_per_word_forward.1} parent=1 // pred_fallthru
      _
    // Predicated region
    $region6: #{aleph_bert_per_word_forward.1} parent=1 // pred_check
      _
    $region7: #{aleph_bert_per_word_forward.1} parent=1 // pred_check_branch
      %27 = sbr.rel (0) target = $region9
    $region8: #{aleph_bert_per_word_forward.1} parent=1 // pred_region
      _
    $region9: #{aleph_bert_per_word_forward.1} parent=1 // pred_fallthru
      _
    // Predicated region
    $region10: #{aleph_bert_per_word_forward.1} parent=1 // pred_check
      _
    $region11: #{aleph_bert_per_word_forward.1} parent=1 // pred_check_branch
      %29 = sbr.rel (0) target = $region13
    $region12: #{aleph_bert_per_word_forward.1} parent=1 // pred_region
      _
    $region13: #{aleph_bert_per_word_forward.1} parent=1 // pred_fallthru
      _
    // Predicated region
    $region14: #{aleph_bert_per_word_forward.1} parent=1 // pred_check
      _
    $region15: #{aleph_bert_per_word_forward.1} parent=1 // pred_check_branch
      %31 = sbr.rel (0) target = $region17
    $region16: #{aleph_bert_per_word_forward.1} parent=1 // pred_region
      _
    $region17: #{aleph_bert_per_word_forward.1} parent=1 // pred_fallthru
      _
    // Predicated region
    $region18: #{aleph_bert_per_word_forward.1} parent=1 // pred_check
      _
    $region19: #{aleph_bert_per_word_forward.1} parent=1 // pred_check_branch
      %33 = sbr.rel (0) target = $region21
    $region20: #{aleph_bert_per_word_forward.1} parent=1 // pred_region
      _
    $region21: #{aleph_bert_per_word_forward.1} parent=1 // pred_fallthru
      _
    // Predicated region
    $region22: #{aleph_bert_per_word_forward.1} parent=1 // pred_check
      _
    $region23: #{aleph_bert_per_word_forward.1} parent=1 // pred_check_branch
      %35 = sbr.rel (0) target = $region25
    $region24: #{aleph_bert_per_word_forward.1} parent=1 // pred_region
      _
    $region25: #{aleph_bert_per_word_forward.1} parent=1 // pred_fallthru
      _
    // Predicated region
    $region26: #{aleph_bert_per_word_forward.1} parent=1 // pred_check
      _
    $region27: #{aleph_bert_per_word_forward.1} parent=1 // pred_check_branch
      %37 = sbr.rel (0) target = $region29
    $region28: #{aleph_bert_per_word_forward.1} parent=1 // pred_region
      _
    $region29: #{aleph_bert_per_word_forward.1} parent=1 // pred_fallthru
      _
    // Predicated region
    $region30: #{aleph_bert_per_word_forward.1} parent=1 // pred_check
      _
    $region31: #{aleph_bert_per_word_forward.1} parent=1 // pred_check_branch
      %39 = sbr.rel (0) target = $region33
    $region32: #{aleph_bert_per_word_forward.1} parent=1 // pred_region
      _
    $region33: #{aleph_bert_per_word_forward.1} parent=1 // pred_fallthru
      _
    // Predicated region
    $region34: #{aleph_bert_per_word_forward.1} parent=1 // pred_check
      _
    $region35: #{aleph_bert_per_word_forward.1} parent=1 // pred_check_branch
      %41 = sbr.rel (0) target = $region37
    $region36: #{aleph_bert_per_word_forward.1} parent=1 // pred_region
      _
    $region37: #{aleph_bert_per_word_forward.1} parent=1 // pred_fallthru
      _
    // Predicated region
    $region38: #{aleph_bert_per_word_forward.1} parent=1 // pred_check
      _
    $region39: #{aleph_bert_per_word_forward.1} parent=1 // pred_check_branch
      %43 = sbr.rel (0) target = $region41
    $region40: #{aleph_bert_per_word_forward.1} parent=1 // pred_region
      _
    $region41: #{aleph_bert_per_word_forward.1} parent=1 // pred_fallthru
      _
    // Predicated region
    $region42: #{aleph_bert_per_word_forward.1} parent=1 // pred_check
      _
    $region43: #{aleph_bert_per_word_forward.1} parent=1 // pred_check_branch
      %45 = sbr.rel (0) target = $region45
    $region44: #{aleph_bert_per_word_forward.1} parent=1 // pred_region
      _
    $region45: #{aleph_bert_per_word_forward.1} parent=1 // pred_fallthru
      _
    // Predicated region
    $region46: #{aleph_bert_per_word_forward.1} parent=1 // pred_check
      _
    $region47: #{aleph_bert_per_word_forward.1} parent=1 // pred_check_branch
      %47 = sbr.rel (0) target = $region49
    $region48: #{aleph_bert_per_word_forward.1} parent=1 // pred_region
      _
    $region49: #{aleph_bert_per_word_forward.1} parent=1 // pred_fallthru
      _
    // Predicated region
    $region50: #{aleph_bert_per_word_forward.1} parent=1 // pred_check
      _
    $region51: #{aleph_bert_per_word_forward.1} parent=1 // pred_check_branch
      %49 = sbr.rel (0) target = $region53
    $region52: #{aleph_bert_per_word_forward.1} parent=1 // pred_region
      %s51 = ssub.s32 16, 16
      %52 = vsyncadd [#allocation4], %s51
      %s54 = sshll.u32 %s12, 4
      %s55 = int_to_ptr.vmem [resolvable:$true] %s54
      %57 = dma.vmem_to_smem %s55, 16, [#allocation2], [#allocation4]
    $region53: #{aleph_bert_per_word_forward.1} parent=1 // pred_fallthru
      _
    // Predicated region
    $region54: #{aleph_bert_per_word_forward.1} parent=1 // pred_check
      _
    $region55: #{aleph_bert_per_word_forward.1} parent=1 // pred_check_branch
      %59 = sbr.rel (0) target = $region57
    $region56: #{aleph_bert_per_word_forward.1} parent=1 // pred_region
      %60 = dma.done [#allocation4], 16
    $region57: #{aleph_bert_per_word_forward.1} parent=1 // pred_fallthru
      _
    %61 = sfence
    %v62 = vld [vmem:[%s1] sm:$0x3]
    %v63 = vcvt.s32.f32 %v62
    %v64 = vsub.f32 1.0, %v63
    %v65 = vmul.f32 %v64, -1e+09
    %v68 = vunpack.c.l.s4 1966171168
    %v69 = vunpack.c.0.s8 %v68
    %v70 = vlaneseq
    %v71 = vshrl.u32 %v70, 7
    %v72 = vsub.s32 %v69, %v71
    %v73 = vrot.slane %v65, %v72
    %v74 = vcombine.high %v73, %v73
    %v76 = vunpack.c.l.s4 1966171168
    %v77 = vunpack.c.0.s8 %v76
    %v78 = vlaneseq
    %v79 = vshrl.u32 %v78, 7
    %v80 = vsub.s32 %v77, %v79
    %v81 = vrot.slane %v73, %v80
    %v83 = vunpack.c.l.s4 1966171168
    %v84 = vunpack.c.0.s8 %v83
    %v85 = vlaneseq
    %v86 = vshrl.u32 %v85, 7
    %v87 = vsub.s32 %v84, %v86
    %v88 = vrot.slane %v74, %v87
    %v89 = vld [vmem:[%s0] sm:$0xff]
    %v90 = vld [vmem:[%s0 + $0x8] sm:$0xff]
    %v91 = vld [vmem:[%s2] sm:$0x1]
    %v92 = vld [vmem:[%s2 + $0x1] sm:$0x1]
    %vm93 = vcmask 261120
    %v94 = vsel %vm93, %v89, 0.0
    %95 = vadd.xlane.f32.xlu0 %v94
    %v96 = vpop.xlane.xlu0 %95
    %v97 = vsel %vm93, %v90, 0.0
    %98 = vadd.xlane.f32.xlu0 %v97
    %v99 = vpop.xlane.xlu0 %98
    %v100 = vrcp.pop 32.0
    %v101 = vmul.f32 %v96, %v100
    %v102 = vmul.f32 %v99, %v100
    %v103 = vsub.f32 %v89, %v101
    %v104 = vsub.f32 %v90, %v102
    %v105 = vmul.f32 %v103, %v103
    %v106 = vmul.f32 %v104, %v104
    %v107 = vsel %vm93, %v105, 0.0
    %108 = vadd.xlane.f32.xlu0 %v107
    %v109 = vpop.xlane.xlu0 %108
    %v110 = vsel %vm93, %v106, 0.0
    %111 = vadd.xlane.f32.xlu0 %v110
    %v112 = vpop.xlane.xlu0 %111
    %v113 = vmul.f32 %v109, %v100
    %v114 = vmul.f32 %v112, %v100
    %v115 = vadd.f32 %v113, 1e-12
    %v116 = vadd.f32 %v114, 1e-12
    %v117 = vrsqrt.pop %v115
    %v118 = vrsqrt.pop %v116
    %v119 = vmul.f32 %v103, %v117
    %v120 = vmul.f32 %v104, %v118
    %v121 = vlaneseq
    %v122 = vshrl.u32 %v121, 7
    %v123 = vsub.s32 0, %v122
    %v124 = vrot.slane %v91, %v123
    %v125 = vmul.f32 %v119, %v124
    %v126 = vmul.f32 %v120, %v124
    %v127 = vlaneseq
    %v128 = vshrl.u32 %v127, 7
    %v129 = vsub.s32 0, %v128
    %v130 = vrot.slane %v92, %v129
    %v131 = vadd.f32 %v125, %v130
    %v132 = vadd.f32 %v126, %v130
    %133 = vst.msk [vmem:[%s13] sm:$0xff] %vm93, %v131
    %134 = vst.msk [vmem:[%s13 + $0x8] sm:$0xff] %vm93, %v132
    %v135 = vld [vmem:[%s9] sm:$0x3f]
    %v136 = vld [vmem:[%s3] sm:$0xff]
    %v137 = vld [vmem:[%s3 + $0x8] sm:$0xff]
    %v138 = vld [vmem:[%s3 + $0x10] sm:$0xff]
    %v139 = vld [vmem:[%s3 + $0x18] sm:$0xff]
    %v140 = vld [vmem:[%s4] sm:$0x1]
    %v142 = vlaneseq
    %v143 = vshrl.u32 %v142, 7
    %v144 = vsub.s32 0, %v143
    %v145 = vrot.slane %v140, %v144
    %v148 = vsel %vm93, %v131, 0
    %v151 = vsel %vm93, %v132, 0
    %153 = vmatprep.subr.mxu0 0.0
    %154 = vmatpush1.msra.mxu0 0.0
    %155 = vmatprep.subr.mxu0 0.0
    %156 = vmatpush1.msra.mxu0 0.0
    %157 = vmatprep.subr.mxu0 0.0
    %158 = vmatpush1.msra.mxu0 0.0
    %159 = vmatprep.subr.mxu0 0.0
    %160 = vmatpush1.msra.mxu0 0.0
    %161 = vmatprep.subr.mxu0 0.0
    %162 = vmatpush1.msra.mxu0 0.0
    %163 = vmatprep.subr.mxu0 0.0
    %164 = vmatpush1.msra.mxu0 0.0
    %165 = vmatprep.subr.mxu0 0.0
    %166 = vmatpush1.msra.mxu0 0.0
    %167 = vmatprep.subr.mxu0 0.0
    %168 = vmatpush1.msra.mxu0 0.0
    %169 = vmatprep.subr.mxu0 0.0
    %170 = vmatpush1.msra.mxu0 0.0
    %171 = vmatprep.subr.mxu0 0.0
    %172 = vmatpush1.msra.mxu0 0.0
    %173 = vmatprep.subr.mxu0 0.0
    %174 = vmatpush1.msra.mxu0 0.0
    %175 = vmatprep.subr.mxu0 0.0
    %176 = vmatpush1.msra.mxu0 0.0
    %177 = vmatprep.subr.mxu0 0.0
    %178 = vmatpush1.msra.mxu0 %v139
    %179 = vmatprep.subr.mxu0 0.0
    %180 = vmatpush1.msra.mxu0 %v138
    %181 = vmatprep.subr.mxu0 0.0
    %182 = vmatpush1.msra.mxu0 %v137
    %183 = vmatprep.subr.mxu0 0.0
    %184 = vmatpush1.msra.mxu0 %v136
    %185 = vmatprep.subr.mxu0 0.0
    %186 = vmatpush2.msra.mxu0 0.0
    %187 = vmatprep.subr.mxu0 0.0
    %188 = vmatpush2.msra.mxu0 0.0
    %189 = vmatprep.subr.mxu0 0.0
    %190 = vmatpush2.msra.mxu0 0.0
    %191 = vmatprep.subr.mxu0 0.0
    %192 = vmatpush2.msra.mxu0 0.0
    %193 = vmatprep.subr.mxu0 0.0
    %194 = vmatpush2.msra.mxu0 0.0
    %195 = vmatprep.subr.mxu0 0.0
    %196 = vmatpush2.msra.mxu0 0.0
    %197 = vmatprep.subr.mxu0 0.0
    %198 = vmatpush2.msra.mxu0 0.0
    %199 = vmatprep.subr.mxu0 0.0
    %200 = vmatpush2.msra.mxu0 0.0
    %201 = vmatprep.subr.mxu0 0.0
    %202 = vmatpush2.msra.mxu0 0.0
    %203 = vmatprep.subr.mxu0 0.0
    %204 = vmatpush2.msra.mxu0 0.0
    %205 = vmatprep.subr.mxu0 0.0
    %206 = vmatpush2.msra.mxu0 0.0
    %207 = vmatprep.subr.mxu0 0.0
    %208 = vmatpush2.msra.mxu0 0.0
    %209 = vmatprep.subr.mxu0 0.0
    %210 = vmatpush2.msra.mxu0 0.0
    %211 = vmatprep.subr.mxu0 0.0
    %212 = vmatpush2.msra.mxu0 0.0
    %213 = vmatprep.subr.mxu0 0.0
    %214 = vmatpush2.msra.mxu0 0.0
    %215 = vmatprep.subr.mxu0 0.0
    %216 = vmatpush2.msra.mxu0 0.0
    %217 = vmatprep.mubr.f32.mxu0 0.0
    %218 = vmatmul.mubr.f32.gmra.mxu0 %v148
    %v219 = vpop.f32.mrf.mxu0
    %v220 = vadd.f32 %v145, %v219
    %v221 = vpop.f32.mrf.mxu0
    %222 = vmatprep.mubr.f32.mxu0 0.0
    %223 = vmatmul.mubr.f32.gmra.mxu0 %v151
    %v224 = vpop.f32.mrf.mxu0
    %v225 = vadd.f32 %v145, %v224
    %v226 = vpop.f32.mrf.mxu0
    %227 = vdwg.mxu0
    %229 = vrot.lane.b32.xlu0 %v220, 96
    %v230 = vpop.permute.xlu0 %229
    %vm231 = vcmask 64512
    %v232 = vsel %vm231, %v220, 0
    %v234 = vsel %vm231, %v230, 0
    %236 = vmatprep.subr.mxu0 0.0
    %237 = vmatpush1.xpose.msra.mxu0 0.0
    %238 = vmatprep.subr.mxu0 0.0
    %239 = vmatpush1.xpose.msra.mxu0 0.0
    %240 = vmatprep.subr.mxu0 0.0
    %241 = vmatpush1.xpose.msra.mxu0 0.0
    %242 = vmatprep.subr.mxu0 0.0
    %243 = vmatpush1.xpose.msra.mxu0 0.0
    %244 = vmatprep.subr.mxu0 0.0
    %245 = vmatpush1.xpose.msra.mxu0 0.0
    %246 = vmatprep.subr.mxu0 0.0
    %247 = vmatpush1.xpose.msra.mxu0 0.0
    %248 = vmatprep.subr.mxu0 0.0
    %249 = vmatpush1.xpose.msra.mxu0 0.0
    %250 = vmatprep.subr.mxu0 0.0
    %251 = vmatpush1.xpose.msra.mxu0 0.0
    %252 = vmatprep.subr.mxu0 0.0
    %253 = vmatpush1.xpose.msra.mxu0 0.0
    %254 = vmatprep.subr.mxu0 0.0
    %255 = vmatpush1.xpose.msra.mxu0 0.0
    %256 = vmatprep.subr.mxu0 0.0
    %257 = vmatpush1.xpose.msra.mxu0 0.0
    %258 = vmatprep.subr.mxu0 0.0
    %259 = vmatpush1.xpose.msra.mxu0 0.0
    %260 = vmatprep.subr.mxu0 0.0
    %261 = vmatpush1.xpose.msra.mxu0 0.0
    %262 = vmatprep.subr.mxu0 0.0
    %263 = vmatpush1.xpose.msra.mxu0 0.0
    %264 = vmatprep.subr.mxu0 0.0
    %265 = vmatpush1.xpose.msra.mxu0 0.0
    %266 = vmatprep.subr.mxu0 0.0
    %267 = vmatpush1.xpose.msra.mxu0 %v234
    %268 = vmatprep.subr.mxu0 0.0
    %269 = vmatpush2.xpose.msra.mxu0 0.0
    %270 = vmatprep.subr.mxu0 0.0
    %271 = vmatpush2.xpose.msra.mxu0 0.0
    %272 = vmatprep.subr.mxu0 0.0
    %273 = vmatpush2.xpose.msra.mxu0 0.0
    %274 = vmatprep.subr.mxu0 0.0
    %275 = vmatpush2.xpose.msra.mxu0 0.0
    %276 = vmatprep.subr.mxu0 0.0
    %277 = vmatpush2.xpose.msra.mxu0 0.0
    %278 = vmatprep.subr.mxu0 0.0
    %279 = vmatpush2.xpose.msra.mxu0 0.0
    %280 = vmatprep.subr.mxu0 0.0
    %281 = vmatpush2.xpose.msra.mxu0 0.0
    %282 = vmatprep.subr.mxu0 0.0
    %283 = vmatpush2.xpose.msra.mxu0 0.0
    %284 = vmatprep.subr.mxu0 0.0
    %285 = vmatpush2.xpose.msra.mxu0 0.0
    %286 = vmatprep.subr.mxu0 0.0
    %287 = vmatpush2.xpose.msra.mxu0 0.0
    %288 = vmatprep.subr.mxu0 0.0
    %289 = vmatpush2.xpose.msra.mxu0 0.0
    %290 = vmatprep.subr.mxu0 0.0
    %291 = vmatpush2.xpose.msra.mxu0 0.0
    %292 = vmatprep.subr.mxu0 0.0
    %293 = vmatpush2.xpose.msra.mxu0 0.0
    %294 = vmatprep.subr.mxu0 0.0
    %295 = vmatpush2.xpose.msra.mxu0 0.0
    %296 = vmatprep.subr.mxu0 0.0
    %297 = vmatpush2.xpose.msra.mxu0 0.0
    %298 = vmatprep.subr.mxu0 0.0
    %299 = vmatpush2.xpose.msra.mxu0 0.0
    %300 = vmatprep.mubr.f32.mxu0 0.0
    %301 = vmatmul.mubr.f32.gmra.mxu0 %v232
    %v302 = vpop.f32.mrf.mxu0
    %v303 = vadd.f32 0.0, %v302
    %v304 = vpop.f32.mrf.mxu0
    %305 = vdwg.mxu0
    %307 = vrot.lane.b32.xlu0 %v225, 96
    %v308 = vpop.permute.xlu0 %307
    %v309 = vsel %vm231, %v225, 0
    %v311 = vsel %vm231, %v308, 0
    %313 = vmatprep.subr.mxu0 0.0
    %314 = vmatpush1.xpose.msra.mxu0 0.0
    %315 = vmatprep.subr.mxu0 0.0
    %316 = vmatpush1.xpose.msra.mxu0 0.0
    %317 = vmatprep.subr.mxu0 0.0
    %318 = vmatpush1.xpose.msra.mxu0 0.0
    %319 = vmatprep.subr.mxu0 0.0
    %320 = vmatpush1.xpose.msra.mxu0 0.0
    %321 = vmatprep.subr.mxu0 0.0
    %322 = vmatpush1.xpose.msra.mxu0 0.0
    %323 = vmatprep.subr.mxu0 0.0
    %324 = vmatpush1.xpose.msra.mxu0 0.0
    %325 = vmatprep.subr.mxu0 0.0
    %326 = vmatpush1.xpose.msra.mxu0 0.0
    %327 = vmatprep.subr.mxu0 0.0
    %328 = vmatpush1.xpose.msra.mxu0 0.0
    %329 = vmatprep.subr.mxu0 0.0
    %330 = vmatpush1.xpose.msra.mxu0 0.0
    %331 = vmatprep.subr.mxu0 0.0
    %332 = vmatpush1.xpose.msra.mxu0 0.0
    %333 = vmatprep.subr.mxu0 0.0
    %334 = vmatpush1.xpose.msra.mxu0 0.0
    %335 = vmatprep.subr.mxu0 0.0
    %336 = vmatpush1.xpose.msra.mxu0 0.0
    %337 = vmatprep.subr.mxu0 0.0
    %338 = vmatpush1.xpose.msra.mxu0 0.0
    %339 = vmatprep.subr.mxu0 0.0
    %340 = vmatpush1.xpose.msra.mxu0 0.0
    %341 = vmatprep.subr.mxu0 0.0
    %342 = vmatpush1.xpose.msra.mxu0 0.0
    %343 = vmatprep.subr.mxu0 0.0
    %344 = vmatpush1.xpose.msra.mxu0 %v311
    %345 = vmatprep.subr.mxu0 0.0
    %346 = vmatpush2.xpose.msra.mxu0 0.0
    %347 = vmatprep.subr.mxu0 0.0
    %348 = vmatpush2.xpose.msra.mxu0 0.0
    %349 = vmatprep.subr.mxu0 0.0
    %350 = vmatpush2.xpose.msra.mxu0 0.0
    %351 = vmatprep.subr.mxu0 0.0
    %352 = vmatpush2.xpose.msra.mxu0 0.0
    %353 = vmatprep.subr.mxu0 0.0
    %354 = vmatpush2.xpose.msra.mxu0 0.0
    %355 = vmatprep.subr.mxu0 0.0
    %356 = vmatpush2.xpose.msra.mxu0 0.0
    %357 = vmatprep.subr.mxu0 0.0
    %358 = vmatpush2.xpose.msra.mxu0 0.0
    %359 = vmatprep.subr.mxu0 0.0
    %360 = vmatpush2.xpose.msra.mxu0 0.0
    %361 = vmatprep.subr.mxu0 0.0
    %362 = vmatpush2.xpose.msra.mxu0 0.0
    %363 = vmatprep.subr.mxu0 0.0
    %364 = vmatpush2.xpose.msra.mxu0 0.0
    %365 = vmatprep.subr.mxu0 0.0
    %366 = vmatpush2.xpose.msra.mxu0 0.0
    %367 = vmatprep.subr.mxu0 0.0
    %368 = vmatpush2.xpose.msra.mxu0 0.0
    %369 = vmatprep.subr.mxu0 0.0
    %370 = vmatpush2.xpose.msra.mxu0 0.0
    %371 = vmatprep.subr.mxu0 0.0
    %372 = vmatpush2.xpose.msra.mxu0 0.0
    %373 = vmatprep.subr.mxu0 0.0
    %374 = vmatpush2.xpose.msra.mxu0 0.0
    %375 = vmatprep.subr.mxu0 0.0
    %376 = vmatpush2.xpose.msra.mxu0 0.0
    %377 = vmatprep.mubr.f32.mxu0 0.0
    %378 = vmatmul.mubr.f32.gmra.mxu0 %v309
    %v379 = vpop.f32.mrf.mxu0
    %v380 = vadd.f32 0.0, %v379
    %v381 = vpop.f32.mrf.mxu0
    %382 = vdwg.mxu0
    %v383 = vmul.f32 %v303, 0.35355338
    %v384 = vmul.f32 %v380, 0.35355338
    %v385 = vlaneseq
    %v386 = vshrl.u32 %v385, 7
    %v387 = vsub.s32 0, %v386
    %v388 = vrot.slane %v81, %v387
    %v389 = vlaneseq
    %v390 = vshrl.u32 %v389, 7
    %v391 = vsub.s32 0, %v390
    %v392 = vrot.slane %v88, %v391
    %v395 = vadd.f32 %v383, %v388
    %v396 = vadd.f32 %v384, %v392
    %v397 = vsel %vm231, %v395, -inf
    %398 = vmax.xlane.f32.xlu0 %v397
    %v399 = vpop.xlane.xlu0 %398
    %v400 = vsel %vm231, %v396, -inf
    %401 = vmax.xlane.f32.xlu0 %v400
    %v402 = vpop.xlane.xlu0 %401
    %v403 = vsub.f32 %v395, %v399
    %v404 = vsub.f32 %v396, %v402
    %v405 = vmul.f32 %v403, 1.442695
    %v406 = vpow.pop %v405
    %v407 = vmul.f32 %v404, 1.442695
    %v408 = vpow.pop %v407
    %v409 = vsel %vm231, %v406, 0.0
    %410 = vadd.xlane.f32.xlu0 %v409
    %v411 = vpop.xlane.xlu0 %410
    %v412 = vsel %vm231, %v408, 0.0
    %413 = vadd.xlane.f32.xlu0 %v412
    %v414 = vpop.xlane.xlu0 %413
    %v415 = vrcp.pop %v411
    %v416 = vmul.f32 %v406, %v415
    %v417 = vrcp.pop %v414
    %v418 = vmul.f32 %v408, %v417
    %419 = vrot.lane.b32.xlu0 %v220, 64
    %v420 = vpop.permute.xlu0 %419
    %v423 = vsel %vm231, %v416, 0
    %425 = vmatprep.subr.mxu0 0.0
    %426 = vmatpush1.msra.mxu0 0.0
    %427 = vmatprep.subr.mxu0 0.0
    %428 = vmatpush1.msra.mxu0 0.0
    %429 = vmatprep.subr.mxu0 0.0
    %430 = vmatpush1.msra.mxu0 0.0
    %431 = vmatprep.subr.mxu0 0.0
    %432 = vmatpush1.msra.mxu0 0.0
    %433 = vmatprep.subr.mxu0 0.0
    %434 = vmatpush1.msra.mxu0 0.0
    %435 = vmatprep.subr.mxu0 0.0
    %436 = vmatpush1.msra.mxu0 0.0
    %437 = vmatprep.subr.mxu0 0.0
    %438 = vmatpush1.msra.mxu0 0.0
    %439 = vmatprep.subr.mxu0 0.0
    %440 = vmatpush1.msra.mxu0 0.0
    %441 = vmatprep.subr.mxu0 0.0
    %442 = vmatpush1.msra.mxu0 0.0
    %443 = vmatprep.subr.mxu0 0.0
    %444 = vmatpush1.msra.mxu0 0.0
    %445 = vmatprep.subr.mxu0 0.0
    %446 = vmatpush1.msra.mxu0 0.0
    %447 = vmatprep.subr.mxu0 0.0
    %448 = vmatpush1.msra.mxu0 0.0
    %449 = vmatprep.subr.mxu0 0.0
    %450 = vmatpush1.msra.mxu0 0.0
    %451 = vmatprep.subr.mxu0 0.0
    %452 = vmatpush1.msra.mxu0 0.0
    %453 = vmatprep.subr.mxu0 0.0
    %454 = vmatpush1.msra.mxu0 0.0
    %455 = vmatprep.subr.mxu0 0.0
    %456 = vmatpush1.msra.mxu0 %v420
    %457 = vmatprep.subr.mxu0 0.0
    %458 = vmatpush2.msra.mxu0 0.0
    %459 = vmatprep.subr.mxu0 0.0
    %460 = vmatpush2.msra.mxu0 0.0
    %461 = vmatprep.subr.mxu0 0.0
    %462 = vmatpush2.msra.mxu0 0.0
    %463 = vmatprep.subr.mxu0 0.0
    %464 = vmatpush2.msra.mxu0 0.0
    %465 = vmatprep.subr.mxu0 0.0
    %466 = vmatpush2.msra.mxu0 0.0
    %467 = vmatprep.subr.mxu0 0.0
    %468 = vmatpush2.msra.mxu0 0.0
    %469 = vmatprep.subr.mxu0 0.0
    %470 = vmatpush2.msra.mxu0 0.0
    %471 = vmatprep.subr.mxu0 0.0
    %472 = vmatpush2.msra.mxu0 0.0
    %473 = vmatprep.subr.mxu0 0.0
    %474 = vmatpush2.msra.mxu0 0.0
    %475 = vmatprep.subr.mxu0 0.0
    %476 = vmatpush2.msra.mxu0 0.0
    %477 = vmatprep.subr.mxu0 0.0
    %478 = vmatpush2.msra.mxu0 0.0
    %479 = vmatprep.subr.mxu0 0.0
    %480 = vmatpush2.msra.mxu0 0.0
    %481 = vmatprep.subr.mxu0 0.0
    %482 = vmatpush2.msra.mxu0 0.0
    %483 = vmatprep.subr.mxu0 0.0
    %484 = vmatpush2.msra.mxu0 0.0
    %485 = vmatprep.subr.mxu0 0.0
    %486 = vmatpush2.msra.mxu0 0.0
    %487 = vmatprep.subr.mxu0 0.0
    %488 = vmatpush2.msra.mxu0 0.0
    %489 = vmatprep.mubr.f32.mxu0 0.0
    %490 = vmatmul.mubr.f32.gmra.mxu0 %v423
    %v491 = vpop.f32.mrf.mxu0
    %v492 = vadd.f32 0.0, %v491
    %v493 = vpop.f32.mrf.mxu0
    %494 = vdwg.mxu0
    %495 = vrot.lane.b32.xlu0 %v225, 64
    %v496 = vpop.permute.xlu0 %495
    %v499 = vsel %vm231, %v418, 0
    %501 = vmatprep.subr.mxu0 0.0
    %502 = vmatpush1.msra.mxu0 0.0
    %503 = vmatprep.subr.mxu0 0.0
    %504 = vmatpush1.msra.mxu0 0.0
    %505 = vmatprep.subr.mxu0 0.0
    %506 = vmatpush1.msra.mxu0 0.0
    %507 = vmatprep.subr.mxu0 0.0
    %508 = vmatpush1.msra.mxu0 0.0
    %509 = vmatprep.subr.mxu0 0.0
    %510 = vmatpush1.msra.mxu0 0.0
    %511 = vmatprep.subr.mxu0 0.0
    %512 = vmatpush1.msra.mxu0 0.0
    %513 = vmatprep.subr.mxu0 0.0
    %514 = vmatpush1.msra.mxu0 0.0
    %515 = vmatprep.subr.mxu0 0.0
    %516 = vmatpush1.msra.mxu0 0.0
    %517 = vmatprep.subr.mxu0 0.0
    %518 = vmatpush1.msra.mxu0 0.0
    %519 = vmatprep.subr.mxu0 0.0
    %520 = vmatpush1.msra.mxu0 0.0
    %521 = vmatprep.subr.mxu0 0.0
    %522 = vmatpush1.msra.mxu0 0.0
    %523 = vmatprep.subr.mxu0 0.0
    %524 = vmatpush1.msra.mxu0 0.0
    %525 = vmatprep.subr.mxu0 0.0
    %526 = vmatpush1.msra.mxu0 0.0
    %527 = vmatprep.subr.mxu0 0.0
    %528 = vmatpush1.msra.mxu0 0.0
    %529 = vmatprep.subr.mxu0 0.0
    %530 = vmatpush1.msra.mxu0 0.0
    %531 = vmatprep.subr.mxu0 0.0
    %532 = vmatpush1.msra.mxu0 %v496
    %533 = vmatprep.subr.mxu0 0.0
    %534 = vmatpush2.msra.mxu0 0.0
    %535 = vmatprep.subr.mxu0 0.0
    %536 = vmatpush2.msra.mxu0 0.0
    %537 = vmatprep.subr.mxu0 0.0
    %538 = vmatpush2.msra.mxu0 0.0
    %539 = vmatprep.subr.mxu0 0.0
    %540 = vmatpush2.msra.mxu0 0.0
    %541 = vmatprep.subr.mxu0 0.0
    %542 = vmatpush2.msra.mxu0 0.0
    %543 = vmatprep.subr.mxu0 0.0
    %544 = vmatpush2.msra.mxu0 0.0
    %545 = vmatprep.subr.mxu0 0.0
    %546 = vmatpush2.msra.mxu0 0.0
    %547 = vmatprep.subr.mxu0 0.0
    %548 = vmatpush2.msra.mxu0 0.0
    %549 = vmatprep.subr.mxu0 0.0
    %550 = vmatpush2.msra.mxu0 0.0
    %551 = vmatprep.subr.mxu0 0.0
    %552 = vmatpush2.msra.mxu0 0.0
    %553 = vmatprep.subr.mxu0 0.0
    %554 = vmatpush2.msra.mxu0 0.0
    %555 = vmatprep.subr.mxu0 0.0
    %556 = vmatpush2.msra.mxu0 0.0
    %557 = vmatprep.subr.mxu0 0.0
    %558 = vmatpush2.msra.mxu0 0.0
    %559 = vmatprep.subr.mxu0 0.0
    %560 = vmatpush2.msra.mxu0 0.0
    %561 = vmatprep.subr.mxu0 0.0
    %562 = vmatpush2.msra.mxu0 0.0
    %563 = vmatprep.subr.mxu0 0.0
    %564 = vmatpush2.msra.mxu0 0.0
    %565 = vmatprep.mubr.f32.mxu0 0.0
    %566 = vmatmul.mubr.f32.gmra.mxu0 %v499
    %v567 = vpop.f32.mrf.mxu0
    %v568 = vadd.f32 0.0, %v567
    %v569 = vpop.f32.mrf.mxu0
    %570 = vdwg.mxu0
    %571 = vrot.lane.b32.xlu0 %v220, 120
    %v572 = vpop.permute.xlu0 %571
    %573 = vrot.lane.b32.xlu0 %v220, 88
    %v574 = vpop.permute.xlu0 %573
    %v575 = vsel %vm231, %v572, 0
    %v577 = vsel %vm231, %v574, 0
    %579 = vmatprep.subr.mxu0 0.0
    %580 = vmatpush1.xpose.msra.mxu0 0.0
    %581 = vmatprep.subr.mxu0 0.0
    %582 = vmatpush1.xpose.msra.mxu0 0.0
    %583 = vmatprep.subr.mxu0 0.0
    %584 = vmatpush1.xpose.msra.mxu0 0.0
    %585 = vmatprep.subr.mxu0 0.0
    %586 = vmatpush1.xpose.msra.mxu0 0.0
    %587 = vmatprep.subr.mxu0 0.0
    %588 = vmatpush1.xpose.msra.mxu0 0.0
    %589 = vmatprep.subr.mxu0 0.0
    %590 = vmatpush1.xpose.msra.mxu0 0.0
    %591 = vmatprep.subr.mxu0 0.0
    %592 = vmatpush1.xpose.msra.mxu0 0.0
    %593 = vmatprep.subr.mxu0 0.0
    %594 = vmatpush1.xpose.msra.mxu0 0.0
    %595 = vmatprep.subr.mxu0 0.0
    %596 = vmatpush1.xpose.msra.mxu0 0.0
    %597 = vmatprep.subr.mxu0 0.0
    %598 = vmatpush1.xpose.msra.mxu0 0.0
    %599 = vmatprep.subr.mxu0 0.0
    %600 = vmatpush1.xpose.msra.mxu0 0.0
    %601 = vmatprep.subr.mxu0 0.0
    %602 = vmatpush1.xpose.msra.mxu0 0.0
    %603 = vmatprep.subr.mxu0 0.0
    %604 = vmatpush1.xpose.msra.mxu0 0.0
    %605 = vmatprep.subr.mxu0 0.0
    %606 = vmatpush1.xpose.msra.mxu0 0.0
    %607 = vmatprep.subr.mxu0 0.0
    %608 = vmatpush1.xpose.msra.mxu0 0.0
    %609 = vmatprep.subr.mxu0 0.0
    %610 = vmatpush1.xpose.msra.mxu0 %v577
    %611 = vmatprep.subr.mxu0 0.0
    %612 = vmatpush2.xpose.msra.mxu0 0.0
    %613 = vmatprep.subr.mxu0 0.0
    %614 = vmatpush2.xpose.msra.mxu0 0.0
    %615 = vmatprep.subr.mxu0 0.0
    %616 = vmatpush2.xpose.msra.mxu0 0.0
    %617 = vmatprep.subr.mxu0 0.0
    %618 = vmatpush2.xpose.msra.mxu0 0.0
    %619 = vmatprep.subr.mxu0 0.0
    %620 = vmatpush2.xpose.msra.mxu0 0.0
    %621 = vmatprep.subr.mxu0 0.0
    %622 = vmatpush2.xpose.msra.mxu0 0.0
    %623 = vmatprep.subr.mxu0 0.0
    %624 = vmatpush2.xpose.msra.mxu0 0.0
    %625 = vmatprep.subr.mxu0 0.0
    %626 = vmatpush2.xpose.msra.mxu0 0.0
    %627 = vmatprep.subr.mxu0 0.0
    %628 = vmatpush2.xpose.msra.mxu0 0.0
    %629 = vmatprep.subr.mxu0 0.0
    %630 = vmatpush2.xpose.msra.mxu0 0.0
    %631 = vmatprep.subr.mxu0 0.0
    %632 = vmatpush2.xpose.msra.mxu0 0.0
    %633 = vmatprep.subr.mxu0 0.0
    %634 = vmatpush2.xpose.msra.mxu0 0.0
    %635 = vmatprep.subr.mxu0 0.0
    %636 = vmatpush2.xpose.msra.mxu0 0.0
    %637 = vmatprep.subr.mxu0 0.0
    %638 = vmatpush2.xpose.msra.mxu0 0.0
    %639 = vmatprep.subr.mxu0 0.0
    %640 = vmatpush2.xpose.msra.mxu0 0.0
    %641 = vmatprep.subr.mxu0 0.0
    %642 = vmatpush2.xpose.msra.mxu0 0.0
    %643 = vmatprep.mubr.f32.mxu0 0.0
    %644 = vmatmul.mubr.f32.gmra.mxu0 %v575
    %v645 = vpop.f32.mrf.mxu0
    %v646 = vadd.f32 0.0, %v645
    %v647 = vpop.f32.mrf.mxu0
    %648 = vdwg.mxu0
    %649 = vrot.lane.b32.xlu0 %v225, 120
    %v650 = vpop.permute.xlu0 %649
    %651 = vrot.lane.b32.xlu0 %v225, 88
    %v652 = vpop.permute.xlu0 %651
    %v653 = vsel %vm231, %v650, 0
    %v655 = vsel %vm231, %v652, 0
    %657 = vmatprep.subr.mxu0 0.0
    %658 = vmatpush1.xpose.msra.mxu0 0.0
    %659 = vmatprep.subr.mxu0 0.0
    %660 = vmatpush1.xpose.msra.mxu0 0.0
    %661 = vmatprep.subr.mxu0 0.0
    %662 = vmatpush1.xpose.msra.mxu0 0.0
    %663 = vmatprep.subr.mxu0 0.0
    %664 = vmatpush1.xpose.msra.mxu0 0.0
    %665 = vmatprep.subr.mxu0 0.0
    %666 = vmatpush1.xpose.msra.mxu0 0.0
    %667 = vmatprep.subr.mxu0 0.0
    %668 = vmatpush1.xpose.msra.mxu0 0.0
    %669 = vmatprep.subr.mxu0 0.0
    %670 = vmatpush1.xpose.msra.mxu0 0.0
    %671 = vmatprep.subr.mxu0 0.0
    %672 = vmatpush1.xpose.msra.mxu0 0.0
    %673 = vmatprep.subr.mxu0 0.0
    %674 = vmatpush1.xpose.msra.mxu0 0.0
    %675 = vmatprep.subr.mxu0 0.0
    %676 = vmatpush1.xpose.msra.mxu0 0.0
    %677 = vmatprep.subr.mxu0 0.0
    %678 = vmatpush1.xpose.msra.mxu0 0.0
    %679 = vmatprep.subr.mxu0 0.0
    %680 = vmatpush1.xpose.msra.mxu0 0.0
    %681 = vmatprep.subr.mxu0 0.0
    %682 = vmatpush1.xpose.msra.mxu0 0.0
    %683 = vmatprep.subr.mxu0 0.0
    %684 = vmatpush1.xpose.msra.mxu0 0.0
    %685 = vmatprep.subr.mxu0 0.0
    %686 = vmatpush1.xpose.msra.mxu0 0.0
    %687 = vmatprep.subr.mxu0 0.0
    %688 = vmatpush1.xpose.msra.mxu0 %v655
    %689 = vmatprep.subr.mxu0 0.0
    %690 = vmatpush2.xpose.msra.mxu0 0.0
    %691 = vmatprep.subr.mxu0 0.0
    %692 = vmatpush2.xpose.msra.mxu0 0.0
    %693 = vmatprep.subr.mxu0 0.0
    %694 = vmatpush2.xpose.msra.mxu0 0.0
    %695 = vmatprep.subr.mxu0 0.0
    %696 = vmatpush2.xpose.msra.mxu0 0.0
    %697 = vmatprep.subr.mxu0 0.0
    %698 = vmatpush2.xpose.msra.mxu0 0.0
    %699 = vmatprep.subr.mxu0 0.0
    %700 = vmatpush2.xpose.msra.mxu0 0.0
    %701 = vmatprep.subr.mxu0 0.0
    %702 = vmatpush2.xpose.msra.mxu0 0.0
    %703 = vmatprep.subr.mxu0 0.0
    %704 = vmatpush2.xpose.msra.mxu0 0.0
    %705 = vmatprep.subr.mxu0 0.0
    %706 = vmatpush2.xpose.msra.mxu0 0.0
    %707 = vmatprep.subr.mxu0 0.0
    %708 = vmatpush2.xpose.msra.mxu0 0.0
    %709 = vmatprep.subr.mxu0 0.0
    %710 = vmatpush2.xpose.msra.mxu0 0.0
    %711 = vmatprep.subr.mxu0 0.0
    %712 = vmatpush2.xpose.msra.mxu0 0.0
    %713 = vmatprep.subr.mxu0 0.0
    %714 = vmatpush2.xpose.msra.mxu0 0.0
    %715 = vmatprep.subr.mxu0 0.0
    %716 = vmatpush2.xpose.msra.mxu0 0.0
    %717 = vmatprep.subr.mxu0 0.0
    %718 = vmatpush2.xpose.msra.mxu0 0.0
    %719 = vmatprep.subr.mxu0 0.0
    %720 = vmatpush2.xpose.msra.mxu0 0.0
    %721 = vmatprep.mubr.f32.mxu0 0.0
    %722 = vmatmul.mubr.f32.gmra.mxu0 %v653
    %v723 = vpop.f32.mrf.mxu0
    %v724 = vadd.f32 0.0, %v723
    %v725 = vpop.f32.mrf.mxu0
    %726 = vdwg.mxu0
    %v727 = vmul.f32 %v646, 0.35355338
    %v728 = vmul.f32 %v724, 0.35355338
    %v729 = vadd.f32 %v727, %v388
    %v730 = vadd.f32 %v728, %v392
    %v731 = vsel %vm231, %v729, -inf
    %732 = vmax.xlane.f32.xlu0 %v731
    %v733 = vpop.xlane.xlu0 %732
    %v734 = vsel %vm231, %v730, -inf
    %735 = vmax.xlane.f32.xlu0 %v734
    %v736 = vpop.xlane.xlu0 %735
    %v737 = vsub.f32 %v729, %v733
    %v738 = vsub.f32 %v730, %v736
    %v739 = vmul.f32 %v737, 1.442695
    %v740 = vpow.pop %v739
    %v741 = vmul.f32 %v738, 1.442695
    %v742 = vpow.pop %v741
    %v743 = vsel %vm231, %v740, 0.0
    %744 = vadd.xlane.f32.xlu0 %v743
    %v745 = vpop.xlane.xlu0 %744
    %v746 = vsel %vm231, %v742, 0.0
    %747 = vadd.xlane.f32.xlu0 %v746
    %v748 = vpop.xlane.xlu0 %747
    %v749 = vrcp.pop %v745
    %v750 = vmul.f32 %v740, %v749
    %v751 = vrcp.pop %v748
    %v752 = vmul.f32 %v742, %v751
    %753 = vrot.lane.b32.xlu0 %v220, 56
    %v754 = vpop.permute.xlu0 %753
    %v757 = vsel %vm231, %v750, 0
    %759 = vmatprep.subr.mxu0 0.0
    %760 = vmatpush1.msra.mxu0 0.0
    %761 = vmatprep.subr.mxu0 0.0
    %762 = vmatpush1.msra.mxu0 0.0
    %763 = vmatprep.subr.mxu0 0.0
    %764 = vmatpush1.msra.mxu0 0.0
    %765 = vmatprep.subr.mxu0 0.0
    %766 = vmatpush1.msra.mxu0 0.0
    %767 = vmatprep.subr.mxu0 0.0
    %768 = vmatpush1.msra.mxu0 0.0
    %769 = vmatprep.subr.mxu0 0.0
    %770 = vmatpush1.msra.mxu0 0.0
    %771 = vmatprep.subr.mxu0 0.0
    %772 = vmatpush1.msra.mxu0 0.0
    %773 = vmatprep.subr.mxu0 0.0
    %774 = vmatpush1.msra.mxu0 0.0
    %775 = vmatprep.subr.mxu0 0.0
    %776 = vmatpush1.msra.mxu0 0.0
    %777 = vmatprep.subr.mxu0 0.0
    %778 = vmatpush1.msra.mxu0 0.0
    %779 = vmatprep.subr.mxu0 0.0
    %780 = vmatpush1.msra.mxu0 0.0
    %781 = vmatprep.subr.mxu0 0.0
    %782 = vmatpush1.msra.mxu0 0.0
    %783 = vmatprep.subr.mxu0 0.0
    %784 = vmatpush1.msra.mxu0 0.0
    %785 = vmatprep.subr.mxu0 0.0
    %786 = vmatpush1.msra.mxu0 0.0
    %787 = vmatprep.subr.mxu0 0.0
    %788 = vmatpush1.msra.mxu0 0.0
    %789 = vmatprep.subr.mxu0 0.0
    %790 = vmatpush1.msra.mxu0 %v754
    %791 = vmatprep.subr.mxu0 0.0
    %792 = vmatpush2.msra.mxu0 0.0
    %793 = vmatprep.subr.mxu0 0.0
    %794 = vmatpush2.msra.mxu0 0.0
    %795 = vmatprep.subr.mxu0 0.0
    %796 = vmatpush2.msra.mxu0 0.0
    %797 = vmatprep.subr.mxu0 0.0
    %798 = vmatpush2.msra.mxu0 0.0
    %799 = vmatprep.subr.mxu0 0.0
    %800 = vmatpush2.msra.mxu0 0.0
    %801 = vmatprep.subr.mxu0 0.0
    %802 = vmatpush2.msra.mxu0 0.0
    %803 = vmatprep.subr.mxu0 0.0
    %804 = vmatpush2.msra.mxu0 0.0
    %805 = vmatprep.subr.mxu0 0.0
    %806 = vmatpush2.msra.mxu0 0.0
    %807 = vmatprep.subr.mxu0 0.0
    %808 = vmatpush2.msra.mxu0 0.0
    %809 = vmatprep.subr.mxu0 0.0
    %810 = vmatpush2.msra.mxu0 0.0
    %811 = vmatprep.subr.mxu0 0.0
    %812 = vmatpush2.msra.mxu0 0.0
    %813 = vmatprep.subr.mxu0 0.0
    %814 = vmatpush2.msra.mxu0 0.0
    %815 = vmatprep.subr.mxu0 0.0
    %816 = vmatpush2.msra.mxu0 0.0
    %817 = vmatprep.subr.mxu0 0.0
    %818 = vmatpush2.msra.mxu0 0.0
    %819 = vmatprep.subr.mxu0 0.0
    %820 = vmatpush2.msra.mxu0 0.0
    %821 = vmatprep.subr.mxu0 0.0
    %822 = vmatpush2.msra.mxu0 0.0
    %823 = vmatprep.mubr.f32.mxu0 0.0
    %824 = vmatmul.mubr.f32.gmra.mxu0 %v757
    %v825 = vpop.f32.mrf.mxu0
    %v826 = vadd.f32 0.0, %v825
    %v827 = vpop.f32.mrf.mxu0
    %828 = vdwg.mxu0
    %829 = vrot.lane.b32.xlu0 %v225, 56
    %v830 = vpop.permute.xlu0 %829
    %v833 = vsel %vm231, %v752, 0
    %835 = vmatprep.subr.mxu0 0.0
    %836 = vmatpush1.msra.mxu0 0.0
    %837 = vmatprep.subr.mxu0 0.0
    %838 = vmatpush1.msra.mxu0 0.0
    %839 = vmatprep.subr.mxu0 0.0
    %840 = vmatpush1.msra.mxu0 0.0
    %841 = vmatprep.subr.mxu0 0.0
    %842 = vmatpush1.msra.mxu0 0.0
    %843 = vmatprep.subr.mxu0 0.0
    %844 = vmatpush1.msra.mxu0 0.0
    %845 = vmatprep.subr.mxu0 0.0
    %846 = vmatpush1.msra.mxu0 0.0
    %847 = vmatprep.subr.mxu0 0.0
    %848 = vmatpush1.msra.mxu0 0.0
    %849 = vmatprep.subr.mxu0 0.0
    %850 = vmatpush1.msra.mxu0 0.0
    %851 = vmatprep.subr.mxu0 0.0
    %852 = vmatpush1.msra.mxu0 0.0
    %853 = vmatprep.subr.mxu0 0.0
    %854 = vmatpush1.msra.mxu0 0.0
    %855 = vmatprep.subr.mxu0 0.0
    %856 = vmatpush1.msra.mxu0 0.0
    %857 = vmatprep.subr.mxu0 0.0
    %858 = vmatpush1.msra.mxu0 0.0
    %859 = vmatprep.subr.mxu0 0.0
    %860 = vmatpush1.msra.mxu0 0.0
    %861 = vmatprep.subr.mxu0 0.0
    %862 = vmatpush1.msra.mxu0 0.0
    %863 = vmatprep.subr.mxu0 0.0
    %864 = vmatpush1.msra.mxu0 0.0
    %865 = vmatprep.subr.mxu0 0.0
    %866 = vmatpush1.msra.mxu0 %v830
    %867 = vmatprep.subr.mxu0 0.0
    %868 = vmatpush2.msra.mxu0 0.0
    %869 = vmatprep.subr.mxu0 0.0
    %870 = vmatpush2.msra.mxu0 0.0
    %871 = vmatprep.subr.mxu0 0.0
    %872 = vmatpush2.msra.mxu0 0.0
    %873 = vmatprep.subr.mxu0 0.0
    %874 = vmatpush2.msra.mxu0 0.0
    %875 = vmatprep.subr.mxu0 0.0
    %876 = vmatpush2.msra.mxu0 0.0
    %877 = vmatprep.subr.mxu0 0.0
    %878 = vmatpush2.msra.mxu0 0.0
    %879 = vmatprep.subr.mxu0 0.0
    %880 = vmatpush2.msra.mxu0 0.0
    %881 = vmatprep.subr.mxu0 0.0
    %882 = vmatpush2.msra.mxu0 0.0
    %883 = vmatprep.subr.mxu0 0.0
    %884 = vmatpush2.msra.mxu0 0.0
    %885 = vmatprep.subr.mxu0 0.0
    %886 = vmatpush2.msra.mxu0 0.0
    %887 = vmatprep.subr.mxu0 0.0
    %888 = vmatpush2.msra.mxu0 0.0
    %889 = vmatprep.subr.mxu0 0.0
    %890 = vmatpush2.msra.mxu0 0.0
    %891 = vmatprep.subr.mxu0 0.0
    %892 = vmatpush2.msra.mxu0 0.0
    %893 = vmatprep.subr.mxu0 0.0
    %894 = vmatpush2.msra.mxu0 0.0
    %895 = vmatprep.subr.mxu0 0.0
    %896 = vmatpush2.msra.mxu0 0.0
    %897 = vmatprep.subr.mxu0 0.0
    %898 = vmatpush2.msra.mxu0 0.0
    %899 = vmatprep.mubr.f32.mxu0 0.0
    %900 = vmatmul.mubr.f32.gmra.mxu0 %v833
    %v901 = vpop.f32.mrf.mxu0
    %v902 = vadd.f32 0.0, %v901
    %v903 = vpop.f32.mrf.mxu0
    %904 = vdwg.mxu0
    %905 = vrot.lane.b32.xlu0 %v220, 112
    %v906 = vpop.permute.xlu0 %905
    %907 = vrot.lane.b32.xlu0 %v220, 80
    %v908 = vpop.permute.xlu0 %907
    %v909 = vsel %vm231, %v906, 0
    %v911 = vsel %vm231, %v908, 0
    %913 = vmatprep.subr.mxu0 0.0
    %914 = vmatpush1.xpose.msra.mxu0 0.0
    %915 = vmatprep.subr.mxu0 0.0
    %916 = vmatpush1.xpose.msra.mxu0 0.0
    %917 = vmatprep.subr.mxu0 0.0
    %918 = vmatpush1.xpose.msra.mxu0 0.0
    %919 = vmatprep.subr.mxu0 0.0
    %920 = vmatpush1.xpose.msra.mxu0 0.0
    %921 = vmatprep.subr.mxu0 0.0
    %922 = vmatpush1.xpose.msra.mxu0 0.0
    %923 = vmatprep.subr.mxu0 0.0
    %924 = vmatpush1.xpose.msra.mxu0 0.0
    %925 = vmatprep.subr.mxu0 0.0
    %926 = vmatpush1.xpose.msra.mxu0 0.0
    %927 = vmatprep.subr.mxu0 0.0
    %928 = vmatpush1.xpose.msra.mxu0 0.0
    %929 = vmatprep.subr.mxu0 0.0
    %930 = vmatpush1.xpose.msra.mxu0 0.0
    %931 = vmatprep.subr.mxu0 0.0
    %932 = vmatpush1.xpose.msra.mxu0 0.0
    %933 = vmatprep.subr.mxu0 0.0
    %934 = vmatpush1.xpose.msra.mxu0 0.0
    %935 = vmatprep.subr.mxu0 0.0
    %936 = vmatpush1.xpose.msra.mxu0 0.0
    %937 = vmatprep.subr.mxu0 0.0
    %938 = vmatpush1.xpose.msra.mxu0 0.0
    %939 = vmatprep.subr.mxu0 0.0
    %940 = vmatpush1.xpose.msra.mxu0 0.0
    %941 = vmatprep.subr.mxu0 0.0
    %942 = vmatpush1.xpose.msra.mxu0 0.0
    %943 = vmatprep.subr.mxu0 0.0
    %944 = vmatpush1.xpose.msra.mxu0 %v911
    %945 = vmatprep.subr.mxu0 0.0
    %946 = vmatpush2.xpose.msra.mxu0 0.0
    %947 = vmatprep.subr.mxu0 0.0
    %948 = vmatpush2.xpose.msra.mxu0 0.0
    %949 = vmatprep.subr.mxu0 0.0
    %950 = vmatpush2.xpose.msra.mxu0 0.0
    %951 = vmatprep.subr.mxu0 0.0
    %952 = vmatpush2.xpose.msra.mxu0 0.0
    %953 = vmatprep.subr.mxu0 0.0
    %954 = vmatpush2.xpose.msra.mxu0 0.0
    %955 = vmatprep.subr.mxu0 0.0
    %956 = vmatpush2.xpose.msra.mxu0 0.0
    %957 = vmatprep.subr.mxu0 0.0
    %958 = vmatpush2.xpose.msra.mxu0 0.0
    %959 = vmatprep.subr.mxu0 0.0
    %960 = vmatpush2.xpose.msra.mxu0 0.0
    %961 = vmatprep.subr.mxu0 0.0
    %962 = vmatpush2.xpose.msra.mxu0 0.0
    %963 = vmatprep.subr.mxu0 0.0
    %964 = vmatpush2.xpose.msra.mxu0 0.0
    %965 = vmatprep.subr.mxu0 0.0
    %966 = vmatpush2.xpose.msra.mxu0 0.0
    %967 = vmatprep.subr.mxu0 0.0
    %968 = vmatpush2.xpose.msra.mxu0 0.0
    %969 = vmatprep.subr.mxu0 0.0
    %970 = vmatpush2.xpose.msra.mxu0 0.0
    %971 = vmatprep.subr.mxu0 0.0
    %972 = vmatpush2.xpose.msra.mxu0 0.0
    %973 = vmatprep.subr.mxu0 0.0
    %974 = vmatpush2.xpose.msra.mxu0 0.0
    %975 = vmatprep.subr.mxu0 0.0
    %976 = vmatpush2.xpose.msra.mxu0 0.0
    %977 = vmatprep.mubr.f32.mxu0 0.0
    %978 = vmatmul.mubr.f32.gmra.mxu0 %v909
    %v979 = vpop.f32.mrf.mxu0
    %v980 = vadd.f32 0.0, %v979
    %v981 = vpop.f32.mrf.mxu0
    %982 = vdwg.mxu0
    %983 = vrot.lane.b32.xlu0 %v225, 112
    %v984 = vpop.permute.xlu0 %983
    %985 = vrot.lane.b32.xlu0 %v225, 80
    %v986 = vpop.permute.xlu0 %985
    %v987 = vsel %vm231, %v984, 0
    %v989 = vsel %vm231, %v986, 0
    %991 = vmatprep.subr.mxu0 0.0
    %992 = vmatpush1.xpose.msra.mxu0 0.0
    %993 = vmatprep.subr.mxu0 0.0
    %994 = vmatpush1.xpose.msra.mxu0 0.0
    %995 = vmatprep.subr.mxu0 0.0
    %996 = vmatpush1.xpose.msra.mxu0 0.0
    %997 = vmatprep.subr.mxu0 0.0
    %998 = vmatpush1.xpose.msra.mxu0 0.0
    %999 = vmatprep.subr.mxu0 0.0
    %1000 = vmatpush1.xpose.msra.mxu0 0.0
    %1001 = vmatprep.subr.mxu0 0.0
    %1002 = vmatpush1.xpose.msra.mxu0 0.0
    %1003 = vmatprep.subr.mxu0 0.0
    %1004 = vmatpush1.xpose.msra.mxu0 0.0
    %1005 = vmatprep.subr.mxu0 0.0
    %1006 = vmatpush1.xpose.msra.mxu0 0.0
    %1007 = vmatprep.subr.mxu0 0.0
    %1008 = vmatpush1.xpose.msra.mxu0 0.0
    %1009 = vmatprep.subr.mxu0 0.0
    %1010 = vmatpush1.xpose.msra.mxu0 0.0
    %1011 = vmatprep.subr.mxu0 0.0
    %1012 = vmatpush1.xpose.msra.mxu0 0.0
    %1013 = vmatprep.subr.mxu0 0.0
    %1014 = vmatpush1.xpose.msra.mxu0 0.0
    %1015 = vmatprep.subr.mxu0 0.0
    %1016 = vmatpush1.xpose.msra.mxu0 0.0
    %1017 = vmatprep.subr.mxu0 0.0
    %1018 = vmatpush1.xpose.msra.mxu0 0.0
    %1019 = vmatprep.subr.mxu0 0.0
    %1020 = vmatpush1.xpose.msra.mxu0 0.0
    %1021 = vmatprep.subr.mxu0 0.0
    %1022 = vmatpush1.xpose.msra.mxu0 %v989
    %1023 = vmatprep.subr.mxu0 0.0
    %1024 = vmatpush2.xpose.msra.mxu0 0.0
    %1025 = vmatprep.subr.mxu0 0.0
    %1026 = vmatpush2.xpose.msra.mxu0 0.0
    %1027 = vmatprep.subr.mxu0 0.0
    %1028 = vmatpush2.xpose.msra.mxu0 0.0
    %1029 = vmatprep.subr.mxu0 0.0
    %1030 = vmatpush2.xpose.msra.mxu0 0.0
    %1031 = vmatprep.subr.mxu0 0.0
    %1032 = vmatpush2.xpose.msra.mxu0 0.0
    %1033 = vmatprep.subr.mxu0 0.0
    %1034 = vmatpush2.xpose.msra.mxu0 0.0
    %1035 = vmatprep.subr.mxu0 0.0
    %1036 = vmatpush2.xpose.msra.mxu0 0.0
    %1037 = vmatprep.subr.mxu0 0.0
    %1038 = vmatpush2.xpose.msra.mxu0 0.0
    %1039 = vmatprep.subr.mxu0 0.0
    %1040 = vmatpush2.xpose.msra.mxu0 0.0
    %1041 = vmatprep.subr.mxu0 0.0
    %1042 = vmatpush2.xpose.msra.mxu0 0.0
    %1043 = vmatprep.subr.mxu0 0.0
    %1044 = vmatpush2.xpose.msra.mxu0 0.0
    %1045 = vmatprep.subr.mxu0 0.0
    %1046 = vmatpush2.xpose.msra.mxu0 0.0
    %1047 = vmatprep.subr.mxu0 0.0
    %1048 = vmatpush2.xpose.msra.mxu0 0.0
    %1049 = vmatprep.subr.mxu0 0.0
    %1050 = vmatpush2.xpose.msra.mxu0 0.0
    %1051 = vmatprep.subr.mxu0 0.0
    %1052 = vmatpush2.xpose.msra.mxu0 0.0
    %1053 = vmatprep.subr.mxu0 0.0
    %1054 = vmatpush2.xpose.msra.mxu0 0.0
    %1055 = vmatprep.mubr.f32.mxu0 0.0
    %1056 = vmatmul.mubr.f32.gmra.mxu0 %v987
    %v1057 = vpop.f32.mrf.mxu0
    %v1058 = vadd.f32 0.0, %v1057
    %v1059 = vpop.f32.mrf.mxu0
    %1060 = vdwg.mxu0
    %v1061 = vmul.f32 %v980, 0.35355338
    %v1062 = vmul.f32 %v1058, 0.35355338
    %v1063 = vadd.f32 %v1061, %v388
    %v1064 = vadd.f32 %v1062, %v392
    %v1065 = vsel %vm231, %v1063, -inf
    %1066 = vmax.xlane.f32.xlu0 %v1065
    %v1067 = vpop.xlane.xlu0 %1066
    %v1068 = vsel %vm231, %v1064, -inf
    %1069 = vmax.xlane.f32.xlu0 %v1068
    %v1070 = vpop.xlane.xlu0 %1069
    %v1071 = vsub.f32 %v1063, %v1067
    %v1072 = vsub.f32 %v1064, %v1070
    %v1073 = vmul.f32 %v1071, 1.442695
    %v1074 = vpow.pop %v1073
    %v1075 = vmul.f32 %v1072, 1.442695
    %v1076 = vpow.pop %v1075
    %v1077 = vsel %vm231, %v1074, 0.0
    %1078 = vadd.xlane.f32.xlu0 %v1077
    %v1079 = vpop.xlane.xlu0 %1078
    %v1080 = vsel %vm231, %v1076, 0.0
    %1081 = vadd.xlane.f32.xlu0 %v1080
    %v1082 = vpop.xlane.xlu0 %1081
    %v1083 = vrcp.pop %v1079
    %v1084 = vmul.f32 %v1074, %v1083
    %v1085 = vrcp.pop %v1082
    %v1086 = vmul.f32 %v1076, %v1085
    %1087 = vrot.lane.b32.xlu0 %v220, 48
    %v1088 = vpop.permute.xlu0 %1087
    %v1091 = vsel %vm231, %v1084, 0
    %1093 = vmatprep.subr.mxu0 0.0
    %1094 = vmatpush1.msra.mxu0 0.0
    %1095 = vmatprep.subr.mxu0 0.0
    %1096 = vmatpush1.msra.mxu0 0.0
    %1097 = vmatprep.subr.mxu0 0.0
    %1098 = vmatpush1.msra.mxu0 0.0
    %1099 = vmatprep.subr.mxu0 0.0
    %1100 = vmatpush1.msra.mxu0 0.0
    %1101 = vmatprep.subr.mxu0 0.0
    %1102 = vmatpush1.msra.mxu0 0.0
    %1103 = vmatprep.subr.mxu0 0.0
    %1104 = vmatpush1.msra.mxu0 0.0
    %1105 = vmatprep.subr.mxu0 0.0
    %1106 = vmatpush1.msra.mxu0 0.0
    %1107 = vmatprep.subr.mxu0 0.0
    %1108 = vmatpush1.msra.mxu0 0.0
    %1109 = vmatprep.subr.mxu0 0.0
    %1110 = vmatpush1.msra.mxu0 0.0
    %1111 = vmatprep.subr.mxu0 0.0
    %1112 = vmatpush1.msra.mxu0 0.0
    %1113 = vmatprep.subr.mxu0 0.0
    %1114 = vmatpush1.msra.mxu0 0.0
    %1115 = vmatprep.subr.mxu0 0.0
    %1116 = vmatpush1.msra.mxu0 0.0
    %1117 = vmatprep.subr.mxu0 0.0
    %1118 = vmatpush1.msra.mxu0 0.0
    %1119 = vmatprep.subr.mxu0 0.0
    %1120 = vmatpush1.msra.mxu0 0.0
    %1121 = vmatprep.subr.mxu0 0.0
    %1122 = vmatpush1.msra.mxu0 0.0
    %1123 = vmatprep.subr.mxu0 0.0
    %1124 = vmatpush1.msra.mxu0 %v1088
    %1125 = vmatprep.subr.mxu0 0.0
    %1126 = vmatpush2.msra.mxu0 0.0
    %1127 = vmatprep.subr.mxu0 0.0
    %1128 = vmatpush2.msra.mxu0 0.0
    %1129 = vmatprep.subr.mxu0 0.0
    %1130 = vmatpush2.msra.mxu0 0.0
    %1131 = vmatprep.subr.mxu0 0.0
    %1132 = vmatpush2.msra.mxu0 0.0
    %1133 = vmatprep.subr.mxu0 0.0
    %1134 = vmatpush2.msra.mxu0 0.0
    %1135 = vmatprep.subr.mxu0 0.0
    %1136 = vmatpush2.msra.mxu0 0.0
    %1137 = vmatprep.subr.mxu0 0.0
    %1138 = vmatpush2.msra.mxu0 0.0
    %1139 = vmatprep.subr.mxu0 0.0
    %1140 = vmatpush2.msra.mxu0 0.0
    %1141 = vmatprep.subr.mxu0 0.0
    %1142 = vmatpush2.msra.mxu0 0.0
    %1143 = vmatprep.subr.mxu0 0.0
    %1144 = vmatpush2.msra.mxu0 0.0
    %1145 = vmatprep.subr.mxu0 0.0
    %1146 = vmatpush2.msra.mxu0 0.0
    %1147 = vmatprep.subr.mxu0 0.0
    %1148 = vmatpush2.msra.mxu0 0.0
    %1149 = vmatprep.subr.mxu0 0.0
    %1150 = vmatpush2.msra.mxu0 0.0
    %1151 = vmatprep.subr.mxu0 0.0
    %1152 = vmatpush2.msra.mxu0 0.0
    %1153 = vmatprep.subr.mxu0 0.0
    %1154 = vmatpush2.msra.mxu0 0.0
    %1155 = vmatprep.subr.mxu0 0.0
    %1156 = vmatpush2.msra.mxu0 0.0
    %1157 = vmatprep.mubr.f32.mxu0 0.0
    %1158 = vmatmul.mubr.f32.gmra.mxu0 %v1091
    %v1159 = vpop.f32.mrf.mxu0
    %v1160 = vadd.f32 0.0, %v1159
    %v1161 = vpop.f32.mrf.mxu0
    %1162 = vdwg.mxu0
    %1163 = vrot.lane.b32.xlu0 %v225, 48
    %v1164 = vpop.permute.xlu0 %1163
    %v1167 = vsel %vm231, %v1086, 0
    %1169 = vmatprep.subr.mxu0 0.0
    %1170 = vmatpush1.msra.mxu0 0.0
    %1171 = vmatprep.subr.mxu0 0.0
    %1172 = vmatpush1.msra.mxu0 0.0
    %1173 = vmatprep.subr.mxu0 0.0
    %1174 = vmatpush1.msra.mxu0 0.0
    %1175 = vmatprep.subr.mxu0 0.0
    %1176 = vmatpush1.msra.mxu0 0.0
    %1177 = vmatprep.subr.mxu0 0.0
    %1178 = vmatpush1.msra.mxu0 0.0
    %1179 = vmatprep.subr.mxu0 0.0
    %1180 = vmatpush1.msra.mxu0 0.0
    %1181 = vmatprep.subr.mxu0 0.0
    %1182 = vmatpush1.msra.mxu0 0.0
    %1183 = vmatprep.subr.mxu0 0.0
    %1184 = vmatpush1.msra.mxu0 0.0
    %1185 = vmatprep.subr.mxu0 0.0
    %1186 = vmatpush1.msra.mxu0 0.0
    %1187 = vmatprep.subr.mxu0 0.0
    %1188 = vmatpush1.msra.mxu0 0.0
    %1189 = vmatprep.subr.mxu0 0.0
    %1190 = vmatpush1.msra.mxu0 0.0
    %1191 = vmatprep.subr.mxu0 0.0
    %1192 = vmatpush1.msra.mxu0 0.0
    %1193 = vmatprep.subr.mxu0 0.0
    %1194 = vmatpush1.msra.mxu0 0.0
    %1195 = vmatprep.subr.mxu0 0.0
    %1196 = vmatpush1.msra.mxu0 0.0
    %1197 = vmatprep.subr.mxu0 0.0
    %1198 = vmatpush1.msra.mxu0 0.0
    %1199 = vmatprep.subr.mxu0 0.0
    %1200 = vmatpush1.msra.mxu0 %v1164
    %1201 = vmatprep.subr.mxu0 0.0
    %1202 = vmatpush2.msra.mxu0 0.0
    %1203 = vmatprep.subr.mxu0 0.0
    %1204 = vmatpush2.msra.mxu0 0.0
    %1205 = vmatprep.subr.mxu0 0.0
    %1206 = vmatpush2.msra.mxu0 0.0
    %1207 = vmatprep.subr.mxu0 0.0
    %1208 = vmatpush2.msra.mxu0 0.0
    %1209 = vmatprep.subr.mxu0 0.0
    %1210 = vmatpush2.msra.mxu0 0.0
    %1211 = vmatprep.subr.mxu0 0.0
    %1212 = vmatpush2.msra.mxu0 0.0
    %1213 = vmatprep.subr.mxu0 0.0
    %1214 = vmatpush2.msra.mxu0 0.0
    %1215 = vmatprep.subr.mxu0 0.0
    %1216 = vmatpush2.msra.mxu0 0.0
    %1217 = vmatprep.subr.mxu0 0.0
    %1218 = vmatpush2.msra.mxu0 0.0
    %1219 = vmatprep.subr.mxu0 0.0
    %1220 = vmatpush2.msra.mxu0 0.0
    %1221 = vmatprep.subr.mxu0 0.0
    %1222 = vmatpush2.msra.mxu0 0.0
    %1223 = vmatprep.subr.mxu0 0.0
    %1224 = vmatpush2.msra.mxu0 0.0
    %1225 = vmatprep.subr.mxu0 0.0
    %1226 = vmatpush2.msra.mxu0 0.0
    %1227 = vmatprep.subr.mxu0 0.0
    %1228 = vmatpush2.msra.mxu0 0.0
    %1229 = vmatprep.subr.mxu0 0.0
    %1230 = vmatpush2.msra.mxu0 0.0
    %1231 = vmatprep.subr.mxu0 0.0
    %1232 = vmatpush2.msra.mxu0 0.0
    %1233 = vmatprep.mubr.f32.mxu0 0.0
    %1234 = vmatmul.mubr.f32.gmra.mxu0 %v1167
    %v1235 = vpop.f32.mrf.mxu0
    %v1236 = vadd.f32 0.0, %v1235
    %v1237 = vpop.f32.mrf.mxu0
    %1238 = vdwg.mxu0
    %1239 = vrot.lane.b32.xlu0 %v220, 104
    %v1240 = vpop.permute.xlu0 %1239
    %1241 = vrot.lane.b32.xlu0 %v220, 72
    %v1242 = vpop.permute.xlu0 %1241
    %v1243 = vsel %vm231, %v1240, 0
    %v1245 = vsel %vm231, %v1242, 0
    %1247 = vmatprep.subr.mxu0 0.0
    %1248 = vmatpush1.xpose.msra.mxu0 0.0
    %1249 = vmatprep.subr.mxu0 0.0
    %1250 = vmatpush1.xpose.msra.mxu0 0.0
    %1251 = vmatprep.subr.mxu0 0.0
    %1252 = vmatpush1.xpose.msra.mxu0 0.0
    %1253 = vmatprep.subr.mxu0 0.0
    %1254 = vmatpush1.xpose.msra.mxu0 0.0
    %1255 = vmatprep.subr.mxu0 0.0
    %1256 = vmatpush1.xpose.msra.mxu0 0.0
    %1257 = vmatprep.subr.mxu0 0.0
    %1258 = vmatpush1.xpose.msra.mxu0 0.0
    %1259 = vmatprep.subr.mxu0 0.0
    %1260 = vmatpush1.xpose.msra.mxu0 0.0
    %1261 = vmatprep.subr.mxu0 0.0
    %1262 = vmatpush1.xpose.msra.mxu0 0.0
    %1263 = vmatprep.subr.mxu0 0.0
    %1264 = vmatpush1.xpose.msra.mxu0 0.0
    %1265 = vmatprep.subr.mxu0 0.0
    %1266 = vmatpush1.xpose.msra.mxu0 0.0
    %1267 = vmatprep.subr.mxu0 0.0
    %1268 = vmatpush1.xpose.msra.mxu0 0.0
    %1269 = vmatprep.subr.mxu0 0.0
    %1270 = vmatpush1.xpose.msra.mxu0 0.0
    %1271 = vmatprep.subr.mxu0 0.0
    %1272 = vmatpush1.xpose.msra.mxu0 0.0
    %1273 = vmatprep.subr.mxu0 0.0
    %1274 = vmatpush1.xpose.msra.mxu0 0.0
    %1275 = vmatprep.subr.mxu0 0.0
    %1276 = vmatpush1.xpose.msra.mxu0 0.0
    %1277 = vmatprep.subr.mxu0 0.0
    %1278 = vmatpush1.xpose.msra.mxu0 %v1245
    %1279 = vmatprep.subr.mxu0 0.0
    %1280 = vmatpush2.xpose.msra.mxu0 0.0
    %1281 = vmatprep.subr.mxu0 0.0
    %1282 = vmatpush2.xpose.msra.mxu0 0.0
    %1283 = vmatprep.subr.mxu0 0.0
    %1284 = vmatpush2.xpose.msra.mxu0 0.0
    %1285 = vmatprep.subr.mxu0 0.0
    %1286 = vmatpush2.xpose.msra.mxu0 0.0
    %1287 = vmatprep.subr.mxu0 0.0
    %1288 = vmatpush2.xpose.msra.mxu0 0.0
    %1289 = vmatprep.subr.mxu0 0.0
    %1290 = vmatpush2.xpose.msra.mxu0 0.0
    %1291 = vmatprep.subr.mxu0 0.0
    %1292 = vmatpush2.xpose.msra.mxu0 0.0
    %1293 = vmatprep.subr.mxu0 0.0
    %1294 = vmatpush2.xpose.msra.mxu0 0.0
    %1295 = vmatprep.subr.mxu0 0.0
    %1296 = vmatpush2.xpose.msra.mxu0 0.0
    %1297 = vmatprep.subr.mxu0 0.0
    %1298 = vmatpush2.xpose.msra.mxu0 0.0
    %1299 = vmatprep.subr.mxu0 0.0
    %1300 = vmatpush2.xpose.msra.mxu0 0.0
    %1301 = vmatprep.subr.mxu0 0.0
    %1302 = vmatpush2.xpose.msra.mxu0 0.0
    %1303 = vmatprep.subr.mxu0 0.0
    %1304 = vmatpush2.xpose.msra.mxu0 0.0
    %1305 = vmatprep.subr.mxu0 0.0
    %1306 = vmatpush2.xpose.msra.mxu0 0.0
    %1307 = vmatprep.subr.mxu0 0.0
    %1308 = vmatpush2.xpose.msra.mxu0 0.0
    %1309 = vmatprep.subr.mxu0 0.0
    %1310 = vmatpush2.xpose.msra.mxu0 0.0
    %1311 = vmatprep.mubr.f32.mxu0 0.0
    %1312 = vmatmul.mubr.f32.gmra.mxu0 %v1243
    %v1313 = vpop.f32.mrf.mxu0
    %v1314 = vadd.f32 0.0, %v1313
    %v1315 = vpop.f32.mrf.mxu0
    %1316 = vdwg.mxu0
    %1317 = vrot.lane.b32.xlu0 %v225, 104
    %v1318 = vpop.permute.xlu0 %1317
    %1319 = vrot.lane.b32.xlu0 %v225, 72
    %v1320 = vpop.permute.xlu0 %1319
    %v1321 = vsel %vm231, %v1318, 0
    %v1323 = vsel %vm231, %v1320, 0
    %1325 = vmatprep.subr.mxu0 0.0
    %1326 = vmatpush1.xpose.msra.mxu0 0.0
    %1327 = vmatprep.subr.mxu0 0.0
    %1328 = vmatpush1.xpose.msra.mxu0 0.0
    %1329 = vmatprep.subr.mxu0 0.0
    %1330 = vmatpush1.xpose.msra.mxu0 0.0
    %1331 = vmatprep.subr.mxu0 0.0
    %1332 = vmatpush1.xpose.msra.mxu0 0.0
    %1333 = vmatprep.subr.mxu0 0.0
    %1334 = vmatpush1.xpose.msra.mxu0 0.0
    %1335 = vmatprep.subr.mxu0 0.0
    %1336 = vmatpush1.xpose.msra.mxu0 0.0
    %1337 = vmatprep.subr.mxu0 0.0
    %1338 = vmatpush1.xpose.msra.mxu0 0.0
    %1339 = vmatprep.subr.mxu0 0.0
    %1340 = vmatpush1.xpose.msra.mxu0 0.0
    %1341 = vmatprep.subr.mxu0 0.0
    %1342 = vmatpush1.xpose.msra.mxu0 0.0
    %1343 = vmatprep.subr.mxu0 0.0
    %1344 = vmatpush1.xpose.msra.mxu0 0.0
    %1345 = vmatprep.subr.mxu0 0.0
    %1346 = vmatpush1.xpose.msra.mxu0 0.0
    %1347 = vmatprep.subr.mxu0 0.0
    %1348 = vmatpush1.xpose.msra.mxu0 0.0
    %1349 = vmatprep.subr.mxu0 0.0
    %1350 = vmatpush1.xpose.msra.mxu0 0.0
    %1351 = vmatprep.subr.mxu0 0.0
    %1352 = vmatpush1.xpose.msra.mxu0 0.0
    %1353 = vmatprep.subr.mxu0 0.0
    %1354 = vmatpush1.xpose.msra.mxu0 0.0
    %1355 = vmatprep.subr.mxu0 0.0
    %1356 = vmatpush1.xpose.msra.mxu0 %v1323
    %1357 = vmatprep.subr.mxu0 0.0
    %1358 = vmatpush2.xpose.msra.mxu0 0.0
    %1359 = vmatprep.subr.mxu0 0.0
    %1360 = vmatpush2.xpose.msra.mxu0 0.0
    %1361 = vmatprep.subr.mxu0 0.0
    %1362 = vmatpush2.xpose.msra.mxu0 0.0
    %1363 = vmatprep.subr.mxu0 0.0
    %1364 = vmatpush2.xpose.msra.mxu0 0.0
    %1365 = vmatprep.subr.mxu0 0.0
    %1366 = vmatpush2.xpose.msra.mxu0 0.0
    %1367 = vmatprep.subr.mxu0 0.0
    %1368 = vmatpush2.xpose.msra.mxu0 0.0
    %1369 = vmatprep.subr.mxu0 0.0
    %1370 = vmatpush2.xpose.msra.mxu0 0.0
    %1371 = vmatprep.subr.mxu0 0.0
    %1372 = vmatpush2.xpose.msra.mxu0 0.0
    %1373 = vmatprep.subr.mxu0 0.0
    %1374 = vmatpush2.xpose.msra.mxu0 0.0
    %1375 = vmatprep.subr.mxu0 0.0
    %1376 = vmatpush2.xpose.msra.mxu0 0.0
    %1377 = vmatprep.subr.mxu0 0.0
    %1378 = vmatpush2.xpose.msra.mxu0 0.0
    %1379 = vmatprep.subr.mxu0 0.0
    %1380 = vmatpush2.xpose.msra.mxu0 0.0
    %1381 = vmatprep.subr.mxu0 0.0
    %1382 = vmatpush2.xpose.msra.mxu0 0.0
    %1383 = vmatprep.subr.mxu0 0.0
    %1384 = vmatpush2.xpose.msra.mxu0 0.0
    %1385 = vmatprep.subr.mxu0 0.0
    %1386 = vmatpush2.xpose.msra.mxu0 0.0
    %1387 = vmatprep.subr.mxu0 0.0
    %1388 = vmatpush2.xpose.msra.mxu0 0.0
    %1389 = vmatprep.mubr.f32.mxu0 0.0
    %1390 = vmatmul.mubr.f32.gmra.mxu0 %v1321
    %v1391 = vpop.f32.mrf.mxu0
    %v1392 = vadd.f32 0.0, %v1391
    %v1393 = vpop.f32.mrf.mxu0
    %1394 = vdwg.mxu0
    %v1395 = vmul.f32 %v1314, 0.35355338
    %v1396 = vmul.f32 %v1392, 0.35355338
    %v1397 = vadd.f32 %v1395, %v388
    %v1398 = vadd.f32 %v1396, %v392
    %v1399 = vsel %vm231, %v1397, -inf
    %1400 = vmax.xlane.f32.xlu0 %v1399
    %v1401 = vpop.xlane.xlu0 %1400
    %v1402 = vsel %vm231, %v1398, -inf
    %1403 = vmax.xlane.f32.xlu0 %v1402
    %v1404 = vpop.xlane.xlu0 %1403
    %v1405 = vsub.f32 %v1397, %v1401
    %v1406 = vsub.f32 %v1398, %v1404
    %v1407 = vmul.f32 %v1405, 1.442695
    %v1408 = vpow.pop %v1407
    %v1409 = vmul.f32 %v1406, 1.442695
    %v1410 = vpow.pop %v1409
    %v1411 = vsel %vm231, %v1408, 0.0
    %1412 = vadd.xlane.f32.xlu0 %v1411
    %v1413 = vpop.xlane.xlu0 %1412
    %v1414 = vsel %vm231, %v1410, 0.0
    %1415 = vadd.xlane.f32.xlu0 %v1414
    %v1416 = vpop.xlane.xlu0 %1415
    %v1417 = vrcp.pop %v1413
    %v1418 = vmul.f32 %v1408, %v1417
    %v1419 = vrcp.pop %v1416
    %v1420 = vmul.f32 %v1410, %v1419
    %1421 = vrot.lane.b32.xlu0 %v220, 40
    %v1422 = vpop.permute.xlu0 %1421
    %v1425 = vsel %vm231, %v1418, 0
    %1427 = vmatprep.subr.mxu0 0.0
    %1428 = vmatpush1.msra.mxu0 0.0
    %1429 = vmatprep.subr.mxu0 0.0
    %1430 = vmatpush1.msra.mxu0 0.0
    %1431 = vmatprep.subr.mxu0 0.0
    %1432 = vmatpush1.msra.mxu0 0.0
    %1433 = vmatprep.subr.mxu0 0.0
    %1434 = vmatpush1.msra.mxu0 0.0
    %1435 = vmatprep.subr.mxu0 0.0
    %1436 = vmatpush1.msra.mxu0 0.0
    %1437 = vmatprep.subr.mxu0 0.0
    %1438 = vmatpush1.msra.mxu0 0.0
    %1439 = vmatprep.subr.mxu0 0.0
    %1440 = vmatpush1.msra.mxu0 0.0
    %1441 = vmatprep.subr.mxu0 0.0
    %1442 = vmatpush1.msra.mxu0 0.0
    %1443 = vmatprep.subr.mxu0 0.0
    %1444 = vmatpush1.msra.mxu0 0.0
    %1445 = vmatprep.subr.mxu0 0.0
    %1446 = vmatpush1.msra.mxu0 0.0
    %1447 = vmatprep.subr.mxu0 0.0
    %1448 = vmatpush1.msra.mxu0 0.0
    %1449 = vmatprep.subr.mxu0 0.0
    %1450 = vmatpush1.msra.mxu0 0.0
    %1451 = vmatprep.subr.mxu0 0.0
    %1452 = vmatpush1.msra.mxu0 0.0
    %1453 = vmatprep.subr.mxu0 0.0
    %1454 = vmatpush1.msra.mxu0 0.0
    %1455 = vmatprep.subr.mxu0 0.0
    %1456 = vmatpush1.msra.mxu0 0.0
    %1457 = vmatprep.subr.mxu0 0.0
    %1458 = vmatpush1.msra.mxu0 %v1422
    %1459 = vmatprep.subr.mxu0 0.0
    %1460 = vmatpush2.msra.mxu0 0.0
    %1461 = vmatprep.subr.mxu0 0.0
    %1462 = vmatpush2.msra.mxu0 0.0
    %1463 = vmatprep.subr.mxu0 0.0
    %1464 = vmatpush2.msra.mxu0 0.0
    %1465 = vmatprep.subr.mxu0 0.0
    %1466 = vmatpush2.msra.mxu0 0.0
    %1467 = vmatprep.subr.mxu0 0.0
    %1468 = vmatpush2.msra.mxu0 0.0
    %1469 = vmatprep.subr.mxu0 0.0
    %1470 = vmatpush2.msra.mxu0 0.0
    %1471 = vmatprep.subr.mxu0 0.0
    %1472 = vmatpush2.msra.mxu0 0.0
    %1473 = vmatprep.subr.mxu0 0.0
    %1474 = vmatpush2.msra.mxu0 0.0
    %1475 = vmatprep.subr.mxu0 0.0
    %1476 = vmatpush2.msra.mxu0 0.0
    %1477 = vmatprep.subr.mxu0 0.0
    %1478 = vmatpush2.msra.mxu0 0.0
    %1479 = vmatprep.subr.mxu0 0.0
    %1480 = vmatpush2.msra.mxu0 0.0
    %1481 = vmatprep.subr.mxu0 0.0
    %1482 = vmatpush2.msra.mxu0 0.0
    %1483 = vmatprep.subr.mxu0 0.0
    %1484 = vmatpush2.msra.mxu0 0.0
    %1485 = vmatprep.subr.mxu0 0.0
    %1486 = vmatpush2.msra.mxu0 0.0
    %1487 = vmatprep.subr.mxu0 0.0
    %1488 = vmatpush2.msra.mxu0 0.0
    %1489 = vmatprep.subr.mxu0 0.0
    %1490 = vmatpush2.msra.mxu0 0.0
    %1491 = vmatprep.mubr.f32.mxu0 0.0
    %1492 = vmatmul.mubr.f32.gmra.mxu0 %v1425
    %v1493 = vpop.f32.mrf.mxu0
    %v1494 = vadd.f32 0.0, %v1493
    %v1495 = vpop.f32.mrf.mxu0
    %1496 = vdwg.mxu0
    %1497 = vrot.lane.b32.xlu0 %v225, 40
    %v1498 = vpop.permute.xlu0 %1497
    %v1501 = vsel %vm231, %v1420, 0
    %1503 = vmatprep.subr.mxu0 0.0
    %1504 = vmatpush1.msra.mxu0 0.0
    %1505 = vmatprep.subr.mxu0 0.0
    %1506 = vmatpush1.msra.mxu0 0.0
    %1507 = vmatprep.subr.mxu0 0.0
    %1508 = vmatpush1.msra.mxu0 0.0
    %1509 = vmatprep.subr.mxu0 0.0
    %1510 = vmatpush1.msra.mxu0 0.0
    %1511 = vmatprep.subr.mxu0 0.0
    %1512 = vmatpush1.msra.mxu0 0.0
    %1513 = vmatprep.subr.mxu0 0.0
    %1514 = vmatpush1.msra.mxu0 0.0
    %1515 = vmatprep.subr.mxu0 0.0
    %1516 = vmatpush1.msra.mxu0 0.0
    %1517 = vmatprep.subr.mxu0 0.0
    %1518 = vmatpush1.msra.mxu0 0.0
    %1519 = vmatprep.subr.mxu0 0.0
    %1520 = vmatpush1.msra.mxu0 0.0
    %1521 = vmatprep.subr.mxu0 0.0
    %1522 = vmatpush1.msra.mxu0 0.0
    %1523 = vmatprep.subr.mxu0 0.0
    %1524 = vmatpush1.msra.mxu0 0.0
    %1525 = vmatprep.subr.mxu0 0.0
    %1526 = vmatpush1.msra.mxu0 0.0
    %1527 = vmatprep.subr.mxu0 0.0
    %1528 = vmatpush1.msra.mxu0 0.0
    %1529 = vmatprep.subr.mxu0 0.0
    %1530 = vmatpush1.msra.mxu0 0.0
    %1531 = vmatprep.subr.mxu0 0.0
    %1532 = vmatpush1.msra.mxu0 0.0
    %1533 = vmatprep.subr.mxu0 0.0
    %1534 = vmatpush1.msra.mxu0 %v1498
    %1535 = vmatprep.subr.mxu0 0.0
    %1536 = vmatpush2.msra.mxu0 0.0
    %1537 = vmatprep.subr.mxu0 0.0
    %1538 = vmatpush2.msra.mxu0 0.0
    %1539 = vmatprep.subr.mxu0 0.0
    %1540 = vmatpush2.msra.mxu0 0.0
    %1541 = vmatprep.subr.mxu0 0.0
    %1542 = vmatpush2.msra.mxu0 0.0
    %1543 = vmatprep.subr.mxu0 0.0
    %1544 = vmatpush2.msra.mxu0 0.0
    %1545 = vmatprep.subr.mxu0 0.0
    %1546 = vmatpush2.msra.mxu0 0.0
    %1547 = vmatprep.subr.mxu0 0.0
    %1548 = vmatpush2.msra.mxu0 0.0
    %1549 = vmatprep.subr.mxu0 0.0
    %1550 = vmatpush2.msra.mxu0 0.0
    %1551 = vmatprep.subr.mxu0 0.0
    %1552 = vmatpush2.msra.mxu0 0.0
    %1553 = vmatprep.subr.mxu0 0.0
    %1554 = vmatpush2.msra.mxu0 0.0
    %1555 = vmatprep.subr.mxu0 0.0
    %1556 = vmatpush2.msra.mxu0 0.0
    %1557 = vmatprep.subr.mxu0 0.0
    %1558 = vmatpush2.msra.mxu0 0.0
    %1559 = vmatprep.subr.mxu0 0.0
    %1560 = vmatpush2.msra.mxu0 0.0
    %1561 = vmatprep.subr.mxu0 0.0
    %1562 = vmatpush2.msra.mxu0 0.0
    %1563 = vmatprep.subr.mxu0 0.0
    %1564 = vmatpush2.msra.mxu0 0.0
    %1565 = vmatprep.subr.mxu0 0.0
    %1566 = vmatpush2.msra.mxu0 0.0
    %1567 = vmatprep.mubr.f32.mxu0 0.0
    %1568 = vmatmul.mubr.f32.gmra.mxu0 %v1501
    %v1569 = vpop.f32.mrf.mxu0
    %v1570 = vadd.f32 0.0, %v1569
    %v1571 = vpop.f32.mrf.mxu0
    %1572 = vdwg.mxu0
    %1575 = vrot.lane.b32.xlu0 %v826, 8
    %v1576 = vpop.permute.xlu0 %1575
    %1577 = vrot.lane.b32.xlu0 %v902, 8
    %v1578 = vpop.permute.xlu0 %1577
    %1583 = vrot.lane.b32.xlu0 %v1160, 16
    %v1584 = vpop.permute.xlu0 %1583
    %1585 = vrot.lane.b32.xlu0 %v1236, 16
    %v1586 = vpop.permute.xlu0 %1585
    %1591 = vrot.lane.b32.xlu0 %v1494, 24
    %v1592 = vpop.permute.xlu0 %1591
    %1593 = vrot.lane.b32.xlu0 %v1570, 24
    %v1594 = vpop.permute.xlu0 %1593
    %v1597 = vsel %vm231, %v492, %v1576
    %v1598 = vsel %vm231, %v568, %v1578
    %vm1599 = vcmask 130048
    %v1600 = vsel %vm1599, %v1597, %v1584
    %v1601 = vsel %vm1599, %v1598, %v1586
    %vm1602 = vcmask 195584
    %v1603 = vsel %vm1602, %v1600, %v1592
    %v1604 = vsel %vm1602, %v1601, %v1594
    %v1605 = vld [vmem:[%s5] sm:$0xff]
    %v1606 = vld [vmem:[%s5 + $0x8] sm:$0xff]
    %v1607 = vld [vmem:[%s5 + $0x10] sm:$0xff]
    %v1608 = vld [vmem:[%s5 + $0x18] sm:$0xff]
    %v1609 = vlaneseq
    %v1610 = vshrl.u32 %v1609, 7
    %v1611 = vsub.s32 0, %v1610
    %v1612 = vrot.slane %v135, %v1611
    %v1614 = vsel %vm93, %v1603, 0
    %v1617 = vsel %vm93, %v1604, 0
    %1619 = vmatprep.subr.mxu0 0.0
    %1620 = vmatpush1.msra.mxu0 0.0
    %1621 = vmatprep.subr.mxu0 0.0
    %1622 = vmatpush1.msra.mxu0 0.0
    %1623 = vmatprep.subr.mxu0 0.0
    %1624 = vmatpush1.msra.mxu0 0.0
    %1625 = vmatprep.subr.mxu0 0.0
    %1626 = vmatpush1.msra.mxu0 0.0
    %1627 = vmatprep.subr.mxu0 0.0
    %1628 = vmatpush1.msra.mxu0 0.0
    %1629 = vmatprep.subr.mxu0 0.0
    %1630 = vmatpush1.msra.mxu0 0.0
    %1631 = vmatprep.subr.mxu0 0.0
    %1632 = vmatpush1.msra.mxu0 0.0
    %1633 = vmatprep.subr.mxu0 0.0
    %1634 = vmatpush1.msra.mxu0 0.0
    %1635 = vmatprep.subr.mxu0 0.0
    %1636 = vmatpush1.msra.mxu0 0.0
    %1637 = vmatprep.subr.mxu0 0.0
    %1638 = vmatpush1.msra.mxu0 0.0
    %1639 = vmatprep.subr.mxu0 0.0
    %1640 = vmatpush1.msra.mxu0 0.0
    %1641 = vmatprep.subr.mxu0 0.0
    %1642 = vmatpush1.msra.mxu0 0.0
    %1643 = vmatprep.subr.mxu0 0.0
    %1644 = vmatpush1.msra.mxu0 %v1608
    %1645 = vmatprep.subr.mxu0 0.0
    %1646 = vmatpush1.msra.mxu0 %v1607
    %1647 = vmatprep.subr.mxu0 0.0
    %1648 = vmatpush1.msra.mxu0 %v1606
    %1649 = vmatprep.subr.mxu0 0.0
    %1650 = vmatpush1.msra.mxu0 %v1605
    %1651 = vmatprep.subr.mxu0 0.0
    %1652 = vmatpush2.msra.mxu0 0.0
    %1653 = vmatprep.subr.mxu0 0.0
    %1654 = vmatpush2.msra.mxu0 0.0
    %1655 = vmatprep.subr.mxu0 0.0
    %1656 = vmatpush2.msra.mxu0 0.0
    %1657 = vmatprep.subr.mxu0 0.0
    %1658 = vmatpush2.msra.mxu0 0.0
    %1659 = vmatprep.subr.mxu0 0.0
    %1660 = vmatpush2.msra.mxu0 0.0
    %1661 = vmatprep.subr.mxu0 0.0
    %1662 = vmatpush2.msra.mxu0 0.0
    %1663 = vmatprep.subr.mxu0 0.0
    %1664 = vmatpush2.msra.mxu0 0.0
    %1665 = vmatprep.subr.mxu0 0.0
    %1666 = vmatpush2.msra.mxu0 0.0
    %1667 = vmatprep.subr.mxu0 0.0
    %1668 = vmatpush2.msra.mxu0 0.0
    %1669 = vmatprep.subr.mxu0 0.0
    %1670 = vmatpush2.msra.mxu0 0.0
    %1671 = vmatprep.subr.mxu0 0.0
    %1672 = vmatpush2.msra.mxu0 0.0
    %1673 = vmatprep.subr.mxu0 0.0
    %1674 = vmatpush2.msra.mxu0 0.0
    %1675 = vmatprep.subr.mxu0 0.0
    %1676 = vmatpush2.msra.mxu0 0.0
    %1677 = vmatprep.subr.mxu0 0.0
    %1678 = vmatpush2.msra.mxu0 0.0
    %1679 = vmatprep.subr.mxu0 0.0
    %1680 = vmatpush2.msra.mxu0 0.0
    %1681 = vmatprep.subr.mxu0 0.0
    %1682 = vmatpush2.msra.mxu0 0.0
    %1683 = vmatprep.mubr.f32.mxu0 0.0
    %1684 = vmatmul.mubr.f32.gmra.mxu0 %v1614
    %v1685 = vpop.f32.mrf.mxu0
    %v1686 = vadd.f32 %v1612, %v1685
    %v1687 = vpop.f32.mrf.mxu0
    %1688 = vmatprep.mubr.f32.mxu0 0.0
    %1689 = vmatmul.mubr.f32.gmra.mxu0 %v1617
    %v1690 = vpop.f32.mrf.mxu0
    %v1691 = vadd.f32 %v1612, %v1690
    %v1692 = vpop.f32.mrf.mxu0
    %1693 = vdwg.mxu0
    %v1694 = vadd.f32 %v1686, %v131
    %v1695 = vadd.f32 %v1691, %v132
    %v1696 = vsel %vm93, %v1694, 0.0
    %1697 = vadd.xlane.f32.xlu0 %v1696
    %v1698 = vpop.xlane.xlu0 %1697
    %v1699 = vsel %vm93, %v1695, 0.0
    %1700 = vadd.xlane.f32.xlu0 %v1699
    %v1701 = vpop.xlane.xlu0 %1700
    %v1702 = vmul.f32 %v1698, %v100
    %v1703 = vmul.f32 %v1701, %v100
    %v1704 = vsub.f32 %v1694, %v1702
    %v1705 = vsub.f32 %v1695, %v1703
    %v1706 = vmul.f32 %v1704, %v1704
    %v1707 = vmul.f32 %v1705, %v1705
    %v1708 = vsel %vm93, %v1706, 0.0
    %1709 = vadd.xlane.f32.xlu0 %v1708
    %v1710 = vpop.xlane.xlu0 %1709
    %v1711 = vsel %vm93, %v1707, 0.0
    %1712 = vadd.xlane.f32.xlu0 %v1711
    %v1713 = vpop.xlane.xlu0 %1712
    %v1714 = vmul.f32 %v1710, %v100
    %v1715 = vmul.f32 %v1713, %v100
    %v1716 = vadd.f32 %v1714, 1e-12
    %v1717 = vadd.f32 %v1715, 1e-12
    %v1718 = vrsqrt.pop %v1716
    %v1719 = vrsqrt.pop %v1717
    %v1720 = vmul.f32 %v1704, %v1718
    %v1721 = vmul.f32 %v1705, %v1719
    %v1722 = vlaneseq
    %v1723 = vshrl.u32 %v1722, 7
    %v1724 = vsub.s32 1, %v1723
    %v1725 = vrot.slane %v135, %v1724
    %v1726 = vmul.f32 %v1720, %v1725
    %v1727 = vmul.f32 %v1721, %v1725
    %v1728 = vlaneseq
    %v1729 = vshrl.u32 %v1728, 7
    %v1730 = vsub.s32 2, %v1729
    %v1731 = vrot.slane %v135, %v1730
    %v1732 = vadd.f32 %v1726, %v1731
    %v1733 = vadd.f32 %v1727, %v1731
    %v1734 = vld [vmem:[%s6] sm:$0xff]
    %v1735 = vld [vmem:[%s6 + $0x8] sm:$0xff]
    %v1736 = vld [vmem:[%s6 + $0x10] sm:$0xff]
    %v1737 = vld [vmem:[%s6 + $0x18] sm:$0xff]
    %v1738 = vld [vmem:[%s7] sm:$0x1]
    %v1740 = vlaneseq
    %v1741 = vshrl.u32 %v1740, 7
    %v1742 = vsub.s32 0, %v1741
    %v1743 = vrot.slane %v1738, %v1742
    %v1746 = vsel %vm93, %v1732, 0
    %v1749 = vsel %vm93, %v1733, 0
    %1751 = vmatprep.subr.mxu0 0.0
    %1752 = vmatpush1.msra.mxu0 0.0
    %1753 = vmatprep.subr.mxu0 0.0
    %1754 = vmatpush1.msra.mxu0 0.0
    %1755 = vmatprep.subr.mxu0 0.0
    %1756 = vmatpush1.msra.mxu0 0.0
    %1757 = vmatprep.subr.mxu0 0.0
    %1758 = vmatpush1.msra.mxu0 0.0
    %1759 = vmatprep.subr.mxu0 0.0
    %1760 = vmatpush1.msra.mxu0 0.0
    %1761 = vmatprep.subr.mxu0 0.0
    %1762 = vmatpush1.msra.mxu0 0.0
    %1763 = vmatprep.subr.mxu0 0.0
    %1764 = vmatpush1.msra.mxu0 0.0
    %1765 = vmatprep.subr.mxu0 0.0
    %1766 = vmatpush1.msra.mxu0 0.0
    %1767 = vmatprep.subr.mxu0 0.0
    %1768 = vmatpush1.msra.mxu0 0.0
    %1769 = vmatprep.subr.mxu0 0.0
    %1770 = vmatpush1.msra.mxu0 0.0
    %1771 = vmatprep.subr.mxu0 0.0
    %1772 = vmatpush1.msra.mxu0 0.0
    %1773 = vmatprep.subr.mxu0 0.0
    %1774 = vmatpush1.msra.mxu0 0.0
    %1775 = vmatprep.subr.mxu0 0.0
    %1776 = vmatpush1.msra.mxu0 %v1737
    %1777 = vmatprep.subr.mxu0 0.0
    %1778 = vmatpush1.msra.mxu0 %v1736
    %1779 = vmatprep.subr.mxu0 0.0
    %1780 = vmatpush1.msra.mxu0 %v1735
    %1781 = vmatprep.subr.mxu0 0.0
    %1782 = vmatpush1.msra.mxu0 %v1734
    %1783 = vmatprep.subr.mxu0 0.0
    %1784 = vmatpush2.msra.mxu0 0.0
    %1785 = vmatprep.subr.mxu0 0.0
    %1786 = vmatpush2.msra.mxu0 0.0
    %1787 = vmatprep.subr.mxu0 0.0
    %1788 = vmatpush2.msra.mxu0 0.0
    %1789 = vmatprep.subr.mxu0 0.0
    %1790 = vmatpush2.msra.mxu0 0.0
    %1791 = vmatprep.subr.mxu0 0.0
    %1792 = vmatpush2.msra.mxu0 0.0
    %1793 = vmatprep.subr.mxu0 0.0
    %1794 = vmatpush2.msra.mxu0 0.0
    %1795 = vmatprep.subr.mxu0 0.0
    %1796 = vmatpush2.msra.mxu0 0.0
    %1797 = vmatprep.subr.mxu0 0.0
    %1798 = vmatpush2.msra.mxu0 0.0
    %1799 = vmatprep.subr.mxu0 0.0
    %1800 = vmatpush2.msra.mxu0 0.0
    %1801 = vmatprep.subr.mxu0 0.0
    %1802 = vmatpush2.msra.mxu0 0.0
    %1803 = vmatprep.subr.mxu0 0.0
    %1804 = vmatpush2.msra.mxu0 0.0
    %1805 = vmatprep.subr.mxu0 0.0
    %1806 = vmatpush2.msra.mxu0 0.0
    %1807 = vmatprep.subr.mxu0 0.0
    %1808 = vmatpush2.msra.mxu0 0.0
    %1809 = vmatprep.subr.mxu0 0.0
    %1810 = vmatpush2.msra.mxu0 0.0
    %1811 = vmatprep.subr.mxu0 0.0
    %1812 = vmatpush2.msra.mxu0 0.0
    %1813 = vmatprep.subr.mxu0 0.0
    %1814 = vmatpush2.msra.mxu0 0.0
    %1815 = vmatprep.mubr.f32.mxu0 0.0
    %1816 = vmatmul.mubr.f32.gmra.mxu0 %v1746
    %v1817 = vpop.f32.mrf.mxu0
    %v1818 = vadd.f32 %v1743, %v1817
    %v1819 = vpop.f32.mrf.mxu0
    %1820 = vmatprep.mubr.f32.mxu0 0.0
    %1821 = vmatmul.mubr.f32.gmra.mxu0 %v1749
    %v1822 = vpop.f32.mrf.mxu0
    %v1823 = vadd.f32 %v1743, %v1822
    %v1824 = vpop.f32.mrf.mxu0
    %1825 = vdwg.mxu0
    %v1826 = vmul.f32 %v1818, 0.5
    %v1827 = vmul.f32 %v1823, 0.5
    %v1828 = vmul.f32 %v1818, 0.044715
    %v1829 = vmul.f32 %v1823, 0.044715
    %v1830 = vmul.f32 %v1828, %v1818
    %v1831 = vmul.f32 %v1829, %v1823
    %v1832 = vmul.f32 %v1830, %v1818
    %v1833 = vmul.f32 %v1831, %v1823
    %v1834 = vadd.f32 %v1818, %v1832
    %v1835 = vadd.f32 %v1823, %v1833
    %v1836 = vmul.f32 %v1834, 0.7978846
    %v1837 = vmul.f32 %v1835, 0.7978846
    %v1838 = vtanh.pop %v1836
    %v1839 = vtanh.pop %v1837
    %v1840 = vadd.f32 %v1838, 1.0
    %v1841 = vadd.f32 %v1839, 1.0
    %v1842 = vmul.f32 %v1826, %v1840
    %v1843 = vmul.f32 %v1827, %v1841
    %v1844 = vld [vmem:[%s8] sm:$0xff]
    %v1845 = vld [vmem:[%s8 + $0x8] sm:$0xff]
    %v1846 = vld [vmem:[%s8 + $0x10] sm:$0xff]
    %v1847 = vld [vmem:[%s8 + $0x18] sm:$0xff]
    %v1848 = vld [vmem:[%s8 + $0x20] sm:$0xff]
    %v1849 = vld [vmem:[%s8 + $0x28] sm:$0xff]
    %v1850 = vld [vmem:[%s8 + $0x30] sm:$0xff]
    %v1851 = vld [vmem:[%s8 + $0x38] sm:$0xff]
    %v1852 = vlaneseq
    %v1853 = vshrl.u32 %v1852, 7
    %v1854 = vsub.s32 3, %v1853
    %v1855 = vrot.slane %v135, %v1854
    %vm1856 = vcmask 523264
    %v1858 = vsel %vm1856, %v1842, 0
    %v1861 = vsel %vm1856, %v1843, 0
    %1863 = vmatprep.subr.mxu0 0.0
    %1864 = vmatpush1.msra.mxu0 0.0
    %1865 = vmatprep.subr.mxu0 0.0
    %1866 = vmatpush1.msra.mxu0 0.0
    %1867 = vmatprep.subr.mxu0 0.0
    %1868 = vmatpush1.msra.mxu0 0.0
    %1869 = vmatprep.subr.mxu0 0.0
    %1870 = vmatpush1.msra.mxu0 0.0
    %1871 = vmatprep.subr.mxu0 0.0
    %1872 = vmatpush1.msra.mxu0 0.0
    %1873 = vmatprep.subr.mxu0 0.0
    %1874 = vmatpush1.msra.mxu0 0.0
    %1875 = vmatprep.subr.mxu0 0.0
    %1876 = vmatpush1.msra.mxu0 0.0
    %1877 = vmatprep.subr.mxu0 0.0
    %1878 = vmatpush1.msra.mxu0 0.0
    %1879 = vmatprep.subr.mxu0 0.0
    %1880 = vmatpush1.msra.mxu0 %v1851
    %1881 = vmatprep.subr.mxu0 0.0
    %1882 = vmatpush1.msra.mxu0 %v1850
    %1883 = vmatprep.subr.mxu0 0.0
    %1884 = vmatpush1.msra.mxu0 %v1849
    %1885 = vmatprep.subr.mxu0 0.0
    %1886 = vmatpush1.msra.mxu0 %v1848
    %1887 = vmatprep.subr.mxu0 0.0
    %1888 = vmatpush1.msra.mxu0 %v1847
    %1889 = vmatprep.subr.mxu0 0.0
    %1890 = vmatpush1.msra.mxu0 %v1846
    %1891 = vmatprep.subr.mxu0 0.0
    %1892 = vmatpush1.msra.mxu0 %v1845
    %1893 = vmatprep.subr.mxu0 0.0
    %1894 = vmatpush1.msra.mxu0 %v1844
    %1895 = vmatprep.subr.mxu0 0.0
    %1896 = vmatpush2.msra.mxu0 0.0
    %1897 = vmatprep.subr.mxu0 0.0
    %1898 = vmatpush2.msra.mxu0 0.0
    %1899 = vmatprep.subr.mxu0 0.0
    %1900 = vmatpush2.msra.mxu0 0.0
    %1901 = vmatprep.subr.mxu0 0.0
    %1902 = vmatpush2.msra.mxu0 0.0
    %1903 = vmatprep.subr.mxu0 0.0
    %1904 = vmatpush2.msra.mxu0 0.0
    %1905 = vmatprep.subr.mxu0 0.0
    %1906 = vmatpush2.msra.mxu0 0.0
    %1907 = vmatprep.subr.mxu0 0.0
    %1908 = vmatpush2.msra.mxu0 0.0
    %1909 = vmatprep.subr.mxu0 0.0
    %1910 = vmatpush2.msra.mxu0 0.0
    %1911 = vmatprep.subr.mxu0 0.0
    %1912 = vmatpush2.msra.mxu0 0.0
    %1913 = vmatprep.subr.mxu0 0.0
    %1914 = vmatpush2.msra.mxu0 0.0
    %1915 = vmatprep.subr.mxu0 0.0
    %1916 = vmatpush2.msra.mxu0 0.0
    %1917 = vmatprep.subr.mxu0 0.0
    %1918 = vmatpush2.msra.mxu0 0.0
    %1919 = vmatprep.subr.mxu0 0.0
    %1920 = vmatpush2.msra.mxu0 0.0
    %1921 = vmatprep.subr.mxu0 0.0
    %1922 = vmatpush2.msra.mxu0 0.0
    %1923 = vmatprep.subr.mxu0 0.0
    %1924 = vmatpush2.msra.mxu0 0.0
    %1925 = vmatprep.subr.mxu0 0.0
    %1926 = vmatpush2.msra.mxu0 0.0
    %1927 = vmatprep.mubr.f32.mxu0 0.0
    %1928 = vmatmul.mubr.f32.gmra.mxu0 %v1858
    %v1929 = vpop.f32.mrf.mxu0
    %v1930 = vadd.f32 %v1855, %v1929
    %v1931 = vpop.f32.mrf.mxu0
    %1932 = vmatprep.mubr.f32.mxu0 0.0
    %1933 = vmatmul.mubr.f32.gmra.mxu0 %v1861
    %v1934 = vpop.f32.mrf.mxu0
    %v1935 = vadd.f32 %v1855, %v1934
    %v1936 = vpop.f32.mrf.mxu0
    %1937 = vdwg.mxu0
    %v1938 = vadd.f32 %v1930, %v1732
    %v1939 = vadd.f32 %v1935, %v1733
    %v1940 = vsel %vm93, %v1938, 0.0
    %1941 = vadd.xlane.f32.xlu0 %v1940
    %v1942 = vpop.xlane.xlu0 %1941
    %v1943 = vsel %vm93, %v1939, 0.0
    %1944 = vadd.xlane.f32.xlu0 %v1943
    %v1945 = vpop.xlane.xlu0 %1944
    %v1946 = vmul.f32 %v1942, %v100
    %v1947 = vmul.f32 %v1945, %v100
    %v1948 = vsub.f32 %v1938, %v1946
    %v1949 = vsub.f32 %v1939, %v1947
    %v1950 = vmul.f32 %v1948, %v1948
    %v1951 = vmul.f32 %v1949, %v1949
    %v1952 = vsel %vm93, %v1950, 0.0
    %1953 = vadd.xlane.f32.xlu0 %v1952
    %v1954 = vpop.xlane.xlu0 %1953
    %v1955 = vsel %vm93, %v1951, 0.0
    %1956 = vadd.xlane.f32.xlu0 %v1955
    %v1957 = vpop.xlane.xlu0 %1956
    %v1958 = vmul.f32 %v1954, %v100
    %v1959 = vmul.f32 %v1957, %v100
    %v1960 = vadd.f32 %v1958, 1e-12
    %v1961 = vadd.f32 %v1959, 1e-12
    %v1962 = vrsqrt.pop %v1960
    %v1963 = vrsqrt.pop %v1961
    %v1964 = vmul.f32 %v1948, %v1962
    %v1965 = vmul.f32 %v1949, %v1963
    %v1966 = vlaneseq
    %v1967 = vshrl.u32 %v1966, 7
    %v1968 = vsub.s32 4, %v1967
    %v1969 = vrot.slane %v135, %v1968
    %v1970 = vmul.f32 %v1964, %v1969
    %v1971 = vmul.f32 %v1965, %v1969
    %v1972 = vlaneseq
    %v1973 = vshrl.u32 %v1972, 7
    %v1974 = vsub.s32 5, %v1973
    %v1975 = vrot.slane %v135, %v1974
    %v1976 = vadd.f32 %v1970, %v1975
    %v1977 = vadd.f32 %v1971, %v1975
    %s1978 = scalar_lea.vmem %s13, 16
    %1979 = vst.msk [vmem:[%s1978] sm:$0xff] %vm93, %v1976
    %1980 = vst.msk [vmem:[%s1978 + $0x8] sm:$0xff] %vm93, %v1977
    %s1981 = scalar_lea.vmem %s9, 8
    %v1982 = vld [vmem:[%s1981] sm:$0x3f]
    %s1983 = scalar_lea.vmem %s3, 32
    %v1984 = vld [vmem:[%s1983] sm:$0xff]
    %v1985 = vld [vmem:[%s1983 + $0x8] sm:$0xff]
    %v1986 = vld [vmem:[%s1983 + $0x10] sm:$0xff]
    %v1987 = vld [vmem:[%s1983 + $0x18] sm:$0xff]
    %s1988 = scalar_lea.vmem %s4, 1
    %v1989 = vld [vmem:[%s1988] sm:$0x1]
    %v1991 = vlaneseq
    %v1992 = vshrl.u32 %v1991, 7
    %v1993 = vsub.s32 0, %v1992
    %v1994 = vrot.slane %v1989, %v1993
    %v1997 = vsel %vm93, %v1976, 0
    %v2000 = vsel %vm93, %v1977, 0
    %2002 = vmatprep.subr.mxu0 0.0
    %2003 = vmatpush1.msra.mxu0 0.0
    %2004 = vmatprep.subr.mxu0 0.0
    %2005 = vmatpush1.msra.mxu0 0.0
    %2006 = vmatprep.subr.mxu0 0.0
    %2007 = vmatpush1.msra.mxu0 0.0
    %2008 = vmatprep.subr.mxu0 0.0
    %2009 = vmatpush1.msra.mxu0 0.0
    %2010 = vmatprep.subr.mxu0 0.0
    %2011 = vmatpush1.msra.mxu0 0.0
    %2012 = vmatprep.subr.mxu0 0.0
    %2013 = vmatpush1.msra.mxu0 0.0
    %2014 = vmatprep.subr.mxu0 0.0
    %2015 = vmatpush1.msra.mxu0 0.0
    %2016 = vmatprep.subr.mxu0 0.0
    %2017 = vmatpush1.msra.mxu0 0.0
    %2018 = vmatprep.subr.mxu0 0.0
    %2019 = vmatpush1.msra.mxu0 0.0
    %2020 = vmatprep.subr.mxu0 0.0
    %2021 = vmatpush1.msra.mxu0 0.0
    %2022 = vmatprep.subr.mxu0 0.0
    %2023 = vmatpush1.msra.mxu0 0.0
    %2024 = vmatprep.subr.mxu0 0.0
    %2025 = vmatpush1.msra.mxu0 0.0
    %2026 = vmatprep.subr.mxu0 0.0
    %2027 = vmatpush1.msra.mxu0 %v1987
    %2028 = vmatprep.subr.mxu0 0.0
    %2029 = vmatpush1.msra.mxu0 %v1986
    %2030 = vmatprep.subr.mxu0 0.0
    %2031 = vmatpush1.msra.mxu0 %v1985
    %2032 = vmatprep.subr.mxu0 0.0
    %2033 = vmatpush1.msra.mxu0 %v1984
    %2034 = vmatprep.subr.mxu0 0.0
    %2035 = vmatpush2.msra.mxu0 0.0
    %2036 = vmatprep.subr.mxu0 0.0
    %2037 = vmatpush2.msra.mxu0 0.0
    %2038 = vmatprep.subr.mxu0 0.0
    %2039 = vmatpush2.msra.mxu0 0.0
    %2040 = vmatprep.subr.mxu0 0.0
    %2041 = vmatpush2.msra.mxu0 0.0
    %2042 = vmatprep.subr.mxu0 0.0
    %2043 = vmatpush2.msra.mxu0 0.0
    %2044 = vmatprep.subr.mxu0 0.0
    %2045 = vmatpush2.msra.mxu0 0.0
    %2046 = vmatprep.subr.mxu0 0.0
    %2047 = vmatpush2.msra.mxu0 0.0
    %2048 = vmatprep.subr.mxu0 0.0
    %2049 = vmatpush2.msra.mxu0 0.0
    %2050 = vmatprep.subr.mxu0 0.0
    %2051 = vmatpush2.msra.mxu0 0.0
    %2052 = vmatprep.subr.mxu0 0.0
    %2053 = vmatpush2.msra.mxu0 0.0
    %2054 = vmatprep.subr.mxu0 0.0
    %2055 = vmatpush2.msra.mxu0 0.0
    %2056 = vmatprep.subr.mxu0 0.0
    %2057 = vmatpush2.msra.mxu0 0.0
    %2058 = vmatprep.subr.mxu0 0.0
    %2059 = vmatpush2.msra.mxu0 0.0
    %2060 = vmatprep.subr.mxu0 0.0
    %2061 = vmatpush2.msra.mxu0 0.0
    %2062 = vmatprep.subr.mxu0 0.0
    %2063 = vmatpush2.msra.mxu0 0.0
    %2064 = vmatprep.subr.mxu0 0.0
    %2065 = vmatpush2.msra.mxu0 0.0
    %2066 = vmatprep.mubr.f32.mxu0 0.0
    %2067 = vmatmul.mubr.f32.gmra.mxu0 %v1997
    %v2068 = vpop.f32.mrf.mxu0
    %v2069 = vadd.f32 %v1994, %v2068
    %v2070 = vpop.f32.mrf.mxu0
    %2071 = vmatprep.mubr.f32.mxu0 0.0
    %2072 = vmatmul.mubr.f32.gmra.mxu0 %v2000
    %v2073 = vpop.f32.mrf.mxu0
    %v2074 = vadd.f32 %v1994, %v2073
    %v2075 = vpop.f32.mrf.mxu0
    %2076 = vdwg.mxu0
    %2078 = vrot.lane.b32.xlu0 %v2069, 96
    %v2079 = vpop.permute.xlu0 %2078
    %v2080 = vsel %vm231, %v2069, 0
    %v2082 = vsel %vm231, %v2079, 0
    %2084 = vmatprep.subr.mxu0 0.0
    %2085 = vmatpush1.xpose.msra.mxu0 0.0
    %2086 = vmatprep.subr.mxu0 0.0
    %2087 = vmatpush1.xpose.msra.mxu0 0.0
    %2088 = vmatprep.subr.mxu0 0.0
    %2089 = vmatpush1.xpose.msra.mxu0 0.0
    %2090 = vmatprep.subr.mxu0 0.0
    %2091 = vmatpush1.xpose.msra.mxu0 0.0
    %2092 = vmatprep.subr.mxu0 0.0
    %2093 = vmatpush1.xpose.msra.mxu0 0.0
    %2094 = vmatprep.subr.mxu0 0.0
    %2095 = vmatpush1.xpose.msra.mxu0 0.0
    %2096 = vmatprep.subr.mxu0 0.0
    %2097 = vmatpush1.xpose.msra.mxu0 0.0
    %2098 = vmatprep.subr.mxu0 0.0
    %2099 = vmatpush1.xpose.msra.mxu0 0.0
    %2100 = vmatprep.subr.mxu0 0.0
    %2101 = vmatpush1.xpose.msra.mxu0 0.0
    %2102 = vmatprep.subr.mxu0 0.0
    %2103 = vmatpush1.xpose.msra.mxu0 0.0
    %2104 = vmatprep.subr.mxu0 0.0
    %2105 = vmatpush1.xpose.msra.mxu0 0.0
    %2106 = vmatprep.subr.mxu0 0.0
    %2107 = vmatpush1.xpose.msra.mxu0 0.0
    %2108 = vmatprep.subr.mxu0 0.0
    %2109 = vmatpush1.xpose.msra.mxu0 0.0
    %2110 = vmatprep.subr.mxu0 0.0
    %2111 = vmatpush1.xpose.msra.mxu0 0.0
    %2112 = vmatprep.subr.mxu0 0.0
    %2113 = vmatpush1.xpose.msra.mxu0 0.0
    %2114 = vmatprep.subr.mxu0 0.0
    %2115 = vmatpush1.xpose.msra.mxu0 %v2082
    %2116 = vmatprep.subr.mxu0 0.0
    %2117 = vmatpush2.xpose.msra.mxu0 0.0
    %2118 = vmatprep.subr.mxu0 0.0
    %2119 = vmatpush2.xpose.msra.mxu0 0.0
    %2120 = vmatprep.subr.mxu0 0.0
    %2121 = vmatpush2.xpose.msra.mxu0 0.0
    %2122 = vmatprep.subr.mxu0 0.0
    %2123 = vmatpush2.xpose.msra.mxu0 0.0
    %2124 = vmatprep.subr.mxu0 0.0
    %2125 = vmatpush2.xpose.msra.mxu0 0.0
    %2126 = vmatprep.subr.mxu0 0.0
    %2127 = vmatpush2.xpose.msra.mxu0 0.0
    %2128 = vmatprep.subr.mxu0 0.0
    %2129 = vmatpush2.xpose.msra.mxu0 0.0
    %2130 = vmatprep.subr.mxu0 0.0
    %2131 = vmatpush2.xpose.msra.mxu0 0.0
    %2132 = vmatprep.subr.mxu0 0.0
    %2133 = vmatpush2.xpose.msra.mxu0 0.0
    %2134 = vmatprep.subr.mxu0 0.0
    %2135 = vmatpush2.xpose.msra.mxu0 0.0
    %2136 = vmatprep.subr.mxu0 0.0
    %2137 = vmatpush2.xpose.msra.mxu0 0.0
    %2138 = vmatprep.subr.mxu0 0.0
    %2139 = vmatpush2.xpose.msra.mxu0 0.0
    %2140 = vmatprep.subr.mxu0 0.0
    %2141 = vmatpush2.xpose.msra.mxu0 0.0
    %2142 = vmatprep.subr.mxu0 0.0
    %2143 = vmatpush2.xpose.msra.mxu0 0.0
    %2144 = vmatprep.subr.mxu0 0.0
    %2145 = vmatpush2.xpose.msra.mxu0 0.0
    %2146 = vmatprep.subr.mxu0 0.0
    %2147 = vmatpush2.xpose.msra.mxu0 0.0
    %2148 = vmatprep.mubr.f32.mxu0 0.0
    %2149 = vmatmul.mubr.f32.gmra.mxu0 %v2080
    %v2150 = vpop.f32.mrf.mxu0
    %v2151 = vadd.f32 0.0, %v2150
    %v2152 = vpop.f32.mrf.mxu0
    %2153 = vdwg.mxu0
    %2155 = vrot.lane.b32.xlu0 %v2074, 96
    %v2156 = vpop.permute.xlu0 %2155
    %v2157 = vsel %vm231, %v2074, 0
    %v2159 = vsel %vm231, %v2156, 0
    %2161 = vmatprep.subr.mxu0 0.0
    %2162 = vmatpush1.xpose.msra.mxu0 0.0
    %2163 = vmatprep.subr.mxu0 0.0
    %2164 = vmatpush1.xpose.msra.mxu0 0.0
    %2165 = vmatprep.subr.mxu0 0.0
    %2166 = vmatpush1.xpose.msra.mxu0 0.0
    %2167 = vmatprep.subr.mxu0 0.0
    %2168 = vmatpush1.xpose.msra.mxu0 0.0
    %2169 = vmatprep.subr.mxu0 0.0
    %2170 = vmatpush1.xpose.msra.mxu0 0.0
    %2171 = vmatprep.subr.mxu0 0.0
    %2172 = vmatpush1.xpose.msra.mxu0 0.0
    %2173 = vmatprep.subr.mxu0 0.0
    %2174 = vmatpush1.xpose.msra.mxu0 0.0
    %2175 = vmatprep.subr.mxu0 0.0
    %2176 = vmatpush1.xpose.msra.mxu0 0.0
    %2177 = vmatprep.subr.mxu0 0.0
    %2178 = vmatpush1.xpose.msra.mxu0 0.0
    %2179 = vmatprep.subr.mxu0 0.0
    %2180 = vmatpush1.xpose.msra.mxu0 0.0
    %2181 = vmatprep.subr.mxu0 0.0
    %2182 = vmatpush1.xpose.msra.mxu0 0.0
    %2183 = vmatprep.subr.mxu0 0.0
    %2184 = vmatpush1.xpose.msra.mxu0 0.0
    %2185 = vmatprep.subr.mxu0 0.0
    %2186 = vmatpush1.xpose.msra.mxu0 0.0
    %2187 = vmatprep.subr.mxu0 0.0
    %2188 = vmatpush1.xpose.msra.mxu0 0.0
    %2189 = vmatprep.subr.mxu0 0.0
    %2190 = vmatpush1.xpose.msra.mxu0 0.0
    %2191 = vmatprep.subr.mxu0 0.0
    %2192 = vmatpush1.xpose.msra.mxu0 %v2159
    %2193 = vmatprep.subr.mxu0 0.0
    %2194 = vmatpush2.xpose.msra.mxu0 0.0
    %2195 = vmatprep.subr.mxu0 0.0
    %2196 = vmatpush2.xpose.msra.mxu0 0.0
    %2197 = vmatprep.subr.mxu0 0.0
    %2198 = vmatpush2.xpose.msra.mxu0 0.0
    %2199 = vmatprep.subr.mxu0 0.0
    %2200 = vmatpush2.xpose.msra.mxu0 0.0
    %2201 = vmatprep.subr.mxu0 0.0
    %2202 = vmatpush2.xpose.msra.mxu0 0.0
    %2203 = vmatprep.subr.mxu0 0.0
    %2204 = vmatpush2.xpose.msra.mxu0 0.0
    %2205 = vmatprep.subr.mxu0 0.0
    %2206 = vmatpush2.xpose.msra.mxu0 0.0
    %2207 = vmatprep.subr.mxu0 0.0
    %2208 = vmatpush2.xpose.msra.mxu0 0.0
    %2209 = vmatprep.subr.mxu0 0.0
    %2210 = vmatpush2.xpose.msra.mxu0 0.0
    %2211 = vmatprep.subr.mxu0 0.0
    %2212 = vmatpush2.xpose.msra.mxu0 0.0
    %2213 = vmatprep.subr.mxu0 0.0
    %2214 = vmatpush2.xpose.msra.mxu0 0.0
    %2215 = vmatprep.subr.mxu0 0.0
    %2216 = vmatpush2.xpose.msra.mxu0 0.0
    %2217 = vmatprep.subr.mxu0 0.0
    %2218 = vmatpush2.xpose.msra.mxu0 0.0
    %2219 = vmatprep.subr.mxu0 0.0
    %2220 = vmatpush2.xpose.msra.mxu0 0.0
    %2221 = vmatprep.subr.mxu0 0.0
    %2222 = vmatpush2.xpose.msra.mxu0 0.0
    %2223 = vmatprep.subr.mxu0 0.0
    %2224 = vmatpush2.xpose.msra.mxu0 0.0
    %2225 = vmatprep.mubr.f32.mxu0 0.0
    %2226 = vmatmul.mubr.f32.gmra.mxu0 %v2157
    %v2227 = vpop.f32.mrf.mxu0
    %v2228 = vadd.f32 0.0, %v2227
    %v2229 = vpop.f32.mrf.mxu0
    %2230 = vdwg.mxu0
    %v2231 = vmul.f32 %v2151, 0.35355338
    %v2232 = vmul.f32 %v2228, 0.35355338
    %v2233 = vadd.f32 %v2231, %v388
    %v2234 = vadd.f32 %v2232, %v392
    %v2235 = vsel %vm231, %v2233, -inf
    %2236 = vmax.xlane.f32.xlu0 %v2235
    %v2237 = vpop.xlane.xlu0 %2236
    %v2238 = vsel %vm231, %v2234, -inf
    %2239 = vmax.xlane.f32.xlu0 %v2238
    %v2240 = vpop.xlane.xlu0 %2239
    %v2241 = vsub.f32 %v2233, %v2237
    %v2242 = vsub.f32 %v2234, %v2240
    %v2243 = vmul.f32 %v2241, 1.442695
    %v2244 = vpow.pop %v2243
    %v2245 = vmul.f32 %v2242, 1.442695
    %v2246 = vpow.pop %v2245
    %v2247 = vsel %vm231, %v2244, 0.0
    %2248 = vadd.xlane.f32.xlu0 %v2247
    %v2249 = vpop.xlane.xlu0 %2248
    %v2250 = vsel %vm231, %v2246, 0.0
    %2251 = vadd.xlane.f32.xlu0 %v2250
    %v2252 = vpop.xlane.xlu0 %2251
    %v2253 = vrcp.pop %v2249
    %v2254 = vmul.f32 %v2244, %v2253
    %v2255 = vrcp.pop %v2252
    %v2256 = vmul.f32 %v2246, %v2255
    %2257 = vrot.lane.b32.xlu0 %v2069, 64
    %v2258 = vpop.permute.xlu0 %2257
    %v2261 = vsel %vm231, %v2254, 0
    %2263 = vmatprep.subr.mxu0 0.0
    %2264 = vmatpush1.msra.mxu0 0.0
    %2265 = vmatprep.subr.mxu0 0.0
    %2266 = vmatpush1.msra.mxu0 0.0
    %2267 = vmatprep.subr.mxu0 0.0
    %2268 = vmatpush1.msra.mxu0 0.0
    %2269 = vmatprep.subr.mxu0 0.0
    %2270 = vmatpush1.msra.mxu0 0.0
    %2271 = vmatprep.subr.mxu0 0.0
    %2272 = vmatpush1.msra.mxu0 0.0
    %2273 = vmatprep.subr.mxu0 0.0
    %2274 = vmatpush1.msra.mxu0 0.0
    %2275 = vmatprep.subr.mxu0 0.0
    %2276 = vmatpush1.msra.mxu0 0.0
    %2277 = vmatprep.subr.mxu0 0.0
    %2278 = vmatpush1.msra.mxu0 0.0
    %2279 = vmatprep.subr.mxu0 0.0
    %2280 = vmatpush1.msra.mxu0 0.0
    %2281 = vmatprep.subr.mxu0 0.0
    %2282 = vmatpush1.msra.mxu0 0.0
    %2283 = vmatprep.subr.mxu0 0.0
    %2284 = vmatpush1.msra.mxu0 0.0
    %2285 = vmatprep.subr.mxu0 0.0
    %2286 = vmatpush1.msra.mxu0 0.0
    %2287 = vmatprep.subr.mxu0 0.0
    %2288 = vmatpush1.msra.mxu0 0.0
    %2289 = vmatprep.subr.mxu0 0.0
    %2290 = vmatpush1.msra.mxu0 0.0
    %2291 = vmatprep.subr.mxu0 0.0
    %2292 = vmatpush1.msra.mxu0 0.0
    %2293 = vmatprep.subr.mxu0 0.0
    %2294 = vmatpush1.msra.mxu0 %v2258
    %2295 = vmatprep.subr.mxu0 0.0
    %2296 = vmatpush2.msra.mxu0 0.0
    %2297 = vmatprep.subr.mxu0 0.0
    %2298 = vmatpush2.msra.mxu0 0.0
    %2299 = vmatprep.subr.mxu0 0.0
    %2300 = vmatpush2.msra.mxu0 0.0
    %2301 = vmatprep.subr.mxu0 0.0
    %2302 = vmatpush2.msra.mxu0 0.0
    %2303 = vmatprep.subr.mxu0 0.0
    %2304 = vmatpush2.msra.mxu0 0.0
    %2305 = vmatprep.subr.mxu0 0.0
    %2306 = vmatpush2.msra.mxu0 0.0
    %2307 = vmatprep.subr.mxu0 0.0
    %2308 = vmatpush2.msra.mxu0 0.0
    %2309 = vmatprep.subr.mxu0 0.0
    %2310 = vmatpush2.msra.mxu0 0.0
    %2311 = vmatprep.subr.mxu0 0.0
    %2312 = vmatpush2.msra.mxu0 0.0
    %2313 = vmatprep.subr.mxu0 0.0
    %2314 = vmatpush2.msra.mxu0 0.0
    %2315 = vmatprep.subr.mxu0 0.0
    %2316 = vmatpush2.msra.mxu0 0.0
    %2317 = vmatprep.subr.mxu0 0.0
    %2318 = vmatpush2.msra.mxu0 0.0
    %2319 = vmatprep.subr.mxu0 0.0
    %2320 = vmatpush2.msra.mxu0 0.0
    %2321 = vmatprep.subr.mxu0 0.0
    %2322 = vmatpush2.msra.mxu0 0.0
    %2323 = vmatprep.subr.mxu0 0.0
    %2324 = vmatpush2.msra.mxu0 0.0
    %2325 = vmatprep.subr.mxu0 0.0
    %2326 = vmatpush2.msra.mxu0 0.0
    %2327 = vmatprep.mubr.f32.mxu0 0.0
    %2328 = vmatmul.mubr.f32.gmra.mxu0 %v2261
    %v2329 = vpop.f32.mrf.mxu0
    %v2330 = vadd.f32 0.0, %v2329
    %v2331 = vpop.f32.mrf.mxu0
    %2332 = vdwg.mxu0
    %2333 = vrot.lane.b32.xlu0 %v2074, 64
    %v2334 = vpop.permute.xlu0 %2333
    %v2337 = vsel %vm231, %v2256, 0
    %2339 = vmatprep.subr.mxu0 0.0
    %2340 = vmatpush1.msra.mxu0 0.0
    %2341 = vmatprep.subr.mxu0 0.0
    %2342 = vmatpush1.msra.mxu0 0.0
    %2343 = vmatprep.subr.mxu0 0.0
    %2344 = vmatpush1.msra.mxu0 0.0
    %2345 = vmatprep.subr.mxu0 0.0
    %2346 = vmatpush1.msra.mxu0 0.0
    %2347 = vmatprep.subr.mxu0 0.0
    %2348 = vmatpush1.msra.mxu0 0.0
    %2349 = vmatprep.subr.mxu0 0.0
    %2350 = vmatpush1.msra.mxu0 0.0
    %2351 = vmatprep.subr.mxu0 0.0
    %2352 = vmatpush1.msra.mxu0 0.0
    %2353 = vmatprep.subr.mxu0 0.0
    %2354 = vmatpush1.msra.mxu0 0.0
    %2355 = vmatprep.subr.mxu0 0.0
    %2356 = vmatpush1.msra.mxu0 0.0
    %2357 = vmatprep.subr.mxu0 0.0
    %2358 = vmatpush1.msra.mxu0 0.0
    %2359 = vmatprep.subr.mxu0 0.0
    %2360 = vmatpush1.msra.mxu0 0.0
    %2361 = vmatprep.subr.mxu0 0.0
    %2362 = vmatpush1.msra.mxu0 0.0
    %2363 = vmatprep.subr.mxu0 0.0
    %2364 = vmatpush1.msra.mxu0 0.0
    %2365 = vmatprep.subr.mxu0 0.0
    %2366 = vmatpush1.msra.mxu0 0.0
    %2367 = vmatprep.subr.mxu0 0.0
    %2368 = vmatpush1.msra.mxu0 0.0
    %2369 = vmatprep.subr.mxu0 0.0
    %2370 = vmatpush1.msra.mxu0 %v2334
    %2371 = vmatprep.subr.mxu0 0.0
    %2372 = vmatpush2.msra.mxu0 0.0
    %2373 = vmatprep.subr.mxu0 0.0
    %2374 = vmatpush2.msra.mxu0 0.0
    %2375 = vmatprep.subr.mxu0 0.0
    %2376 = vmatpush2.msra.mxu0 0.0
    %2377 = vmatprep.subr.mxu0 0.0
    %2378 = vmatpush2.msra.mxu0 0.0
    %2379 = vmatprep.subr.mxu0 0.0
    %2380 = vmatpush2.msra.mxu0 0.0
    %2381 = vmatprep.subr.mxu0 0.0
    %2382 = vmatpush2.msra.mxu0 0.0
    %2383 = vmatprep.subr.mxu0 0.0
    %2384 = vmatpush2.msra.mxu0 0.0
    %2385 = vmatprep.subr.mxu0 0.0
    %2386 = vmatpush2.msra.mxu0 0.0
    %2387 = vmatprep.subr.mxu0 0.0
    %2388 = vmatpush2.msra.mxu0 0.0
    %2389 = vmatprep.subr.mxu0 0.0
    %2390 = vmatpush2.msra.mxu0 0.0
    %2391 = vmatprep.subr.mxu0 0.0
    %2392 = vmatpush2.msra.mxu0 0.0
    %2393 = vmatprep.subr.mxu0 0.0
    %2394 = vmatpush2.msra.mxu0 0.0
    %2395 = vmatprep.subr.mxu0 0.0
    %2396 = vmatpush2.msra.mxu0 0.0
    %2397 = vmatprep.subr.mxu0 0.0
    %2398 = vmatpush2.msra.mxu0 0.0
    %2399 = vmatprep.subr.mxu0 0.0
    %2400 = vmatpush2.msra.mxu0 0.0
    %2401 = vmatprep.subr.mxu0 0.0
    %2402 = vmatpush2.msra.mxu0 0.0
    %2403 = vmatprep.mubr.f32.mxu0 0.0
    %2404 = vmatmul.mubr.f32.gmra.mxu0 %v2337
    %v2405 = vpop.f32.mrf.mxu0
    %v2406 = vadd.f32 0.0, %v2405
    %v2407 = vpop.f32.mrf.mxu0
    %2408 = vdwg.mxu0
    %2409 = vrot.lane.b32.xlu0 %v2069, 120
    %v2410 = vpop.permute.xlu0 %2409
    %2411 = vrot.lane.b32.xlu0 %v2069, 88
    %v2412 = vpop.permute.xlu0 %2411
    %v2413 = vsel %vm231, %v2410, 0
    %v2415 = vsel %vm231, %v2412, 0
    %2417 = vmatprep.subr.mxu0 0.0
    %2418 = vmatpush1.xpose.msra.mxu0 0.0
    %2419 = vmatprep.subr.mxu0 0.0
    %2420 = vmatpush1.xpose.msra.mxu0 0.0
    %2421 = vmatprep.subr.mxu0 0.0
    %2422 = vmatpush1.xpose.msra.mxu0 0.0
    %2423 = vmatprep.subr.mxu0 0.0
    %2424 = vmatpush1.xpose.msra.mxu0 0.0
    %2425 = vmatprep.subr.mxu0 0.0
    %2426 = vmatpush1.xpose.msra.mxu0 0.0
    %2427 = vmatprep.subr.mxu0 0.0
    %2428 = vmatpush1.xpose.msra.mxu0 0.0
    %2429 = vmatprep.subr.mxu0 0.0
    %2430 = vmatpush1.xpose.msra.mxu0 0.0
    %2431 = vmatprep.subr.mxu0 0.0
    %2432 = vmatpush1.xpose.msra.mxu0 0.0
    %2433 = vmatprep.subr.mxu0 0.0
    %2434 = vmatpush1.xpose.msra.mxu0 0.0
    %2435 = vmatprep.subr.mxu0 0.0
    %2436 = vmatpush1.xpose.msra.mxu0 0.0
    %2437 = vmatprep.subr.mxu0 0.0
    %2438 = vmatpush1.xpose.msra.mxu0 0.0
    %2439 = vmatprep.subr.mxu0 0.0
    %2440 = vmatpush1.xpose.msra.mxu0 0.0
    %2441 = vmatprep.subr.mxu0 0.0
    %2442 = vmatpush1.xpose.msra.mxu0 0.0
    %2443 = vmatprep.subr.mxu0 0.0
    %2444 = vmatpush1.xpose.msra.mxu0 0.0
    %2445 = vmatprep.subr.mxu0 0.0
    %2446 = vmatpush1.xpose.msra.mxu0 0.0
    %2447 = vmatprep.subr.mxu0 0.0
    %2448 = vmatpush1.xpose.msra.mxu0 %v2415
    %2449 = vmatprep.subr.mxu0 0.0
    %2450 = vmatpush2.xpose.msra.mxu0 0.0
    %2451 = vmatprep.subr.mxu0 0.0
    %2452 = vmatpush2.xpose.msra.mxu0 0.0
    %2453 = vmatprep.subr.mxu0 0.0
    %2454 = vmatpush2.xpose.msra.mxu0 0.0
    %2455 = vmatprep.subr.mxu0 0.0
    %2456 = vmatpush2.xpose.msra.mxu0 0.0
    %2457 = vmatprep.subr.mxu0 0.0
    %2458 = vmatpush2.xpose.msra.mxu0 0.0
    %2459 = vmatprep.subr.mxu0 0.0
    %2460 = vmatpush2.xpose.msra.mxu0 0.0
    %2461 = vmatprep.subr.mxu0 0.0
    %2462 = vmatpush2.xpose.msra.mxu0 0.0
    %2463 = vmatprep.subr.mxu0 0.0
    %2464 = vmatpush2.xpose.msra.mxu0 0.0
    %2465 = vmatprep.subr.mxu0 0.0
    %2466 = vmatpush2.xpose.msra.mxu0 0.0
    %2467 = vmatprep.subr.mxu0 0.0
    %2468 = vmatpush2.xpose.msra.mxu0 0.0
    %2469 = vmatprep.subr.mxu0 0.0
    %2470 = vmatpush2.xpose.msra.mxu0 0.0
    %2471 = vmatprep.subr.mxu0 0.0
    %2472 = vmatpush2.xpose.msra.mxu0 0.0
    %2473 = vmatprep.subr.mxu0 0.0
    %2474 = vmatpush2.xpose.msra.mxu0 0.0
    %2475 = vmatprep.subr.mxu0 0.0
    %2476 = vmatpush2.xpose.msra.mxu0 0.0
    %2477 = vmatprep.subr.mxu0 0.0
    %2478 = vmatpush2.xpose.msra.mxu0 0.0
    %2479 = vmatprep.subr.mxu0 0.0
    %2480 = vmatpush2.xpose.msra.mxu0 0.0
    %2481 = vmatprep.mubr.f32.mxu0 0.0
    %2482 = vmatmul.mubr.f32.gmra.mxu0 %v2413
    %v2483 = vpop.f32.mrf.mxu0
    %v2484 = vadd.f32 0.0, %v2483
    %v2485 = vpop.f32.mrf.mxu0
    %2486 = vdwg.mxu0
    %2487 = vrot.lane.b32.xlu0 %v2074, 120
    %v2488 = vpop.permute.xlu0 %2487
    %2489 = vrot.lane.b32.xlu0 %v2074, 88
    %v2490 = vpop.permute.xlu0 %2489
    %v2491 = vsel %vm231, %v2488, 0
    %v2493 = vsel %vm231, %v2490, 0
    %2495 = vmatprep.subr.mxu0 0.0
    %2496 = vmatpush1.xpose.msra.mxu0 0.0
    %2497 = vmatprep.subr.mxu0 0.0
    %2498 = vmatpush1.xpose.msra.mxu0 0.0
    %2499 = vmatprep.subr.mxu0 0.0
    %2500 = vmatpush1.xpose.msra.mxu0 0.0
    %2501 = vmatprep.subr.mxu0 0.0
    %2502 = vmatpush1.xpose.msra.mxu0 0.0
    %2503 = vmatprep.subr.mxu0 0.0
    %2504 = vmatpush1.xpose.msra.mxu0 0.0
    %2505 = vmatprep.subr.mxu0 0.0
    %2506 = vmatpush1.xpose.msra.mxu0 0.0
    %2507 = vmatprep.subr.mxu0 0.0
    %2508 = vmatpush1.xpose.msra.mxu0 0.0
    %2509 = vmatprep.subr.mxu0 0.0
    %2510 = vmatpush1.xpose.msra.mxu0 0.0
    %2511 = vmatprep.subr.mxu0 0.0
    %2512 = vmatpush1.xpose.msra.mxu0 0.0
    %2513 = vmatprep.subr.mxu0 0.0
    %2514 = vmatpush1.xpose.msra.mxu0 0.0
    %2515 = vmatprep.subr.mxu0 0.0
    %2516 = vmatpush1.xpose.msra.mxu0 0.0
    %2517 = vmatprep.subr.mxu0 0.0
    %2518 = vmatpush1.xpose.msra.mxu0 0.0
    %2519 = vmatprep.subr.mxu0 0.0
    %2520 = vmatpush1.xpose.msra.mxu0 0.0
    %2521 = vmatprep.subr.mxu0 0.0
    %2522 = vmatpush1.xpose.msra.mxu0 0.0
    %2523 = vmatprep.subr.mxu0 0.0
    %2524 = vmatpush1.xpose.msra.mxu0 0.0
    %2525 = vmatprep.subr.mxu0 0.0
    %2526 = vmatpush1.xpose.msra.mxu0 %v2493
    %2527 = vmatprep.subr.mxu0 0.0
    %2528 = vmatpush2.xpose.msra.mxu0 0.0
    %2529 = vmatprep.subr.mxu0 0.0
    %2530 = vmatpush2.xpose.msra.mxu0 0.0
    %2531 = vmatprep.subr.mxu0 0.0
    %2532 = vmatpush2.xpose.msra.mxu0 0.0
    %2533 = vmatprep.subr.mxu0 0.0
    %2534 = vmatpush2.xpose.msra.mxu0 0.0
    %2535 = vmatprep.subr.mxu0 0.0
    %2536 = vmatpush2.xpose.msra.mxu0 0.0
    %2537 = vmatprep.subr.mxu0 0.0
    %2538 = vmatpush2.xpose.msra.mxu0 0.0
    %2539 = vmatprep.subr.mxu0 0.0
    %2540 = vmatpush2.xpose.msra.mxu0 0.0
    %2541 = vmatprep.subr.mxu0 0.0
    %2542 = vmatpush2.xpose.msra.mxu0 0.0
    %2543 = vmatprep.subr.mxu0 0.0
    %2544 = vmatpush2.xpose.msra.mxu0 0.0
    %2545 = vmatprep.subr.mxu0 0.0
    %2546 = vmatpush2.xpose.msra.mxu0 0.0
    %2547 = vmatprep.subr.mxu0 0.0
    %2548 = vmatpush2.xpose.msra.mxu0 0.0
    %2549 = vmatprep.subr.mxu0 0.0
    %2550 = vmatpush2.xpose.msra.mxu0 0.0
    %2551 = vmatprep.subr.mxu0 0.0
    %2552 = vmatpush2.xpose.msra.mxu0 0.0
    %2553 = vmatprep.subr.mxu0 0.0
    %2554 = vmatpush2.xpose.msra.mxu0 0.0
    %2555 = vmatprep.subr.mxu0 0.0
    %2556 = vmatpush2.xpose.msra.mxu0 0.0
    %2557 = vmatprep.subr.mxu0 0.0
    %2558 = vmatpush2.xpose.msra.mxu0 0.0
    %2559 = vmatprep.mubr.f32.mxu0 0.0
    %2560 = vmatmul.mubr.f32.gmra.mxu0 %v2491
    %v2561 = vpop.f32.mrf.mxu0
    %v2562 = vadd.f32 0.0, %v2561
    %v2563 = vpop.f32.mrf.mxu0
    %2564 = vdwg.mxu0
    %v2565 = vmul.f32 %v2484, 0.35355338
    %v2566 = vmul.f32 %v2562, 0.35355338
    %v2567 = vadd.f32 %v2565, %v388
    %v2568 = vadd.f32 %v2566, %v392
    %v2569 = vsel %vm231, %v2567, -inf
    %2570 = vmax.xlane.f32.xlu0 %v2569
    %v2571 = vpop.xlane.xlu0 %2570
    %v2572 = vsel %vm231, %v2568, -inf
    %2573 = vmax.xlane.f32.xlu0 %v2572
    %v2574 = vpop.xlane.xlu0 %2573
    %v2575 = vsub.f32 %v2567, %v2571
    %v2576 = vsub.f32 %v2568, %v2574
    %v2577 = vmul.f32 %v2575, 1.442695
    %v2578 = vpow.pop %v2577
    %v2579 = vmul.f32 %v2576, 1.442695
    %v2580 = vpow.pop %v2579
    %v2581 = vsel %vm231, %v2578, 0.0
    %2582 = vadd.xlane.f32.xlu0 %v2581
    %v2583 = vpop.xlane.xlu0 %2582
    %v2584 = vsel %vm231, %v2580, 0.0
    %2585 = vadd.xlane.f32.xlu0 %v2584
    %v2586 = vpop.xlane.xlu0 %2585
    %v2587 = vrcp.pop %v2583
    %v2588 = vmul.f32 %v2578, %v2587
    %v2589 = vrcp.pop %v2586
    %v2590 = vmul.f32 %v2580, %v2589
    %2591 = vrot.lane.b32.xlu0 %v2069, 56
    %v2592 = vpop.permute.xlu0 %2591
    %v2595 = vsel %vm231, %v2588, 0
    %2597 = vmatprep.subr.mxu0 0.0
    %2598 = vmatpush1.msra.mxu0 0.0
    %2599 = vmatprep.subr.mxu0 0.0
    %2600 = vmatpush1.msra.mxu0 0.0
    %2601 = vmatprep.subr.mxu0 0.0
    %2602 = vmatpush1.msra.mxu0 0.0
    %2603 = vmatprep.subr.mxu0 0.0
    %2604 = vmatpush1.msra.mxu0 0.0
    %2605 = vmatprep.subr.mxu0 0.0
    %2606 = vmatpush1.msra.mxu0 0.0
    %2607 = vmatprep.subr.mxu0 0.0
    %2608 = vmatpush1.msra.mxu0 0.0
    %2609 = vmatprep.subr.mxu0 0.0
    %2610 = vmatpush1.msra.mxu0 0.0
    %2611 = vmatprep.subr.mxu0 0.0
    %2612 = vmatpush1.msra.mxu0 0.0
    %2613 = vmatprep.subr.mxu0 0.0
    %2614 = vmatpush1.msra.mxu0 0.0
    %2615 = vmatprep.subr.mxu0 0.0
    %2616 = vmatpush1.msra.mxu0 0.0
    %2617 = vmatprep.subr.mxu0 0.0
    %2618 = vmatpush1.msra.mxu0 0.0
    %2619 = vmatprep.subr.mxu0 0.0
    %2620 = vmatpush1.msra.mxu0 0.0
    %2621 = vmatprep.subr.mxu0 0.0
    %2622 = vmatpush1.msra.mxu0 0.0
    %2623 = vmatprep.subr.mxu0 0.0
    %2624 = vmatpush1.msra.mxu0 0.0
    %2625 = vmatprep.subr.mxu0 0.0
    %2626 = vmatpush1.msra.mxu0 0.0
    %2627 = vmatprep.subr.mxu0 0.0
    %2628 = vmatpush1.msra.mxu0 %v2592
    %2629 = vmatprep.subr.mxu0 0.0
    %2630 = vmatpush2.msra.mxu0 0.0
    %2631 = vmatprep.subr.mxu0 0.0
    %2632 = vmatpush2.msra.mxu0 0.0
    %2633 = vmatprep.subr.mxu0 0.0
    %2634 = vmatpush2.msra.mxu0 0.0
    %2635 = vmatprep.subr.mxu0 0.0
    %2636 = vmatpush2.msra.mxu0 0.0
    %2637 = vmatprep.subr.mxu0 0.0
    %2638 = vmatpush2.msra.mxu0 0.0
    %2639 = vmatprep.subr.mxu0 0.0
    %2640 = vmatpush2.msra.mxu0 0.0
    %2641 = vmatprep.subr.mxu0 0.0
    %2642 = vmatpush2.msra.mxu0 0.0
    %2643 = vmatprep.subr.mxu0 0.0
    %2644 = vmatpush2.msra.mxu0 0.0
    %2645 = vmatprep.subr.mxu0 0.0
    %2646 = vmatpush2.msra.mxu0 0.0
    %2647 = vmatprep.subr.mxu0 0.0
    %2648 = vmatpush2.msra.mxu0 0.0
    %2649 = vmatprep.subr.mxu0 0.0
    %2650 = vmatpush2.msra.mxu0 0.0
    %2651 = vmatprep.subr.mxu0 0.0
    %2652 = vmatpush2.msra.mxu0 0.0
    %2653 = vmatprep.subr.mxu0 0.0
    %2654 = vmatpush2.msra.mxu0 0.0
    %2655 = vmatprep.subr.mxu0 0.0
    %2656 = vmatpush2.msra.mxu0 0.0
    %2657 = vmatprep.subr.mxu0 0.0
    %2658 = vmatpush2.msra.mxu0 0.0
    %2659 = vmatprep.subr.mxu0 0.0
    %2660 = vmatpush2.msra.mxu0 0.0
    %2661 = vmatprep.mubr.f32.mxu0 0.0
    %2662 = vmatmul.mubr.f32.gmra.mxu0 %v2595
    %v2663 = vpop.f32.mrf.mxu0
    %v2664 = vadd.f32 0.0, %v2663
    %v2665 = vpop.f32.mrf.mxu0
    %2666 = vdwg.mxu0
    %2667 = vrot.lane.b32.xlu0 %v2074, 56
    %v2668 = vpop.permute.xlu0 %2667
    %v2671 = vsel %vm231, %v2590, 0
    %2673 = vmatprep.subr.mxu0 0.0
    %2674 = vmatpush1.msra.mxu0 0.0
    %2675 = vmatprep.subr.mxu0 0.0
    %2676 = vmatpush1.msra.mxu0 0.0
    %2677 = vmatprep.subr.mxu0 0.0
    %2678 = vmatpush1.msra.mxu0 0.0
    %2679 = vmatprep.subr.mxu0 0.0
    %2680 = vmatpush1.msra.mxu0 0.0
    %2681 = vmatprep.subr.mxu0 0.0
    %2682 = vmatpush1.msra.mxu0 0.0
    %2683 = vmatprep.subr.mxu0 0.0
    %2684 = vmatpush1.msra.mxu0 0.0
    %2685 = vmatprep.subr.mxu0 0.0
    %2686 = vmatpush1.msra.mxu0 0.0
    %2687 = vmatprep.subr.mxu0 0.0
    %2688 = vmatpush1.msra.mxu0 0.0
    %2689 = vmatprep.subr.mxu0 0.0
    %2690 = vmatpush1.msra.mxu0 0.0
    %2691 = vmatprep.subr.mxu0 0.0
    %2692 = vmatpush1.msra.mxu0 0.0
    %2693 = vmatprep.subr.mxu0 0.0
    %2694 = vmatpush1.msra.mxu0 0.0
    %2695 = vmatprep.subr.mxu0 0.0
    %2696 = vmatpush1.msra.mxu0 0.0
    %2697 = vmatprep.subr.mxu0 0.0
    %2698 = vmatpush1.msra.mxu0 0.0
    %2699 = vmatprep.subr.mxu0 0.0
    %2700 = vmatpush1.msra.mxu0 0.0
    %2701 = vmatprep.subr.mxu0 0.0
    %2702 = vmatpush1.msra.mxu0 0.0
    %2703 = vmatprep.subr.mxu0 0.0
    %2704 = vmatpush1.msra.mxu0 %v2668
    %2705 = vmatprep.subr.mxu0 0.0
    %2706 = vmatpush2.msra.mxu0 0.0
    %2707 = vmatprep.subr.mxu0 0.0
    %2708 = vmatpush2.msra.mxu0 0.0
    %2709 = vmatprep.subr.mxu0 0.0
    %2710 = vmatpush2.msra.mxu0 0.0
    %2711 = vmatprep.subr.mxu0 0.0
    %2712 = vmatpush2.msra.mxu0 0.0
    %2713 = vmatprep.subr.mxu0 0.0
    %2714 = vmatpush2.msra.mxu0 0.0
    %2715 = vmatprep.subr.mxu0 0.0
    %2716 = vmatpush2.msra.mxu0 0.0
    %2717 = vmatprep.subr.mxu0 0.0
    %2718 = vmatpush2.msra.mxu0 0.0
    %2719 = vmatprep.subr.mxu0 0.0
    %2720 = vmatpush2.msra.mxu0 0.0
    %2721 = vmatprep.subr.mxu0 0.0
    %2722 = vmatpush2.msra.mxu0 0.0
    %2723 = vmatprep.subr.mxu0 0.0
    %2724 = vmatpush2.msra.mxu0 0.0
    %2725 = vmatprep.subr.mxu0 0.0
    %2726 = vmatpush2.msra.mxu0 0.0
    %2727 = vmatprep.subr.mxu0 0.0
    %2728 = vmatpush2.msra.mxu0 0.0
    %2729 = vmatprep.subr.mxu0 0.0
    %2730 = vmatpush2.msra.mxu0 0.0
    %2731 = vmatprep.subr.mxu0 0.0
    %2732 = vmatpush2.msra.mxu0 0.0
    %2733 = vmatprep.subr.mxu0 0.0
    %2734 = vmatpush2.msra.mxu0 0.0
    %2735 = vmatprep.subr.mxu0 0.0
    %2736 = vmatpush2.msra.mxu0 0.0
    %2737 = vmatprep.mubr.f32.mxu0 0.0
    %2738 = vmatmul.mubr.f32.gmra.mxu0 %v2671
    %v2739 = vpop.f32.mrf.mxu0
    %v2740 = vadd.f32 0.0, %v2739
    %v2741 = vpop.f32.mrf.mxu0
    %2742 = vdwg.mxu0
    %2743 = vrot.lane.b32.xlu0 %v2069, 112
    %v2744 = vpop.permute.xlu0 %2743
    %2745 = vrot.lane.b32.xlu0 %v2069, 80
    %v2746 = vpop.permute.xlu0 %2745
    %v2747 = vsel %vm231, %v2744, 0
    %v2749 = vsel %vm231, %v2746, 0
    %2751 = vmatprep.subr.mxu0 0.0
    %2752 = vmatpush1.xpose.msra.mxu0 0.0
    %2753 = vmatprep.subr.mxu0 0.0
    %2754 = vmatpush1.xpose.msra.mxu0 0.0
    %2755 = vmatprep.subr.mxu0 0.0
    %2756 = vmatpush1.xpose.msra.mxu0 0.0
    %2757 = vmatprep.subr.mxu0 0.0
    %2758 = vmatpush1.xpose.msra.mxu0 0.0
    %2759 = vmatprep.subr.mxu0 0.0
    %2760 = vmatpush1.xpose.msra.mxu0 0.0
    %2761 = vmatprep.subr.mxu0 0.0
    %2762 = vmatpush1.xpose.msra.mxu0 0.0
    %2763 = vmatprep.subr.mxu0 0.0
    %2764 = vmatpush1.xpose.msra.mxu0 0.0
    %2765 = vmatprep.subr.mxu0 0.0
    %2766 = vmatpush1.xpose.msra.mxu0 0.0
    %2767 = vmatprep.subr.mxu0 0.0
    %2768 = vmatpush1.xpose.msra.mxu0 0.0
    %2769 = vmatprep.subr.mxu0 0.0
    %2770 = vmatpush1.xpose.msra.mxu0 0.0
    %2771 = vmatprep.subr.mxu0 0.0
    %2772 = vmatpush1.xpose.msra.mxu0 0.0
    %2773 = vmatprep.subr.mxu0 0.0
    %2774 = vmatpush1.xpose.msra.mxu0 0.0
    %2775 = vmatprep.subr.mxu0 0.0
    %2776 = vmatpush1.xpose.msra.mxu0 0.0
    %2777 = vmatprep.subr.mxu0 0.0
    %2778 = vmatpush1.xpose.msra.mxu0 0.0
    %2779 = vmatprep.subr.mxu0 0.0
    %2780 = vmatpush1.xpose.msra.mxu0 0.0
    %2781 = vmatprep.subr.mxu0 0.0
    %2782 = vmatpush1.xpose.msra.mxu0 %v2749
    %2783 = vmatprep.subr.mxu0 0.0
    %2784 = vmatpush2.xpose.msra.mxu0 0.0
    %2785 = vmatprep.subr.mxu0 0.0
    %2786 = vmatpush2.xpose.msra.mxu0 0.0
    %2787 = vmatprep.subr.mxu0 0.0
    %2788 = vmatpush2.xpose.msra.mxu0 0.0
    %2789 = vmatprep.subr.mxu0 0.0
    %2790 = vmatpush2.xpose.msra.mxu0 0.0
    %2791 = vmatprep.subr.mxu0 0.0
    %2792 = vmatpush2.xpose.msra.mxu0 0.0
    %2793 = vmatprep.subr.mxu0 0.0
    %2794 = vmatpush2.xpose.msra.mxu0 0.0
    %2795 = vmatprep.subr.mxu0 0.0
    %2796 = vmatpush2.xpose.msra.mxu0 0.0
    %2797 = vmatprep.subr.mxu0 0.0
    %2798 = vmatpush2.xpose.msra.mxu0 0.0
    %2799 = vmatprep.subr.mxu0 0.0
    %2800 = vmatpush2.xpose.msra.mxu0 0.0
    %2801 = vmatprep.subr.mxu0 0.0
    %2802 = vmatpush2.xpose.msra.mxu0 0.0
    %2803 = vmatprep.subr.mxu0 0.0
    %2804 = vmatpush2.xpose.msra.mxu0 0.0
    %2805 = vmatprep.subr.mxu0 0.0
    %2806 = vmatpush2.xpose.msra.mxu0 0.0
    %2807 = vmatprep.subr.mxu0 0.0
    %2808 = vmatpush2.xpose.msra.mxu0 0.0
    %2809 = vmatprep.subr.mxu0 0.0
    %2810 = vmatpush2.xpose.msra.mxu0 0.0
    %2811 = vmatprep.subr.mxu0 0.0
    %2812 = vmatpush2.xpose.msra.mxu0 0.0
    %2813 = vmatprep.subr.mxu0 0.0
    %2814 = vmatpush2.xpose.msra.mxu0 0.0
    %2815 = vmatprep.mubr.f32.mxu0 0.0
    %2816 = vmatmul.mubr.f32.gmra.mxu0 %v2747
    %v2817 = vpop.f32.mrf.mxu0
    %v2818 = vadd.f32 0.0, %v2817
    %v2819 = vpop.f32.mrf.mxu0
    %2820 = vdwg.mxu0
    %2821 = vrot.lane.b32.xlu0 %v2074, 112
    %v2822 = vpop.permute.xlu0 %2821
    %2823 = vrot.lane.b32.xlu0 %v2074, 80
    %v2824 = vpop.permute.xlu0 %2823
    %v2825 = vsel %vm231, %v2822, 0
    %v2827 = vsel %vm231, %v2824, 0
    %2829 = vmatprep.subr.mxu0 0.0
    %2830 = vmatpush1.xpose.msra.mxu0 0.0
    %2831 = vmatprep.subr.mxu0 0.0
    %2832 = vmatpush1.xpose.msra.mxu0 0.0
    %2833 = vmatprep.subr.mxu0 0.0
    %2834 = vmatpush1.xpose.msra.mxu0 0.0
    %2835 = vmatprep.subr.mxu0 0.0
    %2836 = vmatpush1.xpose.msra.mxu0 0.0
    %2837 = vmatprep.subr.mxu0 0.0
    %2838 = vmatpush1.xpose.msra.mxu0 0.0
    %2839 = vmatprep.subr.mxu0 0.0
    %2840 = vmatpush1.xpose.msra.mxu0 0.0
    %2841 = vmatprep.subr.mxu0 0.0
    %2842 = vmatpush1.xpose.msra.mxu0 0.0
    %2843 = vmatprep.subr.mxu0 0.0
    %2844 = vmatpush1.xpose.msra.mxu0 0.0
    %2845 = vmatprep.subr.mxu0 0.0
    %2846 = vmatpush1.xpose.msra.mxu0 0.0
    %2847 = vmatprep.subr.mxu0 0.0
    %2848 = vmatpush1.xpose.msra.mxu0 0.0
    %2849 = vmatprep.subr.mxu0 0.0
    %2850 = vmatpush1.xpose.msra.mxu0 0.0
    %2851 = vmatprep.subr.mxu0 0.0
    %2852 = vmatpush1.xpose.msra.mxu0 0.0
    %2853 = vmatprep.subr.mxu0 0.0
    %2854 = vmatpush1.xpose.msra.mxu0 0.0
    %2855 = vmatprep.subr.mxu0 0.0
    %2856 = vmatpush1.xpose.msra.mxu0 0.0
    %2857 = vmatprep.subr.mxu0 0.0
    %2858 = vmatpush1.xpose.msra.mxu0 0.0
    %2859 = vmatprep.subr.mxu0 0.0
    %2860 = vmatpush1.xpose.msra.mxu0 %v2827
    %2861 = vmatprep.subr.mxu0 0.0
    %2862 = vmatpush2.xpose.msra.mxu0 0.0
    %2863 = vmatprep.subr.mxu0 0.0
    %2864 = vmatpush2.xpose.msra.mxu0 0.0
    %2865 = vmatprep.subr.mxu0 0.0
    %2866 = vmatpush2.xpose.msra.mxu0 0.0
    %2867 = vmatprep.subr.mxu0 0.0
    %2868 = vmatpush2.xpose.msra.mxu0 0.0
    %2869 = vmatprep.subr.mxu0 0.0
    %2870 = vmatpush2.xpose.msra.mxu0 0.0
    %2871 = vmatprep.subr.mxu0 0.0
    %2872 = vmatpush2.xpose.msra.mxu0 0.0
    %2873 = vmatprep.subr.mxu0 0.0
    %2874 = vmatpush2.xpose.msra.mxu0 0.0
    %2875 = vmatprep.subr.mxu0 0.0
    %2876 = vmatpush2.xpose.msra.mxu0 0.0
    %2877 = vmatprep.subr.mxu0 0.0
    %2878 = vmatpush2.xpose.msra.mxu0 0.0
    %2879 = vmatprep.subr.mxu0 0.0
    %2880 = vmatpush2.xpose.msra.mxu0 0.0
    %2881 = vmatprep.subr.mxu0 0.0
    %2882 = vmatpush2.xpose.msra.mxu0 0.0
    %2883 = vmatprep.subr.mxu0 0.0
    %2884 = vmatpush2.xpose.msra.mxu0 0.0
    %2885 = vmatprep.subr.mxu0 0.0
    %2886 = vmatpush2.xpose.msra.mxu0 0.0
    %2887 = vmatprep.subr.mxu0 0.0
    %2888 = vmatpush2.xpose.msra.mxu0 0.0
    %2889 = vmatprep.subr.mxu0 0.0
    %2890 = vmatpush2.xpose.msra.mxu0 0.0
    %2891 = vmatprep.subr.mxu0 0.0
    %2892 = vmatpush2.xpose.msra.mxu0 0.0
    %2893 = vmatprep.mubr.f32.mxu0 0.0
    %2894 = vmatmul.mubr.f32.gmra.mxu0 %v2825
    %v2895 = vpop.f32.mrf.mxu0
    %v2896 = vadd.f32 0.0, %v2895
    %v2897 = vpop.f32.mrf.mxu0
    %2898 = vdwg.mxu0
    %v2899 = vmul.f32 %v2818, 0.35355338
    %v2900 = vmul.f32 %v2896, 0.35355338
    %v2901 = vadd.f32 %v2899, %v388
    %v2902 = vadd.f32 %v2900, %v392
    %v2903 = vsel %vm231, %v2901, -inf
    %2904 = vmax.xlane.f32.xlu0 %v2903
    %v2905 = vpop.xlane.xlu0 %2904
    %v2906 = vsel %vm231, %v2902, -inf
    %2907 = vmax.xlane.f32.xlu0 %v2906
    %v2908 = vpop.xlane.xlu0 %2907
    %v2909 = vsub.f32 %v2901, %v2905
    %v2910 = vsub.f32 %v2902, %v2908
    %v2911 = vmul.f32 %v2909, 1.442695
    %v2912 = vpow.pop %v2911
    %v2913 = vmul.f32 %v2910, 1.442695
    %v2914 = vpow.pop %v2913
    %v2915 = vsel %vm231, %v2912, 0.0
    %2916 = vadd.xlane.f32.xlu0 %v2915
    %v2917 = vpop.xlane.xlu0 %2916
    %v2918 = vsel %vm231, %v2914, 0.0
    %2919 = vadd.xlane.f32.xlu0 %v2918
    %v2920 = vpop.xlane.xlu0 %2919
    %v2921 = vrcp.pop %v2917
    %v2922 = vmul.f32 %v2912, %v2921
    %v2923 = vrcp.pop %v2920
    %v2924 = vmul.f32 %v2914, %v2923
    %2925 = vrot.lane.b32.xlu0 %v2069, 48
    %v2926 = vpop.permute.xlu0 %2925
    %v2929 = vsel %vm231, %v2922, 0
    %2931 = vmatprep.subr.mxu0 0.0
    %2932 = vmatpush1.msra.mxu0 0.0
    %2933 = vmatprep.subr.mxu0 0.0
    %2934 = vmatpush1.msra.mxu0 0.0
    %2935 = vmatprep.subr.mxu0 0.0
    %2936 = vmatpush1.msra.mxu0 0.0
    %2937 = vmatprep.subr.mxu0 0.0
    %2938 = vmatpush1.msra.mxu0 0.0
    %2939 = vmatprep.subr.mxu0 0.0
    %2940 = vmatpush1.msra.mxu0 0.0
    %2941 = vmatprep.subr.mxu0 0.0
    %2942 = vmatpush1.msra.mxu0 0.0
    %2943 = vmatprep.subr.mxu0 0.0
    %2944 = vmatpush1.msra.mxu0 0.0
    %2945 = vmatprep.subr.mxu0 0.0
    %2946 = vmatpush1.msra.mxu0 0.0
    %2947 = vmatprep.subr.mxu0 0.0
    %2948 = vmatpush1.msra.mxu0 0.0
    %2949 = vmatprep.subr.mxu0 0.0
    %2950 = vmatpush1.msra.mxu0 0.0
    %2951 = vmatprep.subr.mxu0 0.0
    %2952 = vmatpush1.msra.mxu0 0.0
    %2953 = vmatprep.subr.mxu0 0.0
    %2954 = vmatpush1.msra.mxu0 0.0
    %2955 = vmatprep.subr.mxu0 0.0
    %2956 = vmatpush1.msra.mxu0 0.0
    %2957 = vmatprep.subr.mxu0 0.0
    %2958 = vmatpush1.msra.mxu0 0.0
    %2959 = vmatprep.subr.mxu0 0.0
    %2960 = vmatpush1.msra.mxu0 0.0
    %2961 = vmatprep.subr.mxu0 0.0
    %2962 = vmatpush1.msra.mxu0 %v2926
    %2963 = vmatprep.subr.mxu0 0.0
    %2964 = vmatpush2.msra.mxu0 0.0
    %2965 = vmatprep.subr.mxu0 0.0
    %2966 = vmatpush2.msra.mxu0 0.0
    %2967 = vmatprep.subr.mxu0 0.0
    %2968 = vmatpush2.msra.mxu0 0.0
    %2969 = vmatprep.subr.mxu0 0.0
    %2970 = vmatpush2.msra.mxu0 0.0
    %2971 = vmatprep.subr.mxu0 0.0
    %2972 = vmatpush2.msra.mxu0 0.0
    %2973 = vmatprep.subr.mxu0 0.0
    %2974 = vmatpush2.msra.mxu0 0.0
    %2975 = vmatprep.subr.mxu0 0.0
    %2976 = vmatpush2.msra.mxu0 0.0
    %2977 = vmatprep.subr.mxu0 0.0
    %2978 = vmatpush2.msra.mxu0 0.0
    %2979 = vmatprep.subr.mxu0 0.0
    %2980 = vmatpush2.msra.mxu0 0.0
    %2981 = vmatprep.subr.mxu0 0.0
    %2982 = vmatpush2.msra.mxu0 0.0
    %2983 = vmatprep.subr.mxu0 0.0
    %2984 = vmatpush2.msra.mxu0 0.0
    %2985 = vmatprep.subr.mxu0 0.0
    %2986 = vmatpush2.msra.mxu0 0.0
    %2987 = vmatprep.subr.mxu0 0.0
    %2988 = vmatpush2.msra.mxu0 0.0
    %2989 = vmatprep.subr.mxu0 0.0
    %2990 = vmatpush2.msra.mxu0 0.0
    %2991 = vmatprep.subr.mxu0 0.0
    %2992 = vmatpush2.msra.mxu0 0.0
    %2993 = vmatprep.subr.mxu0 0.0
    %2994 = vmatpush2.msra.mxu0 0.0
    %2995 = vmatprep.mubr.f32.mxu0 0.0
    %2996 = vmatmul.mubr.f32.gmra.mxu0 %v2929
    %v2997 = vpop.f32.mrf.mxu0
    %v2998 = vadd.f32 0.0, %v2997
    %v2999 = vpop.f32.mrf.mxu0
    %3000 = vdwg.mxu0
    %3001 = vrot.lane.b32.xlu0 %v2074, 48
    %v3002 = vpop.permute.xlu0 %3001
    %v3005 = vsel %vm231, %v2924, 0
    %3007 = vmatprep.subr.mxu0 0.0
    %3008 = vmatpush1.msra.mxu0 0.0
    %3009 = vmatprep.subr.mxu0 0.0
    %3010 = vmatpush1.msra.mxu0 0.0
    %3011 = vmatprep.subr.mxu0 0.0
    %3012 = vmatpush1.msra.mxu0 0.0
    %3013 = vmatprep.subr.mxu0 0.0
    %3014 = vmatpush1.msra.mxu0 0.0
    %3015 = vmatprep.subr.mxu0 0.0
    %3016 = vmatpush1.msra.mxu0 0.0
    %3017 = vmatprep.subr.mxu0 0.0
    %3018 = vmatpush1.msra.mxu0 0.0
    %3019 = vmatprep.subr.mxu0 0.0
    %3020 = vmatpush1.msra.mxu0 0.0
    %3021 = vmatprep.subr.mxu0 0.0
    %3022 = vmatpush1.msra.mxu0 0.0
    %3023 = vmatprep.subr.mxu0 0.0
    %3024 = vmatpush1.msra.mxu0 0.0
    %3025 = vmatprep.subr.mxu0 0.0
    %3026 = vmatpush1.msra.mxu0 0.0
    %3027 = vmatprep.subr.mxu0 0.0
    %3028 = vmatpush1.msra.mxu0 0.0
    %3029 = vmatprep.subr.mxu0 0.0
    %3030 = vmatpush1.msra.mxu0 0.0
    %3031 = vmatprep.subr.mxu0 0.0
    %3032 = vmatpush1.msra.mxu0 0.0
    %3033 = vmatprep.subr.mxu0 0.0
    %3034 = vmatpush1.msra.mxu0 0.0
    %3035 = vmatprep.subr.mxu0 0.0
    %3036 = vmatpush1.msra.mxu0 0.0
    %3037 = vmatprep.subr.mxu0 0.0
    %3038 = vmatpush1.msra.mxu0 %v3002
    %3039 = vmatprep.subr.mxu0 0.0
    %3040 = vmatpush2.msra.mxu0 0.0
    %3041 = vmatprep.subr.mxu0 0.0
    %3042 = vmatpush2.msra.mxu0 0.0
    %3043 = vmatprep.subr.mxu0 0.0
    %3044 = vmatpush2.msra.mxu0 0.0
    %3045 = vmatprep.subr.mxu0 0.0
    %3046 = vmatpush2.msra.mxu0 0.0
    %3047 = vmatprep.subr.mxu0 0.0
    %3048 = vmatpush2.msra.mxu0 0.0
    %3049 = vmatprep.subr.mxu0 0.0
    %3050 = vmatpush2.msra.mxu0 0.0
    %3051 = vmatprep.subr.mxu0 0.0
    %3052 = vmatpush2.msra.mxu0 0.0
    %3053 = vmatprep.subr.mxu0 0.0
    %3054 = vmatpush2.msra.mxu0 0.0
    %3055 = vmatprep.subr.mxu0 0.0
    %3056 = vmatpush2.msra.mxu0 0.0
    %3057 = vmatprep.subr.mxu0 0.0
    %3058 = vmatpush2.msra.mxu0 0.0
    %3059 = vmatprep.subr.mxu0 0.0
    %3060 = vmatpush2.msra.mxu0 0.0
    %3061 = vmatprep.subr.mxu0 0.0
    %3062 = vmatpush2.msra.mxu0 0.0
    %3063 = vmatprep.subr.mxu0 0.0
    %3064 = vmatpush2.msra.mxu0 0.0
    %3065 = vmatprep.subr.mxu0 0.0
    %3066 = vmatpush2.msra.mxu0 0.0
    %3067 = vmatprep.subr.mxu0 0.0
    %3068 = vmatpush2.msra.mxu0 0.0
    %3069 = vmatprep.subr.mxu0 0.0
    %3070 = vmatpush2.msra.mxu0 0.0
    %3071 = vmatprep.mubr.f32.mxu0 0.0
    %3072 = vmatmul.mubr.f32.gmra.mxu0 %v3005
    %v3073 = vpop.f32.mrf.mxu0
    %v3074 = vadd.f32 0.0, %v3073
    %v3075 = vpop.f32.mrf.mxu0
    %3076 = vdwg.mxu0
    %3077 = vrot.lane.b32.xlu0 %v2069, 104
    %v3078 = vpop.permute.xlu0 %3077
    %3079 = vrot.lane.b32.xlu0 %v2069, 72
    %v3080 = vpop.permute.xlu0 %3079
    %v3081 = vsel %vm231, %v3078, 0
    %v3083 = vsel %vm231, %v3080, 0
    %3085 = vmatprep.subr.mxu0 0.0
    %3086 = vmatpush1.xpose.msra.mxu0 0.0
    %3087 = vmatprep.subr.mxu0 0.0
    %3088 = vmatpush1.xpose.msra.mxu0 0.0
    %3089 = vmatprep.subr.mxu0 0.0
    %3090 = vmatpush1.xpose.msra.mxu0 0.0
    %3091 = vmatprep.subr.mxu0 0.0
    %3092 = vmatpush1.xpose.msra.mxu0 0.0
    %3093 = vmatprep.subr.mxu0 0.0
    %3094 = vmatpush1.xpose.msra.mxu0 0.0
    %3095 = vmatprep.subr.mxu0 0.0
    %3096 = vmatpush1.xpose.msra.mxu0 0.0
    %3097 = vmatprep.subr.mxu0 0.0
    %3098 = vmatpush1.xpose.msra.mxu0 0.0
    %3099 = vmatprep.subr.mxu0 0.0
    %3100 = vmatpush1.xpose.msra.mxu0 0.0
    %3101 = vmatprep.subr.mxu0 0.0
    %3102 = vmatpush1.xpose.msra.mxu0 0.0
    %3103 = vmatprep.subr.mxu0 0.0
    %3104 = vmatpush1.xpose.msra.mxu0 0.0
    %3105 = vmatprep.subr.mxu0 0.0
    %3106 = vmatpush1.xpose.msra.mxu0 0.0
    %3107 = vmatprep.subr.mxu0 0.0
    %3108 = vmatpush1.xpose.msra.mxu0 0.0
    %3109 = vmatprep.subr.mxu0 0.0
    %3110 = vmatpush1.xpose.msra.mxu0 0.0
    %3111 = vmatprep.subr.mxu0 0.0
    %3112 = vmatpush1.xpose.msra.mxu0 0.0
    %3113 = vmatprep.subr.mxu0 0.0
    %3114 = vmatpush1.xpose.msra.mxu0 0.0
    %3115 = vmatprep.subr.mxu0 0.0
    %3116 = vmatpush1.xpose.msra.mxu0 %v3083
    %3117 = vmatprep.subr.mxu0 0.0
    %3118 = vmatpush2.xpose.msra.mxu0 0.0
    %3119 = vmatprep.subr.mxu0 0.0
    %3120 = vmatpush2.xpose.msra.mxu0 0.0
    %3121 = vmatprep.subr.mxu0 0.0
    %3122 = vmatpush2.xpose.msra.mxu0 0.0
    %3123 = vmatprep.subr.mxu0 0.0
    %3124 = vmatpush2.xpose.msra.mxu0 0.0
    %3125 = vmatprep.subr.mxu0 0.0
    %3126 = vmatpush2.xpose.msra.mxu0 0.0
    %3127 = vmatprep.subr.mxu0 0.0
    %3128 = vmatpush2.xpose.msra.mxu0 0.0
    %3129 = vmatprep.subr.mxu0 0.0
    %3130 = vmatpush2.xpose.msra.mxu0 0.0
    %3131 = vmatprep.subr.mxu0 0.0
    %3132 = vmatpush2.xpose.msra.mxu0 0.0
    %3133 = vmatprep.subr.mxu0 0.0
    %3134 = vmatpush2.xpose.msra.mxu0 0.0
    %3135 = vmatprep.subr.mxu0 0.0
    %3136 = vmatpush2.xpose.msra.mxu0 0.0
    %3137 = vmatprep.subr.mxu0 0.0
    %3138 = vmatpush2.xpose.msra.mxu0 0.0
    %3139 = vmatprep.subr.mxu0 0.0
    %3140 = vmatpush2.xpose.msra.mxu0 0.0
    %3141 = vmatprep.subr.mxu0 0.0
    %3142 = vmatpush2.xpose.msra.mxu0 0.0
    %3143 = vmatprep.subr.mxu0 0.0
    %3144 = vmatpush2.xpose.msra.mxu0 0.0
    %3145 = vmatprep.subr.mxu0 0.0
    %3146 = vmatpush2.xpose.msra.mxu0 0.0
    %3147 = vmatprep.subr.mxu0 0.0
    %3148 = vmatpush2.xpose.msra.mxu0 0.0
    %3149 = vmatprep.mubr.f32.mxu0 0.0
    %3150 = vmatmul.mubr.f32.gmra.mxu0 %v3081
    %v3151 = vpop.f32.mrf.mxu0
    %v3152 = vadd.f32 0.0, %v3151
    %v3153 = vpop.f32.mrf.mxu0
    %3154 = vdwg.mxu0
    %3155 = vrot.lane.b32.xlu0 %v2074, 104
    %v3156 = vpop.permute.xlu0 %3155
    %3157 = vrot.lane.b32.xlu0 %v2074, 72
    %v3158 = vpop.permute.xlu0 %3157
    %v3159 = vsel %vm231, %v3156, 0
    %v3161 = vsel %vm231, %v3158, 0
    %3163 = vmatprep.subr.mxu0 0.0
    %3164 = vmatpush1.xpose.msra.mxu0 0.0
    %3165 = vmatprep.subr.mxu0 0.0
    %3166 = vmatpush1.xpose.msra.mxu0 0.0
    %3167 = vmatprep.subr.mxu0 0.0
    %3168 = vmatpush1.xpose.msra.mxu0 0.0
    %3169 = vmatprep.subr.mxu0 0.0
    %3170 = vmatpush1.xpose.msra.mxu0 0.0
    %3171 = vmatprep.subr.mxu0 0.0
    %3172 = vmatpush1.xpose.msra.mxu0 0.0
    %3173 = vmatprep.subr.mxu0 0.0
    %3174 = vmatpush1.xpose.msra.mxu0 0.0
    %3175 = vmatprep.subr.mxu0 0.0
    %3176 = vmatpush1.xpose.msra.mxu0 0.0
    %3177 = vmatprep.subr.mxu0 0.0
    %3178 = vmatpush1.xpose.msra.mxu0 0.0
    %3179 = vmatprep.subr.mxu0 0.0
    %3180 = vmatpush1.xpose.msra.mxu0 0.0
    %3181 = vmatprep.subr.mxu0 0.0
    %3182 = vmatpush1.xpose.msra.mxu0 0.0
    %3183 = vmatprep.subr.mxu0 0.0
    %3184 = vmatpush1.xpose.msra.mxu0 0.0
    %3185 = vmatprep.subr.mxu0 0.0
    %3186 = vmatpush1.xpose.msra.mxu0 0.0
    %3187 = vmatprep.subr.mxu0 0.0
    %3188 = vmatpush1.xpose.msra.mxu0 0.0
    %3189 = vmatprep.subr.mxu0 0.0
    %3190 = vmatpush1.xpose.msra.mxu0 0.0
    %3191 = vmatprep.subr.mxu0 0.0
    %3192 = vmatpush1.xpose.msra.mxu0 0.0
    %3193 = vmatprep.subr.mxu0 0.0
    %3194 = vmatpush1.xpose.msra.mxu0 %v3161
    %3195 = vmatprep.subr.mxu0 0.0
    %3196 = vmatpush2.xpose.msra.mxu0 0.0
    %3197 = vmatprep.subr.mxu0 0.0
    %3198 = vmatpush2.xpose.msra.mxu0 0.0
    %3199 = vmatprep.subr.mxu0 0.0
    %3200 = vmatpush2.xpose.msra.mxu0 0.0
    %3201 = vmatprep.subr.mxu0 0.0
    %3202 = vmatpush2.xpose.msra.mxu0 0.0
    %3203 = vmatprep.subr.mxu0 0.0
    %3204 = vmatpush2.xpose.msra.mxu0 0.0
    %3205 = vmatprep.subr.mxu0 0.0
    %3206 = vmatpush2.xpose.msra.mxu0 0.0
    %3207 = vmatprep.subr.mxu0 0.0
    %3208 = vmatpush2.xpose.msra.mxu0 0.0
    %3209 = vmatprep.subr.mxu0 0.0
    %3210 = vmatpush2.xpose.msra.mxu0 0.0
    %3211 = vmatprep.subr.mxu0 0.0
    %3212 = vmatpush2.xpose.msra.mxu0 0.0
    %3213 = vmatprep.subr.mxu0 0.0
    %3214 = vmatpush2.xpose.msra.mxu0 0.0
    %3215 = vmatprep.subr.mxu0 0.0
    %3216 = vmatpush2.xpose.msra.mxu0 0.0
    %3217 = vmatprep.subr.mxu0 0.0
    %3218 = vmatpush2.xpose.msra.mxu0 0.0
    %3219 = vmatprep.subr.mxu0 0.0
    %3220 = vmatpush2.xpose.msra.mxu0 0.0
    %3221 = vmatprep.subr.mxu0 0.0
    %3222 = vmatpush2.xpose.msra.mxu0 0.0
    %3223 = vmatprep.subr.mxu0 0.0
    %3224 = vmatpush2.xpose.msra.mxu0 0.0
    %3225 = vmatprep.subr.mxu0 0.0
    %3226 = vmatpush2.xpose.msra.mxu0 0.0
    %3227 = vmatprep.mubr.f32.mxu0 0.0
    %3228 = vmatmul.mubr.f32.gmra.mxu0 %v3159
    %v3229 = vpop.f32.mrf.mxu0
    %v3230 = vadd.f32 0.0, %v3229
    %v3231 = vpop.f32.mrf.mxu0
    %3232 = vdwg.mxu0
    %v3233 = vmul.f32 %v3152, 0.35355338
    %v3234 = vmul.f32 %v3230, 0.35355338
    %v3235 = vadd.f32 %v3233, %v388
    %v3236 = vadd.f32 %v3234, %v392
    %v3237 = vsel %vm231, %v3235, -inf
    %3238 = vmax.xlane.f32.xlu0 %v3237
    %v3239 = vpop.xlane.xlu0 %3238
    %v3240 = vsel %vm231, %v3236, -inf
    %3241 = vmax.xlane.f32.xlu0 %v3240
    %v3242 = vpop.xlane.xlu0 %3241
    %v3243 = vsub.f32 %v3235, %v3239
    %v3244 = vsub.f32 %v3236, %v3242
    %v3245 = vmul.f32 %v3243, 1.442695
    %v3246 = vpow.pop %v3245
    %v3247 = vmul.f32 %v3244, 1.442695
    %v3248 = vpow.pop %v3247
    %v3249 = vsel %vm231, %v3246, 0.0
    %3250 = vadd.xlane.f32.xlu0 %v3249
    %v3251 = vpop.xlane.xlu0 %3250
    %v3252 = vsel %vm231, %v3248, 0.0
    %3253 = vadd.xlane.f32.xlu0 %v3252
    %v3254 = vpop.xlane.xlu0 %3253
    %v3255 = vrcp.pop %v3251
    %v3256 = vmul.f32 %v3246, %v3255
    %v3257 = vrcp.pop %v3254
    %v3258 = vmul.f32 %v3248, %v3257
    %3259 = vrot.lane.b32.xlu0 %v2069, 40
    %v3260 = vpop.permute.xlu0 %3259
    %v3263 = vsel %vm231, %v3256, 0
    %3265 = vmatprep.subr.mxu0 0.0
    %3266 = vmatpush1.msra.mxu0 0.0
    %3267 = vmatprep.subr.mxu0 0.0
    %3268 = vmatpush1.msra.mxu0 0.0
    %3269 = vmatprep.subr.mxu0 0.0
    %3270 = vmatpush1.msra.mxu0 0.0
    %3271 = vmatprep.subr.mxu0 0.0
    %3272 = vmatpush1.msra.mxu0 0.0
    %3273 = vmatprep.subr.mxu0 0.0
    %3274 = vmatpush1.msra.mxu0 0.0
    %3275 = vmatprep.subr.mxu0 0.0
    %3276 = vmatpush1.msra.mxu0 0.0
    %3277 = vmatprep.subr.mxu0 0.0
    %3278 = vmatpush1.msra.mxu0 0.0
    %3279 = vmatprep.subr.mxu0 0.0
    %3280 = vmatpush1.msra.mxu0 0.0
    %3281 = vmatprep.subr.mxu0 0.0
    %3282 = vmatpush1.msra.mxu0 0.0
    %3283 = vmatprep.subr.mxu0 0.0
    %3284 = vmatpush1.msra.mxu0 0.0
    %3285 = vmatprep.subr.mxu0 0.0
    %3286 = vmatpush1.msra.mxu0 0.0
    %3287 = vmatprep.subr.mxu0 0.0
    %3288 = vmatpush1.msra.mxu0 0.0
    %3289 = vmatprep.subr.mxu0 0.0
    %3290 = vmatpush1.msra.mxu0 0.0
    %3291 = vmatprep.subr.mxu0 0.0
    %3292 = vmatpush1.msra.mxu0 0.0
    %3293 = vmatprep.subr.mxu0 0.0
    %3294 = vmatpush1.msra.mxu0 0.0
    %3295 = vmatprep.subr.mxu0 0.0
    %3296 = vmatpush1.msra.mxu0 %v3260
    %3297 = vmatprep.subr.mxu0 0.0
    %3298 = vmatpush2.msra.mxu0 0.0
    %3299 = vmatprep.subr.mxu0 0.0
    %3300 = vmatpush2.msra.mxu0 0.0
    %3301 = vmatprep.subr.mxu0 0.0
    %3302 = vmatpush2.msra.mxu0 0.0
    %3303 = vmatprep.subr.mxu0 0.0
    %3304 = vmatpush2.msra.mxu0 0.0
    %3305 = vmatprep.subr.mxu0 0.0
    %3306 = vmatpush2.msra.mxu0 0.0
    %3307 = vmatprep.subr.mxu0 0.0
    %3308 = vmatpush2.msra.mxu0 0.0
    %3309 = vmatprep.subr.mxu0 0.0
    %3310 = vmatpush2.msra.mxu0 0.0
    %3311 = vmatprep.subr.mxu0 0.0
    %3312 = vmatpush2.msra.mxu0 0.0
    %3313 = vmatprep.subr.mxu0 0.0
    %3314 = vmatpush2.msra.mxu0 0.0
    %3315 = vmatprep.subr.mxu0 0.0
    %3316 = vmatpush2.msra.mxu0 0.0
    %3317 = vmatprep.subr.mxu0 0.0
    %3318 = vmatpush2.msra.mxu0 0.0
    %3319 = vmatprep.subr.mxu0 0.0
    %3320 = vmatpush2.msra.mxu0 0.0
    %3321 = vmatprep.subr.mxu0 0.0
    %3322 = vmatpush2.msra.mxu0 0.0
    %3323 = vmatprep.subr.mxu0 0.0
    %3324 = vmatpush2.msra.mxu0 0.0
    %3325 = vmatprep.subr.mxu0 0.0
    %3326 = vmatpush2.msra.mxu0 0.0
    %3327 = vmatprep.subr.mxu0 0.0
    %3328 = vmatpush2.msra.mxu0 0.0
    %3329 = vmatprep.mubr.f32.mxu0 0.0
    %3330 = vmatmul.mubr.f32.gmra.mxu0 %v3263
    %v3331 = vpop.f32.mrf.mxu0
    %v3332 = vadd.f32 0.0, %v3331
    %v3333 = vpop.f32.mrf.mxu0
    %3334 = vdwg.mxu0
    %3335 = vrot.lane.b32.xlu0 %v2074, 40
    %v3336 = vpop.permute.xlu0 %3335
    %v3339 = vsel %vm231, %v3258, 0
    %3341 = vmatprep.subr.mxu0 0.0
    %3342 = vmatpush1.msra.mxu0 0.0
    %3343 = vmatprep.subr.mxu0 0.0
    %3344 = vmatpush1.msra.mxu0 0.0
    %3345 = vmatprep.subr.mxu0 0.0
    %3346 = vmatpush1.msra.mxu0 0.0
    %3347 = vmatprep.subr.mxu0 0.0
    %3348 = vmatpush1.msra.mxu0 0.0
    %3349 = vmatprep.subr.mxu0 0.0
    %3350 = vmatpush1.msra.mxu0 0.0
    %3351 = vmatprep.subr.mxu0 0.0
    %3352 = vmatpush1.msra.mxu0 0.0
    %3353 = vmatprep.subr.mxu0 0.0
    %3354 = vmatpush1.msra.mxu0 0.0
    %3355 = vmatprep.subr.mxu0 0.0
    %3356 = vmatpush1.msra.mxu0 0.0
    %3357 = vmatprep.subr.mxu0 0.0
    %3358 = vmatpush1.msra.mxu0 0.0
    %3359 = vmatprep.subr.mxu0 0.0
    %3360 = vmatpush1.msra.mxu0 0.0
    %3361 = vmatprep.subr.mxu0 0.0
    %3362 = vmatpush1.msra.mxu0 0.0
    %3363 = vmatprep.subr.mxu0 0.0
    %3364 = vmatpush1.msra.mxu0 0.0
    %3365 = vmatprep.subr.mxu0 0.0
    %3366 = vmatpush1.msra.mxu0 0.0
    %3367 = vmatprep.subr.mxu0 0.0
    %3368 = vmatpush1.msra.mxu0 0.0
    %3369 = vmatprep.subr.mxu0 0.0
    %3370 = vmatpush1.msra.mxu0 0.0
    %3371 = vmatprep.subr.mxu0 0.0
    %3372 = vmatpush1.msra.mxu0 %v3336
    %3373 = vmatprep.subr.mxu0 0.0
    %3374 = vmatpush2.msra.mxu0 0.0
    %3375 = vmatprep.subr.mxu0 0.0
    %3376 = vmatpush2.msra.mxu0 0.0
    %3377 = vmatprep.subr.mxu0 0.0
    %3378 = vmatpush2.msra.mxu0 0.0
    %3379 = vmatprep.subr.mxu0 0.0
    %3380 = vmatpush2.msra.mxu0 0.0
    %3381 = vmatprep.subr.mxu0 0.0
    %3382 = vmatpush2.msra.mxu0 0.0
    %3383 = vmatprep.subr.mxu0 0.0
    %3384 = vmatpush2.msra.mxu0 0.0
    %3385 = vmatprep.subr.mxu0 0.0
    %3386 = vmatpush2.msra.mxu0 0.0
    %3387 = vmatprep.subr.mxu0 0.0
    %3388 = vmatpush2.msra.mxu0 0.0
    %3389 = vmatprep.subr.mxu0 0.0
    %3390 = vmatpush2.msra.mxu0 0.0
    %3391 = vmatprep.subr.mxu0 0.0
    %3392 = vmatpush2.msra.mxu0 0.0
    %3393 = vmatprep.subr.mxu0 0.0
    %3394 = vmatpush2.msra.mxu0 0.0
    %3395 = vmatprep.subr.mxu0 0.0
    %3396 = vmatpush2.msra.mxu0 0.0
    %3397 = vmatprep.subr.mxu0 0.0
    %3398 = vmatpush2.msra.mxu0 0.0
    %3399 = vmatprep.subr.mxu0 0.0
    %3400 = vmatpush2.msra.mxu0 0.0
    %3401 = vmatprep.subr.mxu0 0.0
    %3402 = vmatpush2.msra.mxu0 0.0
    %3403 = vmatprep.subr.mxu0 0.0
    %3404 = vmatpush2.msra.mxu0 0.0
    %3405 = vmatprep.mubr.f32.mxu0 0.0
    %3406 = vmatmul.mubr.f32.gmra.mxu0 %v3339
    %v3407 = vpop.f32.mrf.mxu0
    %v3408 = vadd.f32 0.0, %v3407
    %v3409 = vpop.f32.mrf.mxu0
    %3410 = vdwg.mxu0
    %3413 = vrot.lane.b32.xlu0 %v2664, 8
    %v3414 = vpop.permute.xlu0 %3413
    %3415 = vrot.lane.b32.xlu0 %v2740, 8
    %v3416 = vpop.permute.xlu0 %3415
    %3421 = vrot.lane.b32.xlu0 %v2998, 16
    %v3422 = vpop.permute.xlu0 %3421
    %3423 = vrot.lane.b32.xlu0 %v3074, 16
    %v3424 = vpop.permute.xlu0 %3423
    %3429 = vrot.lane.b32.xlu0 %v3332, 24
    %v3430 = vpop.permute.xlu0 %3429
    %3431 = vrot.lane.b32.xlu0 %v3408, 24
    %v3432 = vpop.permute.xlu0 %3431
    %v3435 = vsel %vm231, %v2330, %v3414
    %v3436 = vsel %vm231, %v2406, %v3416
    %v3437 = vsel %vm1599, %v3435, %v3422
    %v3438 = vsel %vm1599, %v3436, %v3424
    %v3439 = vsel %vm1602, %v3437, %v3430
    %v3440 = vsel %vm1602, %v3438, %v3432
    %s3441 = scalar_lea.vmem %s5, 32
    %v3442 = vld [vmem:[%s3441] sm:$0xff]
    %v3443 = vld [vmem:[%s3441 + $0x8] sm:$0xff]
    %v3444 = vld [vmem:[%s3441 + $0x10] sm:$0xff]
    %v3445 = vld [vmem:[%s3441 + $0x18] sm:$0xff]
    %v3446 = vlaneseq
    %v3447 = vshrl.u32 %v3446, 7
    %v3448 = vsub.s32 0, %v3447
    %v3449 = vrot.slane %v1982, %v3448
    %v3451 = vsel %vm93, %v3439, 0
    %v3454 = vsel %vm93, %v3440, 0
    %3456 = vmatprep.subr.mxu0 0.0
    %3457 = vmatpush1.msra.mxu0 0.0
    %3458 = vmatprep.subr.mxu0 0.0
    %3459 = vmatpush1.msra.mxu0 0.0
    %3460 = vmatprep.subr.mxu0 0.0
    %3461 = vmatpush1.msra.mxu0 0.0
    %3462 = vmatprep.subr.mxu0 0.0
    %3463 = vmatpush1.msra.mxu0 0.0
    %3464 = vmatprep.subr.mxu0 0.0
    %3465 = vmatpush1.msra.mxu0 0.0
    %3466 = vmatprep.subr.mxu0 0.0
    %3467 = vmatpush1.msra.mxu0 0.0
    %3468 = vmatprep.subr.mxu0 0.0
    %3469 = vmatpush1.msra.mxu0 0.0
    %3470 = vmatprep.subr.mxu0 0.0
    %3471 = vmatpush1.msra.mxu0 0.0
    %3472 = vmatprep.subr.mxu0 0.0
    %3473 = vmatpush1.msra.mxu0 0.0
    %3474 = vmatprep.subr.mxu0 0.0
    %3475 = vmatpush1.msra.mxu0 0.0
    %3476 = vmatprep.subr.mxu0 0.0
    %3477 = vmatpush1.msra.mxu0 0.0
    %3478 = vmatprep.subr.mxu0 0.0
    %3479 = vmatpush1.msra.mxu0 0.0
    %3480 = vmatprep.subr.mxu0 0.0
    %3481 = vmatpush1.msra.mxu0 %v3445
    %3482 = vmatprep.subr.mxu0 0.0
    %3483 = vmatpush1.msra.mxu0 %v3444
    %3484 = vmatprep.subr.mxu0 0.0
    %3485 = vmatpush1.msra.mxu0 %v3443
    %3486 = vmatprep.subr.mxu0 0.0
    %3487 = vmatpush1.msra.mxu0 %v3442
    %3488 = vmatprep.subr.mxu0 0.0
    %3489 = vmatpush2.msra.mxu0 0.0
    %3490 = vmatprep.subr.mxu0 0.0
    %3491 = vmatpush2.msra.mxu0 0.0
    %3492 = vmatprep.subr.mxu0 0.0
    %3493 = vmatpush2.msra.mxu0 0.0
    %3494 = vmatprep.subr.mxu0 0.0
    %3495 = vmatpush2.msra.mxu0 0.0
    %3496 = vmatprep.subr.mxu0 0.0
    %3497 = vmatpush2.msra.mxu0 0.0
    %3498 = vmatprep.subr.mxu0 0.0
    %3499 = vmatpush2.msra.mxu0 0.0
    %3500 = vmatprep.subr.mxu0 0.0
    %3501 = vmatpush2.msra.mxu0 0.0
    %3502 = vmatprep.subr.mxu0 0.0
    %3503 = vmatpush2.msra.mxu0 0.0
    %3504 = vmatprep.subr.mxu0 0.0
    %3505 = vmatpush2.msra.mxu0 0.0
    %3506 = vmatprep.subr.mxu0 0.0
    %3507 = vmatpush2.msra.mxu0 0.0
    %3508 = vmatprep.subr.mxu0 0.0
    %3509 = vmatpush2.msra.mxu0 0.0
    %3510 = vmatprep.subr.mxu0 0.0
    %3511 = vmatpush2.msra.mxu0 0.0
    %3512 = vmatprep.subr.mxu0 0.0
    %3513 = vmatpush2.msra.mxu0 0.0
    %3514 = vmatprep.subr.mxu0 0.0
    %3515 = vmatpush2.msra.mxu0 0.0
    %3516 = vmatprep.subr.mxu0 0.0
    %3517 = vmatpush2.msra.mxu0 0.0
    %3518 = vmatprep.subr.mxu0 0.0
    %3519 = vmatpush2.msra.mxu0 0.0
    %3520 = vmatprep.mubr.f32.mxu0 0.0
    %3521 = vmatmul.mubr.f32.gmra.mxu0 %v3451
    %v3522 = vpop.f32.mrf.mxu0
    %v3523 = vadd.f32 %v3449, %v3522
    %v3524 = vpop.f32.mrf.mxu0
    %3525 = vmatprep.mubr.f32.mxu0 0.0
    %3526 = vmatmul.mubr.f32.gmra.mxu0 %v3454
    %v3527 = vpop.f32.mrf.mxu0
    %v3528 = vadd.f32 %v3449, %v3527
    %v3529 = vpop.f32.mrf.mxu0
    %3530 = vdwg.mxu0
    %v3531 = vadd.f32 %v3523, %v1976
    %v3532 = vadd.f32 %v3528, %v1977
    %v3533 = vsel %vm93, %v3531, 0.0
    %3534 = vadd.xlane.f32.xlu0 %v3533
    %v3535 = vpop.xlane.xlu0 %3534
    %v3536 = vsel %vm93, %v3532, 0.0
    %3537 = vadd.xlane.f32.xlu0 %v3536
    %v3538 = vpop.xlane.xlu0 %3537
    %v3539 = vmul.f32 %v3535, %v100
    %v3540 = vmul.f32 %v3538, %v100
    %v3541 = vsub.f32 %v3531, %v3539
    %v3542 = vsub.f32 %v3532, %v3540
    %v3543 = vmul.f32 %v3541, %v3541
    %v3544 = vmul.f32 %v3542, %v3542
    %v3545 = vsel %vm93, %v3543, 0.0
    %3546 = vadd.xlane.f32.xlu0 %v3545
    %v3547 = vpop.xlane.xlu0 %3546
    %v3548 = vsel %vm93, %v3544, 0.0
    %3549 = vadd.xlane.f32.xlu0 %v3548
    %v3550 = vpop.xlane.xlu0 %3549
    %v3551 = vmul.f32 %v3547, %v100
    %v3552 = vmul.f32 %v3550, %v100
    %v3553 = vadd.f32 %v3551, 1e-12
    %v3554 = vadd.f32 %v3552, 1e-12
    %v3555 = vrsqrt.pop %v3553
    %v3556 = vrsqrt.pop %v3554
    %v3557 = vmul.f32 %v3541, %v3555
    %v3558 = vmul.f32 %v3542, %v3556
    %v3559 = vlaneseq
    %v3560 = vshrl.u32 %v3559, 7
    %v3561 = vsub.s32 1, %v3560
    %v3562 = vrot.slane %v1982, %v3561
    %v3563 = vmul.f32 %v3557, %v3562
    %v3564 = vmul.f32 %v3558, %v3562
    %v3565 = vlaneseq
    %v3566 = vshrl.u32 %v3565, 7
    %v3567 = vsub.s32 2, %v3566
    %v3568 = vrot.slane %v1982, %v3567
    %v3569 = vadd.f32 %v3563, %v3568
    %v3570 = vadd.f32 %v3564, %v3568
    %s3571 = scalar_lea.vmem %s6, 32
    %v3572 = vld [vmem:[%s3571] sm:$0xff]
    %v3573 = vld [vmem:[%s3571 + $0x8] sm:$0xff]
    %v3574 = vld [vmem:[%s3571 + $0x10] sm:$0xff]
    %v3575 = vld [vmem:[%s3571 + $0x18] sm:$0xff]
    %s3576 = scalar_lea.vmem %s7, 1
    %v3577 = vld [vmem:[%s3576] sm:$0x1]
    %v3579 = vlaneseq
    %v3580 = vshrl.u32 %v3579, 7
    %v3581 = vsub.s32 0, %v3580
    %v3582 = vrot.slane %v3577, %v3581
    %v3585 = vsel %vm93, %v3569, 0
    %v3588 = vsel %vm93, %v3570, 0
    %3590 = vmatprep.subr.mxu0 0.0
    %3591 = vmatpush1.msra.mxu0 0.0
    %3592 = vmatprep.subr.mxu0 0.0
    %3593 = vmatpush1.msra.mxu0 0.0
    %3594 = vmatprep.subr.mxu0 0.0
    %3595 = vmatpush1.msra.mxu0 0.0
    %3596 = vmatprep.subr.mxu0 0.0
    %3597 = vmatpush1.msra.mxu0 0.0
    %3598 = vmatprep.subr.mxu0 0.0
    %3599 = vmatpush1.msra.mxu0 0.0
    %3600 = vmatprep.subr.mxu0 0.0
    %3601 = vmatpush1.msra.mxu0 0.0
    %3602 = vmatprep.subr.mxu0 0.0
    %3603 = vmatpush1.msra.mxu0 0.0
    %3604 = vmatprep.subr.mxu0 0.0
    %3605 = vmatpush1.msra.mxu0 0.0
    %3606 = vmatprep.subr.mxu0 0.0
    %3607 = vmatpush1.msra.mxu0 0.0
    %3608 = vmatprep.subr.mxu0 0.0
    %3609 = vmatpush1.msra.mxu0 0.0
    %3610 = vmatprep.subr.mxu0 0.0
    %3611 = vmatpush1.msra.mxu0 0.0
    %3612 = vmatprep.subr.mxu0 0.0
    %3613 = vmatpush1.msra.mxu0 0.0
    %3614 = vmatprep.subr.mxu0 0.0
    %3615 = vmatpush1.msra.mxu0 %v3575
    %3616 = vmatprep.subr.mxu0 0.0
    %3617 = vmatpush1.msra.mxu0 %v3574
    %3618 = vmatprep.subr.mxu0 0.0
    %3619 = vmatpush1.msra.mxu0 %v3573
    %3620 = vmatprep.subr.mxu0 0.0
    %3621 = vmatpush1.msra.mxu0 %v3572
    %3622 = vmatprep.subr.mxu0 0.0
    %3623 = vmatpush2.msra.mxu0 0.0
    %3624 = vmatprep.subr.mxu0 0.0
    %3625 = vmatpush2.msra.mxu0 0.0
    %3626 = vmatprep.subr.mxu0 0.0
    %3627 = vmatpush2.msra.mxu0 0.0
    %3628 = vmatprep.subr.mxu0 0.0
    %3629 = vmatpush2.msra.mxu0 0.0
    %3630 = vmatprep.subr.mxu0 0.0
    %3631 = vmatpush2.msra.mxu0 0.0
    %3632 = vmatprep.subr.mxu0 0.0
    %3633 = vmatpush2.msra.mxu0 0.0
    %3634 = vmatprep.subr.mxu0 0.0
    %3635 = vmatpush2.msra.mxu0 0.0
    %3636 = vmatprep.subr.mxu0 0.0
    %3637 = vmatpush2.msra.mxu0 0.0
    %3638 = vmatprep.subr.mxu0 0.0
    %3639 = vmatpush2.msra.mxu0 0.0
    %3640 = vmatprep.subr.mxu0 0.0
    %3641 = vmatpush2.msra.mxu0 0.0
    %3642 = vmatprep.subr.mxu0 0.0
    %3643 = vmatpush2.msra.mxu0 0.0
    %3644 = vmatprep.subr.mxu0 0.0
    %3645 = vmatpush2.msra.mxu0 0.0
    %3646 = vmatprep.subr.mxu0 0.0
    %3647 = vmatpush2.msra.mxu0 0.0
    %3648 = vmatprep.subr.mxu0 0.0
    %3649 = vmatpush2.msra.mxu0 0.0
    %3650 = vmatprep.subr.mxu0 0.0
    %3651 = vmatpush2.msra.mxu0 0.0
    %3652 = vmatprep.subr.mxu0 0.0
    %3653 = vmatpush2.msra.mxu0 0.0
    %3654 = vmatprep.mubr.f32.mxu0 0.0
    %3655 = vmatmul.mubr.f32.gmra.mxu0 %v3585
    %v3656 = vpop.f32.mrf.mxu0
    %v3657 = vadd.f32 %v3582, %v3656
    %v3658 = vpop.f32.mrf.mxu0
    %3659 = vmatprep.mubr.f32.mxu0 0.0
    %3660 = vmatmul.mubr.f32.gmra.mxu0 %v3588
    %v3661 = vpop.f32.mrf.mxu0
    %v3662 = vadd.f32 %v3582, %v3661
    %v3663 = vpop.f32.mrf.mxu0
    %3664 = vdwg.mxu0
    %v3665 = vmul.f32 %v3657, 0.5
    %v3666 = vmul.f32 %v3662, 0.5
    %v3667 = vmul.f32 %v3657, 0.044715
    %v3668 = vmul.f32 %v3662, 0.044715
    %v3669 = vmul.f32 %v3667, %v3657
    %v3670 = vmul.f32 %v3668, %v3662
    %v3671 = vmul.f32 %v3669, %v3657
    %v3672 = vmul.f32 %v3670, %v3662
    %v3673 = vadd.f32 %v3657, %v3671
    %v3674 = vadd.f32 %v3662, %v3672
    %v3675 = vmul.f32 %v3673, 0.7978846
    %v3676 = vmul.f32 %v3674, 0.7978846
    %v3677 = vtanh.pop %v3675
    %v3678 = vtanh.pop %v3676
    %v3679 = vadd.f32 %v3677, 1.0
    %v3680 = vadd.f32 %v3678, 1.0
    %v3681 = vmul.f32 %v3665, %v3679
    %v3682 = vmul.f32 %v3666, %v3680
    %s3683 = scalar_lea.vmem %s8, 64
    %v3684 = vld [vmem:[%s3683] sm:$0xff]
    %v3685 = vld [vmem:[%s3683 + $0x8] sm:$0xff]
    %v3686 = vld [vmem:[%s3683 + $0x10] sm:$0xff]
    %v3687 = vld [vmem:[%s3683 + $0x18] sm:$0xff]
    %v3688 = vld [vmem:[%s3683 + $0x20] sm:$0xff]
    %v3689 = vld [vmem:[%s3683 + $0x28] sm:$0xff]
    %v3690 = vld [vmem:[%s3683 + $0x30] sm:$0xff]
    %v3691 = vld [vmem:[%s3683 + $0x38] sm:$0xff]
    %v3692 = vlaneseq
    %v3693 = vshrl.u32 %v3692, 7
    %v3694 = vsub.s32 3, %v3693
    %v3695 = vrot.slane %v1982, %v3694
    %v3697 = vsel %vm1856, %v3681, 0
    %v3700 = vsel %vm1856, %v3682, 0
    %3702 = vmatprep.subr.mxu0 0.0
    %3703 = vmatpush1.msra.mxu0 0.0
    %3704 = vmatprep.subr.mxu0 0.0
    %3705 = vmatpush1.msra.mxu0 0.0
    %3706 = vmatprep.subr.mxu0 0.0
    %3707 = vmatpush1.msra.mxu0 0.0
    %3708 = vmatprep.subr.mxu0 0.0
    %3709 = vmatpush1.msra.mxu0 0.0
    %3710 = vmatprep.subr.mxu0 0.0
    %3711 = vmatpush1.msra.mxu0 0.0
    %3712 = vmatprep.subr.mxu0 0.0
    %3713 = vmatpush1.msra.mxu0 0.0
    %3714 = vmatprep.subr.mxu0 0.0
    %3715 = vmatpush1.msra.mxu0 0.0
    %3716 = vmatprep.subr.mxu0 0.0
    %3717 = vmatpush1.msra.mxu0 0.0
    %3718 = vmatprep.subr.mxu0 0.0
    %3719 = vmatpush1.msra.mxu0 %v3691
    %3720 = vmatprep.subr.mxu0 0.0
    %3721 = vmatpush1.msra.mxu0 %v3690
    %3722 = vmatprep.subr.mxu0 0.0
    %3723 = vmatpush1.msra.mxu0 %v3689
    %3724 = vmatprep.subr.mxu0 0.0
    %3725 = vmatpush1.msra.mxu0 %v3688
    %3726 = vmatprep.subr.mxu0 0.0
    %3727 = vmatpush1.msra.mxu0 %v3687
    %3728 = vmatprep.subr.mxu0 0.0
    %3729 = vmatpush1.msra.mxu0 %v3686
    %3730 = vmatprep.subr.mxu0 0.0
    %3731 = vmatpush1.msra.mxu0 %v3685
    %3732 = vmatprep.subr.mxu0 0.0
    %3733 = vmatpush1.msra.mxu0 %v3684
    %3734 = vmatprep.subr.mxu0 0.0
    %3735 = vmatpush2.msra.mxu0 0.0
    %3736 = vmatprep.subr.mxu0 0.0
    %3737 = vmatpush2.msra.mxu0 0.0
    %3738 = vmatprep.subr.mxu0 0.0
    %3739 = vmatpush2.msra.mxu0 0.0
    %3740 = vmatprep.subr.mxu0 0.0
    %3741 = vmatpush2.msra.mxu0 0.0
    %3742 = vmatprep.subr.mxu0 0.0
    %3743 = vmatpush2.msra.mxu0 0.0
    %3744 = vmatprep.subr.mxu0 0.0
    %3745 = vmatpush2.msra.mxu0 0.0
    %3746 = vmatprep.subr.mxu0 0.0
    %3747 = vmatpush2.msra.mxu0 0.0
    %3748 = vmatprep.subr.mxu0 0.0
    %3749 = vmatpush2.msra.mxu0 0.0
    %3750 = vmatprep.subr.mxu0 0.0
    %3751 = vmatpush2.msra.mxu0 0.0
    %3752 = vmatprep.subr.mxu0 0.0
    %3753 = vmatpush2.msra.mxu0 0.0
    %3754 = vmatprep.subr.mxu0 0.0
    %3755 = vmatpush2.msra.mxu0 0.0
    %3756 = vmatprep.subr.mxu0 0.0
    %3757 = vmatpush2.msra.mxu0 0.0
    %3758 = vmatprep.subr.mxu0 0.0
    %3759 = vmatpush2.msra.mxu0 0.0
    %3760 = vmatprep.subr.mxu0 0.0
    %3761 = vmatpush2.msra.mxu0 0.0
    %3762 = vmatprep.subr.mxu0 0.0
    %3763 = vmatpush2.msra.mxu0 0.0
    %3764 = vmatprep.subr.mxu0 0.0
    %3765 = vmatpush2.msra.mxu0 0.0
    %3766 = vmatprep.mubr.f32.mxu0 0.0
    %3767 = vmatmul.mubr.f32.gmra.mxu0 %v3697
    %v3768 = vpop.f32.mrf.mxu0
    %v3769 = vadd.f32 %v3695, %v3768
    %v3770 = vpop.f32.mrf.mxu0
    %3771 = vmatprep.mubr.f32.mxu0 0.0
    %3772 = vmatmul.mubr.f32.gmra.mxu0 %v3700
    %v3773 = vpop.f32.mrf.mxu0
    %v3774 = vadd.f32 %v3695, %v3773
    %v3775 = vpop.f32.mrf.mxu0
    %3776 = vdwg.mxu0
    %v3777 = vadd.f32 %v3769, %v3569
    %v3778 = vadd.f32 %v3774, %v3570
    %v3779 = vsel %vm93, %v3777, 0.0
    %3780 = vadd.xlane.f32.xlu0 %v3779
    %v3781 = vpop.xlane.xlu0 %3780
    %v3782 = vsel %vm93, %v3778, 0.0
    %3783 = vadd.xlane.f32.xlu0 %v3782
    %v3784 = vpop.xlane.xlu0 %3783
    %v3785 = vmul.f32 %v3781, %v100
    %v3786 = vmul.f32 %v3784, %v100
    %v3787 = vsub.f32 %v3777, %v3785
    %v3788 = vsub.f32 %v3778, %v3786
    %v3789 = vmul.f32 %v3787, %v3787
    %v3790 = vmul.f32 %v3788, %v3788
    %v3791 = vsel %vm93, %v3789, 0.0
    %3792 = vadd.xlane.f32.xlu0 %v3791
    %v3793 = vpop.xlane.xlu0 %3792
    %v3794 = vsel %vm93, %v3790, 0.0
    %3795 = vadd.xlane.f32.xlu0 %v3794
    %v3796 = vpop.xlane.xlu0 %3795
    %v3797 = vmul.f32 %v3793, %v100
    %v3798 = vmul.f32 %v3796, %v100
    %v3799 = vadd.f32 %v3797, 1e-12
    %v3800 = vadd.f32 %v3798, 1e-12
    %v3801 = vrsqrt.pop %v3799
    %v3802 = vrsqrt.pop %v3800
    %v3803 = vmul.f32 %v3787, %v3801
    %v3804 = vmul.f32 %v3788, %v3802
    %v3805 = vlaneseq
    %v3806 = vshrl.u32 %v3805, 7
    %v3807 = vsub.s32 4, %v3806
    %v3808 = vrot.slane %v1982, %v3807
    %v3809 = vmul.f32 %v3803, %v3808
    %v3810 = vmul.f32 %v3804, %v3808
    %v3811 = vlaneseq
    %v3812 = vshrl.u32 %v3811, 7
    %v3813 = vsub.s32 5, %v3812
    %v3814 = vrot.slane %v1982, %v3813
    %v3815 = vadd.f32 %v3809, %v3814
    %v3816 = vadd.f32 %v3810, %v3814
    %s3817 = scalar_lea.vmem %s13, 32
    %3818 = vst.msk [vmem:[%s3817] sm:$0xff] %vm93, %v3815
    %3819 = vst.msk [vmem:[%s3817 + $0x8] sm:$0xff] %vm93, %v3816
    %s3820 = scalar_lea.vmem %s9, 16
    %v3821 = vld [vmem:[%s3820] sm:$0x3f]
    %s3822 = scalar_lea.vmem %s3, 64
    %v3823 = vld [vmem:[%s3822] sm:$0xff]
    %v3824 = vld [vmem:[%s3822 + $0x8] sm:$0xff]
    %v3825 = vld [vmem:[%s3822 + $0x10] sm:$0xff]
    %v3826 = vld [vmem:[%s3822 + $0x18] sm:$0xff]
    %s3827 = scalar_lea.vmem %s4, 2
    %v3828 = vld [vmem:[%s3827] sm:$0x1]
    %v3830 = vlaneseq
    %v3831 = vshrl.u32 %v3830, 7
    %v3832 = vsub.s32 0, %v3831
    %v3833 = vrot.slane %v3828, %v3832
    %v3836 = vsel %vm93, %v3815, 0
    %v3839 = vsel %vm93, %v3816, 0
    %3841 = vmatprep.subr.mxu0 0.0
    %3842 = vmatpush1.msra.mxu0 0.0
    %3843 = vmatprep.subr.mxu0 0.0
    %3844 = vmatpush1.msra.mxu0 0.0
    %3845 = vmatprep.subr.mxu0 0.0
    %3846 = vmatpush1.msra.mxu0 0.0
    %3847 = vmatprep.subr.mxu0 0.0
    %3848 = vmatpush1.msra.mxu0 0.0
    %3849 = vmatprep.subr.mxu0 0.0
    %3850 = vmatpush1.msra.mxu0 0.0
    %3851 = vmatprep.subr.mxu0 0.0
    %3852 = vmatpush1.msra.mxu0 0.0
    %3853 = vmatprep.subr.mxu0 0.0
    %3854 = vmatpush1.msra.mxu0 0.0
    %3855 = vmatprep.subr.mxu0 0.0
    %3856 = vmatpush1.msra.mxu0 0.0
    %3857 = vmatprep.subr.mxu0 0.0
    %3858 = vmatpush1.msra.mxu0 0.0
    %3859 = vmatprep.subr.mxu0 0.0
    %3860 = vmatpush1.msra.mxu0 0.0
    %3861 = vmatprep.subr.mxu0 0.0
    %3862 = vmatpush1.msra.mxu0 0.0
    %3863 = vmatprep.subr.mxu0 0.0
    %3864 = vmatpush1.msra.mxu0 0.0
    %3865 = vmatprep.subr.mxu0 0.0
    %3866 = vmatpush1.msra.mxu0 %v3826
    %3867 = vmatprep.subr.mxu0 0.0
    %3868 = vmatpush1.msra.mxu0 %v3825
    %3869 = vmatprep.subr.mxu0 0.0
    %3870 = vmatpush1.msra.mxu0 %v3824
    %3871 = vmatprep.subr.mxu0 0.0
    %3872 = vmatpush1.msra.mxu0 %v3823
    %3873 = vmatprep.subr.mxu0 0.0
    %3874 = vmatpush2.msra.mxu0 0.0
    %3875 = vmatprep.subr.mxu0 0.0
    %3876 = vmatpush2.msra.mxu0 0.0
    %3877 = vmatprep.subr.mxu0 0.0
    %3878 = vmatpush2.msra.mxu0 0.0
    %3879 = vmatprep.subr.mxu0 0.0
    %3880 = vmatpush2.msra.mxu0 0.0
    %3881 = vmatprep.subr.mxu0 0.0
    %3882 = vmatpush2.msra.mxu0 0.0
    %3883 = vmatprep.subr.mxu0 0.0
    %3884 = vmatpush2.msra.mxu0 0.0
    %3885 = vmatprep.subr.mxu0 0.0
    %3886 = vmatpush2.msra.mxu0 0.0
    %3887 = vmatprep.subr.mxu0 0.0
    %3888 = vmatpush2.msra.mxu0 0.0
    %3889 = vmatprep.subr.mxu0 0.0
    %3890 = vmatpush2.msra.mxu0 0.0
    %3891 = vmatprep.subr.mxu0 0.0
    %3892 = vmatpush2.msra.mxu0 0.0
    %3893 = vmatprep.subr.mxu0 0.0
    %3894 = vmatpush2.msra.mxu0 0.0
    %3895 = vmatprep.subr.mxu0 0.0
    %3896 = vmatpush2.msra.mxu0 0.0
    %3897 = vmatprep.subr.mxu0 0.0
    %3898 = vmatpush2.msra.mxu0 0.0
    %3899 = vmatprep.subr.mxu0 0.0
    %3900 = vmatpush2.msra.mxu0 0.0
    %3901 = vmatprep.subr.mxu0 0.0
    %3902 = vmatpush2.msra.mxu0 0.0
    %3903 = vmatprep.subr.mxu0 0.0
    %3904 = vmatpush2.msra.mxu0 0.0
    %3905 = vmatprep.mubr.f32.mxu0 0.0
    %3906 = vmatmul.mubr.f32.gmra.mxu0 %v3836
    %v3907 = vpop.f32.mrf.mxu0
    %v3908 = vadd.f32 %v3833, %v3907
    %v3909 = vpop.f32.mrf.mxu0
    %3910 = vmatprep.mubr.f32.mxu0 0.0
    %3911 = vmatmul.mubr.f32.gmra.mxu0 %v3839
    %v3912 = vpop.f32.mrf.mxu0
    %v3913 = vadd.f32 %v3833, %v3912
    %v3914 = vpop.f32.mrf.mxu0
    %3915 = vdwg.mxu0
    %3917 = vrot.lane.b32.xlu0 %v3908, 96
    %v3918 = vpop.permute.xlu0 %3917
    %v3919 = vsel %vm231, %v3908, 0
    %v3921 = vsel %vm231, %v3918, 0
    %3923 = vmatprep.subr.mxu0 0.0
    %3924 = vmatpush1.xpose.msra.mxu0 0.0
    %3925 = vmatprep.subr.mxu0 0.0
    %3926 = vmatpush1.xpose.msra.mxu0 0.0
    %3927 = vmatprep.subr.mxu0 0.0
    %3928 = vmatpush1.xpose.msra.mxu0 0.0
    %3929 = vmatprep.subr.mxu0 0.0
    %3930 = vmatpush1.xpose.msra.mxu0 0.0
    %3931 = vmatprep.subr.mxu0 0.0
    %3932 = vmatpush1.xpose.msra.mxu0 0.0
    %3933 = vmatprep.subr.mxu0 0.0
    %3934 = vmatpush1.xpose.msra.mxu0 0.0
    %3935 = vmatprep.subr.mxu0 0.0
    %3936 = vmatpush1.xpose.msra.mxu0 0.0
    %3937 = vmatprep.subr.mxu0 0.0
    %3938 = vmatpush1.xpose.msra.mxu0 0.0
    %3939 = vmatprep.subr.mxu0 0.0
    %3940 = vmatpush1.xpose.msra.mxu0 0.0
    %3941 = vmatprep.subr.mxu0 0.0
    %3942 = vmatpush1.xpose.msra.mxu0 0.0
    %3943 = vmatprep.subr.mxu0 0.0
    %3944 = vmatpush1.xpose.msra.mxu0 0.0
    %3945 = vmatprep.subr.mxu0 0.0
    %3946 = vmatpush1.xpose.msra.mxu0 0.0
    %3947 = vmatprep.subr.mxu0 0.0
    %3948 = vmatpush1.xpose.msra.mxu0 0.0
    %3949 = vmatprep.subr.mxu0 0.0
    %3950 = vmatpush1.xpose.msra.mxu0 0.0
    %3951 = vmatprep.subr.mxu0 0.0
    %3952 = vmatpush1.xpose.msra.mxu0 0.0
    %3953 = vmatprep.subr.mxu0 0.0
    %3954 = vmatpush1.xpose.msra.mxu0 %v3921
    %3955 = vmatprep.subr.mxu0 0.0
    %3956 = vmatpush2.xpose.msra.mxu0 0.0
    %3957 = vmatprep.subr.mxu0 0.0
    %3958 = vmatpush2.xpose.msra.mxu0 0.0
    %3959 = vmatprep.subr.mxu0 0.0
    %3960 = vmatpush2.xpose.msra.mxu0 0.0
    %3961 = vmatprep.subr.mxu0 0.0
    %3962 = vmatpush2.xpose.msra.mxu0 0.0
    %3963 = vmatprep.subr.mxu0 0.0
    %3964 = vmatpush2.xpose.msra.mxu0 0.0
    %3965 = vmatprep.subr.mxu0 0.0
    %3966 = vmatpush2.xpose.msra.mxu0 0.0
    %3967 = vmatprep.subr.mxu0 0.0
    %3968 = vmatpush2.xpose.msra.mxu0 0.0
    %3969 = vmatprep.subr.mxu0 0.0
    %3970 = vmatpush2.xpose.msra.mxu0 0.0
    %3971 = vmatprep.subr.mxu0 0.0
    %3972 = vmatpush2.xpose.msra.mxu0 0.0
    %3973 = vmatprep.subr.mxu0 0.0
    %3974 = vmatpush2.xpose.msra.mxu0 0.0
    %3975 = vmatprep.subr.mxu0 0.0
    %3976 = vmatpush2.xpose.msra.mxu0 0.0
    %3977 = vmatprep.subr.mxu0 0.0
    %3978 = vmatpush2.xpose.msra.mxu0 0.0
    %3979 = vmatprep.subr.mxu0 0.0
    %3980 = vmatpush2.xpose.msra.mxu0 0.0
    %3981 = vmatprep.subr.mxu0 0.0
    %3982 = vmatpush2.xpose.msra.mxu0 0.0
    %3983 = vmatprep.subr.mxu0 0.0
    %3984 = vmatpush2.xpose.msra.mxu0 0.0
    %3985 = vmatprep.subr.mxu0 0.0
    %3986 = vmatpush2.xpose.msra.mxu0 0.0
    %3987 = vmatprep.mubr.f32.mxu0 0.0
    %3988 = vmatmul.mubr.f32.gmra.mxu0 %v3919
    %v3989 = vpop.f32.mrf.mxu0
    %v3990 = vadd.f32 0.0, %v3989
    %v3991 = vpop.f32.mrf.mxu0
    %3992 = vdwg.mxu0
    %3994 = vrot.lane.b32.xlu0 %v3913, 96
    %v3995 = vpop.permute.xlu0 %3994
    %v3996 = vsel %vm231, %v3913, 0
    %v3998 = vsel %vm231, %v3995, 0
    %4000 = vmatprep.subr.mxu0 0.0
    %4001 = vmatpush1.xpose.msra.mxu0 0.0
    %4002 = vmatprep.subr.mxu0 0.0
    %4003 = vmatpush1.xpose.msra.mxu0 0.0
    %4004 = vmatprep.subr.mxu0 0.0
    %4005 = vmatpush1.xpose.msra.mxu0 0.0
    %4006 = vmatprep.subr.mxu0 0.0
    %4007 = vmatpush1.xpose.msra.mxu0 0.0
    %4008 = vmatprep.subr.mxu0 0.0
    %4009 = vmatpush1.xpose.msra.mxu0 0.0
    %4010 = vmatprep.subr.mxu0 0.0
    %4011 = vmatpush1.xpose.msra.mxu0 0.0
    %4012 = vmatprep.subr.mxu0 0.0
    %4013 = vmatpush1.xpose.msra.mxu0 0.0
    %4014 = vmatprep.subr.mxu0 0.0
    %4015 = vmatpush1.xpose.msra.mxu0 0.0
    %4016 = vmatprep.subr.mxu0 0.0
    %4017 = vmatpush1.xpose.msra.mxu0 0.0
    %4018 = vmatprep.subr.mxu0 0.0
    %4019 = vmatpush1.xpose.msra.mxu0 0.0
    %4020 = vmatprep.subr.mxu0 0.0
    %4021 = vmatpush1.xpose.msra.mxu0 0.0
    %4022 = vmatprep.subr.mxu0 0.0
    %4023 = vmatpush1.xpose.msra.mxu0 0.0
    %4024 = vmatprep.subr.mxu0 0.0
    %4025 = vmatpush1.xpose.msra.mxu0 0.0
    %4026 = vmatprep.subr.mxu0 0.0
    %4027 = vmatpush1.xpose.msra.mxu0 0.0
    %4028 = vmatprep.subr.mxu0 0.0
    %4029 = vmatpush1.xpose.msra.mxu0 0.0
    %4030 = vmatprep.subr.mxu0 0.0
    %4031 = vmatpush1.xpose.msra.mxu0 %v3998
    %4032 = vmatprep.subr.mxu0 0.0
    %4033 = vmatpush2.xpose.msra.mxu0 0.0
    %4034 = vmatprep.subr.mxu0 0.0
    %4035 = vmatpush2.xpose.msra.mxu0 0.0
    %4036 = vmatprep.subr.mxu0 0.0
    %4037 = vmatpush2.xpose.msra.mxu0 0.0
    %4038 = vmatprep.subr.mxu0 0.0
    %4039 = vmatpush2.xpose.msra.mxu0 0.0
    %4040 = vmatprep.subr.mxu0 0.0
    %4041 = vmatpush2.xpose.msra.mxu0 0.0
    %4042 = vmatprep.subr.mxu0 0.0
    %4043 = vmatpush2.xpose.msra.mxu0 0.0
    %4044 = vmatprep.subr.mxu0 0.0
    %4045 = vmatpush2.xpose.msra.mxu0 0.0
    %4046 = vmatprep.subr.mxu0 0.0
    %4047 = vmatpush2.xpose.msra.mxu0 0.0
    %4048 = vmatprep.subr.mxu0 0.0
    %4049 = vmatpush2.xpose.msra.mxu0 0.0
    %4050 = vmatprep.subr.mxu0 0.0
    %4051 = vmatpush2.xpose.msra.mxu0 0.0
    %4052 = vmatprep.subr.mxu0 0.0
    %4053 = vmatpush2.xpose.msra.mxu0 0.0
    %4054 = vmatprep.subr.mxu0 0.0
    %4055 = vmatpush2.xpose.msra.mxu0 0.0
    %4056 = vmatprep.subr.mxu0 0.0
    %4057 = vmatpush2.xpose.msra.mxu0 0.0
    %4058 = vmatprep.subr.mxu0 0.0
    %4059 = vmatpush2.xpose.msra.mxu0 0.0
    %4060 = vmatprep.subr.mxu0 0.0
    %4061 = vmatpush2.xpose.msra.mxu0 0.0
    %4062 = vmatprep.subr.mxu0 0.0
    %4063 = vmatpush2.xpose.msra.mxu0 0.0
    %4064 = vmatprep.mubr.f32.mxu0 0.0
    %4065 = vmatmul.mubr.f32.gmra.mxu0 %v3996
    %v4066 = vpop.f32.mrf.mxu0
    %v4067 = vadd.f32 0.0, %v4066
    %v4068 = vpop.f32.mrf.mxu0
    %4069 = vdwg.mxu0
    %v4070 = vmul.f32 %v3990, 0.35355338
    %v4071 = vmul.f32 %v4067, 0.35355338
    %v4072 = vadd.f32 %v4070, %v388
    %v4073 = vadd.f32 %v4071, %v392
    %v4074 = vsel %vm231, %v4072, -inf
    %4075 = vmax.xlane.f32.xlu0 %v4074
    %v4076 = vpop.xlane.xlu0 %4075
    %v4077 = vsel %vm231, %v4073, -inf
    %4078 = vmax.xlane.f32.xlu0 %v4077
    %v4079 = vpop.xlane.xlu0 %4078
    %v4080 = vsub.f32 %v4072, %v4076
    %v4081 = vsub.f32 %v4073, %v4079
    %v4082 = vmul.f32 %v4080, 1.442695
    %v4083 = vpow.pop %v4082
    %v4084 = vmul.f32 %v4081, 1.442695
    %v4085 = vpow.pop %v4084
    %v4086 = vsel %vm231, %v4083, 0.0
    %4087 = vadd.xlane.f32.xlu0 %v4086
    %v4088 = vpop.xlane.xlu0 %4087
    %v4089 = vsel %vm231, %v4085, 0.0
    %4090 = vadd.xlane.f32.xlu0 %v4089
    %v4091 = vpop.xlane.xlu0 %4090
    %v4092 = vrcp.pop %v4088
    %v4093 = vmul.f32 %v4083, %v4092
    %v4094 = vrcp.pop %v4091
    %v4095 = vmul.f32 %v4085, %v4094
    %4096 = vrot.lane.b32.xlu0 %v3908, 64
    %v4097 = vpop.permute.xlu0 %4096
    %v4100 = vsel %vm231, %v4093, 0
    %4102 = vmatprep.subr.mxu0 0.0
    %4103 = vmatpush1.msra.mxu0 0.0
    %4104 = vmatprep.subr.mxu0 0.0
    %4105 = vmatpush1.msra.mxu0 0.0
    %4106 = vmatprep.subr.mxu0 0.0
    %4107 = vmatpush1.msra.mxu0 0.0
    %4108 = vmatprep.subr.mxu0 0.0
    %4109 = vmatpush1.msra.mxu0 0.0
    %4110 = vmatprep.subr.mxu0 0.0
    %4111 = vmatpush1.msra.mxu0 0.0
    %4112 = vmatprep.subr.mxu0 0.0
    %4113 = vmatpush1.msra.mxu0 0.0
    %4114 = vmatprep.subr.mxu0 0.0
    %4115 = vmatpush1.msra.mxu0 0.0
    %4116 = vmatprep.subr.mxu0 0.0
    %4117 = vmatpush1.msra.mxu0 0.0
    %4118 = vmatprep.subr.mxu0 0.0
    %4119 = vmatpush1.msra.mxu0 0.0
    %4120 = vmatprep.subr.mxu0 0.0
    %4121 = vmatpush1.msra.mxu0 0.0
    %4122 = vmatprep.subr.mxu0 0.0
    %4123 = vmatpush1.msra.mxu0 0.0
    %4124 = vmatprep.subr.mxu0 0.0
    %4125 = vmatpush1.msra.mxu0 0.0
    %4126 = vmatprep.subr.mxu0 0.0
    %4127 = vmatpush1.msra.mxu0 0.0
    %4128 = vmatprep.subr.mxu0 0.0
    %4129 = vmatpush1.msra.mxu0 0.0
    %4130 = vmatprep.subr.mxu0 0.0
    %4131 = vmatpush1.msra.mxu0 0.0
    %4132 = vmatprep.subr.mxu0 0.0
    %4133 = vmatpush1.msra.mxu0 %v4097
    %4134 = vmatprep.subr.mxu0 0.0
    %4135 = vmatpush2.msra.mxu0 0.0
    %4136 = vmatprep.subr.mxu0 0.0
    %4137 = vmatpush2.msra.mxu0 0.0
    %4138 = vmatprep.subr.mxu0 0.0
    %4139 = vmatpush2.msra.mxu0 0.0
    %4140 = vmatprep.subr.mxu0 0.0
    %4141 = vmatpush2.msra.mxu0 0.0
    %4142 = vmatprep.subr.mxu0 0.0
    %4143 = vmatpush2.msra.mxu0 0.0
    %4144 = vmatprep.subr.mxu0 0.0
    %4145 = vmatpush2.msra.mxu0 0.0
    %4146 = vmatprep.subr.mxu0 0.0
    %4147 = vmatpush2.msra.mxu0 0.0
    %4148 = vmatprep.subr.mxu0 0.0
    %4149 = vmatpush2.msra.mxu0 0.0
    %4150 = vmatprep.subr.mxu0 0.0
    %4151 = vmatpush2.msra.mxu0 0.0
    %4152 = vmatprep.subr.mxu0 0.0
    %4153 = vmatpush2.msra.mxu0 0.0
    %4154 = vmatprep.subr.mxu0 0.0
    %4155 = vmatpush2.msra.mxu0 0.0
    %4156 = vmatprep.subr.mxu0 0.0
    %4157 = vmatpush2.msra.mxu0 0.0
    %4158 = vmatprep.subr.mxu0 0.0
    %4159 = vmatpush2.msra.mxu0 0.0
    %4160 = vmatprep.subr.mxu0 0.0
    %4161 = vmatpush2.msra.mxu0 0.0
    %4162 = vmatprep.subr.mxu0 0.0
    %4163 = vmatpush2.msra.mxu0 0.0
    %4164 = vmatprep.subr.mxu0 0.0
    %4165 = vmatpush2.msra.mxu0 0.0
    %4166 = vmatprep.mubr.f32.mxu0 0.0
    %4167 = vmatmul.mubr.f32.gmra.mxu0 %v4100
    %v4168 = vpop.f32.mrf.mxu0
    %v4169 = vadd.f32 0.0, %v4168
    %v4170 = vpop.f32.mrf.mxu0
    %4171 = vdwg.mxu0
    %4172 = vrot.lane.b32.xlu0 %v3913, 64
    %v4173 = vpop.permute.xlu0 %4172
    %v4176 = vsel %vm231, %v4095, 0
    %4178 = vmatprep.subr.mxu0 0.0
    %4179 = vmatpush1.msra.mxu0 0.0
    %4180 = vmatprep.subr.mxu0 0.0
    %4181 = vmatpush1.msra.mxu0 0.0
    %4182 = vmatprep.subr.mxu0 0.0
    %4183 = vmatpush1.msra.mxu0 0.0
    %4184 = vmatprep.subr.mxu0 0.0
    %4185 = vmatpush1.msra.mxu0 0.0
    %4186 = vmatprep.subr.mxu0 0.0
    %4187 = vmatpush1.msra.mxu0 0.0
    %4188 = vmatprep.subr.mxu0 0.0
    %4189 = vmatpush1.msra.mxu0 0.0
    %4190 = vmatprep.subr.mxu0 0.0
    %4191 = vmatpush1.msra.mxu0 0.0
    %4192 = vmatprep.subr.mxu0 0.0
    %4193 = vmatpush1.msra.mxu0 0.0
    %4194 = vmatprep.subr.mxu0 0.0
    %4195 = vmatpush1.msra.mxu0 0.0
    %4196 = vmatprep.subr.mxu0 0.0
    %4197 = vmatpush1.msra.mxu0 0.0
    %4198 = vmatprep.subr.mxu0 0.0
    %4199 = vmatpush1.msra.mxu0 0.0
    %4200 = vmatprep.subr.mxu0 0.0
    %4201 = vmatpush1.msra.mxu0 0.0
    %4202 = vmatprep.subr.mxu0 0.0
    %4203 = vmatpush1.msra.mxu0 0.0
    %4204 = vmatprep.subr.mxu0 0.0
    %4205 = vmatpush1.msra.mxu0 0.0
    %4206 = vmatprep.subr.mxu0 0.0
    %4207 = vmatpush1.msra.mxu0 0.0
    %4208 = vmatprep.subr.mxu0 0.0
    %4209 = vmatpush1.msra.mxu0 %v4173
    %4210 = vmatprep.subr.mxu0 0.0
    %4211 = vmatpush2.msra.mxu0 0.0
    %4212 = vmatprep.subr.mxu0 0.0
    %4213 = vmatpush2.msra.mxu0 0.0
    %4214 = vmatprep.subr.mxu0 0.0
    %4215 = vmatpush2.msra.mxu0 0.0
    %4216 = vmatprep.subr.mxu0 0.0
    %4217 = vmatpush2.msra.mxu0 0.0
    %4218 = vmatprep.subr.mxu0 0.0
    %4219 = vmatpush2.msra.mxu0 0.0
    %4220 = vmatprep.subr.mxu0 0.0
    %4221 = vmatpush2.msra.mxu0 0.0
    %4222 = vmatprep.subr.mxu0 0.0
    %4223 = vmatpush2.msra.mxu0 0.0
    %4224 = vmatprep.subr.mxu0 0.0
    %4225 = vmatpush2.msra.mxu0 0.0
    %4226 = vmatprep.subr.mxu0 0.0
    %4227 = vmatpush2.msra.mxu0 0.0
    %4228 = vmatprep.subr.mxu0 0.0
    %4229 = vmatpush2.msra.mxu0 0.0
    %4230 = vmatprep.subr.mxu0 0.0
    %4231 = vmatpush2.msra.mxu0 0.0
    %4232 = vmatprep.subr.mxu0 0.0
    %4233 = vmatpush2.msra.mxu0 0.0
    %4234 = vmatprep.subr.mxu0 0.0
    %4235 = vmatpush2.msra.mxu0 0.0
    %4236 = vmatprep.subr.mxu0 0.0
    %4237 = vmatpush2.msra.mxu0 0.0
    %4238 = vmatprep.subr.mxu0 0.0
    %4239 = vmatpush2.msra.mxu0 0.0
    %4240 = vmatprep.subr.mxu0 0.0
    %4241 = vmatpush2.msra.mxu0 0.0
    %4242 = vmatprep.mubr.f32.mxu0 0.0
    %4243 = vmatmul.mubr.f32.gmra.mxu0 %v4176
    %v4244 = vpop.f32.mrf.mxu0
    %v4245 = vadd.f32 0.0, %v4244
    %v4246 = vpop.f32.mrf.mxu0
    %4247 = vdwg.mxu0
    %4248 = vrot.lane.b32.xlu0 %v3908, 120
    %v4249 = vpop.permute.xlu0 %4248
    %4250 = vrot.lane.b32.xlu0 %v3908, 88
    %v4251 = vpop.permute.xlu0 %4250
    %v4252 = vsel %vm231, %v4249, 0
    %v4254 = vsel %vm231, %v4251, 0
    %4256 = vmatprep.subr.mxu0 0.0
    %4257 = vmatpush1.xpose.msra.mxu0 0.0
    %4258 = vmatprep.subr.mxu0 0.0
    %4259 = vmatpush1.xpose.msra.mxu0 0.0
    %4260 = vmatprep.subr.mxu0 0.0
    %4261 = vmatpush1.xpose.msra.mxu0 0.0
    %4262 = vmatprep.subr.mxu0 0.0
    %4263 = vmatpush1.xpose.msra.mxu0 0.0
    %4264 = vmatprep.subr.mxu0 0.0
    %4265 = vmatpush1.xpose.msra.mxu0 0.0
    %4266 = vmatprep.subr.mxu0 0.0
    %4267 = vmatpush1.xpose.msra.mxu0 0.0
    %4268 = vmatprep.subr.mxu0 0.0
    %4269 = vmatpush1.xpose.msra.mxu0 0.0
    %4270 = vmatprep.subr.mxu0 0.0
    %4271 = vmatpush1.xpose.msra.mxu0 0.0
    %4272 = vmatprep.subr.mxu0 0.0
    %4273 = vmatpush1.xpose.msra.mxu0 0.0
    %4274 = vmatprep.subr.mxu0 0.0
    %4275 = vmatpush1.xpose.msra.mxu0 0.0
    %4276 = vmatprep.subr.mxu0 0.0
    %4277 = vmatpush1.xpose.msra.mxu0 0.0
    %4278 = vmatprep.subr.mxu0 0.0
    %4279 = vmatpush1.xpose.msra.mxu0 0.0
    %4280 = vmatprep.subr.mxu0 0.0
    %4281 = vmatpush1.xpose.msra.mxu0 0.0
    %4282 = vmatprep.subr.mxu0 0.0
    %4283 = vmatpush1.xpose.msra.mxu0 0.0
    %4284 = vmatprep.subr.mxu0 0.0
    %4285 = vmatpush1.xpose.msra.mxu0 0.0
    %4286 = vmatprep.subr.mxu0 0.0
    %4287 = vmatpush1.xpose.msra.mxu0 %v4254
    %4288 = vmatprep.subr.mxu0 0.0
    %4289 = vmatpush2.xpose.msra.mxu0 0.0
    %4290 = vmatprep.subr.mxu0 0.0
    %4291 = vmatpush2.xpose.msra.mxu0 0.0
    %4292 = vmatprep.subr.mxu0 0.0
    %4293 = vmatpush2.xpose.msra.mxu0 0.0
    %4294 = vmatprep.subr.mxu0 0.0
    %4295 = vmatpush2.xpose.msra.mxu0 0.0
    %4296 = vmatprep.subr.mxu0 0.0
    %4297 = vmatpush2.xpose.msra.mxu0 0.0
    %4298 = vmatprep.subr.mxu0 0.0
    %4299 = vmatpush2.xpose.msra.mxu0 0.0
    %4300 = vmatprep.subr.mxu0 0.0
    %4301 = vmatpush2.xpose.msra.mxu0 0.0
    %4302 = vmatprep.subr.mxu0 0.0
    %4303 = vmatpush2.xpose.msra.mxu0 0.0
    %4304 = vmatprep.subr.mxu0 0.0
    %4305 = vmatpush2.xpose.msra.mxu0 0.0
    %4306 = vmatprep.subr.mxu0 0.0
    %4307 = vmatpush2.xpose.msra.mxu0 0.0
    %4308 = vmatprep.subr.mxu0 0.0
    %4309 = vmatpush2.xpose.msra.mxu0 0.0
    %4310 = vmatprep.subr.mxu0 0.0
    %4311 = vmatpush2.xpose.msra.mxu0 0.0
    %4312 = vmatprep.subr.mxu0 0.0
    %4313 = vmatpush2.xpose.msra.mxu0 0.0
    %4314 = vmatprep.subr.mxu0 0.0
    %4315 = vmatpush2.xpose.msra.mxu0 0.0
    %4316 = vmatprep.subr.mxu0 0.0
    %4317 = vmatpush2.xpose.msra.mxu0 0.0
    %4318 = vmatprep.subr.mxu0 0.0
    %4319 = vmatpush2.xpose.msra.mxu0 0.0
    %4320 = vmatprep.mubr.f32.mxu0 0.0
    %4321 = vmatmul.mubr.f32.gmra.mxu0 %v4252
    %v4322 = vpop.f32.mrf.mxu0
    %v4323 = vadd.f32 0.0, %v4322
    %v4324 = vpop.f32.mrf.mxu0
    %4325 = vdwg.mxu0
    %4326 = vrot.lane.b32.xlu0 %v3913, 120
    %v4327 = vpop.permute.xlu0 %4326
    %4328 = vrot.lane.b32.xlu0 %v3913, 88
    %v4329 = vpop.permute.xlu0 %4328
    %v4330 = vsel %vm231, %v4327, 0
    %v4332 = vsel %vm231, %v4329, 0
    %4334 = vmatprep.subr.mxu0 0.0
    %4335 = vmatpush1.xpose.msra.mxu0 0.0
    %4336 = vmatprep.subr.mxu0 0.0
    %4337 = vmatpush1.xpose.msra.mxu0 0.0
    %4338 = vmatprep.subr.mxu0 0.0
    %4339 = vmatpush1.xpose.msra.mxu0 0.0
    %4340 = vmatprep.subr.mxu0 0.0
    %4341 = vmatpush1.xpose.msra.mxu0 0.0
    %4342 = vmatprep.subr.mxu0 0.0
    %4343 = vmatpush1.xpose.msra.mxu0 0.0
    %4344 = vmatprep.subr.mxu0 0.0
    %4345 = vmatpush1.xpose.msra.mxu0 0.0
    %4346 = vmatprep.subr.mxu0 0.0
    %4347 = vmatpush1.xpose.msra.mxu0 0.0
    %4348 = vmatprep.subr.mxu0 0.0
    %4349 = vmatpush1.xpose.msra.mxu0 0.0
    %4350 = vmatprep.subr.mxu0 0.0
    %4351 = vmatpush1.xpose.msra.mxu0 0.0
    %4352 = vmatprep.subr.mxu0 0.0
    %4353 = vmatpush1.xpose.msra.mxu0 0.0
    %4354 = vmatprep.subr.mxu0 0.0
    %4355 = vmatpush1.xpose.msra.mxu0 0.0
    %4356 = vmatprep.subr.mxu0 0.0
    %4357 = vmatpush1.xpose.msra.mxu0 0.0
    %4358 = vmatprep.subr.mxu0 0.0
    %4359 = vmatpush1.xpose.msra.mxu0 0.0
    %4360 = vmatprep.subr.mxu0 0.0
    %4361 = vmatpush1.xpose.msra.mxu0 0.0
    %4362 = vmatprep.subr.mxu0 0.0
    %4363 = vmatpush1.xpose.msra.mxu0 0.0
    %4364 = vmatprep.subr.mxu0 0.0
    %4365 = vmatpush1.xpose.msra.mxu0 %v4332
    %4366 = vmatprep.subr.mxu0 0.0
    %4367 = vmatpush2.xpose.msra.mxu0 0.0
    %4368 = vmatprep.subr.mxu0 0.0
    %4369 = vmatpush2.xpose.msra.mxu0 0.0
    %4370 = vmatprep.subr.mxu0 0.0
    %4371 = vmatpush2.xpose.msra.mxu0 0.0
    %4372 = vmatprep.subr.mxu0 0.0
    %4373 = vmatpush2.xpose.msra.mxu0 0.0
    %4374 = vmatprep.subr.mxu0 0.0
    %4375 = vmatpush2.xpose.msra.mxu0 0.0
    %4376 = vmatprep.subr.mxu0 0.0
    %4377 = vmatpush2.xpose.msra.mxu0 0.0
    %4378 = vmatprep.subr.mxu0 0.0
    %4379 = vmatpush2.xpose.msra.mxu0 0.0
    %4380 = vmatprep.subr.mxu0 0.0
    %4381 = vmatpush2.xpose.msra.mxu0 0.0
    %4382 = vmatprep.subr.mxu0 0.0
    %4383 = vmatpush2.xpose.msra.mxu0 0.0
    %4384 = vmatprep.subr.mxu0 0.0
    %4385 = vmatpush2.xpose.msra.mxu0 0.0
    %4386 = vmatprep.subr.mxu0 0.0
    %4387 = vmatpush2.xpose.msra.mxu0 0.0
    %4388 = vmatprep.subr.mxu0 0.0
    %4389 = vmatpush2.xpose.msra.mxu0 0.0
    %4390 = vmatprep.subr.mxu0 0.0
    %4391 = vmatpush2.xpose.msra.mxu0 0.0
    %4392 = vmatprep.subr.mxu0 0.0
    %4393 = vmatpush2.xpose.msra.mxu0 0.0
    %4394 = vmatprep.subr.mxu0 0.0
    %4395 = vmatpush2.xpose.msra.mxu0 0.0
    %4396 = vmatprep.subr.mxu0 0.0
    %4397 = vmatpush2.xpose.msra.mxu0 0.0
    %4398 = vmatprep.mubr.f32.mxu0 0.0
    %4399 = vmatmul.mubr.f32.gmra.mxu0 %v4330
    %v4400 = vpop.f32.mrf.mxu0
    %v4401 = vadd.f32 0.0, %v4400
    %v4402 = vpop.f32.mrf.mxu0
    %4403 = vdwg.mxu0
    %v4404 = vmul.f32 %v4323, 0.35355338
    %v4405 = vmul.f32 %v4401, 0.35355338
    %v4406 = vadd.f32 %v4404, %v388
    %v4407 = vadd.f32 %v4405, %v392
    %v4408 = vsel %vm231, %v4406, -inf
    %4409 = vmax.xlane.f32.xlu0 %v4408
    %v4410 = vpop.xlane.xlu0 %4409
    %v4411 = vsel %vm231, %v4407, -inf
    %4412 = vmax.xlane.f32.xlu0 %v4411
    %v4413 = vpop.xlane.xlu0 %4412
    %v4414 = vsub.f32 %v4406, %v4410
    %v4415 = vsub.f32 %v4407, %v4413
    %v4416 = vmul.f32 %v4414, 1.442695
    %v4417 = vpow.pop %v4416
    %v4418 = vmul.f32 %v4415, 1.442695
    %v4419 = vpow.pop %v4418
    %v4420 = vsel %vm231, %v4417, 0.0
    %4421 = vadd.xlane.f32.xlu0 %v4420
    %v4422 = vpop.xlane.xlu0 %4421
    %v4423 = vsel %vm231, %v4419, 0.0
    %4424 = vadd.xlane.f32.xlu0 %v4423
    %v4425 = vpop.xlane.xlu0 %4424
    %v4426 = vrcp.pop %v4422
    %v4427 = vmul.f32 %v4417, %v4426
    %v4428 = vrcp.pop %v4425
    %v4429 = vmul.f32 %v4419, %v4428
    %4430 = vrot.lane.b32.xlu0 %v3908, 56
    %v4431 = vpop.permute.xlu0 %4430
    %v4434 = vsel %vm231, %v4427, 0
    %4436 = vmatprep.subr.mxu0 0.0
    %4437 = vmatpush1.msra.mxu0 0.0
    %4438 = vmatprep.subr.mxu0 0.0
    %4439 = vmatpush1.msra.mxu0 0.0
    %4440 = vmatprep.subr.mxu0 0.0
    %4441 = vmatpush1.msra.mxu0 0.0
    %4442 = vmatprep.subr.mxu0 0.0
    %4443 = vmatpush1.msra.mxu0 0.0
    %4444 = vmatprep.subr.mxu0 0.0
    %4445 = vmatpush1.msra.mxu0 0.0
    %4446 = vmatprep.subr.mxu0 0.0
    %4447 = vmatpush1.msra.mxu0 0.0
    %4448 = vmatprep.subr.mxu0 0.0
    %4449 = vmatpush1.msra.mxu0 0.0
    %4450 = vmatprep.subr.mxu0 0.0
    %4451 = vmatpush1.msra.mxu0 0.0
    %4452 = vmatprep.subr.mxu0 0.0
    %4453 = vmatpush1.msra.mxu0 0.0
    %4454 = vmatprep.subr.mxu0 0.0
    %4455 = vmatpush1.msra.mxu0 0.0
    %4456 = vmatprep.subr.mxu0 0.0
    %4457 = vmatpush1.msra.mxu0 0.0
    %4458 = vmatprep.subr.mxu0 0.0
    %4459 = vmatpush1.msra.mxu0 0.0
    %4460 = vmatprep.subr.mxu0 0.0
    %4461 = vmatpush1.msra.mxu0 0.0
    %4462 = vmatprep.subr.mxu0 0.0
    %4463 = vmatpush1.msra.mxu0 0.0
    %4464 = vmatprep.subr.mxu0 0.0
    %4465 = vmatpush1.msra.mxu0 0.0
    %4466 = vmatprep.subr.mxu0 0.0
    %4467 = vmatpush1.msra.mxu0 %v4431
    %4468 = vmatprep.subr.mxu0 0.0
    %4469 = vmatpush2.msra.mxu0 0.0
    %4470 = vmatprep.subr.mxu0 0.0
    %4471 = vmatpush2.msra.mxu0 0.0
    %4472 = vmatprep.subr.mxu0 0.0
    %4473 = vmatpush2.msra.mxu0 0.0
    %4474 = vmatprep.subr.mxu0 0.0
    %4475 = vmatpush2.msra.mxu0 0.0
    %4476 = vmatprep.subr.mxu0 0.0
    %4477 = vmatpush2.msra.mxu0 0.0
    %4478 = vmatprep.subr.mxu0 0.0
    %4479 = vmatpush2.msra.mxu0 0.0
    %4480 = vmatprep.subr.mxu0 0.0
    %4481 = vmatpush2.msra.mxu0 0.0
    %4482 = vmatprep.subr.mxu0 0.0
    %4483 = vmatpush2.msra.mxu0 0.0
    %4484 = vmatprep.subr.mxu0 0.0
    %4485 = vmatpush2.msra.mxu0 0.0
    %4486 = vmatprep.subr.mxu0 0.0
    %4487 = vmatpush2.msra.mxu0 0.0
    %4488 = vmatprep.subr.mxu0 0.0
    %4489 = vmatpush2.msra.mxu0 0.0
    %4490 = vmatprep.subr.mxu0 0.0
    %4491 = vmatpush2.msra.mxu0 0.0
    %4492 = vmatprep.subr.mxu0 0.0
    %4493 = vmatpush2.msra.mxu0 0.0
    %4494 = vmatprep.subr.mxu0 0.0
    %4495 = vmatpush2.msra.mxu0 0.0
    %4496 = vmatprep.subr.mxu0 0.0
    %4497 = vmatpush2.msra.mxu0 0.0
    %4498 = vmatprep.subr.mxu0 0.0
    %4499 = vmatpush2.msra.mxu0 0.0
    %4500 = vmatprep.mubr.f32.mxu0 0.0
    %4501 = vmatmul.mubr.f32.gmra.mxu0 %v4434
    %v4502 = vpop.f32.mrf.mxu0
    %v4503 = vadd.f32 0.0, %v4502
    %v4504 = vpop.f32.mrf.mxu0
    %4505 = vdwg.mxu0
    %4506 = vrot.lane.b32.xlu0 %v3913, 56
    %v4507 = vpop.permute.xlu0 %4506
    %v4510 = vsel %vm231, %v4429, 0
    %4512 = vmatprep.subr.mxu0 0.0
    %4513 = vmatpush1.msra.mxu0 0.0
    %4514 = vmatprep.subr.mxu0 0.0
    %4515 = vmatpush1.msra.mxu0 0.0
    %4516 = vmatprep.subr.mxu0 0.0
    %4517 = vmatpush1.msra.mxu0 0.0
    %4518 = vmatprep.subr.mxu0 0.0
    %4519 = vmatpush1.msra.mxu0 0.0
    %4520 = vmatprep.subr.mxu0 0.0
    %4521 = vmatpush1.msra.mxu0 0.0
    %4522 = vmatprep.subr.mxu0 0.0
    %4523 = vmatpush1.msra.mxu0 0.0
    %4524 = vmatprep.subr.mxu0 0.0
    %4525 = vmatpush1.msra.mxu0 0.0
    %4526 = vmatprep.subr.mxu0 0.0
    %4527 = vmatpush1.msra.mxu0 0.0
    %4528 = vmatprep.subr.mxu0 0.0
    %4529 = vmatpush1.msra.mxu0 0.0
    %4530 = vmatprep.subr.mxu0 0.0
    %4531 = vmatpush1.msra.mxu0 0.0
    %4532 = vmatprep.subr.mxu0 0.0
    %4533 = vmatpush1.msra.mxu0 0.0
    %4534 = vmatprep.subr.mxu0 0.0
    %4535 = vmatpush1.msra.mxu0 0.0
    %4536 = vmatprep.subr.mxu0 0.0
    %4537 = vmatpush1.msra.mxu0 0.0
    %4538 = vmatprep.subr.mxu0 0.0
    %4539 = vmatpush1.msra.mxu0 0.0
    %4540 = vmatprep.subr.mxu0 0.0
    %4541 = vmatpush1.msra.mxu0 0.0
    %4542 = vmatprep.subr.mxu0 0.0
    %4543 = vmatpush1.msra.mxu0 %v4507
    %4544 = vmatprep.subr.mxu0 0.0
    %4545 = vmatpush2.msra.mxu0 0.0
    %4546 = vmatprep.subr.mxu0 0.0
    %4547 = vmatpush2.msra.mxu0 0.0
    %4548 = vmatprep.subr.mxu0 0.0
    %4549 = vmatpush2.msra.mxu0 0.0
    %4550 = vmatprep.subr.mxu0 0.0
    %4551 = vmatpush2.msra.mxu0 0.0
    %4552 = vmatprep.subr.mxu0 0.0
    %4553 = vmatpush2.msra.mxu0 0.0
    %4554 = vmatprep.subr.mxu0 0.0
    %4555 = vmatpush2.msra.mxu0 0.0
    %4556 = vmatprep.subr.mxu0 0.0
    %4557 = vmatpush2.msra.mxu0 0.0
    %4558 = vmatprep.subr.mxu0 0.0
    %4559 = vmatpush2.msra.mxu0 0.0
    %4560 = vmatprep.subr.mxu0 0.0
    %4561 = vmatpush2.msra.mxu0 0.0
    %4562 = vmatprep.subr.mxu0 0.0
    %4563 = vmatpush2.msra.mxu0 0.0
    %4564 = vmatprep.subr.mxu0 0.0
    %4565 = vmatpush2.msra.mxu0 0.0
    %4566 = vmatprep.subr.mxu0 0.0
    %4567 = vmatpush2.msra.mxu0 0.0
    %4568 = vmatprep.subr.mxu0 0.0
    %4569 = vmatpush2.msra.mxu0 0.0
    %4570 = vmatprep.subr.mxu0 0.0
    %4571 = vmatpush2.msra.mxu0 0.0
    %4572 = vmatprep.subr.mxu0 0.0
    %4573 = vmatpush2.msra.mxu0 0.0
    %4574 = vmatprep.subr.mxu0 0.0
    %4575 = vmatpush2.msra.mxu0 0.0
    %4576 = vmatprep.mubr.f32.mxu0 0.0
    %4577 = vmatmul.mubr.f32.gmra.mxu0 %v4510
    %v4578 = vpop.f32.mrf.mxu0
    %v4579 = vadd.f32 0.0, %v4578
    %v4580 = vpop.f32.mrf.mxu0
    %4581 = vdwg.mxu0
    %4582 = vrot.lane.b32.xlu0 %v3908, 112
    %v4583 = vpop.permute.xlu0 %4582
    %4584 = vrot.lane.b32.xlu0 %v3908, 80
    %v4585 = vpop.permute.xlu0 %4584
    %v4586 = vsel %vm231, %v4583, 0
    %v4588 = vsel %vm231, %v4585, 0
    %4590 = vmatprep.subr.mxu0 0.0
    %4591 = vmatpush1.xpose.msra.mxu0 0.0
    %4592 = vmatprep.subr.mxu0 0.0
    %4593 = vmatpush1.xpose.msra.mxu0 0.0
    %4594 = vmatprep.subr.mxu0 0.0
    %4595 = vmatpush1.xpose.msra.mxu0 0.0
    %4596 = vmatprep.subr.mxu0 0.0
    %4597 = vmatpush1.xpose.msra.mxu0 0.0
    %4598 = vmatprep.subr.mxu0 0.0
    %4599 = vmatpush1.xpose.msra.mxu0 0.0
    %4600 = vmatprep.subr.mxu0 0.0
    %4601 = vmatpush1.xpose.msra.mxu0 0.0
    %4602 = vmatprep.subr.mxu0 0.0
    %4603 = vmatpush1.xpose.msra.mxu0 0.0
    %4604 = vmatprep.subr.mxu0 0.0
    %4605 = vmatpush1.xpose.msra.mxu0 0.0
    %4606 = vmatprep.subr.mxu0 0.0
    %4607 = vmatpush1.xpose.msra.mxu0 0.0
    %4608 = vmatprep.subr.mxu0 0.0
    %4609 = vmatpush1.xpose.msra.mxu0 0.0
    %4610 = vmatprep.subr.mxu0 0.0
    %4611 = vmatpush1.xpose.msra.mxu0 0.0
    %4612 = vmatprep.subr.mxu0 0.0
    %4613 = vmatpush1.xpose.msra.mxu0 0.0
    %4614 = vmatprep.subr.mxu0 0.0
    %4615 = vmatpush1.xpose.msra.mxu0 0.0
    %4616 = vmatprep.subr.mxu0 0.0
    %4617 = vmatpush1.xpose.msra.mxu0 0.0
    %4618 = vmatprep.subr.mxu0 0.0
    %4619 = vmatpush1.xpose.msra.mxu0 0.0
    %4620 = vmatprep.subr.mxu0 0.0
    %4621 = vmatpush1.xpose.msra.mxu0 %v4588
    %4622 = vmatprep.subr.mxu0 0.0
    %4623 = vmatpush2.xpose.msra.mxu0 0.0
    %4624 = vmatprep.subr.mxu0 0.0
    %4625 = vmatpush2.xpose.msra.mxu0 0.0
    %4626 = vmatprep.subr.mxu0 0.0
    %4627 = vmatpush2.xpose.msra.mxu0 0.0
    %4628 = vmatprep.subr.mxu0 0.0
    %4629 = vmatpush2.xpose.msra.mxu0 0.0
    %4630 = vmatprep.subr.mxu0 0.0
    %4631 = vmatpush2.xpose.msra.mxu0 0.0
    %4632 = vmatprep.subr.mxu0 0.0
    %4633 = vmatpush2.xpose.msra.mxu0 0.0
    %4634 = vmatprep.subr.mxu0 0.0
    %4635 = vmatpush2.xpose.msra.mxu0 0.0
    %4636 = vmatprep.subr.mxu0 0.0
    %4637 = vmatpush2.xpose.msra.mxu0 0.0
    %4638 = vmatprep.subr.mxu0 0.0
    %4639 = vmatpush2.xpose.msra.mxu0 0.0
    %4640 = vmatprep.subr.mxu0 0.0
    %4641 = vmatpush2.xpose.msra.mxu0 0.0
    %4642 = vmatprep.subr.mxu0 0.0
    %4643 = vmatpush2.xpose.msra.mxu0 0.0
    %4644 = vmatprep.subr.mxu0 0.0
    %4645 = vmatpush2.xpose.msra.mxu0 0.0
    %4646 = vmatprep.subr.mxu0 0.0
    %4647 = vmatpush2.xpose.msra.mxu0 0.0
    %4648 = vmatprep.subr.mxu0 0.0
    %4649 = vmatpush2.xpose.msra.mxu0 0.0
    %4650 = vmatprep.subr.mxu0 0.0
    %4651 = vmatpush2.xpose.msra.mxu0 0.0
    %4652 = vmatprep.subr.mxu0 0.0
    %4653 = vmatpush2.xpose.msra.mxu0 0.0
    %4654 = vmatprep.mubr.f32.mxu0 0.0
    %4655 = vmatmul.mubr.f32.gmra.mxu0 %v4586
    %v4656 = vpop.f32.mrf.mxu0
    %v4657 = vadd.f32 0.0, %v4656
    %v4658 = vpop.f32.mrf.mxu0
    %4659 = vdwg.mxu0
    %4660 = vrot.lane.b32.xlu0 %v3913, 112
    %v4661 = vpop.permute.xlu0 %4660
    %4662 = vrot.lane.b32.xlu0 %v3913, 80
    %v4663 = vpop.permute.xlu0 %4662
    %v4664 = vsel %vm231, %v4661, 0
    %v4666 = vsel %vm231, %v4663, 0
    %4668 = vmatprep.subr.mxu0 0.0
    %4669 = vmatpush1.xpose.msra.mxu0 0.0
    %4670 = vmatprep.subr.mxu0 0.0
    %4671 = vmatpush1.xpose.msra.mxu0 0.0
    %4672 = vmatprep.subr.mxu0 0.0
    %4673 = vmatpush1.xpose.msra.mxu0 0.0
    %4674 = vmatprep.subr.mxu0 0.0
    %4675 = vmatpush1.xpose.msra.mxu0 0.0
    %4676 = vmatprep.subr.mxu0 0.0
    %4677 = vmatpush1.xpose.msra.mxu0 0.0
    %4678 = vmatprep.subr.mxu0 0.0
    %4679 = vmatpush1.xpose.msra.mxu0 0.0
    %4680 = vmatprep.subr.mxu0 0.0
    %4681 = vmatpush1.xpose.msra.mxu0 0.0
    %4682 = vmatprep.subr.mxu0 0.0
    %4683 = vmatpush1.xpose.msra.mxu0 0.0
    %4684 = vmatprep.subr.mxu0 0.0
    %4685 = vmatpush1.xpose.msra.mxu0 0.0
    %4686 = vmatprep.subr.mxu0 0.0
    %4687 = vmatpush1.xpose.msra.mxu0 0.0
    %4688 = vmatprep.subr.mxu0 0.0
    %4689 = vmatpush1.xpose.msra.mxu0 0.0
    %4690 = vmatprep.subr.mxu0 0.0
    %4691 = vmatpush1.xpose.msra.mxu0 0.0
    %4692 = vmatprep.subr.mxu0 0.0
    %4693 = vmatpush1.xpose.msra.mxu0 0.0
    %4694 = vmatprep.subr.mxu0 0.0
    %4695 = vmatpush1.xpose.msra.mxu0 0.0
    %4696 = vmatprep.subr.mxu0 0.0
    %4697 = vmatpush1.xpose.msra.mxu0 0.0
    %4698 = vmatprep.subr.mxu0 0.0
    %4699 = vmatpush1.xpose.msra.mxu0 %v4666
    %4700 = vmatprep.subr.mxu0 0.0
    %4701 = vmatpush2.xpose.msra.mxu0 0.0
    %4702 = vmatprep.subr.mxu0 0.0
    %4703 = vmatpush2.xpose.msra.mxu0 0.0
    %4704 = vmatprep.subr.mxu0 0.0
    %4705 = vmatpush2.xpose.msra.mxu0 0.0
    %4706 = vmatprep.subr.mxu0 0.0
    %4707 = vmatpush2.xpose.msra.mxu0 0.0
    %4708 = vmatprep.subr.mxu0 0.0
    %4709 = vmatpush2.xpose.msra.mxu0 0.0
    %4710 = vmatprep.subr.mxu0 0.0
    %4711 = vmatpush2.xpose.msra.mxu0 0.0
    %4712 = vmatprep.subr.mxu0 0.0
    %4713 = vmatpush2.xpose.msra.mxu0 0.0
    %4714 = vmatprep.subr.mxu0 0.0
    %4715 = vmatpush2.xpose.msra.mxu0 0.0
    %4716 = vmatprep.subr.mxu0 0.0
    %4717 = vmatpush2.xpose.msra.mxu0 0.0
    %4718 = vmatprep.subr.mxu0 0.0
    %4719 = vmatpush2.xpose.msra.mxu0 0.0
    %4720 = vmatprep.subr.mxu0 0.0
    %4721 = vmatpush2.xpose.msra.mxu0 0.0
    %4722 = vmatprep.subr.mxu0 0.0
    %4723 = vmatpush2.xpose.msra.mxu0 0.0
    %4724 = vmatprep.subr.mxu0 0.0
    %4725 = vmatpush2.xpose.msra.mxu0 0.0
    %4726 = vmatprep.subr.mxu0 0.0
    %4727 = vmatpush2.xpose.msra.mxu0 0.0
    %4728 = vmatprep.subr.mxu0 0.0
    %4729 = vmatpush2.xpose.msra.mxu0 0.0
    %4730 = vmatprep.subr.mxu0 0.0
    %4731 = vmatpush2.xpose.msra.mxu0 0.0
    %4732 = vmatprep.mubr.f32.mxu0 0.0
    %4733 = vmatmul.mubr.f32.gmra.mxu0 %v4664
    %v4734 = vpop.f32.mrf.mxu0
    %v4735 = vadd.f32 0.0, %v4734
    %v4736 = vpop.f32.mrf.mxu0
    %4737 = vdwg.mxu0
    %v4738 = vmul.f32 %v4657, 0.35355338
    %v4739 = vmul.f32 %v4735, 0.35355338
    %v4740 = vadd.f32 %v4738, %v388
    %v4741 = vadd.f32 %v4739, %v392
    %v4742 = vsel %vm231, %v4740, -inf
    %4743 = vmax.xlane.f32.xlu0 %v4742
    %v4744 = vpop.xlane.xlu0 %4743
    %v4745 = vsel %vm231, %v4741, -inf
    %4746 = vmax.xlane.f32.xlu0 %v4745
    %v4747 = vpop.xlane.xlu0 %4746
    %v4748 = vsub.f32 %v4740, %v4744
    %v4749 = vsub.f32 %v4741, %v4747
    %v4750 = vmul.f32 %v4748, 1.442695
    %v4751 = vpow.pop %v4750
    %v4752 = vmul.f32 %v4749, 1.442695
    %v4753 = vpow.pop %v4752
    %v4754 = vsel %vm231, %v4751, 0.0
    %4755 = vadd.xlane.f32.xlu0 %v4754
    %v4756 = vpop.xlane.xlu0 %4755
    %v4757 = vsel %vm231, %v4753, 0.0
    %4758 = vadd.xlane.f32.xlu0 %v4757
    %v4759 = vpop.xlane.xlu0 %4758
    %v4760 = vrcp.pop %v4756
    %v4761 = vmul.f32 %v4751, %v4760
    %v4762 = vrcp.pop %v4759
    %v4763 = vmul.f32 %v4753, %v4762
    %4764 = vrot.lane.b32.xlu0 %v3908, 48
    %v4765 = vpop.permute.xlu0 %4764
    %v4768 = vsel %vm231, %v4761, 0
    %4770 = vmatprep.subr.mxu0 0.0
    %4771 = vmatpush1.msra.mxu0 0.0
    %4772 = vmatprep.subr.mxu0 0.0
    %4773 = vmatpush1.msra.mxu0 0.0
    %4774 = vmatprep.subr.mxu0 0.0
    %4775 = vmatpush1.msra.mxu0 0.0
    %4776 = vmatprep.subr.mxu0 0.0
    %4777 = vmatpush1.msra.mxu0 0.0
    %4778 = vmatprep.subr.mxu0 0.0
    %4779 = vmatpush1.msra.mxu0 0.0
    %4780 = vmatprep.subr.mxu0 0.0
    %4781 = vmatpush1.msra.mxu0 0.0
    %4782 = vmatprep.subr.mxu0 0.0
    %4783 = vmatpush1.msra.mxu0 0.0
    %4784 = vmatprep.subr.mxu0 0.0
    %4785 = vmatpush1.msra.mxu0 0.0
    %4786 = vmatprep.subr.mxu0 0.0
    %4787 = vmatpush1.msra.mxu0 0.0
    %4788 = vmatprep.subr.mxu0 0.0
    %4789 = vmatpush1.msra.mxu0 0.0
    %4790 = vmatprep.subr.mxu0 0.0
    %4791 = vmatpush1.msra.mxu0 0.0
    %4792 = vmatprep.subr.mxu0 0.0
    %4793 = vmatpush1.msra.mxu0 0.0
    %4794 = vmatprep.subr.mxu0 0.0
    %4795 = vmatpush1.msra.mxu0 0.0
    %4796 = vmatprep.subr.mxu0 0.0
    %4797 = vmatpush1.msra.mxu0 0.0
    %4798 = vmatprep.subr.mxu0 0.0
    %4799 = vmatpush1.msra.mxu0 0.0
    %4800 = vmatprep.subr.mxu0 0.0
    %4801 = vmatpush1.msra.mxu0 %v4765
    %4802 = vmatprep.subr.mxu0 0.0
    %4803 = vmatpush2.msra.mxu0 0.0
    %4804 = vmatprep.subr.mxu0 0.0
    %4805 = vmatpush2.msra.mxu0 0.0
    %4806 = vmatprep.subr.mxu0 0.0
    %4807 = vmatpush2.msra.mxu0 0.0
    %4808 = vmatprep.subr.mxu0 0.0
    %4809 = vmatpush2.msra.mxu0 0.0
    %4810 = vmatprep.subr.mxu0 0.0
    %4811 = vmatpush2.msra.mxu0 0.0
    %4812 = vmatprep.subr.mxu0 0.0
    %4813 = vmatpush2.msra.mxu0 0.0
    %4814 = vmatprep.subr.mxu0 0.0
    %4815 = vmatpush2.msra.mxu0 0.0
    %4816 = vmatprep.subr.mxu0 0.0
    %4817 = vmatpush2.msra.mxu0 0.0
    %4818 = vmatprep.subr.mxu0 0.0
    %4819 = vmatpush2.msra.mxu0 0.0
    %4820 = vmatprep.subr.mxu0 0.0
    %4821 = vmatpush2.msra.mxu0 0.0
    %4822 = vmatprep.subr.mxu0 0.0
    %4823 = vmatpush2.msra.mxu0 0.0
    %4824 = vmatprep.subr.mxu0 0.0
    %4825 = vmatpush2.msra.mxu0 0.0
    %4826 = vmatprep.subr.mxu0 0.0
    %4827 = vmatpush2.msra.mxu0 0.0
    %4828 = vmatprep.subr.mxu0 0.0
    %4829 = vmatpush2.msra.mxu0 0.0
    %4830 = vmatprep.subr.mxu0 0.0
    %4831 = vmatpush2.msra.mxu0 0.0
    %4832 = vmatprep.subr.mxu0 0.0
    %4833 = vmatpush2.msra.mxu0 0.0
    %4834 = vmatprep.mubr.f32.mxu0 0.0
    %4835 = vmatmul.mubr.f32.gmra.mxu0 %v4768
    %v4836 = vpop.f32.mrf.mxu0
    %v4837 = vadd.f32 0.0, %v4836
    %v4838 = vpop.f32.mrf.mxu0
    %4839 = vdwg.mxu0
    %4840 = vrot.lane.b32.xlu0 %v3913, 48
    %v4841 = vpop.permute.xlu0 %4840
    %v4844 = vsel %vm231, %v4763, 0
    %4846 = vmatprep.subr.mxu0 0.0
    %4847 = vmatpush1.msra.mxu0 0.0
    %4848 = vmatprep.subr.mxu0 0.0
    %4849 = vmatpush1.msra.mxu0 0.0
    %4850 = vmatprep.subr.mxu0 0.0
    %4851 = vmatpush1.msra.mxu0 0.0
    %4852 = vmatprep.subr.mxu0 0.0
    %4853 = vmatpush1.msra.mxu0 0.0
    %4854 = vmatprep.subr.mxu0 0.0
    %4855 = vmatpush1.msra.mxu0 0.0
    %4856 = vmatprep.subr.mxu0 0.0
    %4857 = vmatpush1.msra.mxu0 0.0
    %4858 = vmatprep.subr.mxu0 0.0
    %4859 = vmatpush1.msra.mxu0 0.0
    %4860 = vmatprep.subr.mxu0 0.0
    %4861 = vmatpush1.msra.mxu0 0.0
    %4862 = vmatprep.subr.mxu0 0.0
    %4863 = vmatpush1.msra.mxu0 0.0
    %4864 = vmatprep.subr.mxu0 0.0
    %4865 = vmatpush1.msra.mxu0 0.0
    %4866 = vmatprep.subr.mxu0 0.0
    %4867 = vmatpush1.msra.mxu0 0.0
    %4868 = vmatprep.subr.mxu0 0.0
    %4869 = vmatpush1.msra.mxu0 0.0
    %4870 = vmatprep.subr.mxu0 0.0
    %4871 = vmatpush1.msra.mxu0 0.0
    %4872 = vmatprep.subr.mxu0 0.0
    %4873 = vmatpush1.msra.mxu0 0.0
    %4874 = vmatprep.subr.mxu0 0.0
    %4875 = vmatpush1.msra.mxu0 0.0
    %4876 = vmatprep.subr.mxu0 0.0
    %4877 = vmatpush1.msra.mxu0 %v4841
    %4878 = vmatprep.subr.mxu0 0.0
    %4879 = vmatpush2.msra.mxu0 0.0
    %4880 = vmatprep.subr.mxu0 0.0
    %4881 = vmatpush2.msra.mxu0 0.0
    %4882 = vmatprep.subr.mxu0 0.0
    %4883 = vmatpush2.msra.mxu0 0.0
    %4884 = vmatprep.subr.mxu0 0.0
    %4885 = vmatpush2.msra.mxu0 0.0
    %4886 = vmatprep.subr.mxu0 0.0
    %4887 = vmatpush2.msra.mxu0 0.0
    %4888 = vmatprep.subr.mxu0 0.0
    %4889 = vmatpush2.msra.mxu0 0.0
    %4890 = vmatprep.subr.mxu0 0.0
    %4891 = vmatpush2.msra.mxu0 0.0
    %4892 = vmatprep.subr.mxu0 0.0
    %4893 = vmatpush2.msra.mxu0 0.0
    %4894 = vmatprep.subr.mxu0 0.0
    %4895 = vmatpush2.msra.mxu0 0.0
    %4896 = vmatprep.subr.mxu0 0.0
    %4897 = vmatpush2.msra.mxu0 0.0
    %4898 = vmatprep.subr.mxu0 0.0
    %4899 = vmatpush2.msra.mxu0 0.0
    %4900 = vmatprep.subr.mxu0 0.0
    %4901 = vmatpush2.msra.mxu0 0.0
    %4902 = vmatprep.subr.mxu0 0.0
    %4903 = vmatpush2.msra.mxu0 0.0
    %4904 = vmatprep.subr.mxu0 0.0
    %4905 = vmatpush2.msra.mxu0 0.0
    %4906 = vmatprep.subr.mxu0 0.0
    %4907 = vmatpush2.msra.mxu0 0.0
    %4908 = vmatprep.subr.mxu0 0.0
    %4909 = vmatpush2.msra.mxu0 0.0
    %4910 = vmatprep.mubr.f32.mxu0 0.0
    %4911 = vmatmul.mubr.f32.gmra.mxu0 %v4844
    %v4912 = vpop.f32.mrf.mxu0
    %v4913 = vadd.f32 0.0, %v4912
    %v4914 = vpop.f32.mrf.mxu0
    %4915 = vdwg.mxu0
    %4916 = vrot.lane.b32.xlu0 %v3908, 104
    %v4917 = vpop.permute.xlu0 %4916
    %4918 = vrot.lane.b32.xlu0 %v3908, 72
    %v4919 = vpop.permute.xlu0 %4918
    %v4920 = vsel %vm231, %v4917, 0
    %v4922 = vsel %vm231, %v4919, 0
    %4924 = vmatprep.subr.mxu0 0.0
    %4925 = vmatpush1.xpose.msra.mxu0 0.0
    %4926 = vmatprep.subr.mxu0 0.0
    %4927 = vmatpush1.xpose.msra.mxu0 0.0
    %4928 = vmatprep.subr.mxu0 0.0
    %4929 = vmatpush1.xpose.msra.mxu0 0.0
    %4930 = vmatprep.subr.mxu0 0.0
    %4931 = vmatpush1.xpose.msra.mxu0 0.0
    %4932 = vmatprep.subr.mxu0 0.0
    %4933 = vmatpush1.xpose.msra.mxu0 0.0
    %4934 = vmatprep.subr.mxu0 0.0
    %4935 = vmatpush1.xpose.msra.mxu0 0.0
    %4936 = vmatprep.subr.mxu0 0.0
    %4937 = vmatpush1.xpose.msra.mxu0 0.0
    %4938 = vmatprep.subr.mxu0 0.0
    %4939 = vmatpush1.xpose.msra.mxu0 0.0
    %4940 = vmatprep.subr.mxu0 0.0
    %4941 = vmatpush1.xpose.msra.mxu0 0.0
    %4942 = vmatprep.subr.mxu0 0.0
    %4943 = vmatpush1.xpose.msra.mxu0 0.0
    %4944 = vmatprep.subr.mxu0 0.0
    %4945 = vmatpush1.xpose.msra.mxu0 0.0
    %4946 = vmatprep.subr.mxu0 0.0
    %4947 = vmatpush1.xpose.msra.mxu0 0.0
    %4948 = vmatprep.subr.mxu0 0.0
    %4949 = vmatpush1.xpose.msra.mxu0 0.0
    %4950 = vmatprep.subr.mxu0 0.0
    %4951 = vmatpush1.xpose.msra.mxu0 0.0
    %4952 = vmatprep.subr.mxu0 0.0
    %4953 = vmatpush1.xpose.msra.mxu0 0.0
    %4954 = vmatprep.subr.mxu0 0.0
    %4955 = vmatpush1.xpose.msra.mxu0 %v4922
    %4956 = vmatprep.subr.mxu0 0.0
    %4957 = vmatpush2.xpose.msra.mxu0 0.0
    %4958 = vmatprep.subr.mxu0 0.0
    %4959 = vmatpush2.xpose.msra.mxu0 0.0
    %4960 = vmatprep.subr.mxu0 0.0
    %4961 = vmatpush2.xpose.msra.mxu0 0.0
    %4962 = vmatprep.subr.mxu0 0.0
    %4963 = vmatpush2.xpose.msra.mxu0 0.0
    %4964 = vmatprep.subr.mxu0 0.0
    %4965 = vmatpush2.xpose.msra.mxu0 0.0
    %4966 = vmatprep.subr.mxu0 0.0
    %4967 = vmatpush2.xpose.msra.mxu0 0.0
    %4968 = vmatprep.subr.mxu0 0.0
    %4969 = vmatpush2.xpose.msra.mxu0 0.0
    %4970 = vmatprep.subr.mxu0 0.0
    %4971 = vmatpush2.xpose.msra.mxu0 0.0
    %4972 = vmatprep.subr.mxu0 0.0
    %4973 = vmatpush2.xpose.msra.mxu0 0.0
    %4974 = vmatprep.subr.mxu0 0.0
    %4975 = vmatpush2.xpose.msra.mxu0 0.0
    %4976 = vmatprep.subr.mxu0 0.0
    %4977 = vmatpush2.xpose.msra.mxu0 0.0
    %4978 = vmatprep.subr.mxu0 0.0
    %4979 = vmatpush2.xpose.msra.mxu0 0.0
    %4980 = vmatprep.subr.mxu0 0.0
    %4981 = vmatpush2.xpose.msra.mxu0 0.0
    %4982 = vmatprep.subr.mxu0 0.0
    %4983 = vmatpush2.xpose.msra.mxu0 0.0
    %4984 = vmatprep.subr.mxu0 0.0
    %4985 = vmatpush2.xpose.msra.mxu0 0.0
    %4986 = vmatprep.subr.mxu0 0.0
    %4987 = vmatpush2.xpose.msra.mxu0 0.0
    %4988 = vmatprep.mubr.f32.mxu0 0.0
    %4989 = vmatmul.mubr.f32.gmra.mxu0 %v4920
    %v4990 = vpop.f32.mrf.mxu0
    %v4991 = vadd.f32 0.0, %v4990
    %v4992 = vpop.f32.mrf.mxu0
    %4993 = vdwg.mxu0
    %4994 = vrot.lane.b32.xlu0 %v3913, 104
    %v4995 = vpop.permute.xlu0 %4994
    %4996 = vrot.lane.b32.xlu0 %v3913, 72
    %v4997 = vpop.permute.xlu0 %4996
    %v4998 = vsel %vm231, %v4995, 0
    %v5000 = vsel %vm231, %v4997, 0
    %5002 = vmatprep.subr.mxu0 0.0
    %5003 = vmatpush1.xpose.msra.mxu0 0.0
    %5004 = vmatprep.subr.mxu0 0.0
    %5005 = vmatpush1.xpose.msra.mxu0 0.0
    %5006 = vmatprep.subr.mxu0 0.0
    %5007 = vmatpush1.xpose.msra.mxu0 0.0
    %5008 = vmatprep.subr.mxu0 0.0
    %5009 = vmatpush1.xpose.msra.mxu0 0.0
    %5010 = vmatprep.subr.mxu0 0.0
    %5011 = vmatpush1.xpose.msra.mxu0 0.0
    %5012 = vmatprep.subr.mxu0 0.0
    %5013 = vmatpush1.xpose.msra.mxu0 0.0
    %5014 = vmatprep.subr.mxu0 0.0
    %5015 = vmatpush1.xpose.msra.mxu0 0.0
    %5016 = vmatprep.subr.mxu0 0.0
    %5017 = vmatpush1.xpose.msra.mxu0 0.0
    %5018 = vmatprep.subr.mxu0 0.0
    %5019 = vmatpush1.xpose.msra.mxu0 0.0
    %5020 = vmatprep.subr.mxu0 0.0
    %5021 = vmatpush1.xpose.msra.mxu0 0.0
    %5022 = vmatprep.subr.mxu0 0.0
    %5023 = vmatpush1.xpose.msra.mxu0 0.0
    %5024 = vmatprep.subr.mxu0 0.0
    %5025 = vmatpush1.xpose.msra.mxu0 0.0
    %5026 = vmatprep.subr.mxu0 0.0
    %5027 = vmatpush1.xpose.msra.mxu0 0.0
    %5028 = vmatprep.subr.mxu0 0.0
    %5029 = vmatpush1.xpose.msra.mxu0 0.0
    %5030 = vmatprep.subr.mxu0 0.0
    %5031 = vmatpush1.xpose.msra.mxu0 0.0
    %5032 = vmatprep.subr.mxu0 0.0
    %5033 = vmatpush1.xpose.msra.mxu0 %v5000
    %5034 = vmatprep.subr.mxu0 0.0
    %5035 = vmatpush2.xpose.msra.mxu0 0.0
    %5036 = vmatprep.subr.mxu0 0.0
    %5037 = vmatpush2.xpose.msra.mxu0 0.0
    %5038 = vmatprep.subr.mxu0 0.0
    %5039 = vmatpush2.xpose.msra.mxu0 0.0
    %5040 = vmatprep.subr.mxu0 0.0
    %5041 = vmatpush2.xpose.msra.mxu0 0.0
    %5042 = vmatprep.subr.mxu0 0.0
    %5043 = vmatpush2.xpose.msra.mxu0 0.0
    %5044 = vmatprep.subr.mxu0 0.0
    %5045 = vmatpush2.xpose.msra.mxu0 0.0
    %5046 = vmatprep.subr.mxu0 0.0
    %5047 = vmatpush2.xpose.msra.mxu0 0.0
    %5048 = vmatprep.subr.mxu0 0.0
    %5049 = vmatpush2.xpose.msra.mxu0 0.0
    %5050 = vmatprep.subr.mxu0 0.0
    %5051 = vmatpush2.xpose.msra.mxu0 0.0
    %5052 = vmatprep.subr.mxu0 0.0
    %5053 = vmatpush2.xpose.msra.mxu0 0.0
    %5054 = vmatprep.subr.mxu0 0.0
    %5055 = vmatpush2.xpose.msra.mxu0 0.0
    %5056 = vmatprep.subr.mxu0 0.0
    %5057 = vmatpush2.xpose.msra.mxu0 0.0
    %5058 = vmatprep.subr.mxu0 0.0
    %5059 = vmatpush2.xpose.msra.mxu0 0.0
    %5060 = vmatprep.subr.mxu0 0.0
    %5061 = vmatpush2.xpose.msra.mxu0 0.0
    %5062 = vmatprep.subr.mxu0 0.0
    %5063 = vmatpush2.xpose.msra.mxu0 0.0
    %5064 = vmatprep.subr.mxu0 0.0
    %5065 = vmatpush2.xpose.msra.mxu0 0.0
    %5066 = vmatprep.mubr.f32.mxu0 0.0
    %5067 = vmatmul.mubr.f32.gmra.mxu0 %v4998
    %v5068 = vpop.f32.mrf.mxu0
    %v5069 = vadd.f32 0.0, %v5068
    %v5070 = vpop.f32.mrf.mxu0
    %5071 = vdwg.mxu0
    %v5072 = vmul.f32 %v4991, 0.35355338
    %v5073 = vmul.f32 %v5069, 0.35355338
    %v5074 = vadd.f32 %v5072, %v388
    %v5075 = vadd.f32 %v5073, %v392
    %v5076 = vsel %vm231, %v5074, -inf
    %5077 = vmax.xlane.f32.xlu0 %v5076
    %v5078 = vpop.xlane.xlu0 %5077
    %v5079 = vsel %vm231, %v5075, -inf
    %5080 = vmax.xlane.f32.xlu0 %v5079
    %v5081 = vpop.xlane.xlu0 %5080
    %v5082 = vsub.f32 %v5074, %v5078
    %v5083 = vsub.f32 %v5075, %v5081
    %v5084 = vmul.f32 %v5082, 1.442695
    %v5085 = vpow.pop %v5084
    %v5086 = vmul.f32 %v5083, 1.442695
    %v5087 = vpow.pop %v5086
    %v5088 = vsel %vm231, %v5085, 0.0
    %5089 = vadd.xlane.f32.xlu0 %v5088
    %v5090 = vpop.xlane.xlu0 %5089
    %v5091 = vsel %vm231, %v5087, 0.0
    %5092 = vadd.xlane.f32.xlu0 %v5091
    %v5093 = vpop.xlane.xlu0 %5092
    %v5094 = vrcp.pop %v5090
    %v5095 = vmul.f32 %v5085, %v5094
    %v5096 = vrcp.pop %v5093
    %v5097 = vmul.f32 %v5087, %v5096
    %5098 = vrot.lane.b32.xlu0 %v3908, 40
    %v5099 = vpop.permute.xlu0 %5098
    %v5102 = vsel %vm231, %v5095, 0
    %5104 = vmatprep.subr.mxu0 0.0
    %5105 = vmatpush1.msra.mxu0 0.0
    %5106 = vmatprep.subr.mxu0 0.0
    %5107 = vmatpush1.msra.mxu0 0.0
    %5108 = vmatprep.subr.mxu0 0.0
    %5109 = vmatpush1.msra.mxu0 0.0
    %5110 = vmatprep.subr.mxu0 0.0
    %5111 = vmatpush1.msra.mxu0 0.0
    %5112 = vmatprep.subr.mxu0 0.0
    %5113 = vmatpush1.msra.mxu0 0.0
    %5114 = vmatprep.subr.mxu0 0.0
    %5115 = vmatpush1.msra.mxu0 0.0
    %5116 = vmatprep.subr.mxu0 0.0
    %5117 = vmatpush1.msra.mxu0 0.0
    %5118 = vmatprep.subr.mxu0 0.0
    %5119 = vmatpush1.msra.mxu0 0.0
    %5120 = vmatprep.subr.mxu0 0.0
    %5121 = vmatpush1.msra.mxu0 0.0
    %5122 = vmatprep.subr.mxu0 0.0
    %5123 = vmatpush1.msra.mxu0 0.0
    %5124 = vmatprep.subr.mxu0 0.0
    %5125 = vmatpush1.msra.mxu0 0.0
    %5126 = vmatprep.subr.mxu0 0.0
    %5127 = vmatpush1.msra.mxu0 0.0
    %5128 = vmatprep.subr.mxu0 0.0
    %5129 = vmatpush1.msra.mxu0 0.0
    %5130 = vmatprep.subr.mxu0 0.0
    %5131 = vmatpush1.msra.mxu0 0.0
    %5132 = vmatprep.subr.mxu0 0.0
    %5133 = vmatpush1.msra.mxu0 0.0
    %5134 = vmatprep.subr.mxu0 0.0
    %5135 = vmatpush1.msra.mxu0 %v5099
    %5136 = vmatprep.subr.mxu0 0.0
    %5137 = vmatpush2.msra.mxu0 0.0
    %5138 = vmatprep.subr.mxu0 0.0
    %5139 = vmatpush2.msra.mxu0 0.0
    %5140 = vmatprep.subr.mxu0 0.0
    %5141 = vmatpush2.msra.mxu0 0.0
    %5142 = vmatprep.subr.mxu0 0.0
    %5143 = vmatpush2.msra.mxu0 0.0
    %5144 = vmatprep.subr.mxu0 0.0
    %5145 = vmatpush2.msra.mxu0 0.0
    %5146 = vmatprep.subr.mxu0 0.0
    %5147 = vmatpush2.msra.mxu0 0.0
    %5148 = vmatprep.subr.mxu0 0.0
    %5149 = vmatpush2.msra.mxu0 0.0
    %5150 = vmatprep.subr.mxu0 0.0
    %5151 = vmatpush2.msra.mxu0 0.0
    %5152 = vmatprep.subr.mxu0 0.0
    %5153 = vmatpush2.msra.mxu0 0.0
    %5154 = vmatprep.subr.mxu0 0.0
    %5155 = vmatpush2.msra.mxu0 0.0
    %5156 = vmatprep.subr.mxu0 0.0
    %5157 = vmatpush2.msra.mxu0 0.0
    %5158 = vmatprep.subr.mxu0 0.0
    %5159 = vmatpush2.msra.mxu0 0.0
    %5160 = vmatprep.subr.mxu0 0.0
    %5161 = vmatpush2.msra.mxu0 0.0
    %5162 = vmatprep.subr.mxu0 0.0
    %5163 = vmatpush2.msra.mxu0 0.0
    %5164 = vmatprep.subr.mxu0 0.0
    %5165 = vmatpush2.msra.mxu0 0.0
    %5166 = vmatprep.subr.mxu0 0.0
    %5167 = vmatpush2.msra.mxu0 0.0
    %5168 = vmatprep.mubr.f32.mxu0 0.0
    %5169 = vmatmul.mubr.f32.gmra.mxu0 %v5102
    %v5170 = vpop.f32.mrf.mxu0
    %v5171 = vadd.f32 0.0, %v5170
    %v5172 = vpop.f32.mrf.mxu0
    %5173 = vdwg.mxu0
    %5174 = vrot.lane.b32.xlu0 %v3913, 40
    %v5175 = vpop.permute.xlu0 %5174
    %v5178 = vsel %vm231, %v5097, 0
    %5180 = vmatprep.subr.mxu0 0.0
    %5181 = vmatpush1.msra.mxu0 0.0
    %5182 = vmatprep.subr.mxu0 0.0
    %5183 = vmatpush1.msra.mxu0 0.0
    %5184 = vmatprep.subr.mxu0 0.0
    %5185 = vmatpush1.msra.mxu0 0.0
    %5186 = vmatprep.subr.mxu0 0.0
    %5187 = vmatpush1.msra.mxu0 0.0
    %5188 = vmatprep.subr.mxu0 0.0
    %5189 = vmatpush1.msra.mxu0 0.0
    %5190 = vmatprep.subr.mxu0 0.0
    %5191 = vmatpush1.msra.mxu0 0.0
    %5192 = vmatprep.subr.mxu0 0.0
    %5193 = vmatpush1.msra.mxu0 0.0
    %5194 = vmatprep.subr.mxu0 0.0
    %5195 = vmatpush1.msra.mxu0 0.0
    %5196 = vmatprep.subr.mxu0 0.0
    %5197 = vmatpush1.msra.mxu0 0.0
    %5198 = vmatprep.subr.mxu0 0.0
    %5199 = vmatpush1.msra.mxu0 0.0
    %5200 = vmatprep.subr.mxu0 0.0
    %5201 = vmatpush1.msra.mxu0 0.0
    %5202 = vmatprep.subr.mxu0 0.0
    %5203 = vmatpush1.msra.mxu0 0.0
    %5204 = vmatprep.subr.mxu0 0.0
    %5205 = vmatpush1.msra.mxu0 0.0
    %5206 = vmatprep.subr.mxu0 0.0
    %5207 = vmatpush1.msra.mxu0 0.0
    %5208 = vmatprep.subr.mxu0 0.0
    %5209 = vmatpush1.msra.mxu0 0.0
    %5210 = vmatprep.subr.mxu0 0.0
    %5211 = vmatpush1.msra.mxu0 %v5175
    %5212 = vmatprep.subr.mxu0 0.0
    %5213 = vmatpush2.msra.mxu0 0.0
    %5214 = vmatprep.subr.mxu0 0.0
    %5215 = vmatpush2.msra.mxu0 0.0
    %5216 = vmatprep.subr.mxu0 0.0
    %5217 = vmatpush2.msra.mxu0 0.0
    %5218 = vmatprep.subr.mxu0 0.0
    %5219 = vmatpush2.msra.mxu0 0.0
    %5220 = vmatprep.subr.mxu0 0.0
    %5221 = vmatpush2.msra.mxu0 0.0
    %5222 = vmatprep.subr.mxu0 0.0
    %5223 = vmatpush2.msra.mxu0 0.0
    %5224 = vmatprep.subr.mxu0 0.0
    %5225 = vmatpush2.msra.mxu0 0.0
    %5226 = vmatprep.subr.mxu0 0.0
    %5227 = vmatpush2.msra.mxu0 0.0
    %5228 = vmatprep.subr.mxu0 0.0
    %5229 = vmatpush2.msra.mxu0 0.0
    %5230 = vmatprep.subr.mxu0 0.0
    %5231 = vmatpush2.msra.mxu0 0.0
    %5232 = vmatprep.subr.mxu0 0.0
    %5233 = vmatpush2.msra.mxu0 0.0
    %5234 = vmatprep.subr.mxu0 0.0
    %5235 = vmatpush2.msra.mxu0 0.0
    %5236 = vmatprep.subr.mxu0 0.0
    %5237 = vmatpush2.msra.mxu0 0.0
    %5238 = vmatprep.subr.mxu0 0.0
    %5239 = vmatpush2.msra.mxu0 0.0
    %5240 = vmatprep.subr.mxu0 0.0
    %5241 = vmatpush2.msra.mxu0 0.0
    %5242 = vmatprep.subr.mxu0 0.0
    %5243 = vmatpush2.msra.mxu0 0.0
    %5244 = vmatprep.mubr.f32.mxu0 0.0
    %5245 = vmatmul.mubr.f32.gmra.mxu0 %v5178
    %v5246 = vpop.f32.mrf.mxu0
    %v5247 = vadd.f32 0.0, %v5246
    %v5248 = vpop.f32.mrf.mxu0
    %5249 = vdwg.mxu0
    %5252 = vrot.lane.b32.xlu0 %v4503, 8
    %v5253 = vpop.permute.xlu0 %5252
    %5254 = vrot.lane.b32.xlu0 %v4579, 8
    %v5255 = vpop.permute.xlu0 %5254
    %5260 = vrot.lane.b32.xlu0 %v4837, 16
    %v5261 = vpop.permute.xlu0 %5260
    %5262 = vrot.lane.b32.xlu0 %v4913, 16
    %v5263 = vpop.permute.xlu0 %5262
    %5268 = vrot.lane.b32.xlu0 %v5171, 24
    %v5269 = vpop.permute.xlu0 %5268
    %5270 = vrot.lane.b32.xlu0 %v5247, 24
    %v5271 = vpop.permute.xlu0 %5270
    %v5274 = vsel %vm231, %v4169, %v5253
    %v5275 = vsel %vm231, %v4245, %v5255
    %v5276 = vsel %vm1599, %v5274, %v5261
    %v5277 = vsel %vm1599, %v5275, %v5263
    %v5278 = vsel %vm1602, %v5276, %v5269
    %v5279 = vsel %vm1602, %v5277, %v5271
    %s5280 = scalar_lea.vmem %s5, 64
    %v5281 = vld [vmem:[%s5280] sm:$0xff]
    %v5282 = vld [vmem:[%s5280 + $0x8] sm:$0xff]
    %v5283 = vld [vmem:[%s5280 + $0x10] sm:$0xff]
    %v5284 = vld [vmem:[%s5280 + $0x18] sm:$0xff]
    %v5285 = vlaneseq
    %v5286 = vshrl.u32 %v5285, 7
    %v5287 = vsub.s32 0, %v5286
    %v5288 = vrot.slane %v3821, %v5287
    %v5290 = vsel %vm93, %v5278, 0
    %v5293 = vsel %vm93, %v5279, 0
    %5295 = vmatprep.subr.mxu0 0.0
    %5296 = vmatpush1.msra.mxu0 0.0
    %5297 = vmatprep.subr.mxu0 0.0
    %5298 = vmatpush1.msra.mxu0 0.0
    %5299 = vmatprep.subr.mxu0 0.0
    %5300 = vmatpush1.msra.mxu0 0.0
    %5301 = vmatprep.subr.mxu0 0.0
    %5302 = vmatpush1.msra.mxu0 0.0
    %5303 = vmatprep.subr.mxu0 0.0
    %5304 = vmatpush1.msra.mxu0 0.0
    %5305 = vmatprep.subr.mxu0 0.0
    %5306 = vmatpush1.msra.mxu0 0.0
    %5307 = vmatprep.subr.mxu0 0.0
    %5308 = vmatpush1.msra.mxu0 0.0
    %5309 = vmatprep.subr.mxu0 0.0
    %5310 = vmatpush1.msra.mxu0 0.0
    %5311 = vmatprep.subr.mxu0 0.0
    %5312 = vmatpush1.msra.mxu0 0.0
    %5313 = vmatprep.subr.mxu0 0.0
    %5314 = vmatpush1.msra.mxu0 0.0
    %5315 = vmatprep.subr.mxu0 0.0
    %5316 = vmatpush1.msra.mxu0 0.0
    %5317 = vmatprep.subr.mxu0 0.0
    %5318 = vmatpush1.msra.mxu0 0.0
    %5319 = vmatprep.subr.mxu0 0.0
    %5320 = vmatpush1.msra.mxu0 %v5284
    %5321 = vmatprep.subr.mxu0 0.0
    %5322 = vmatpush1.msra.mxu0 %v5283
    %5323 = vmatprep.subr.mxu0 0.0
    %5324 = vmatpush1.msra.mxu0 %v5282
    %5325 = vmatprep.subr.mxu0 0.0
    %5326 = vmatpush1.msra.mxu0 %v5281
    %5327 = vmatprep.subr.mxu0 0.0
    %5328 = vmatpush2.msra.mxu0 0.0
    %5329 = vmatprep.subr.mxu0 0.0
    %5330 = vmatpush2.msra.mxu0 0.0
    %5331 = vmatprep.subr.mxu0 0.0
    %5332 = vmatpush2.msra.mxu0 0.0
    %5333 = vmatprep.subr.mxu0 0.0
    %5334 = vmatpush2.msra.mxu0 0.0
    %5335 = vmatprep.subr.mxu0 0.0
    %5336 = vmatpush2.msra.mxu0 0.0
    %5337 = vmatprep.subr.mxu0 0.0
    %5338 = vmatpush2.msra.mxu0 0.0
    %5339 = vmatprep.subr.mxu0 0.0
    %5340 = vmatpush2.msra.mxu0 0.0
    %5341 = vmatprep.subr.mxu0 0.0
    %5342 = vmatpush2.msra.mxu0 0.0
    %5343 = vmatprep.subr.mxu0 0.0
    %5344 = vmatpush2.msra.mxu0 0.0
    %5345 = vmatprep.subr.mxu0 0.0
    %5346 = vmatpush2.msra.mxu0 0.0
    %5347 = vmatprep.subr.mxu0 0.0
    %5348 = vmatpush2.msra.mxu0 0.0
    %5349 = vmatprep.subr.mxu0 0.0
    %5350 = vmatpush2.msra.mxu0 0.0
    %5351 = vmatprep.subr.mxu0 0.0
    %5352 = vmatpush2.msra.mxu0 0.0
    %5353 = vmatprep.subr.mxu0 0.0
    %5354 = vmatpush2.msra.mxu0 0.0
    %5355 = vmatprep.subr.mxu0 0.0
    %5356 = vmatpush2.msra.mxu0 0.0
    %5357 = vmatprep.subr.mxu0 0.0
    %5358 = vmatpush2.msra.mxu0 0.0
    %5359 = vmatprep.mubr.f32.mxu0 0.0
    %5360 = vmatmul.mubr.f32.gmra.mxu0 %v5290
    %v5361 = vpop.f32.mrf.mxu0
    %v5362 = vadd.f32 %v5288, %v5361
    %v5363 = vpop.f32.mrf.mxu0
    %5364 = vmatprep.mubr.f32.mxu0 0.0
    %5365 = vmatmul.mubr.f32.gmra.mxu0 %v5293
    %v5366 = vpop.f32.mrf.mxu0
    %v5367 = vadd.f32 %v5288, %v5366
    %v5368 = vpop.f32.mrf.mxu0
    %5369 = vdwg.mxu0
    %v5370 = vadd.f32 %v5362, %v3815
    %v5371 = vadd.f32 %v5367, %v3816
    %v5372 = vsel %vm93, %v5370, 0.0
    %5373 = vadd.xlane.f32.xlu0 %v5372
    %v5374 = vpop.xlane.xlu0 %5373
    %v5375 = vsel %vm93, %v5371, 0.0
    %5376 = vadd.xlane.f32.xlu0 %v5375
    %v5377 = vpop.xlane.xlu0 %5376
    %v5378 = vmul.f32 %v5374, %v100
    %v5379 = vmul.f32 %v5377, %v100
    %v5380 = vsub.f32 %v5370, %v5378
    %v5381 = vsub.f32 %v5371, %v5379
    %v5382 = vmul.f32 %v5380, %v5380
    %v5383 = vmul.f32 %v5381, %v5381
    %v5384 = vsel %vm93, %v5382, 0.0
    %5385 = vadd.xlane.f32.xlu0 %v5384
    %v5386 = vpop.xlane.xlu0 %5385
    %v5387 = vsel %vm93, %v5383, 0.0
    %5388 = vadd.xlane.f32.xlu0 %v5387
    %v5389 = vpop.xlane.xlu0 %5388
    %v5390 = vmul.f32 %v5386, %v100
    %v5391 = vmul.f32 %v5389, %v100
    %v5392 = vadd.f32 %v5390, 1e-12
    %v5393 = vadd.f32 %v5391, 1e-12
    %v5394 = vrsqrt.pop %v5392
    %v5395 = vrsqrt.pop %v5393
    %v5396 = vmul.f32 %v5380, %v5394
    %v5397 = vmul.f32 %v5381, %v5395
    %v5398 = vlaneseq
    %v5399 = vshrl.u32 %v5398, 7
    %v5400 = vsub.s32 1, %v5399
    %v5401 = vrot.slane %v3821, %v5400
    %v5402 = vmul.f32 %v5396, %v5401
    %v5403 = vmul.f32 %v5397, %v5401
    %v5404 = vlaneseq
    %v5405 = vshrl.u32 %v5404, 7
    %v5406 = vsub.s32 2, %v5405
    %v5407 = vrot.slane %v3821, %v5406
    %v5408 = vadd.f32 %v5402, %v5407
    %v5409 = vadd.f32 %v5403, %v5407
    %s5410 = scalar_lea.vmem %s6, 64
    %v5411 = vld [vmem:[%s5410] sm:$0xff]
    %v5412 = vld [vmem:[%s5410 + $0x8] sm:$0xff]
    %v5413 = vld [vmem:[%s5410 + $0x10] sm:$0xff]
    %v5414 = vld [vmem:[%s5410 + $0x18] sm:$0xff]
    %s5415 = scalar_lea.vmem %s7, 2
    %v5416 = vld [vmem:[%s5415] sm:$0x1]
    %v5418 = vlaneseq
    %v5419 = vshrl.u32 %v5418, 7
    %v5420 = vsub.s32 0, %v5419
    %v5421 = vrot.slane %v5416, %v5420
    %v5424 = vsel %vm93, %v5408, 0
    %v5427 = vsel %vm93, %v5409, 0
    %5429 = vmatprep.subr.mxu0 0.0
    %5430 = vmatpush1.msra.mxu0 0.0
    %5431 = vmatprep.subr.mxu0 0.0
    %5432 = vmatpush1.msra.mxu0 0.0
    %5433 = vmatprep.subr.mxu0 0.0
    %5434 = vmatpush1.msra.mxu0 0.0
    %5435 = vmatprep.subr.mxu0 0.0
    %5436 = vmatpush1.msra.mxu0 0.0
    %5437 = vmatprep.subr.mxu0 0.0
    %5438 = vmatpush1.msra.mxu0 0.0
    %5439 = vmatprep.subr.mxu0 0.0
    %5440 = vmatpush1.msra.mxu0 0.0
    %5441 = vmatprep.subr.mxu0 0.0
    %5442 = vmatpush1.msra.mxu0 0.0
    %5443 = vmatprep.subr.mxu0 0.0
    %5444 = vmatpush1.msra.mxu0 0.0
    %5445 = vmatprep.subr.mxu0 0.0
    %5446 = vmatpush1.msra.mxu0 0.0
    %5447 = vmatprep.subr.mxu0 0.0
    %5448 = vmatpush1.msra.mxu0 0.0
    %5449 = vmatprep.subr.mxu0 0.0
    %5450 = vmatpush1.msra.mxu0 0.0
    %5451 = vmatprep.subr.mxu0 0.0
    %5452 = vmatpush1.msra.mxu0 0.0
    %5453 = vmatprep.subr.mxu0 0.0
    %5454 = vmatpush1.msra.mxu0 %v5414
    %5455 = vmatprep.subr.mxu0 0.0
    %5456 = vmatpush1.msra.mxu0 %v5413
    %5457 = vmatprep.subr.mxu0 0.0
    %5458 = vmatpush1.msra.mxu0 %v5412
    %5459 = vmatprep.subr.mxu0 0.0
    %5460 = vmatpush1.msra.mxu0 %v5411
    %5461 = vmatprep.subr.mxu0 0.0
    %5462 = vmatpush2.msra.mxu0 0.0
    %5463 = vmatprep.subr.mxu0 0.0
    %5464 = vmatpush2.msra.mxu0 0.0
    %5465 = vmatprep.subr.mxu0 0.0
    %5466 = vmatpush2.msra.mxu0 0.0
    %5467 = vmatprep.subr.mxu0 0.0
    %5468 = vmatpush2.msra.mxu0 0.0
    %5469 = vmatprep.subr.mxu0 0.0
    %5470 = vmatpush2.msra.mxu0 0.0
    %5471 = vmatprep.subr.mxu0 0.0
    %5472 = vmatpush2.msra.mxu0 0.0
    %5473 = vmatprep.subr.mxu0 0.0
    %5474 = vmatpush2.msra.mxu0 0.0
    %5475 = vmatprep.subr.mxu0 0.0
    %5476 = vmatpush2.msra.mxu0 0.0
    %5477 = vmatprep.subr.mxu0 0.0
    %5478 = vmatpush2.msra.mxu0 0.0
    %5479 = vmatprep.subr.mxu0 0.0
    %5480 = vmatpush2.msra.mxu0 0.0
    %5481 = vmatprep.subr.mxu0 0.0
    %5482 = vmatpush2.msra.mxu0 0.0
    %5483 = vmatprep.subr.mxu0 0.0
    %5484 = vmatpush2.msra.mxu0 0.0
    %5485 = vmatprep.subr.mxu0 0.0
    %5486 = vmatpush2.msra.mxu0 0.0
    %5487 = vmatprep.subr.mxu0 0.0
    %5488 = vmatpush2.msra.mxu0 0.0
    %5489 = vmatprep.subr.mxu0 0.0
    %5490 = vmatpush2.msra.mxu0 0.0
    %5491 = vmatprep.subr.mxu0 0.0
    %5492 = vmatpush2.msra.mxu0 0.0
    %5493 = vmatprep.mubr.f32.mxu0 0.0
    %5494 = vmatmul.mubr.f32.gmra.mxu0 %v5424
    %v5495 = vpop.f32.mrf.mxu0
    %v5496 = vadd.f32 %v5421, %v5495
    %v5497 = vpop.f32.mrf.mxu0
    %5498 = vmatprep.mubr.f32.mxu0 0.0
    %5499 = vmatmul.mubr.f32.gmra.mxu0 %v5427
    %v5500 = vpop.f32.mrf.mxu0
    %v5501 = vadd.f32 %v5421, %v5500
    %v5502 = vpop.f32.mrf.mxu0
    %5503 = vdwg.mxu0
    %v5504 = vmul.f32 %v5496, 0.5
    %v5505 = vmul.f32 %v5501, 0.5
    %v5506 = vmul.f32 %v5496, 0.044715
    %v5507 = vmul.f32 %v5501, 0.044715
    %v5508 = vmul.f32 %v5506, %v5496
    %v5509 = vmul.f32 %v5507, %v5501
    %v5510 = vmul.f32 %v5508, %v5496
    %v5511 = vmul.f32 %v5509, %v5501
    %v5512 = vadd.f32 %v5496, %v5510
    %v5513 = vadd.f32 %v5501, %v5511
    %v5514 = vmul.f32 %v5512, 0.7978846
    %v5515 = vmul.f32 %v5513, 0.7978846
    %v5516 = vtanh.pop %v5514
    %v5517 = vtanh.pop %v5515
    %v5518 = vadd.f32 %v5516, 1.0
    %v5519 = vadd.f32 %v5517, 1.0
    %v5520 = vmul.f32 %v5504, %v5518
    %v5521 = vmul.f32 %v5505, %v5519
    %s5522 = scalar_lea.vmem %s8, 128
    %v5523 = vld [vmem:[%s5522] sm:$0xff]
    %v5524 = vld [vmem:[%s5522 + $0x8] sm:$0xff]
    %v5525 = vld [vmem:[%s5522 + $0x10] sm:$0xff]
    %v5526 = vld [vmem:[%s5522 + $0x18] sm:$0xff]
    %v5527 = vld [vmem:[%s5522 + $0x20] sm:$0xff]
    %v5528 = vld [vmem:[%s5522 + $0x28] sm:$0xff]
    %v5529 = vld [vmem:[%s5522 + $0x30] sm:$0xff]
    %v5530 = vld [vmem:[%s5522 + $0x38] sm:$0xff]
    %v5531 = vlaneseq
    %v5532 = vshrl.u32 %v5531, 7
    %v5533 = vsub.s32 3, %v5532
    %v5534 = vrot.slane %v3821, %v5533
    %v5536 = vsel %vm1856, %v5520, 0
    %v5539 = vsel %vm1856, %v5521, 0
    %5541 = vmatprep.subr.mxu0 0.0
    %5542 = vmatpush1.msra.mxu0 0.0
    %5543 = vmatprep.subr.mxu0 0.0
    %5544 = vmatpush1.msra.mxu0 0.0
    %5545 = vmatprep.subr.mxu0 0.0
    %5546 = vmatpush1.msra.mxu0 0.0
    %5547 = vmatprep.subr.mxu0 0.0
    %5548 = vmatpush1.msra.mxu0 0.0
    %5549 = vmatprep.subr.mxu0 0.0
    %5550 = vmatpush1.msra.mxu0 0.0
    %5551 = vmatprep.subr.mxu0 0.0
    %5552 = vmatpush1.msra.mxu0 0.0
    %5553 = vmatprep.subr.mxu0 0.0
    %5554 = vmatpush1.msra.mxu0 0.0
    %5555 = vmatprep.subr.mxu0 0.0
    %5556 = vmatpush1.msra.mxu0 0.0
    %5557 = vmatprep.subr.mxu0 0.0
    %5558 = vmatpush1.msra.mxu0 %v5530
    %5559 = vmatprep.subr.mxu0 0.0
    %5560 = vmatpush1.msra.mxu0 %v5529
    %5561 = vmatprep.subr.mxu0 0.0
    %5562 = vmatpush1.msra.mxu0 %v5528
    %5563 = vmatprep.subr.mxu0 0.0
    %5564 = vmatpush1.msra.mxu0 %v5527
    %5565 = vmatprep.subr.mxu0 0.0
    %5566 = vmatpush1.msra.mxu0 %v5526
    %5567 = vmatprep.subr.mxu0 0.0
    %5568 = vmatpush1.msra.mxu0 %v5525
    %5569 = vmatprep.subr.mxu0 0.0
    %5570 = vmatpush1.msra.mxu0 %v5524
    %5571 = vmatprep.subr.mxu0 0.0
    %5572 = vmatpush1.msra.mxu0 %v5523
    %5573 = vmatprep.subr.mxu0 0.0
    %5574 = vmatpush2.msra.mxu0 0.0
    %5575 = vmatprep.subr.mxu0 0.0
    %5576 = vmatpush2.msra.mxu0 0.0
    %5577 = vmatprep.subr.mxu0 0.0
    %5578 = vmatpush2.msra.mxu0 0.0
    %5579 = vmatprep.subr.mxu0 0.0
    %5580 = vmatpush2.msra.mxu0 0.0
    %5581 = vmatprep.subr.mxu0 0.0
    %5582 = vmatpush2.msra.mxu0 0.0
    %5583 = vmatprep.subr.mxu0 0.0
    %5584 = vmatpush2.msra.mxu0 0.0
    %5585 = vmatprep.subr.mxu0 0.0
    %5586 = vmatpush2.msra.mxu0 0.0
    %5587 = vmatprep.subr.mxu0 0.0
    %5588 = vmatpush2.msra.mxu0 0.0
    %5589 = vmatprep.subr.mxu0 0.0
    %5590 = vmatpush2.msra.mxu0 0.0
    %5591 = vmatprep.subr.mxu0 0.0
    %5592 = vmatpush2.msra.mxu0 0.0
    %5593 = vmatprep.subr.mxu0 0.0
    %5594 = vmatpush2.msra.mxu0 0.0
    %5595 = vmatprep.subr.mxu0 0.0
    %5596 = vmatpush2.msra.mxu0 0.0
    %5597 = vmatprep.subr.mxu0 0.0
    %5598 = vmatpush2.msra.mxu0 0.0
    %5599 = vmatprep.subr.mxu0 0.0
    %5600 = vmatpush2.msra.mxu0 0.0
    %5601 = vmatprep.subr.mxu0 0.0
    %5602 = vmatpush2.msra.mxu0 0.0
    %5603 = vmatprep.subr.mxu0 0.0
    %5604 = vmatpush2.msra.mxu0 0.0
    %5605 = vmatprep.mubr.f32.mxu0 0.0
    %5606 = vmatmul.mubr.f32.gmra.mxu0 %v5536
    %v5607 = vpop.f32.mrf.mxu0
    %v5608 = vadd.f32 %v5534, %v5607
    %v5609 = vpop.f32.mrf.mxu0
    %5610 = vmatprep.mubr.f32.mxu0 0.0
    %5611 = vmatmul.mubr.f32.gmra.mxu0 %v5539
    %v5612 = vpop.f32.mrf.mxu0
    %v5613 = vadd.f32 %v5534, %v5612
    %v5614 = vpop.f32.mrf.mxu0
    %5615 = vdwg.mxu0
    %v5616 = vadd.f32 %v5608, %v5408
    %v5617 = vadd.f32 %v5613, %v5409
    %v5618 = vsel %vm93, %v5616, 0.0
    %5619 = vadd.xlane.f32.xlu0 %v5618
    %v5620 = vpop.xlane.xlu0 %5619
    %v5621 = vsel %vm93, %v5617, 0.0
    %5622 = vadd.xlane.f32.xlu0 %v5621
    %v5623 = vpop.xlane.xlu0 %5622
    %v5624 = vmul.f32 %v5620, %v100
    %v5625 = vmul.f32 %v5623, %v100
    %v5626 = vsub.f32 %v5616, %v5624
    %v5627 = vsub.f32 %v5617, %v5625
    %v5628 = vmul.f32 %v5626, %v5626
    %v5629 = vmul.f32 %v5627, %v5627
    %v5630 = vsel %vm93, %v5628, 0.0
    %5631 = vadd.xlane.f32.xlu0 %v5630
    %v5632 = vpop.xlane.xlu0 %5631
    %v5633 = vsel %vm93, %v5629, 0.0
    %5634 = vadd.xlane.f32.xlu0 %v5633
    %v5635 = vpop.xlane.xlu0 %5634
    %v5636 = vmul.f32 %v5632, %v100
    %v5637 = vmul.f32 %v5635, %v100
    %v5638 = vadd.f32 %v5636, 1e-12
    %v5639 = vadd.f32 %v5637, 1e-12
    %v5640 = vrsqrt.pop %v5638
    %v5641 = vrsqrt.pop %v5639
    %v5642 = vmul.f32 %v5626, %v5640
    %v5643 = vmul.f32 %v5627, %v5641
    %v5644 = vlaneseq
    %v5645 = vshrl.u32 %v5644, 7
    %v5646 = vsub.s32 4, %v5645
    %v5647 = vrot.slane %v3821, %v5646
    %v5648 = vmul.f32 %v5642, %v5647
    %v5649 = vmul.f32 %v5643, %v5647
    %v5650 = vlaneseq
    %v5651 = vshrl.u32 %v5650, 7
    %v5652 = vsub.s32 5, %v5651
    %v5653 = vrot.slane %v3821, %v5652
    %v5654 = vadd.f32 %v5648, %v5653
    %v5655 = vadd.f32 %v5649, %v5653
    %s5656 = scalar_lea.vmem %s13, 48
    %5657 = vst.msk [vmem:[%s5656] sm:$0xff] %vm93, %v5654
    %5658 = vst.msk [vmem:[%s5656 + $0x8] sm:$0xff] %vm93, %v5655
    %s5659 = scalar_lea.vmem %s9, 24
    %v5660 = vld [vmem:[%s5659] sm:$0x3f]
    %s5661 = scalar_lea.vmem %s3, 96
    %v5662 = vld [vmem:[%s5661] sm:$0xff]
    %v5663 = vld [vmem:[%s5661 + $0x8] sm:$0xff]
    %v5664 = vld [vmem:[%s5661 + $0x10] sm:$0xff]
    %v5665 = vld [vmem:[%s5661 + $0x18] sm:$0xff]
    %s5666 = scalar_lea.vmem %s4, 3
    %v5667 = vld [vmem:[%s5666] sm:$0x1]
    %v5669 = vlaneseq
    %v5670 = vshrl.u32 %v5669, 7
    %v5671 = vsub.s32 0, %v5670
    %v5672 = vrot.slane %v5667, %v5671
    %v5675 = vsel %vm93, %v5654, 0
    %v5678 = vsel %vm93, %v5655, 0
    %5680 = vmatprep.subr.mxu0 0.0
    %5681 = vmatpush1.msra.mxu0 0.0
    %5682 = vmatprep.subr.mxu0 0.0
    %5683 = vmatpush1.msra.mxu0 0.0
    %5684 = vmatprep.subr.mxu0 0.0
    %5685 = vmatpush1.msra.mxu0 0.0
    %5686 = vmatprep.subr.mxu0 0.0
    %5687 = vmatpush1.msra.mxu0 0.0
    %5688 = vmatprep.subr.mxu0 0.0
    %5689 = vmatpush1.msra.mxu0 0.0
    %5690 = vmatprep.subr.mxu0 0.0
    %5691 = vmatpush1.msra.mxu0 0.0
    %5692 = vmatprep.subr.mxu0 0.0
    %5693 = vmatpush1.msra.mxu0 0.0
    %5694 = vmatprep.subr.mxu0 0.0
    %5695 = vmatpush1.msra.mxu0 0.0
    %5696 = vmatprep.subr.mxu0 0.0
    %5697 = vmatpush1.msra.mxu0 0.0
    %5698 = vmatprep.subr.mxu0 0.0
    %5699 = vmatpush1.msra.mxu0 0.0
    %5700 = vmatprep.subr.mxu0 0.0
    %5701 = vmatpush1.msra.mxu0 0.0
    %5702 = vmatprep.subr.mxu0 0.0
    %5703 = vmatpush1.msra.mxu0 0.0
    %5704 = vmatprep.subr.mxu0 0.0
    %5705 = vmatpush1.msra.mxu0 %v5665
    %5706 = vmatprep.subr.mxu0 0.0
    %5707 = vmatpush1.msra.mxu0 %v5664
    %5708 = vmatprep.subr.mxu0 0.0
    %5709 = vmatpush1.msra.mxu0 %v5663
    %5710 = vmatprep.subr.mxu0 0.0
    %5711 = vmatpush1.msra.mxu0 %v5662
    %5712 = vmatprep.subr.mxu0 0.0
    %5713 = vmatpush2.msra.mxu0 0.0
    %5714 = vmatprep.subr.mxu0 0.0
    %5715 = vmatpush2.msra.mxu0 0.0
    %5716 = vmatprep.subr.mxu0 0.0
    %5717 = vmatpush2.msra.mxu0 0.0
    %5718 = vmatprep.subr.mxu0 0.0
    %5719 = vmatpush2.msra.mxu0 0.0
    %5720 = vmatprep.subr.mxu0 0.0
    %5721 = vmatpush2.msra.mxu0 0.0
    %5722 = vmatprep.subr.mxu0 0.0
    %5723 = vmatpush2.msra.mxu0 0.0
    %5724 = vmatprep.subr.mxu0 0.0
    %5725 = vmatpush2.msra.mxu0 0.0
    %5726 = vmatprep.subr.mxu0 0.0
    %5727 = vmatpush2.msra.mxu0 0.0
    %5728 = vmatprep.subr.mxu0 0.0
    %5729 = vmatpush2.msra.mxu0 0.0
    %5730 = vmatprep.subr.mxu0 0.0
    %5731 = vmatpush2.msra.mxu0 0.0
    %5732 = vmatprep.subr.mxu0 0.0
    %5733 = vmatpush2.msra.mxu0 0.0
    %5734 = vmatprep.subr.mxu0 0.0
    %5735 = vmatpush2.msra.mxu0 0.0
    %5736 = vmatprep.subr.mxu0 0.0
    %5737 = vmatpush2.msra.mxu0 0.0
    %5738 = vmatprep.subr.mxu0 0.0
    %5739 = vmatpush2.msra.mxu0 0.0
    %5740 = vmatprep.subr.mxu0 0.0
    %5741 = vmatpush2.msra.mxu0 0.0
    %5742 = vmatprep.subr.mxu0 0.0
    %5743 = vmatpush2.msra.mxu0 0.0
    %5744 = vmatprep.mubr.f32.mxu0 0.0
    %5745 = vmatmul.mubr.f32.gmra.mxu0 %v5675
    %v5746 = vpop.f32.mrf.mxu0
    %v5747 = vadd.f32 %v5672, %v5746
    %v5748 = vpop.f32.mrf.mxu0
    %5749 = vmatprep.mubr.f32.mxu0 0.0
    %5750 = vmatmul.mubr.f32.gmra.mxu0 %v5678
    %v5751 = vpop.f32.mrf.mxu0
    %v5752 = vadd.f32 %v5672, %v5751
    %v5753 = vpop.f32.mrf.mxu0
    %5754 = vdwg.mxu0
    %5756 = vrot.lane.b32.xlu0 %v5747, 96
    %v5757 = vpop.permute.xlu0 %5756
    %v5758 = vsel %vm231, %v5747, 0
    %v5760 = vsel %vm231, %v5757, 0
    %5762 = vmatprep.subr.mxu0 0.0
    %5763 = vmatpush1.xpose.msra.mxu0 0.0
    %5764 = vmatprep.subr.mxu0 0.0
    %5765 = vmatpush1.xpose.msra.mxu0 0.0
    %5766 = vmatprep.subr.mxu0 0.0
    %5767 = vmatpush1.xpose.msra.mxu0 0.0
    %5768 = vmatprep.subr.mxu0 0.0
    %5769 = vmatpush1.xpose.msra.mxu0 0.0
    %5770 = vmatprep.subr.mxu0 0.0
    %5771 = vmatpush1.xpose.msra.mxu0 0.0
    %5772 = vmatprep.subr.mxu0 0.0
    %5773 = vmatpush1.xpose.msra.mxu0 0.0
    %5774 = vmatprep.subr.mxu0 0.0
    %5775 = vmatpush1.xpose.msra.mxu0 0.0
    %5776 = vmatprep.subr.mxu0 0.0
    %5777 = vmatpush1.xpose.msra.mxu0 0.0
    %5778 = vmatprep.subr.mxu0 0.0
    %5779 = vmatpush1.xpose.msra.mxu0 0.0
    %5780 = vmatprep.subr.mxu0 0.0
    %5781 = vmatpush1.xpose.msra.mxu0 0.0
    %5782 = vmatprep.subr.mxu0 0.0
    %5783 = vmatpush1.xpose.msra.mxu0 0.0
    %5784 = vmatprep.subr.mxu0 0.0
    %5785 = vmatpush1.xpose.msra.mxu0 0.0
    %5786 = vmatprep.subr.mxu0 0.0
    %5787 = vmatpush1.xpose.msra.mxu0 0.0
    %5788 = vmatprep.subr.mxu0 0.0
    %5789 = vmatpush1.xpose.msra.mxu0 0.0
    %5790 = vmatprep.subr.mxu0 0.0
    %5791 = vmatpush1.xpose.msra.mxu0 0.0
    %5792 = vmatprep.subr.mxu0 0.0
    %5793 = vmatpush1.xpose.msra.mxu0 %v5760
    %5794 = vmatprep.subr.mxu0 0.0
    %5795 = vmatpush2.xpose.msra.mxu0 0.0
    %5796 = vmatprep.subr.mxu0 0.0
    %5797 = vmatpush2.xpose.msra.mxu0 0.0
    %5798 = vmatprep.subr.mxu0 0.0
    %5799 = vmatpush2.xpose.msra.mxu0 0.0
    %5800 = vmatprep.subr.mxu0 0.0
    %5801 = vmatpush2.xpose.msra.mxu0 0.0
    %5802 = vmatprep.subr.mxu0 0.0
    %5803 = vmatpush2.xpose.msra.mxu0 0.0
    %5804 = vmatprep.subr.mxu0 0.0
    %5805 = vmatpush2.xpose.msra.mxu0 0.0
    %5806 = vmatprep.subr.mxu0 0.0
    %5807 = vmatpush2.xpose.msra.mxu0 0.0
    %5808 = vmatprep.subr.mxu0 0.0
    %5809 = vmatpush2.xpose.msra.mxu0 0.0
    %5810 = vmatprep.subr.mxu0 0.0
    %5811 = vmatpush2.xpose.msra.mxu0 0.0
    %5812 = vmatprep.subr.mxu0 0.0
    %5813 = vmatpush2.xpose.msra.mxu0 0.0
    %5814 = vmatprep.subr.mxu0 0.0
    %5815 = vmatpush2.xpose.msra.mxu0 0.0
    %5816 = vmatprep.subr.mxu0 0.0
    %5817 = vmatpush2.xpose.msra.mxu0 0.0
    %5818 = vmatprep.subr.mxu0 0.0
    %5819 = vmatpush2.xpose.msra.mxu0 0.0
    %5820 = vmatprep.subr.mxu0 0.0
    %5821 = vmatpush2.xpose.msra.mxu0 0.0
    %5822 = vmatprep.subr.mxu0 0.0
    %5823 = vmatpush2.xpose.msra.mxu0 0.0
    %5824 = vmatprep.subr.mxu0 0.0
    %5825 = vmatpush2.xpose.msra.mxu0 0.0
    %5826 = vmatprep.mubr.f32.mxu0 0.0
    %5827 = vmatmul.mubr.f32.gmra.mxu0 %v5758
    %v5828 = vpop.f32.mrf.mxu0
    %v5829 = vadd.f32 0.0, %v5828
    %v5830 = vpop.f32.mrf.mxu0
    %5831 = vdwg.mxu0
    %5833 = vrot.lane.b32.xlu0 %v5752, 96
    %v5834 = vpop.permute.xlu0 %5833
    %v5835 = vsel %vm231, %v5752, 0
    %v5837 = vsel %vm231, %v5834, 0
    %5839 = vmatprep.subr.mxu0 0.0
    %5840 = vmatpush1.xpose.msra.mxu0 0.0
    %5841 = vmatprep.subr.mxu0 0.0
    %5842 = vmatpush1.xpose.msra.mxu0 0.0
    %5843 = vmatprep.subr.mxu0 0.0
    %5844 = vmatpush1.xpose.msra.mxu0 0.0
    %5845 = vmatprep.subr.mxu0 0.0
    %5846 = vmatpush1.xpose.msra.mxu0 0.0
    %5847 = vmatprep.subr.mxu0 0.0
    %5848 = vmatpush1.xpose.msra.mxu0 0.0
    %5849 = vmatprep.subr.mxu0 0.0
    %5850 = vmatpush1.xpose.msra.mxu0 0.0
    %5851 = vmatprep.subr.mxu0 0.0
    %5852 = vmatpush1.xpose.msra.mxu0 0.0
    %5853 = vmatprep.subr.mxu0 0.0
    %5854 = vmatpush1.xpose.msra.mxu0 0.0
    %5855 = vmatprep.subr.mxu0 0.0
    %5856 = vmatpush1.xpose.msra.mxu0 0.0
    %5857 = vmatprep.subr.mxu0 0.0
    %5858 = vmatpush1.xpose.msra.mxu0 0.0
    %5859 = vmatprep.subr.mxu0 0.0
    %5860 = vmatpush1.xpose.msra.mxu0 0.0
    %5861 = vmatprep.subr.mxu0 0.0
    %5862 = vmatpush1.xpose.msra.mxu0 0.0
    %5863 = vmatprep.subr.mxu0 0.0
    %5864 = vmatpush1.xpose.msra.mxu0 0.0
    %5865 = vmatprep.subr.mxu0 0.0
    %5866 = vmatpush1.xpose.msra.mxu0 0.0
    %5867 = vmatprep.subr.mxu0 0.0
    %5868 = vmatpush1.xpose.msra.mxu0 0.0
    %5869 = vmatprep.subr.mxu0 0.0
    %5870 = vmatpush1.xpose.msra.mxu0 %v5837
    %5871 = vmatprep.subr.mxu0 0.0
    %5872 = vmatpush2.xpose.msra.mxu0 0.0
    %5873 = vmatprep.subr.mxu0 0.0
    %5874 = vmatpush2.xpose.msra.mxu0 0.0
    %5875 = vmatprep.subr.mxu0 0.0
    %5876 = vmatpush2.xpose.msra.mxu0 0.0
    %5877 = vmatprep.subr.mxu0 0.0
    %5878 = vmatpush2.xpose.msra.mxu0 0.0
    %5879 = vmatprep.subr.mxu0 0.0
    %5880 = vmatpush2.xpose.msra.mxu0 0.0
    %5881 = vmatprep.subr.mxu0 0.0
    %5882 = vmatpush2.xpose.msra.mxu0 0.0
    %5883 = vmatprep.subr.mxu0 0.0
    %5884 = vmatpush2.xpose.msra.mxu0 0.0
    %5885 = vmatprep.subr.mxu0 0.0
    %5886 = vmatpush2.xpose.msra.mxu0 0.0
    %5887 = vmatprep.subr.mxu0 0.0
    %5888 = vmatpush2.xpose.msra.mxu0 0.0
    %5889 = vmatprep.subr.mxu0 0.0
    %5890 = vmatpush2.xpose.msra.mxu0 0.0
    %5891 = vmatprep.subr.mxu0 0.0
    %5892 = vmatpush2.xpose.msra.mxu0 0.0
    %5893 = vmatprep.subr.mxu0 0.0
    %5894 = vmatpush2.xpose.msra.mxu0 0.0
    %5895 = vmatprep.subr.mxu0 0.0
    %5896 = vmatpush2.xpose.msra.mxu0 0.0
    %5897 = vmatprep.subr.mxu0 0.0
    %5898 = vmatpush2.xpose.msra.mxu0 0.0
    %5899 = vmatprep.subr.mxu0 0.0
    %5900 = vmatpush2.xpose.msra.mxu0 0.0
    %5901 = vmatprep.subr.mxu0 0.0
    %5902 = vmatpush2.xpose.msra.mxu0 0.0
    %5903 = vmatprep.mubr.f32.mxu0 0.0
    %5904 = vmatmul.mubr.f32.gmra.mxu0 %v5835
    %v5905 = vpop.f32.mrf.mxu0
    %v5906 = vadd.f32 0.0, %v5905
    %v5907 = vpop.f32.mrf.mxu0
    %5908 = vdwg.mxu0
    %v5909 = vmul.f32 %v5829, 0.35355338
    %v5910 = vmul.f32 %v5906, 0.35355338
    %v5911 = vadd.f32 %v5909, %v388
    %v5912 = vadd.f32 %v5910, %v392
    %v5913 = vsel %vm231, %v5911, -inf
    %5914 = vmax.xlane.f32.xlu0 %v5913
    %v5915 = vpop.xlane.xlu0 %5914
    %v5916 = vsel %vm231, %v5912, -inf
    %5917 = vmax.xlane.f32.xlu0 %v5916
    %v5918 = vpop.xlane.xlu0 %5917
    %v5919 = vsub.f32 %v5911, %v5915
    %v5920 = vsub.f32 %v5912, %v5918
    %v5921 = vmul.f32 %v5919, 1.442695
    %v5922 = vpow.pop %v5921
    %v5923 = vmul.f32 %v5920, 1.442695
    %v5924 = vpow.pop %v5923
    %v5925 = vsel %vm231, %v5922, 0.0
    %5926 = vadd.xlane.f32.xlu0 %v5925
    %v5927 = vpop.xlane.xlu0 %5926
    %v5928 = vsel %vm231, %v5924, 0.0
    %5929 = vadd.xlane.f32.xlu0 %v5928
    %v5930 = vpop.xlane.xlu0 %5929
    %v5931 = vrcp.pop %v5927
    %v5932 = vmul.f32 %v5922, %v5931
    %v5933 = vrcp.pop %v5930
    %v5934 = vmul.f32 %v5924, %v5933
    %5935 = vrot.lane.b32.xlu0 %v5747, 64
    %v5936 = vpop.permute.xlu0 %5935
    %v5939 = vsel %vm231, %v5932, 0
    %5941 = vmatprep.subr.mxu0 0.0
    %5942 = vmatpush1.msra.mxu0 0.0
    %5943 = vmatprep.subr.mxu0 0.0
    %5944 = vmatpush1.msra.mxu0 0.0
    %5945 = vmatprep.subr.mxu0 0.0
    %5946 = vmatpush1.msra.mxu0 0.0
    %5947 = vmatprep.subr.mxu0 0.0
    %5948 = vmatpush1.msra.mxu0 0.0
    %5949 = vmatprep.subr.mxu0 0.0
    %5950 = vmatpush1.msra.mxu0 0.0
    %5951 = vmatprep.subr.mxu0 0.0
    %5952 = vmatpush1.msra.mxu0 0.0
    %5953 = vmatprep.subr.mxu0 0.0
    %5954 = vmatpush1.msra.mxu0 0.0
    %5955 = vmatprep.subr.mxu0 0.0
    %5956 = vmatpush1.msra.mxu0 0.0
    %5957 = vmatprep.subr.mxu0 0.0
    %5958 = vmatpush1.msra.mxu0 0.0
    %5959 = vmatprep.subr.mxu0 0.0
    %5960 = vmatpush1.msra.mxu0 0.0
    %5961 = vmatprep.subr.mxu0 0.0
    %5962 = vmatpush1.msra.mxu0 0.0
    %5963 = vmatprep.subr.mxu0 0.0
    %5964 = vmatpush1.msra.mxu0 0.0
    %5965 = vmatprep.subr.mxu0 0.0
    %5966 = vmatpush1.msra.mxu0 0.0
    %5967 = vmatprep.subr.mxu0 0.0
    %5968 = vmatpush1.msra.mxu0 0.0
    %5969 = vmatprep.subr.mxu0 0.0
    %5970 = vmatpush1.msra.mxu0 0.0
    %5971 = vmatprep.subr.mxu0 0.0
    %5972 = vmatpush1.msra.mxu0 %v5936
    %5973 = vmatprep.subr.mxu0 0.0
    %5974 = vmatpush2.msra.mxu0 0.0
    %5975 = vmatprep.subr.mxu0 0.0
    %5976 = vmatpush2.msra.mxu0 0.0
    %5977 = vmatprep.subr.mxu0 0.0
    %5978 = vmatpush2.msra.mxu0 0.0
    %5979 = vmatprep.subr.mxu0 0.0
    %5980 = vmatpush2.msra.mxu0 0.0
    %5981 = vmatprep.subr.mxu0 0.0
    %5982 = vmatpush2.msra.mxu0 0.0
    %5983 = vmatprep.subr.mxu0 0.0
    %5984 = vmatpush2.msra.mxu0 0.0
    %5985 = vmatprep.subr.mxu0 0.0
    %5986 = vmatpush2.msra.mxu0 0.0
    %5987 = vmatprep.subr.mxu0 0.0
    %5988 = vmatpush2.msra.mxu0 0.0
    %5989 = vmatprep.subr.mxu0 0.0
    %5990 = vmatpush2.msra.mxu0 0.0
    %5991 = vmatprep.subr.mxu0 0.0
    %5992 = vmatpush2.msra.mxu0 0.0
    %5993 = vmatprep.subr.mxu0 0.0
    %5994 = vmatpush2.msra.mxu0 0.0
    %5995 = vmatprep.subr.mxu0 0.0
    %5996 = vmatpush2.msra.mxu0 0.0
    %5997 = vmatprep.subr.mxu0 0.0
    %5998 = vmatpush2.msra.mxu0 0.0
    %5999 = vmatprep.subr.mxu0 0.0
    %6000 = vmatpush2.msra.mxu0 0.0
    %6001 = vmatprep.subr.mxu0 0.0
    %6002 = vmatpush2.msra.mxu0 0.0
    %6003 = vmatprep.subr.mxu0 0.0
    %6004 = vmatpush2.msra.mxu0 0.0
    %6005 = vmatprep.mubr.f32.mxu0 0.0
    %6006 = vmatmul.mubr.f32.gmra.mxu0 %v5939
    %v6007 = vpop.f32.mrf.mxu0
    %v6008 = vadd.f32 0.0, %v6007
    %v6009 = vpop.f32.mrf.mxu0
    %6010 = vdwg.mxu0
    %6011 = vrot.lane.b32.xlu0 %v5752, 64
    %v6012 = vpop.permute.xlu0 %6011
    %v6015 = vsel %vm231, %v5934, 0
    %6017 = vmatprep.subr.mxu0 0.0
    %6018 = vmatpush1.msra.mxu0 0.0
    %6019 = vmatprep.subr.mxu0 0.0
    %6020 = vmatpush1.msra.mxu0 0.0
    %6021 = vmatprep.subr.mxu0 0.0
    %6022 = vmatpush1.msra.mxu0 0.0
    %6023 = vmatprep.subr.mxu0 0.0
    %6024 = vmatpush1.msra.mxu0 0.0
    %6025 = vmatprep.subr.mxu0 0.0
    %6026 = vmatpush1.msra.mxu0 0.0
    %6027 = vmatprep.subr.mxu0 0.0
    %6028 = vmatpush1.msra.mxu0 0.0
    %6029 = vmatprep.subr.mxu0 0.0
    %6030 = vmatpush1.msra.mxu0 0.0
    %6031 = vmatprep.subr.mxu0 0.0
    %6032 = vmatpush1.msra.mxu0 0.0
    %6033 = vmatprep.subr.mxu0 0.0
    %6034 = vmatpush1.msra.mxu0 0.0
    %6035 = vmatprep.subr.mxu0 0.0
    %6036 = vmatpush1.msra.mxu0 0.0
    %6037 = vmatprep.subr.mxu0 0.0
    %6038 = vmatpush1.msra.mxu0 0.0
    %6039 = vmatprep.subr.mxu0 0.0
    %6040 = vmatpush1.msra.mxu0 0.0
    %6041 = vmatprep.subr.mxu0 0.0
    %6042 = vmatpush1.msra.mxu0 0.0
    %6043 = vmatprep.subr.mxu0 0.0
    %6044 = vmatpush1.msra.mxu0 0.0
    %6045 = vmatprep.subr.mxu0 0.0
    %6046 = vmatpush1.msra.mxu0 0.0
    %6047 = vmatprep.subr.mxu0 0.0
    %6048 = vmatpush1.msra.mxu0 %v6012
    %6049 = vmatprep.subr.mxu0 0.0
    %6050 = vmatpush2.msra.mxu0 0.0
    %6051 = vmatprep.subr.mxu0 0.0
    %6052 = vmatpush2.msra.mxu0 0.0
    %6053 = vmatprep.subr.mxu0 0.0
    %6054 = vmatpush2.msra.mxu0 0.0
    %6055 = vmatprep.subr.mxu0 0.0
    %6056 = vmatpush2.msra.mxu0 0.0
    %6057 = vmatprep.subr.mxu0 0.0
    %6058 = vmatpush2.msra.mxu0 0.0
    %6059 = vmatprep.subr.mxu0 0.0
    %6060 = vmatpush2.msra.mxu0 0.0
    %6061 = vmatprep.subr.mxu0 0.0
    %6062 = vmatpush2.msra.mxu0 0.0
    %6063 = vmatprep.subr.mxu0 0.0
    %6064 = vmatpush2.msra.mxu0 0.0
    %6065 = vmatprep.subr.mxu0 0.0
    %6066 = vmatpush2.msra.mxu0 0.0
    %6067 = vmatprep.subr.mxu0 0.0
    %6068 = vmatpush2.msra.mxu0 0.0
    %6069 = vmatprep.subr.mxu0 0.0
    %6070 = vmatpush2.msra.mxu0 0.0
    %6071 = vmatprep.subr.mxu0 0.0
    %6072 = vmatpush2.msra.mxu0 0.0
    %6073 = vmatprep.subr.mxu0 0.0
    %6074 = vmatpush2.msra.mxu0 0.0
    %6075 = vmatprep.subr.mxu0 0.0
    %6076 = vmatpush2.msra.mxu0 0.0
    %6077 = vmatprep.subr.mxu0 0.0
    %6078 = vmatpush2.msra.mxu0 0.0
    %6079 = vmatprep.subr.mxu0 0.0
    %6080 = vmatpush2.msra.mxu0 0.0
    %6081 = vmatprep.mubr.f32.mxu0 0.0
    %6082 = vmatmul.mubr.f32.gmra.mxu0 %v6015
    %v6083 = vpop.f32.mrf.mxu0
    %v6084 = vadd.f32 0.0, %v6083
    %v6085 = vpop.f32.mrf.mxu0
    %6086 = vdwg.mxu0
    %6087 = vrot.lane.b32.xlu0 %v5747, 120
    %v6088 = vpop.permute.xlu0 %6087
    %6089 = vrot.lane.b32.xlu0 %v5747, 88
    %v6090 = vpop.permute.xlu0 %6089
    %v6091 = vsel %vm231, %v6088, 0
    %v6093 = vsel %vm231, %v6090, 0
    %6095 = vmatprep.subr.mxu0 0.0
    %6096 = vmatpush1.xpose.msra.mxu0 0.0
    %6097 = vmatprep.subr.mxu0 0.0
    %6098 = vmatpush1.xpose.msra.mxu0 0.0
    %6099 = vmatprep.subr.mxu0 0.0
    %6100 = vmatpush1.xpose.msra.mxu0 0.0
    %6101 = vmatprep.subr.mxu0 0.0
    %6102 = vmatpush1.xpose.msra.mxu0 0.0
    %6103 = vmatprep.subr.mxu0 0.0
    %6104 = vmatpush1.xpose.msra.mxu0 0.0
    %6105 = vmatprep.subr.mxu0 0.0
    %6106 = vmatpush1.xpose.msra.mxu0 0.0
    %6107 = vmatprep.subr.mxu0 0.0
    %6108 = vmatpush1.xpose.msra.mxu0 0.0
    %6109 = vmatprep.subr.mxu0 0.0
    %6110 = vmatpush1.xpose.msra.mxu0 0.0
    %6111 = vmatprep.subr.mxu0 0.0
    %6112 = vmatpush1.xpose.msra.mxu0 0.0
    %6113 = vmatprep.subr.mxu0 0.0
    %6114 = vmatpush1.xpose.msra.mxu0 0.0
    %6115 = vmatprep.subr.mxu0 0.0
    %6116 = vmatpush1.xpose.msra.mxu0 0.0
    %6117 = vmatprep.subr.mxu0 0.0
    %6118 = vmatpush1.xpose.msra.mxu0 0.0
    %6119 = vmatprep.subr.mxu0 0.0
    %6120 = vmatpush1.xpose.msra.mxu0 0.0
    %6121 = vmatprep.subr.mxu0 0.0
    %6122 = vmatpush1.xpose.msra.mxu0 0.0
    %6123 = vmatprep.subr.mxu0 0.0
    %6124 = vmatpush1.xpose.msra.mxu0 0.0
    %6125 = vmatprep.subr.mxu0 0.0
    %6126 = vmatpush1.xpose.msra.mxu0 %v6093
    %6127 = vmatprep.subr.mxu0 0.0
    %6128 = vmatpush2.xpose.msra.mxu0 0.0
    %6129 = vmatprep.subr.mxu0 0.0
    %6130 = vmatpush2.xpose.msra.mxu0 0.0
    %6131 = vmatprep.subr.mxu0 0.0
    %6132 = vmatpush2.xpose.msra.mxu0 0.0
    %6133 = vmatprep.subr.mxu0 0.0
    %6134 = vmatpush2.xpose.msra.mxu0 0.0
    %6135 = vmatprep.subr.mxu0 0.0
    %6136 = vmatpush2.xpose.msra.mxu0 0.0
    %6137 = vmatprep.subr.mxu0 0.0
    %6138 = vmatpush2.xpose.msra.mxu0 0.0
    %6139 = vmatprep.subr.mxu0 0.0
    %6140 = vmatpush2.xpose.msra.mxu0 0.0
    %6141 = vmatprep.subr.mxu0 0.0
    %6142 = vmatpush2.xpose.msra.mxu0 0.0
    %6143 = vmatprep.subr.mxu0 0.0
    %6144 = vmatpush2.xpose.msra.mxu0 0.0
    %6145 = vmatprep.subr.mxu0 0.0
    %6146 = vmatpush2.xpose.msra.mxu0 0.0
    %6147 = vmatprep.subr.mxu0 0.0
    %6148 = vmatpush2.xpose.msra.mxu0 0.0
    %6149 = vmatprep.subr.mxu0 0.0
    %6150 = vmatpush2.xpose.msra.mxu0 0.0
    %6151 = vmatprep.subr.mxu0 0.0
    %6152 = vmatpush2.xpose.msra.mxu0 0.0
    %6153 = vmatprep.subr.mxu0 0.0
    %6154 = vmatpush2.xpose.msra.mxu0 0.0
    %6155 = vmatprep.subr.mxu0 0.0
    %6156 = vmatpush2.xpose.msra.mxu0 0.0
    %6157 = vmatprep.subr.mxu0 0.0
    %6158 = vmatpush2.xpose.msra.mxu0 0.0
    %6159 = vmatprep.mubr.f32.mxu0 0.0
    %6160 = vmatmul.mubr.f32.gmra.mxu0 %v6091
    %v6161 = vpop.f32.mrf.mxu0
    %v6162 = vadd.f32 0.0, %v6161
    %v6163 = vpop.f32.mrf.mxu0
    %6164 = vdwg.mxu0
    %6165 = vrot.lane.b32.xlu0 %v5752, 120
    %v6166 = vpop.permute.xlu0 %6165
    %6167 = vrot.lane.b32.xlu0 %v5752, 88
    %v6168 = vpop.permute.xlu0 %6167
    %v6169 = vsel %vm231, %v6166, 0
    %v6171 = vsel %vm231, %v6168, 0
    %6173 = vmatprep.subr.mxu0 0.0
    %6174 = vmatpush1.xpose.msra.mxu0 0.0
    %6175 = vmatprep.subr.mxu0 0.0
    %6176 = vmatpush1.xpose.msra.mxu0 0.0
    %6177 = vmatprep.subr.mxu0 0.0
    %6178 = vmatpush1.xpose.msra.mxu0 0.0
    %6179 = vmatprep.subr.mxu0 0.0
    %6180 = vmatpush1.xpose.msra.mxu0 0.0
    %6181 = vmatprep.subr.mxu0 0.0
    %6182 = vmatpush1.xpose.msra.mxu0 0.0
    %6183 = vmatprep.subr.mxu0 0.0
    %6184 = vmatpush1.xpose.msra.mxu0 0.0
    %6185 = vmatprep.subr.mxu0 0.0
    %6186 = vmatpush1.xpose.msra.mxu0 0.0
    %6187 = vmatprep.subr.mxu0 0.0
    %6188 = vmatpush1.xpose.msra.mxu0 0.0
    %6189 = vmatprep.subr.mxu0 0.0
    %6190 = vmatpush1.xpose.msra.mxu0 0.0
    %6191 = vmatprep.subr.mxu0 0.0
    %6192 = vmatpush1.xpose.msra.mxu0 0.0
    %6193 = vmatprep.subr.mxu0 0.0
    %6194 = vmatpush1.xpose.msra.mxu0 0.0
    %6195 = vmatprep.subr.mxu0 0.0
    %6196 = vmatpush1.xpose.msra.mxu0 0.0
    %6197 = vmatprep.subr.mxu0 0.0
    %6198 = vmatpush1.xpose.msra.mxu0 0.0
    %6199 = vmatprep.subr.mxu0 0.0
    %6200 = vmatpush1.xpose.msra.mxu0 0.0
    %6201 = vmatprep.subr.mxu0 0.0
    %6202 = vmatpush1.xpose.msra.mxu0 0.0
    %6203 = vmatprep.subr.mxu0 0.0
    %6204 = vmatpush1.xpose.msra.mxu0 %v6171
    %6205 = vmatprep.subr.mxu0 0.0
    %6206 = vmatpush2.xpose.msra.mxu0 0.0
    %6207 = vmatprep.subr.mxu0 0.0
    %6208 = vmatpush2.xpose.msra.mxu0 0.0
    %6209 = vmatprep.subr.mxu0 0.0
    %6210 = vmatpush2.xpose.msra.mxu0 0.0
    %6211 = vmatprep.subr.mxu0 0.0
    %6212 = vmatpush2.xpose.msra.mxu0 0.0
    %6213 = vmatprep.subr.mxu0 0.0
    %6214 = vmatpush2.xpose.msra.mxu0 0.0
    %6215 = vmatprep.subr.mxu0 0.0
    %6216 = vmatpush2.xpose.msra.mxu0 0.0
    %6217 = vmatprep.subr.mxu0 0.0
    %6218 = vmatpush2.xpose.msra.mxu0 0.0
    %6219 = vmatprep.subr.mxu0 0.0
    %6220 = vmatpush2.xpose.msra.mxu0 0.0
    %6221 = vmatprep.subr.mxu0 0.0
    %6222 = vmatpush2.xpose.msra.mxu0 0.0
    %6223 = vmatprep.subr.mxu0 0.0
    %6224 = vmatpush2.xpose.msra.mxu0 0.0
    %6225 = vmatprep.subr.mxu0 0.0
    %6226 = vmatpush2.xpose.msra.mxu0 0.0
    %6227 = vmatprep.subr.mxu0 0.0
    %6228 = vmatpush2.xpose.msra.mxu0 0.0
    %6229 = vmatprep.subr.mxu0 0.0
    %6230 = vmatpush2.xpose.msra.mxu0 0.0
    %6231 = vmatprep.subr.mxu0 0.0
    %6232 = vmatpush2.xpose.msra.mxu0 0.0
    %6233 = vmatprep.subr.mxu0 0.0
    %6234 = vmatpush2.xpose.msra.mxu0 0.0
    %6235 = vmatprep.subr.mxu0 0.0
    %6236 = vmatpush2.xpose.msra.mxu0 0.0
    %6237 = vmatprep.mubr.f32.mxu0 0.0
    %6238 = vmatmul.mubr.f32.gmra.mxu0 %v6169
    %v6239 = vpop.f32.mrf.mxu0
    %v6240 = vadd.f32 0.0, %v6239
    %v6241 = vpop.f32.mrf.mxu0
    %6242 = vdwg.mxu0
    %v6243 = vmul.f32 %v6162, 0.35355338
    %v6244 = vmul.f32 %v6240, 0.35355338
    %v6245 = vadd.f32 %v6243, %v388
    %v6246 = vadd.f32 %v6244, %v392
    %v6247 = vsel %vm231, %v6245, -inf
    %6248 = vmax.xlane.f32.xlu0 %v6247
    %v6249 = vpop.xlane.xlu0 %6248
    %v6250 = vsel %vm231, %v6246, -inf
    %6251 = vmax.xlane.f32.xlu0 %v6250
    %v6252 = vpop.xlane.xlu0 %6251
    %v6253 = vsub.f32 %v6245, %v6249
    %v6254 = vsub.f32 %v6246, %v6252
    %v6255 = vmul.f32 %v6253, 1.442695
    %v6256 = vpow.pop %v6255
    %v6257 = vmul.f32 %v6254, 1.442695
    %v6258 = vpow.pop %v6257
    %v6259 = vsel %vm231, %v6256, 0.0
    %6260 = vadd.xlane.f32.xlu0 %v6259
    %v6261 = vpop.xlane.xlu0 %6260
    %v6262 = vsel %vm231, %v6258, 0.0
    %6263 = vadd.xlane.f32.xlu0 %v6262
    %v6264 = vpop.xlane.xlu0 %6263
    %v6265 = vrcp.pop %v6261
    %v6266 = vmul.f32 %v6256, %v6265
    %v6267 = vrcp.pop %v6264
    %v6268 = vmul.f32 %v6258, %v6267
    %6269 = vrot.lane.b32.xlu0 %v5747, 56
    %v6270 = vpop.permute.xlu0 %6269
    %v6273 = vsel %vm231, %v6266, 0
    %6275 = vmatprep.subr.mxu0 0.0
    %6276 = vmatpush1.msra.mxu0 0.0
    %6277 = vmatprep.subr.mxu0 0.0
    %6278 = vmatpush1.msra.mxu0 0.0
    %6279 = vmatprep.subr.mxu0 0.0
    %6280 = vmatpush1.msra.mxu0 0.0
    %6281 = vmatprep.subr.mxu0 0.0
    %6282 = vmatpush1.msra.mxu0 0.0
    %6283 = vmatprep.subr.mxu0 0.0
    %6284 = vmatpush1.msra.mxu0 0.0
    %6285 = vmatprep.subr.mxu0 0.0
    %6286 = vmatpush1.msra.mxu0 0.0
    %6287 = vmatprep.subr.mxu0 0.0
    %6288 = vmatpush1.msra.mxu0 0.0
    %6289 = vmatprep.subr.mxu0 0.0
    %6290 = vmatpush1.msra.mxu0 0.0
    %6291 = vmatprep.subr.mxu0 0.0
    %6292 = vmatpush1.msra.mxu0 0.0
    %6293 = vmatprep.subr.mxu0 0.0
    %6294 = vmatpush1.msra.mxu0 0.0
    %6295 = vmatprep.subr.mxu0 0.0
    %6296 = vmatpush1.msra.mxu0 0.0
    %6297 = vmatprep.subr.mxu0 0.0
    %6298 = vmatpush1.msra.mxu0 0.0
    %6299 = vmatprep.subr.mxu0 0.0
    %6300 = vmatpush1.msra.mxu0 0.0
    %6301 = vmatprep.subr.mxu0 0.0
    %6302 = vmatpush1.msra.mxu0 0.0
    %6303 = vmatprep.subr.mxu0 0.0
    %6304 = vmatpush1.msra.mxu0 0.0
    %6305 = vmatprep.subr.mxu0 0.0
    %6306 = vmatpush1.msra.mxu0 %v6270
    %6307 = vmatprep.subr.mxu0 0.0
    %6308 = vmatpush2.msra.mxu0 0.0
    %6309 = vmatprep.subr.mxu0 0.0
    %6310 = vmatpush2.msra.mxu0 0.0
    %6311 = vmatprep.subr.mxu0 0.0
    %6312 = vmatpush2.msra.mxu0 0.0
    %6313 = vmatprep.subr.mxu0 0.0
    %6314 = vmatpush2.msra.mxu0 0.0
    %6315 = vmatprep.subr.mxu0 0.0
    %6316 = vmatpush2.msra.mxu0 0.0
    %6317 = vmatprep.subr.mxu0 0.0
    %6318 = vmatpush2.msra.mxu0 0.0
    %6319 = vmatprep.subr.mxu0 0.0
    %6320 = vmatpush2.msra.mxu0 0.0
    %6321 = vmatprep.subr.mxu0 0.0
    %6322 = vmatpush2.msra.mxu0 0.0
    %6323 = vmatprep.subr.mxu0 0.0
    %6324 = vmatpush2.msra.mxu0 0.0
    %6325 = vmatprep.subr.mxu0 0.0
    %6326 = vmatpush2.msra.mxu0 0.0
    %6327 = vmatprep.subr.mxu0 0.0
    %6328 = vmatpush2.msra.mxu0 0.0
    %6329 = vmatprep.subr.mxu0 0.0
    %6330 = vmatpush2.msra.mxu0 0.0
    %6331 = vmatprep.subr.mxu0 0.0
    %6332 = vmatpush2.msra.mxu0 0.0
    %6333 = vmatprep.subr.mxu0 0.0
    %6334 = vmatpush2.msra.mxu0 0.0
    %6335 = vmatprep.subr.mxu0 0.0
    %6336 = vmatpush2.msra.mxu0 0.0
    %6337 = vmatprep.subr.mxu0 0.0
    %6338 = vmatpush2.msra.mxu0 0.0
    %6339 = vmatprep.mubr.f32.mxu0 0.0
    %6340 = vmatmul.mubr.f32.gmra.mxu0 %v6273
    %v6341 = vpop.f32.mrf.mxu0
    %v6342 = vadd.f32 0.0, %v6341
    %v6343 = vpop.f32.mrf.mxu0
    %6344 = vdwg.mxu0
    %6345 = vrot.lane.b32.xlu0 %v5752, 56
    %v6346 = vpop.permute.xlu0 %6345
    %v6349 = vsel %vm231, %v6268, 0
    %6351 = vmatprep.subr.mxu0 0.0
    %6352 = vmatpush1.msra.mxu0 0.0
    %6353 = vmatprep.subr.mxu0 0.0
    %6354 = vmatpush1.msra.mxu0 0.0
    %6355 = vmatprep.subr.mxu0 0.0
    %6356 = vmatpush1.msra.mxu0 0.0
    %6357 = vmatprep.subr.mxu0 0.0
    %6358 = vmatpush1.msra.mxu0 0.0
    %6359 = vmatprep.subr.mxu0 0.0
    %6360 = vmatpush1.msra.mxu0 0.0
    %6361 = vmatprep.subr.mxu0 0.0
    %6362 = vmatpush1.msra.mxu0 0.0
    %6363 = vmatprep.subr.mxu0 0.0
    %6364 = vmatpush1.msra.mxu0 0.0
    %6365 = vmatprep.subr.mxu0 0.0
    %6366 = vmatpush1.msra.mxu0 0.0
    %6367 = vmatprep.subr.mxu0 0.0
    %6368 = vmatpush1.msra.mxu0 0.0
    %6369 = vmatprep.subr.mxu0 0.0
    %6370 = vmatpush1.msra.mxu0 0.0
    %6371 = vmatprep.subr.mxu0 0.0
    %6372 = vmatpush1.msra.mxu0 0.0
    %6373 = vmatprep.subr.mxu0 0.0
    %6374 = vmatpush1.msra.mxu0 0.0
    %6375 = vmatprep.subr.mxu0 0.0
    %6376 = vmatpush1.msra.mxu0 0.0
    %6377 = vmatprep.subr.mxu0 0.0
    %6378 = vmatpush1.msra.mxu0 0.0
    %6379 = vmatprep.subr.mxu0 0.0
    %6380 = vmatpush1.msra.mxu0 0.0
    %6381 = vmatprep.subr.mxu0 0.0
    %6382 = vmatpush1.msra.mxu0 %v6346
    %6383 = vmatprep.subr.mxu0 0.0
    %6384 = vmatpush2.msra.mxu0 0.0
    %6385 = vmatprep.subr.mxu0 0.0
    %6386 = vmatpush2.msra.mxu0 0.0
    %6387 = vmatprep.subr.mxu0 0.0
    %6388 = vmatpush2.msra.mxu0 0.0
    %6389 = vmatprep.subr.mxu0 0.0
    %6390 = vmatpush2.msra.mxu0 0.0
    %6391 = vmatprep.subr.mxu0 0.0
    %6392 = vmatpush2.msra.mxu0 0.0
    %6393 = vmatprep.subr.mxu0 0.0
    %6394 = vmatpush2.msra.mxu0 0.0
    %6395 = vmatprep.subr.mxu0 0.0
    %6396 = vmatpush2.msra.mxu0 0.0
    %6397 = vmatprep.subr.mxu0 0.0
    %6398 = vmatpush2.msra.mxu0 0.0
    %6399 = vmatprep.subr.mxu0 0.0
    %6400 = vmatpush2.msra.mxu0 0.0
    %6401 = vmatprep.subr.mxu0 0.0
    %6402 = vmatpush2.msra.mxu0 0.0
    %6403 = vmatprep.subr.mxu0 0.0
    %6404 = vmatpush2.msra.mxu0 0.0
    %6405 = vmatprep.subr.mxu0 0.0
    %6406 = vmatpush2.msra.mxu0 0.0
    %6407 = vmatprep.subr.mxu0 0.0
    %6408 = vmatpush2.msra.mxu0 0.0
    %6409 = vmatprep.subr.mxu0 0.0
    %6410 = vmatpush2.msra.mxu0 0.0
    %6411 = vmatprep.subr.mxu0 0.0
    %6412 = vmatpush2.msra.mxu0 0.0
    %6413 = vmatprep.subr.mxu0 0.0
    %6414 = vmatpush2.msra.mxu0 0.0
    %6415 = vmatprep.mubr.f32.mxu0 0.0
    %6416 = vmatmul.mubr.f32.gmra.mxu0 %v6349
    %v6417 = vpop.f32.mrf.mxu0
    %v6418 = vadd.f32 0.0, %v6417
    %v6419 = vpop.f32.mrf.mxu0
    %6420 = vdwg.mxu0
    %6421 = vrot.lane.b32.xlu0 %v5747, 112
    %v6422 = vpop.permute.xlu0 %6421
    %6423 = vrot.lane.b32.xlu0 %v5747, 80
    %v6424 = vpop.permute.xlu0 %6423
    %v6425 = vsel %vm231, %v6422, 0
    %v6427 = vsel %vm231, %v6424, 0
    %6429 = vmatprep.subr.mxu0 0.0
    %6430 = vmatpush1.xpose.msra.mxu0 0.0
    %6431 = vmatprep.subr.mxu0 0.0
    %6432 = vmatpush1.xpose.msra.mxu0 0.0
    %6433 = vmatprep.subr.mxu0 0.0
    %6434 = vmatpush1.xpose.msra.mxu0 0.0
    %6435 = vmatprep.subr.mxu0 0.0
    %6436 = vmatpush1.xpose.msra.mxu0 0.0
    %6437 = vmatprep.subr.mxu0 0.0
    %6438 = vmatpush1.xpose.msra.mxu0 0.0
    %6439 = vmatprep.subr.mxu0 0.0
    %6440 = vmatpush1.xpose.msra.mxu0 0.0
    %6441 = vmatprep.subr.mxu0 0.0
    %6442 = vmatpush1.xpose.msra.mxu0 0.0
    %6443 = vmatprep.subr.mxu0 0.0
    %6444 = vmatpush1.xpose.msra.mxu0 0.0
    %6445 = vmatprep.subr.mxu0 0.0
    %6446 = vmatpush1.xpose.msra.mxu0 0.0
    %6447 = vmatprep.subr.mxu0 0.0
    %6448 = vmatpush1.xpose.msra.mxu0 0.0
    %6449 = vmatprep.subr.mxu0 0.0
    %6450 = vmatpush1.xpose.msra.mxu0 0.0
    %6451 = vmatprep.subr.mxu0 0.0
    %6452 = vmatpush1.xpose.msra.mxu0 0.0
    %6453 = vmatprep.subr.mxu0 0.0
    %6454 = vmatpush1.xpose.msra.mxu0 0.0
    %6455 = vmatprep.subr.mxu0 0.0
    %6456 = vmatpush1.xpose.msra.mxu0 0.0
    %6457 = vmatprep.subr.mxu0 0.0
    %6458 = vmatpush1.xpose.msra.mxu0 0.0
    %6459 = vmatprep.subr.mxu0 0.0
    %6460 = vmatpush1.xpose.msra.mxu0 %v6427
    %6461 = vmatprep.subr.mxu0 0.0
    %6462 = vmatpush2.xpose.msra.mxu0 0.0
    %6463 = vmatprep.subr.mxu0 0.0
    %6464 = vmatpush2.xpose.msra.mxu0 0.0
    %6465 = vmatprep.subr.mxu0 0.0
    %6466 = vmatpush2.xpose.msra.mxu0 0.0
    %6467 = vmatprep.subr.mxu0 0.0
    %6468 = vmatpush2.xpose.msra.mxu0 0.0
    %6469 = vmatprep.subr.mxu0 0.0
    %6470 = vmatpush2.xpose.msra.mxu0 0.0
    %6471 = vmatprep.subr.mxu0 0.0
    %6472 = vmatpush2.xpose.msra.mxu0 0.0
    %6473 = vmatprep.subr.mxu0 0.0
    %6474 = vmatpush2.xpose.msra.mxu0 0.0
    %6475 = vmatprep.subr.mxu0 0.0
    %6476 = vmatpush2.xpose.msra.mxu0 0.0
    %6477 = vmatprep.subr.mxu0 0.0
    %6478 = vmatpush2.xpose.msra.mxu0 0.0
    %6479 = vmatprep.subr.mxu0 0.0
    %6480 = vmatpush2.xpose.msra.mxu0 0.0
    %6481 = vmatprep.subr.mxu0 0.0
    %6482 = vmatpush2.xpose.msra.mxu0 0.0
    %6483 = vmatprep.subr.mxu0 0.0
    %6484 = vmatpush2.xpose.msra.mxu0 0.0
    %6485 = vmatprep.subr.mxu0 0.0
    %6486 = vmatpush2.xpose.msra.mxu0 0.0
    %6487 = vmatprep.subr.mxu0 0.0
    %6488 = vmatpush2.xpose.msra.mxu0 0.0
    %6489 = vmatprep.subr.mxu0 0.0
    %6490 = vmatpush2.xpose.msra.mxu0 0.0
    %6491 = vmatprep.subr.mxu0 0.0
    %6492 = vmatpush2.xpose.msra.mxu0 0.0
    %6493 = vmatprep.mubr.f32.mxu0 0.0
    %6494 = vmatmul.mubr.f32.gmra.mxu0 %v6425
    %v6495 = vpop.f32.mrf.mxu0
    %v6496 = vadd.f32 0.0, %v6495
    %v6497 = vpop.f32.mrf.mxu0
    %6498 = vdwg.mxu0
    %6499 = vrot.lane.b32.xlu0 %v5752, 112
    %v6500 = vpop.permute.xlu0 %6499
    %6501 = vrot.lane.b32.xlu0 %v5752, 80
    %v6502 = vpop.permute.xlu0 %6501
    %v6503 = vsel %vm231, %v6500, 0
    %v6505 = vsel %vm231, %v6502, 0
    %6507 = vmatprep.subr.mxu0 0.0
    %6508 = vmatpush1.xpose.msra.mxu0 0.0
    %6509 = vmatprep.subr.mxu0 0.0
    %6510 = vmatpush1.xpose.msra.mxu0 0.0
    %6511 = vmatprep.subr.mxu0 0.0
    %6512 = vmatpush1.xpose.msra.mxu0 0.0
    %6513 = vmatprep.subr.mxu0 0.0
    %6514 = vmatpush1.xpose.msra.mxu0 0.0
    %6515 = vmatprep.subr.mxu0 0.0
    %6516 = vmatpush1.xpose.msra.mxu0 0.0
    %6517 = vmatprep.subr.mxu0 0.0
    %6518 = vmatpush1.xpose.msra.mxu0 0.0
    %6519 = vmatprep.subr.mxu0 0.0
    %6520 = vmatpush1.xpose.msra.mxu0 0.0
    %6521 = vmatprep.subr.mxu0 0.0
    %6522 = vmatpush1.xpose.msra.mxu0 0.0
    %6523 = vmatprep.subr.mxu0 0.0
    %6524 = vmatpush1.xpose.msra.mxu0 0.0
    %6525 = vmatprep.subr.mxu0 0.0
    %6526 = vmatpush1.xpose.msra.mxu0 0.0
    %6527 = vmatprep.subr.mxu0 0.0
    %6528 = vmatpush1.xpose.msra.mxu0 0.0
    %6529 = vmatprep.subr.mxu0 0.0
    %6530 = vmatpush1.xpose.msra.mxu0 0.0
    %6531 = vmatprep.subr.mxu0 0.0
    %6532 = vmatpush1.xpose.msra.mxu0 0.0
    %6533 = vmatprep.subr.mxu0 0.0
    %6534 = vmatpush1.xpose.msra.mxu0 0.0
    %6535 = vmatprep.subr.mxu0 0.0
    %6536 = vmatpush1.xpose.msra.mxu0 0.0
    %6537 = vmatprep.subr.mxu0 0.0
    %6538 = vmatpush1.xpose.msra.mxu0 %v6505
    %6539 = vmatprep.subr.mxu0 0.0
    %6540 = vmatpush2.xpose.msra.mxu0 0.0
    %6541 = vmatprep.subr.mxu0 0.0
    %6542 = vmatpush2.xpose.msra.mxu0 0.0
    %6543 = vmatprep.subr.mxu0 0.0
    %6544 = vmatpush2.xpose.msra.mxu0 0.0
    %6545 = vmatprep.subr.mxu0 0.0
    %6546 = vmatpush2.xpose.msra.mxu0 0.0
    %6547 = vmatprep.subr.mxu0 0.0
    %6548 = vmatpush2.xpose.msra.mxu0 0.0
    %6549 = vmatprep.subr.mxu0 0.0
    %6550 = vmatpush2.xpose.msra.mxu0 0.0
    %6551 = vmatprep.subr.mxu0 0.0
    %6552 = vmatpush2.xpose.msra.mxu0 0.0
    %6553 = vmatprep.subr.mxu0 0.0
    %6554 = vmatpush2.xpose.msra.mxu0 0.0
    %6555 = vmatprep.subr.mxu0 0.0
    %6556 = vmatpush2.xpose.msra.mxu0 0.0
    %6557 = vmatprep.subr.mxu0 0.0
    %6558 = vmatpush2.xpose.msra.mxu0 0.0
    %6559 = vmatprep.subr.mxu0 0.0
    %6560 = vmatpush2.xpose.msra.mxu0 0.0
    %6561 = vmatprep.subr.mxu0 0.0
    %6562 = vmatpush2.xpose.msra.mxu0 0.0
    %6563 = vmatprep.subr.mxu0 0.0
    %6564 = vmatpush2.xpose.msra.mxu0 0.0
    %6565 = vmatprep.subr.mxu0 0.0
    %6566 = vmatpush2.xpose.msra.mxu0 0.0
    %6567 = vmatprep.subr.mxu0 0.0
    %6568 = vmatpush2.xpose.msra.mxu0 0.0
    %6569 = vmatprep.subr.mxu0 0.0
    %6570 = vmatpush2.xpose.msra.mxu0 0.0
    %6571 = vmatprep.mubr.f32.mxu0 0.0
    %6572 = vmatmul.mubr.f32.gmra.mxu0 %v6503
    %v6573 = vpop.f32.mrf.mxu0
    %v6574 = vadd.f32 0.0, %v6573
    %v6575 = vpop.f32.mrf.mxu0
    %6576 = vdwg.mxu0
    %v6577 = vmul.f32 %v6496, 0.35355338
    %v6578 = vmul.f32 %v6574, 0.35355338
    %v6579 = vadd.f32 %v6577, %v388
    %v6580 = vadd.f32 %v6578, %v392
    %v6581 = vsel %vm231, %v6579, -inf
    %6582 = vmax.xlane.f32.xlu0 %v6581
    %v6583 = vpop.xlane.xlu0 %6582
    %v6584 = vsel %vm231, %v6580, -inf
    %6585 = vmax.xlane.f32.xlu0 %v6584
    %v6586 = vpop.xlane.xlu0 %6585
    %v6587 = vsub.f32 %v6579, %v6583
    %v6588 = vsub.f32 %v6580, %v6586
    %v6589 = vmul.f32 %v6587, 1.442695
    %v6590 = vpow.pop %v6589
    %v6591 = vmul.f32 %v6588, 1.442695
    %v6592 = vpow.pop %v6591
    %v6593 = vsel %vm231, %v6590, 0.0
    %6594 = vadd.xlane.f32.xlu0 %v6593
    %v6595 = vpop.xlane.xlu0 %6594
    %v6596 = vsel %vm231, %v6592, 0.0
    %6597 = vadd.xlane.f32.xlu0 %v6596
    %v6598 = vpop.xlane.xlu0 %6597
    %v6599 = vrcp.pop %v6595
    %v6600 = vmul.f32 %v6590, %v6599
    %v6601 = vrcp.pop %v6598
    %v6602 = vmul.f32 %v6592, %v6601
    %6603 = vrot.lane.b32.xlu0 %v5747, 48
    %v6604 = vpop.permute.xlu0 %6603
    %v6607 = vsel %vm231, %v6600, 0
    %6609 = vmatprep.subr.mxu0 0.0
    %6610 = vmatpush1.msra.mxu0 0.0
    %6611 = vmatprep.subr.mxu0 0.0
    %6612 = vmatpush1.msra.mxu0 0.0
    %6613 = vmatprep.subr.mxu0 0.0
    %6614 = vmatpush1.msra.mxu0 0.0
    %6615 = vmatprep.subr.mxu0 0.0
    %6616 = vmatpush1.msra.mxu0 0.0
    %6617 = vmatprep.subr.mxu0 0.0
    %6618 = vmatpush1.msra.mxu0 0.0
    %6619 = vmatprep.subr.mxu0 0.0
    %6620 = vmatpush1.msra.mxu0 0.0
    %6621 = vmatprep.subr.mxu0 0.0
    %6622 = vmatpush1.msra.mxu0 0.0
    %6623 = vmatprep.subr.mxu0 0.0
    %6624 = vmatpush1.msra.mxu0 0.0
    %6625 = vmatprep.subr.mxu0 0.0
    %6626 = vmatpush1.msra.mxu0 0.0
    %6627 = vmatprep.subr.mxu0 0.0
    %6628 = vmatpush1.msra.mxu0 0.0
    %6629 = vmatprep.subr.mxu0 0.0
    %6630 = vmatpush1.msra.mxu0 0.0
    %6631 = vmatprep.subr.mxu0 0.0
    %6632 = vmatpush1.msra.mxu0 0.0
    %6633 = vmatprep.subr.mxu0 0.0
    %6634 = vmatpush1.msra.mxu0 0.0
    %6635 = vmatprep.subr.mxu0 0.0
    %6636 = vmatpush1.msra.mxu0 0.0
    %6637 = vmatprep.subr.mxu0 0.0
    %6638 = vmatpush1.msra.mxu0 0.0
    %6639 = vmatprep.subr.mxu0 0.0
    %6640 = vmatpush1.msra.mxu0 %v6604
    %6641 = vmatprep.subr.mxu0 0.0
    %6642 = vmatpush2.msra.mxu0 0.0
    %6643 = vmatprep.subr.mxu0 0.0
    %6644 = vmatpush2.msra.mxu0 0.0
    %6645 = vmatprep.subr.mxu0 0.0
    %6646 = vmatpush2.msra.mxu0 0.0
    %6647 = vmatprep.subr.mxu0 0.0
    %6648 = vmatpush2.msra.mxu0 0.0
    %6649 = vmatprep.subr.mxu0 0.0
    %6650 = vmatpush2.msra.mxu0 0.0
    %6651 = vmatprep.subr.mxu0 0.0
    %6652 = vmatpush2.msra.mxu0 0.0
    %6653 = vmatprep.subr.mxu0 0.0
    %6654 = vmatpush2.msra.mxu0 0.0
    %6655 = vmatprep.subr.mxu0 0.0
    %6656 = vmatpush2.msra.mxu0 0.0
    %6657 = vmatprep.subr.mxu0 0.0
    %6658 = vmatpush2.msra.mxu0 0.0
    %6659 = vmatprep.subr.mxu0 0.0
    %6660 = vmatpush2.msra.mxu0 0.0
    %6661 = vmatprep.subr.mxu0 0.0
    %6662 = vmatpush2.msra.mxu0 0.0
    %6663 = vmatprep.subr.mxu0 0.0
    %6664 = vmatpush2.msra.mxu0 0.0
    %6665 = vmatprep.subr.mxu0 0.0
    %6666 = vmatpush2.msra.mxu0 0.0
    %6667 = vmatprep.subr.mxu0 0.0
    %6668 = vmatpush2.msra.mxu0 0.0
    %6669 = vmatprep.subr.mxu0 0.0
    %6670 = vmatpush2.msra.mxu0 0.0
    %6671 = vmatprep.subr.mxu0 0.0
    %6672 = vmatpush2.msra.mxu0 0.0
    %6673 = vmatprep.mubr.f32.mxu0 0.0
    %6674 = vmatmul.mubr.f32.gmra.mxu0 %v6607
    %v6675 = vpop.f32.mrf.mxu0
    %v6676 = vadd.f32 0.0, %v6675
    %v6677 = vpop.f32.mrf.mxu0
    %6678 = vdwg.mxu0
    %6679 = vrot.lane.b32.xlu0 %v5752, 48
    %v6680 = vpop.permute.xlu0 %6679
    %v6683 = vsel %vm231, %v6602, 0
    %6685 = vmatprep.subr.mxu0 0.0
    %6686 = vmatpush1.msra.mxu0 0.0
    %6687 = vmatprep.subr.mxu0 0.0
    %6688 = vmatpush1.msra.mxu0 0.0
    %6689 = vmatprep.subr.mxu0 0.0
    %6690 = vmatpush1.msra.mxu0 0.0
    %6691 = vmatprep.subr.mxu0 0.0
    %6692 = vmatpush1.msra.mxu0 0.0
    %6693 = vmatprep.subr.mxu0 0.0
    %6694 = vmatpush1.msra.mxu0 0.0
    %6695 = vmatprep.subr.mxu0 0.0
    %6696 = vmatpush1.msra.mxu0 0.0
    %6697 = vmatprep.subr.mxu0 0.0
    %6698 = vmatpush1.msra.mxu0 0.0
    %6699 = vmatprep.subr.mxu0 0.0
    %6700 = vmatpush1.msra.mxu0 0.0
    %6701 = vmatprep.subr.mxu0 0.0
    %6702 = vmatpush1.msra.mxu0 0.0
    %6703 = vmatprep.subr.mxu0 0.0
    %6704 = vmatpush1.msra.mxu0 0.0
    %6705 = vmatprep.subr.mxu0 0.0
    %6706 = vmatpush1.msra.mxu0 0.0
    %6707 = vmatprep.subr.mxu0 0.0
    %6708 = vmatpush1.msra.mxu0 0.0
    %6709 = vmatprep.subr.mxu0 0.0
    %6710 = vmatpush1.msra.mxu0 0.0
    %6711 = vmatprep.subr.mxu0 0.0
    %6712 = vmatpush1.msra.mxu0 0.0
    %6713 = vmatprep.subr.mxu0 0.0
    %6714 = vmatpush1.msra.mxu0 0.0
    %6715 = vmatprep.subr.mxu0 0.0
    %6716 = vmatpush1.msra.mxu0 %v6680
    %6717 = vmatprep.subr.mxu0 0.0
    %6718 = vmatpush2.msra.mxu0 0.0
    %6719 = vmatprep.subr.mxu0 0.0
    %6720 = vmatpush2.msra.mxu0 0.0
    %6721 = vmatprep.subr.mxu0 0.0
    %6722 = vmatpush2.msra.mxu0 0.0
    %6723 = vmatprep.subr.mxu0 0.0
    %6724 = vmatpush2.msra.mxu0 0.0
    %6725 = vmatprep.subr.mxu0 0.0
    %6726 = vmatpush2.msra.mxu0 0.0
    %6727 = vmatprep.subr.mxu0 0.0
    %6728 = vmatpush2.msra.mxu0 0.0
    %6729 = vmatprep.subr.mxu0 0.0
    %6730 = vmatpush2.msra.mxu0 0.0
    %6731 = vmatprep.subr.mxu0 0.0
    %6732 = vmatpush2.msra.mxu0 0.0
    %6733 = vmatprep.subr.mxu0 0.0
    %6734 = vmatpush2.msra.mxu0 0.0
    %6735 = vmatprep.subr.mxu0 0.0
    %6736 = vmatpush2.msra.mxu0 0.0
    %6737 = vmatprep.subr.mxu0 0.0
    %6738 = vmatpush2.msra.mxu0 0.0
    %6739 = vmatprep.subr.mxu0 0.0
    %6740 = vmatpush2.msra.mxu0 0.0
    %6741 = vmatprep.subr.mxu0 0.0
    %6742 = vmatpush2.msra.mxu0 0.0
    %6743 = vmatprep.subr.mxu0 0.0
    %6744 = vmatpush2.msra.mxu0 0.0
    %6745 = vmatprep.subr.mxu0 0.0
    %6746 = vmatpush2.msra.mxu0 0.0
    %6747 = vmatprep.subr.mxu0 0.0
    %6748 = vmatpush2.msra.mxu0 0.0
    %6749 = vmatprep.mubr.f32.mxu0 0.0
    %6750 = vmatmul.mubr.f32.gmra.mxu0 %v6683
    %v6751 = vpop.f32.mrf.mxu0
    %v6752 = vadd.f32 0.0, %v6751
    %v6753 = vpop.f32.mrf.mxu0
    %6754 = vdwg.mxu0
    %6755 = vrot.lane.b32.xlu0 %v5747, 104
    %v6756 = vpop.permute.xlu0 %6755
    %6757 = vrot.lane.b32.xlu0 %v5747, 72
    %v6758 = vpop.permute.xlu0 %6757
    %v6759 = vsel %vm231, %v6756, 0
    %v6761 = vsel %vm231, %v6758, 0
    %6763 = vmatprep.subr.mxu0 0.0
    %6764 = vmatpush1.xpose.msra.mxu0 0.0
    %6765 = vmatprep.subr.mxu0 0.0
    %6766 = vmatpush1.xpose.msra.mxu0 0.0
    %6767 = vmatprep.subr.mxu0 0.0
    %6768 = vmatpush1.xpose.msra.mxu0 0.0
    %6769 = vmatprep.subr.mxu0 0.0
    %6770 = vmatpush1.xpose.msra.mxu0 0.0
    %6771 = vmatprep.subr.mxu0 0.0
    %6772 = vmatpush1.xpose.msra.mxu0 0.0
    %6773 = vmatprep.subr.mxu0 0.0
    %6774 = vmatpush1.xpose.msra.mxu0 0.0
    %6775 = vmatprep.subr.mxu0 0.0
    %6776 = vmatpush1.xpose.msra.mxu0 0.0
    %6777 = vmatprep.subr.mxu0 0.0
    %6778 = vmatpush1.xpose.msra.mxu0 0.0
    %6779 = vmatprep.subr.mxu0 0.0
    %6780 = vmatpush1.xpose.msra.mxu0 0.0
    %6781 = vmatprep.subr.mxu0 0.0
    %6782 = vmatpush1.xpose.msra.mxu0 0.0
    %6783 = vmatprep.subr.mxu0 0.0
    %6784 = vmatpush1.xpose.msra.mxu0 0.0
    %6785 = vmatprep.subr.mxu0 0.0
    %6786 = vmatpush1.xpose.msra.mxu0 0.0
    %6787 = vmatprep.subr.mxu0 0.0
    %6788 = vmatpush1.xpose.msra.mxu0 0.0
    %6789 = vmatprep.subr.mxu0 0.0
    %6790 = vmatpush1.xpose.msra.mxu0 0.0
    %6791 = vmatprep.subr.mxu0 0.0
    %6792 = vmatpush1.xpose.msra.mxu0 0.0
    %6793 = vmatprep.subr.mxu0 0.0
    %6794 = vmatpush1.xpose.msra.mxu0 %v6761
    %6795 = vmatprep.subr.mxu0 0.0
    %6796 = vmatpush2.xpose.msra.mxu0 0.0
    %6797 = vmatprep.subr.mxu0 0.0
    %6798 = vmatpush2.xpose.msra.mxu0 0.0
    %6799 = vmatprep.subr.mxu0 0.0
    %6800 = vmatpush2.xpose.msra.mxu0 0.0
    %6801 = vmatprep.subr.mxu0 0.0
    %6802 = vmatpush2.xpose.msra.mxu0 0.0
    %6803 = vmatprep.subr.mxu0 0.0
    %6804 = vmatpush2.xpose.msra.mxu0 0.0
    %6805 = vmatprep.subr.mxu0 0.0
    %6806 = vmatpush2.xpose.msra.mxu0 0.0
    %6807 = vmatprep.subr.mxu0 0.0
    %6808 = vmatpush2.xpose.msra.mxu0 0.0
    %6809 = vmatprep.subr.mxu0 0.0
    %6810 = vmatpush2.xpose.msra.mxu0 0.0
    %6811 = vmatprep.subr.mxu0 0.0
    %6812 = vmatpush2.xpose.msra.mxu0 0.0
    %6813 = vmatprep.subr.mxu0 0.0
    %6814 = vmatpush2.xpose.msra.mxu0 0.0
    %6815 = vmatprep.subr.mxu0 0.0
    %6816 = vmatpush2.xpose.msra.mxu0 0.0
    %6817 = vmatprep.subr.mxu0 0.0
    %6818 = vmatpush2.xpose.msra.mxu0 0.0
    %6819 = vmatprep.subr.mxu0 0.0
    %6820 = vmatpush2.xpose.msra.mxu0 0.0
    %6821 = vmatprep.subr.mxu0 0.0
    %6822 = vmatpush2.xpose.msra.mxu0 0.0
    %6823 = vmatprep.subr.mxu0 0.0
    %6824 = vmatpush2.xpose.msra.mxu0 0.0
    %6825 = vmatprep.subr.mxu0 0.0
    %6826 = vmatpush2.xpose.msra.mxu0 0.0
    %6827 = vmatprep.mubr.f32.mxu0 0.0
    %6828 = vmatmul.mubr.f32.gmra.mxu0 %v6759
    %v6829 = vpop.f32.mrf.mxu0
    %v6830 = vadd.f32 0.0, %v6829
    %v6831 = vpop.f32.mrf.mxu0
    %6832 = vdwg.mxu0
    %6833 = vrot.lane.b32.xlu0 %v5752, 104
    %v6834 = vpop.permute.xlu0 %6833
    %6835 = vrot.lane.b32.xlu0 %v5752, 72
    %v6836 = vpop.permute.xlu0 %6835
    %v6837 = vsel %vm231, %v6834, 0
    %v6839 = vsel %vm231, %v6836, 0
    %6841 = vmatprep.subr.mxu0 0.0
    %6842 = vmatpush1.xpose.msra.mxu0 0.0
    %6843 = vmatprep.subr.mxu0 0.0
    %6844 = vmatpush1.xpose.msra.mxu0 0.0
    %6845 = vmatprep.subr.mxu0 0.0
    %6846 = vmatpush1.xpose.msra.mxu0 0.0
    %6847 = vmatprep.subr.mxu0 0.0
    %6848 = vmatpush1.xpose.msra.mxu0 0.0
    %6849 = vmatprep.subr.mxu0 0.0
    %6850 = vmatpush1.xpose.msra.mxu0 0.0
    %6851 = vmatprep.subr.mxu0 0.0
    %6852 = vmatpush1.xpose.msra.mxu0 0.0
    %6853 = vmatprep.subr.mxu0 0.0
    %6854 = vmatpush1.xpose.msra.mxu0 0.0
    %6855 = vmatprep.subr.mxu0 0.0
    %6856 = vmatpush1.xpose.msra.mxu0 0.0
    %6857 = vmatprep.subr.mxu0 0.0
    %6858 = vmatpush1.xpose.msra.mxu0 0.0
    %6859 = vmatprep.subr.mxu0 0.0
    %6860 = vmatpush1.xpose.msra.mxu0 0.0
    %6861 = vmatprep.subr.mxu0 0.0
    %6862 = vmatpush1.xpose.msra.mxu0 0.0
    %6863 = vmatprep.subr.mxu0 0.0
    %6864 = vmatpush1.xpose.msra.mxu0 0.0
    %6865 = vmatprep.subr.mxu0 0.0
    %6866 = vmatpush1.xpose.msra.mxu0 0.0
    %6867 = vmatprep.subr.mxu0 0.0
    %6868 = vmatpush1.xpose.msra.mxu0 0.0
    %6869 = vmatprep.subr.mxu0 0.0
    %6870 = vmatpush1.xpose.msra.mxu0 0.0
    %6871 = vmatprep.subr.mxu0 0.0
    %6872 = vmatpush1.xpose.msra.mxu0 %v6839
    %6873 = vmatprep.subr.mxu0 0.0
    %6874 = vmatpush2.xpose.msra.mxu0 0.0
    %6875 = vmatprep.subr.mxu0 0.0
    %6876 = vmatpush2.xpose.msra.mxu0 0.0
    %6877 = vmatprep.subr.mxu0 0.0
    %6878 = vmatpush2.xpose.msra.mxu0 0.0
    %6879 = vmatprep.subr.mxu0 0.0
    %6880 = vmatpush2.xpose.msra.mxu0 0.0
    %6881 = vmatprep.subr.mxu0 0.0
    %6882 = vmatpush2.xpose.msra.mxu0 0.0
    %6883 = vmatprep.subr.mxu0 0.0
    %6884 = vmatpush2.xpose.msra.mxu0 0.0
    %6885 = vmatprep.subr.mxu0 0.0
    %6886 = vmatpush2.xpose.msra.mxu0 0.0
    %6887 = vmatprep.subr.mxu0 0.0
    %6888 = vmatpush2.xpose.msra.mxu0 0.0
    %6889 = vmatprep.subr.mxu0 0.0
    %6890 = vmatpush2.xpose.msra.mxu0 0.0
    %6891 = vmatprep.subr.mxu0 0.0
    %6892 = vmatpush2.xpose.msra.mxu0 0.0
    %6893 = vmatprep.subr.mxu0 0.0
    %6894 = vmatpush2.xpose.msra.mxu0 0.0
    %6895 = vmatprep.subr.mxu0 0.0
    %6896 = vmatpush2.xpose.msra.mxu0 0.0
    %6897 = vmatprep.subr.mxu0 0.0
    %6898 = vmatpush2.xpose.msra.mxu0 0.0
    %6899 = vmatprep.subr.mxu0 0.0
    %6900 = vmatpush2.xpose.msra.mxu0 0.0
    %6901 = vmatprep.subr.mxu0 0.0
    %6902 = vmatpush2.xpose.msra.mxu0 0.0
    %6903 = vmatprep.subr.mxu0 0.0
    %6904 = vmatpush2.xpose.msra.mxu0 0.0
    %6905 = vmatprep.mubr.f32.mxu0 0.0
    %6906 = vmatmul.mubr.f32.gmra.mxu0 %v6837
    %v6907 = vpop.f32.mrf.mxu0
    %v6908 = vadd.f32 0.0, %v6907
    %v6909 = vpop.f32.mrf.mxu0
    %6910 = vdwg.mxu0
    %v6911 = vmul.f32 %v6830, 0.35355338
    %v6912 = vmul.f32 %v6908, 0.35355338
    %v6913 = vadd.f32 %v6911, %v388
    %v6914 = vadd.f32 %v6912, %v392
    %v6915 = vsel %vm231, %v6913, -inf
    %6916 = vmax.xlane.f32.xlu0 %v6915
    %v6917 = vpop.xlane.xlu0 %6916
    %v6918 = vsel %vm231, %v6914, -inf
    %6919 = vmax.xlane.f32.xlu0 %v6918
    %v6920 = vpop.xlane.xlu0 %6919
    %v6921 = vsub.f32 %v6913, %v6917
    %v6922 = vsub.f32 %v6914, %v6920
    %v6923 = vmul.f32 %v6921, 1.442695
    %v6924 = vpow.pop %v6923
    %v6925 = vmul.f32 %v6922, 1.442695
    %v6926 = vpow.pop %v6925
    %v6927 = vsel %vm231, %v6924, 0.0
    %6928 = vadd.xlane.f32.xlu0 %v6927
    %v6929 = vpop.xlane.xlu0 %6928
    %v6930 = vsel %vm231, %v6926, 0.0
    %6931 = vadd.xlane.f32.xlu0 %v6930
    %v6932 = vpop.xlane.xlu0 %6931
    %v6933 = vrcp.pop %v6929
    %v6934 = vmul.f32 %v6924, %v6933
    %v6935 = vrcp.pop %v6932
    %v6936 = vmul.f32 %v6926, %v6935
    %6937 = vrot.lane.b32.xlu0 %v5747, 40
    %v6938 = vpop.permute.xlu0 %6937
    %v6941 = vsel %vm231, %v6934, 0
    %6943 = vmatprep.subr.mxu0 0.0
    %6944 = vmatpush1.msra.mxu0 0.0
    %6945 = vmatprep.subr.mxu0 0.0
    %6946 = vmatpush1.msra.mxu0 0.0
    %6947 = vmatprep.subr.mxu0 0.0
    %6948 = vmatpush1.msra.mxu0 0.0
    %6949 = vmatprep.subr.mxu0 0.0
    %6950 = vmatpush1.msra.mxu0 0.0
    %6951 = vmatprep.subr.mxu0 0.0
    %6952 = vmatpush1.msra.mxu0 0.0
    %6953 = vmatprep.subr.mxu0 0.0
    %6954 = vmatpush1.msra.mxu0 0.0
    %6955 = vmatprep.subr.mxu0 0.0
    %6956 = vmatpush1.msra.mxu0 0.0
    %6957 = vmatprep.subr.mxu0 0.0
    %6958 = vmatpush1.msra.mxu0 0.0
    %6959 = vmatprep.subr.mxu0 0.0
    %6960 = vmatpush1.msra.mxu0 0.0
    %6961 = vmatprep.subr.mxu0 0.0
    %6962 = vmatpush1.msra.mxu0 0.0
    %6963 = vmatprep.subr.mxu0 0.0
    %6964 = vmatpush1.msra.mxu0 0.0
    %6965 = vmatprep.subr.mxu0 0.0
    %6966 = vmatpush1.msra.mxu0 0.0
    %6967 = vmatprep.subr.mxu0 0.0
    %6968 = vmatpush1.msra.mxu0 0.0
    %6969 = vmatprep.subr.mxu0 0.0
    %6970 = vmatpush1.msra.mxu0 0.0
    %6971 = vmatprep.subr.mxu0 0.0
    %6972 = vmatpush1.msra.mxu0 0.0
    %6973 = vmatprep.subr.mxu0 0.0
    %6974 = vmatpush1.msra.mxu0 %v6938
    %6975 = vmatprep.subr.mxu0 0.0
    %6976 = vmatpush2.msra.mxu0 0.0
    %6977 = vmatprep.subr.mxu0 0.0
    %6978 = vmatpush2.msra.mxu0 0.0
    %6979 = vmatprep.subr.mxu0 0.0
    %6980 = vmatpush2.msra.mxu0 0.0
    %6981 = vmatprep.subr.mxu0 0.0
    %6982 = vmatpush2.msra.mxu0 0.0
    %6983 = vmatprep.subr.mxu0 0.0
    %6984 = vmatpush2.msra.mxu0 0.0
    %6985 = vmatprep.subr.mxu0 0.0
    %6986 = vmatpush2.msra.mxu0 0.0
    %6987 = vmatprep.subr.mxu0 0.0
    %6988 = vmatpush2.msra.mxu0 0.0
    %6989 = vmatprep.subr.mxu0 0.0
    %6990 = vmatpush2.msra.mxu0 0.0
    %6991 = vmatprep.subr.mxu0 0.0
    %6992 = vmatpush2.msra.mxu0 0.0
    %6993 = vmatprep.subr.mxu0 0.0
    %6994 = vmatpush2.msra.mxu0 0.0
    %6995 = vmatprep.subr.mxu0 0.0
    %6996 = vmatpush2.msra.mxu0 0.0
    %6997 = vmatprep.subr.mxu0 0.0
    %6998 = vmatpush2.msra.mxu0 0.0
    %6999 = vmatprep.subr.mxu0 0.0
    %7000 = vmatpush2.msra.mxu0 0.0
    %7001 = vmatprep.subr.mxu0 0.0
    %7002 = vmatpush2.msra.mxu0 0.0
    %7003 = vmatprep.subr.mxu0 0.0
    %7004 = vmatpush2.msra.mxu0 0.0
    %7005 = vmatprep.subr.mxu0 0.0
    %7006 = vmatpush2.msra.mxu0 0.0
    %7007 = vmatprep.mubr.f32.mxu0 0.0
    %7008 = vmatmul.mubr.f32.gmra.mxu0 %v6941
    %v7009 = vpop.f32.mrf.mxu0
    %v7010 = vadd.f32 0.0, %v7009
    %v7011 = vpop.f32.mrf.mxu0
    %7012 = vdwg.mxu0
    %7013 = vrot.lane.b32.xlu0 %v5752, 40
    %v7014 = vpop.permute.xlu0 %7013
    %v7017 = vsel %vm231, %v6936, 0
    %7019 = vmatprep.subr.mxu0 0.0
    %7020 = vmatpush1.msra.mxu0 0.0
    %7021 = vmatprep.subr.mxu0 0.0
    %7022 = vmatpush1.msra.mxu0 0.0
    %7023 = vmatprep.subr.mxu0 0.0
    %7024 = vmatpush1.msra.mxu0 0.0
    %7025 = vmatprep.subr.mxu0 0.0
    %7026 = vmatpush1.msra.mxu0 0.0
    %7027 = vmatprep.subr.mxu0 0.0
    %7028 = vmatpush1.msra.mxu0 0.0
    %7029 = vmatprep.subr.mxu0 0.0
    %7030 = vmatpush1.msra.mxu0 0.0
    %7031 = vmatprep.subr.mxu0 0.0
    %7032 = vmatpush1.msra.mxu0 0.0
    %7033 = vmatprep.subr.mxu0 0.0
    %7034 = vmatpush1.msra.mxu0 0.0
    %7035 = vmatprep.subr.mxu0 0.0
    %7036 = vmatpush1.msra.mxu0 0.0
    %7037 = vmatprep.subr.mxu0 0.0
    %7038 = vmatpush1.msra.mxu0 0.0
    %7039 = vmatprep.subr.mxu0 0.0
    %7040 = vmatpush1.msra.mxu0 0.0
    %7041 = vmatprep.subr.mxu0 0.0
    %7042 = vmatpush1.msra.mxu0 0.0
    %7043 = vmatprep.subr.mxu0 0.0
    %7044 = vmatpush1.msra.mxu0 0.0
    %7045 = vmatprep.subr.mxu0 0.0
    %7046 = vmatpush1.msra.mxu0 0.0
    %7047 = vmatprep.subr.mxu0 0.0
    %7048 = vmatpush1.msra.mxu0 0.0
    %7049 = vmatprep.subr.mxu0 0.0
    %7050 = vmatpush1.msra.mxu0 %v7014
    %7051 = vmatprep.subr.mxu0 0.0
    %7052 = vmatpush2.msra.mxu0 0.0
    %7053 = vmatprep.subr.mxu0 0.0
    %7054 = vmatpush2.msra.mxu0 0.0
    %7055 = vmatprep.subr.mxu0 0.0
    %7056 = vmatpush2.msra.mxu0 0.0
    %7057 = vmatprep.subr.mxu0 0.0
    %7058 = vmatpush2.msra.mxu0 0.0
    %7059 = vmatprep.subr.mxu0 0.0
    %7060 = vmatpush2.msra.mxu0 0.0
    %7061 = vmatprep.subr.mxu0 0.0
    %7062 = vmatpush2.msra.mxu0 0.0
    %7063 = vmatprep.subr.mxu0 0.0
    %7064 = vmatpush2.msra.mxu0 0.0
    %7065 = vmatprep.subr.mxu0 0.0
    %7066 = vmatpush2.msra.mxu0 0.0
    %7067 = vmatprep.subr.mxu0 0.0
    %7068 = vmatpush2.msra.mxu0 0.0
    %7069 = vmatprep.subr.mxu0 0.0
    %7070 = vmatpush2.msra.mxu0 0.0
    %7071 = vmatprep.subr.mxu0 0.0
    %7072 = vmatpush2.msra.mxu0 0.0
    %7073 = vmatprep.subr.mxu0 0.0
    %7074 = vmatpush2.msra.mxu0 0.0
    %7075 = vmatprep.subr.mxu0 0.0
    %7076 = vmatpush2.msra.mxu0 0.0
    %7077 = vmatprep.subr.mxu0 0.0
    %7078 = vmatpush2.msra.mxu0 0.0
    %7079 = vmatprep.subr.mxu0 0.0
    %7080 = vmatpush2.msra.mxu0 0.0
    %7081 = vmatprep.subr.mxu0 0.0
    %7082 = vmatpush2.msra.mxu0 0.0
    %7083 = vmatprep.mubr.f32.mxu0 0.0
    %7084 = vmatmul.mubr.f32.gmra.mxu0 %v7017
    %v7085 = vpop.f32.mrf.mxu0
    %v7086 = vadd.f32 0.0, %v7085
    %v7087 = vpop.f32.mrf.mxu0
    %7088 = vdwg.mxu0
    %7091 = vrot.lane.b32.xlu0 %v6342, 8
    %v7092 = vpop.permute.xlu0 %7091
    %7093 = vrot.lane.b32.xlu0 %v6418, 8
    %v7094 = vpop.permute.xlu0 %7093
    %7099 = vrot.lane.b32.xlu0 %v6676, 16
    %v7100 = vpop.permute.xlu0 %7099
    %7101 = vrot.lane.b32.xlu0 %v6752, 16
    %v7102 = vpop.permute.xlu0 %7101
    %7107 = vrot.lane.b32.xlu0 %v7010, 24
    %v7108 = vpop.permute.xlu0 %7107
    %7109 = vrot.lane.b32.xlu0 %v7086, 24
    %v7110 = vpop.permute.xlu0 %7109
    %v7113 = vsel %vm231, %v6008, %v7092
    %v7114 = vsel %vm231, %v6084, %v7094
    %v7115 = vsel %vm1599, %v7113, %v7100
    %v7116 = vsel %vm1599, %v7114, %v7102
    %v7117 = vsel %vm1602, %v7115, %v7108
    %v7118 = vsel %vm1602, %v7116, %v7110
    %s7119 = scalar_lea.vmem %s5, 96
    %v7120 = vld [vmem:[%s7119] sm:$0xff]
    %v7121 = vld [vmem:[%s7119 + $0x8] sm:$0xff]
    %v7122 = vld [vmem:[%s7119 + $0x10] sm:$0xff]
    %v7123 = vld [vmem:[%s7119 + $0x18] sm:$0xff]
    %v7124 = vlaneseq
    %v7125 = vshrl.u32 %v7124, 7
    %v7126 = vsub.s32 0, %v7125
    %v7127 = vrot.slane %v5660, %v7126
    %v7129 = vsel %vm93, %v7117, 0
    %v7132 = vsel %vm93, %v7118, 0
    %7134 = vmatprep.subr.mxu0 0.0
    %7135 = vmatpush1.msra.mxu0 0.0
    %7136 = vmatprep.subr.mxu0 0.0
    %7137 = vmatpush1.msra.mxu0 0.0
    %7138 = vmatprep.subr.mxu0 0.0
    %7139 = vmatpush1.msra.mxu0 0.0
    %7140 = vmatprep.subr.mxu0 0.0
    %7141 = vmatpush1.msra.mxu0 0.0
    %7142 = vmatprep.subr.mxu0 0.0
    %7143 = vmatpush1.msra.mxu0 0.0
    %7144 = vmatprep.subr.mxu0 0.0
    %7145 = vmatpush1.msra.mxu0 0.0
    %7146 = vmatprep.subr.mxu0 0.0
    %7147 = vmatpush1.msra.mxu0 0.0
    %7148 = vmatprep.subr.mxu0 0.0
    %7149 = vmatpush1.msra.mxu0 0.0
    %7150 = vmatprep.subr.mxu0 0.0
    %7151 = vmatpush1.msra.mxu0 0.0
    %7152 = vmatprep.subr.mxu0 0.0
    %7153 = vmatpush1.msra.mxu0 0.0
    %7154 = vmatprep.subr.mxu0 0.0
    %7155 = vmatpush1.msra.mxu0 0.0
    %7156 = vmatprep.subr.mxu0 0.0
    %7157 = vmatpush1.msra.mxu0 0.0
    %7158 = vmatprep.subr.mxu0 0.0
    %7159 = vmatpush1.msra.mxu0 %v7123
    %7160 = vmatprep.subr.mxu0 0.0
    %7161 = vmatpush1.msra.mxu0 %v7122
    %7162 = vmatprep.subr.mxu0 0.0
    %7163 = vmatpush1.msra.mxu0 %v7121
    %7164 = vmatprep.subr.mxu0 0.0
    %7165 = vmatpush1.msra.mxu0 %v7120
    %7166 = vmatprep.subr.mxu0 0.0
    %7167 = vmatpush2.msra.mxu0 0.0
    %7168 = vmatprep.subr.mxu0 0.0
    %7169 = vmatpush2.msra.mxu0 0.0
    %7170 = vmatprep.subr.mxu0 0.0
    %7171 = vmatpush2.msra.mxu0 0.0
    %7172 = vmatprep.subr.mxu0 0.0
    %7173 = vmatpush2.msra.mxu0 0.0
    %7174 = vmatprep.subr.mxu0 0.0
    %7175 = vmatpush2.msra.mxu0 0.0
    %7176 = vmatprep.subr.mxu0 0.0
    %7177 = vmatpush2.msra.mxu0 0.0
    %7178 = vmatprep.subr.mxu0 0.0
    %7179 = vmatpush2.msra.mxu0 0.0
    %7180 = vmatprep.subr.mxu0 0.0
    %7181 = vmatpush2.msra.mxu0 0.0
    %7182 = vmatprep.subr.mxu0 0.0
    %7183 = vmatpush2.msra.mxu0 0.0
    %7184 = vmatprep.subr.mxu0 0.0
    %7185 = vmatpush2.msra.mxu0 0.0
    %7186 = vmatprep.subr.mxu0 0.0
    %7187 = vmatpush2.msra.mxu0 0.0
    %7188 = vmatprep.subr.mxu0 0.0
    %7189 = vmatpush2.msra.mxu0 0.0
    %7190 = vmatprep.subr.mxu0 0.0
    %7191 = vmatpush2.msra.mxu0 0.0
    %7192 = vmatprep.subr.mxu0 0.0
    %7193 = vmatpush2.msra.mxu0 0.0
    %7194 = vmatprep.subr.mxu0 0.0
    %7195 = vmatpush2.msra.mxu0 0.0
    %7196 = vmatprep.subr.mxu0 0.0
    %7197 = vmatpush2.msra.mxu0 0.0
    %7198 = vmatprep.mubr.f32.mxu0 0.0
    %7199 = vmatmul.mubr.f32.gmra.mxu0 %v7129
    %v7200 = vpop.f32.mrf.mxu0
    %v7201 = vadd.f32 %v7127, %v7200
    %v7202 = vpop.f32.mrf.mxu0
    %7203 = vmatprep.mubr.f32.mxu0 0.0
    %7204 = vmatmul.mubr.f32.gmra.mxu0 %v7132
    %v7205 = vpop.f32.mrf.mxu0
    %v7206 = vadd.f32 %v7127, %v7205
    %v7207 = vpop.f32.mrf.mxu0
    %7208 = vdwg.mxu0
    %v7209 = vadd.f32 %v7201, %v5654
    %v7210 = vadd.f32 %v7206, %v5655
    %v7211 = vsel %vm93, %v7209, 0.0
    %7212 = vadd.xlane.f32.xlu0 %v7211
    %v7213 = vpop.xlane.xlu0 %7212
    %v7214 = vsel %vm93, %v7210, 0.0
    %7215 = vadd.xlane.f32.xlu0 %v7214
    %v7216 = vpop.xlane.xlu0 %7215
    %v7217 = vmul.f32 %v7213, %v100
    %v7218 = vmul.f32 %v7216, %v100
    %v7219 = vsub.f32 %v7209, %v7217
    %v7220 = vsub.f32 %v7210, %v7218
    %v7221 = vmul.f32 %v7219, %v7219
    %v7222 = vmul.f32 %v7220, %v7220
    %v7223 = vsel %vm93, %v7221, 0.0
    %7224 = vadd.xlane.f32.xlu0 %v7223
    %v7225 = vpop.xlane.xlu0 %7224
    %v7226 = vsel %vm93, %v7222, 0.0
    %7227 = vadd.xlane.f32.xlu0 %v7226
    %v7228 = vpop.xlane.xlu0 %7227
    %v7229 = vmul.f32 %v7225, %v100
    %v7230 = vmul.f32 %v7228, %v100
    %v7231 = vadd.f32 %v7229, 1e-12
    %v7232 = vadd.f32 %v7230, 1e-12
    %v7233 = vrsqrt.pop %v7231
    %v7234 = vrsqrt.pop %v7232
    %v7235 = vmul.f32 %v7219, %v7233
    %v7236 = vmul.f32 %v7220, %v7234
    %v7237 = vlaneseq
    %v7238 = vshrl.u32 %v7237, 7
    %v7239 = vsub.s32 1, %v7238
    %v7240 = vrot.slane %v5660, %v7239
    %v7241 = vmul.f32 %v7235, %v7240
    %v7242 = vmul.f32 %v7236, %v7240
    %v7243 = vlaneseq
    %v7244 = vshrl.u32 %v7243, 7
    %v7245 = vsub.s32 2, %v7244
    %v7246 = vrot.slane %v5660, %v7245
    %v7247 = vadd.f32 %v7241, %v7246
    %v7248 = vadd.f32 %v7242, %v7246
    %s7249 = scalar_lea.vmem %s6, 96
    %v7250 = vld [vmem:[%s7249] sm:$0xff]
    %v7251 = vld [vmem:[%s7249 + $0x8] sm:$0xff]
    %v7252 = vld [vmem:[%s7249 + $0x10] sm:$0xff]
    %v7253 = vld [vmem:[%s7249 + $0x18] sm:$0xff]
    %s7254 = scalar_lea.vmem %s7, 3
    %v7255 = vld [vmem:[%s7254] sm:$0x1]
    %v7257 = vlaneseq
    %v7258 = vshrl.u32 %v7257, 7
    %v7259 = vsub.s32 0, %v7258
    %v7260 = vrot.slane %v7255, %v7259
    %v7263 = vsel %vm93, %v7247, 0
    %v7266 = vsel %vm93, %v7248, 0
    %7268 = vmatprep.subr.mxu0 0.0
    %7269 = vmatpush1.msra.mxu0 0.0
    %7270 = vmatprep.subr.mxu0 0.0
    %7271 = vmatpush1.msra.mxu0 0.0
    %7272 = vmatprep.subr.mxu0 0.0
    %7273 = vmatpush1.msra.mxu0 0.0
    %7274 = vmatprep.subr.mxu0 0.0
    %7275 = vmatpush1.msra.mxu0 0.0
    %7276 = vmatprep.subr.mxu0 0.0
    %7277 = vmatpush1.msra.mxu0 0.0
    %7278 = vmatprep.subr.mxu0 0.0
    %7279 = vmatpush1.msra.mxu0 0.0
    %7280 = vmatprep.subr.mxu0 0.0
    %7281 = vmatpush1.msra.mxu0 0.0
    %7282 = vmatprep.subr.mxu0 0.0
    %7283 = vmatpush1.msra.mxu0 0.0
    %7284 = vmatprep.subr.mxu0 0.0
    %7285 = vmatpush1.msra.mxu0 0.0
    %7286 = vmatprep.subr.mxu0 0.0
    %7287 = vmatpush1.msra.mxu0 0.0
    %7288 = vmatprep.subr.mxu0 0.0
    %7289 = vmatpush1.msra.mxu0 0.0
    %7290 = vmatprep.subr.mxu0 0.0
    %7291 = vmatpush1.msra.mxu0 0.0
    %7292 = vmatprep.subr.mxu0 0.0
    %7293 = vmatpush1.msra.mxu0 %v7253
    %7294 = vmatprep.subr.mxu0 0.0
    %7295 = vmatpush1.msra.mxu0 %v7252
    %7296 = vmatprep.subr.mxu0 0.0
    %7297 = vmatpush1.msra.mxu0 %v7251
    %7298 = vmatprep.subr.mxu0 0.0
    %7299 = vmatpush1.msra.mxu0 %v7250
    %7300 = vmatprep.subr.mxu0 0.0
    %7301 = vmatpush2.msra.mxu0 0.0
    %7302 = vmatprep.subr.mxu0 0.0
    %7303 = vmatpush2.msra.mxu0 0.0
    %7304 = vmatprep.subr.mxu0 0.0
    %7305 = vmatpush2.msra.mxu0 0.0
    %7306 = vmatprep.subr.mxu0 0.0
    %7307 = vmatpush2.msra.mxu0 0.0
    %7308 = vmatprep.subr.mxu0 0.0
    %7309 = vmatpush2.msra.mxu0 0.0
    %7310 = vmatprep.subr.mxu0 0.0
    %7311 = vmatpush2.msra.mxu0 0.0
    %7312 = vmatprep.subr.mxu0 0.0
    %7313 = vmatpush2.msra.mxu0 0.0
    %7314 = vmatprep.subr.mxu0 0.0
    %7315 = vmatpush2.msra.mxu0 0.0
    %7316 = vmatprep.subr.mxu0 0.0
    %7317 = vmatpush2.msra.mxu0 0.0
    %7318 = vmatprep.subr.mxu0 0.0
    %7319 = vmatpush2.msra.mxu0 0.0
    %7320 = vmatprep.subr.mxu0 0.0
    %7321 = vmatpush2.msra.mxu0 0.0
    %7322 = vmatprep.subr.mxu0 0.0
    %7323 = vmatpush2.msra.mxu0 0.0
    %7324 = vmatprep.subr.mxu0 0.0
    %7325 = vmatpush2.msra.mxu0 0.0
    %7326 = vmatprep.subr.mxu0 0.0
    %7327 = vmatpush2.msra.mxu0 0.0
    %7328 = vmatprep.subr.mxu0 0.0
    %7329 = vmatpush2.msra.mxu0 0.0
    %7330 = vmatprep.subr.mxu0 0.0
    %7331 = vmatpush2.msra.mxu0 0.0
    %7332 = vmatprep.mubr.f32.mxu0 0.0
    %7333 = vmatmul.mubr.f32.gmra.mxu0 %v7263
    %v7334 = vpop.f32.mrf.mxu0
    %v7335 = vadd.f32 %v7260, %v7334
    %v7336 = vpop.f32.mrf.mxu0
    %7337 = vmatprep.mubr.f32.mxu0 0.0
    %7338 = vmatmul.mubr.f32.gmra.mxu0 %v7266
    %v7339 = vpop.f32.mrf.mxu0
    %v7340 = vadd.f32 %v7260, %v7339
    %v7341 = vpop.f32.mrf.mxu0
    %7342 = vdwg.mxu0
    %v7343 = vmul.f32 %v7335, 0.5
    %v7344 = vmul.f32 %v7340, 0.5
    %v7345 = vmul.f32 %v7335, 0.044715
    %v7346 = vmul.f32 %v7340, 0.044715
    %v7347 = vmul.f32 %v7345, %v7335
    %v7348 = vmul.f32 %v7346, %v7340
    %v7349 = vmul.f32 %v7347, %v7335
    %v7350 = vmul.f32 %v7348, %v7340
    %v7351 = vadd.f32 %v7335, %v7349
    %v7352 = vadd.f32 %v7340, %v7350
    %v7353 = vmul.f32 %v7351, 0.7978846
    %v7354 = vmul.f32 %v7352, 0.7978846
    %v7355 = vtanh.pop %v7353
    %v7356 = vtanh.pop %v7354
    %v7357 = vadd.f32 %v7355, 1.0
    %v7358 = vadd.f32 %v7356, 1.0
    %v7359 = vmul.f32 %v7343, %v7357
    %v7360 = vmul.f32 %v7344, %v7358
    %s7361 = scalar_lea.vmem %s8, 192
    %v7362 = vld [vmem:[%s7361] sm:$0xff]
    %v7363 = vld [vmem:[%s7361 + $0x8] sm:$0xff]
    %v7364 = vld [vmem:[%s7361 + $0x10] sm:$0xff]
    %v7365 = vld [vmem:[%s7361 + $0x18] sm:$0xff]
    %v7366 = vld [vmem:[%s7361 + $0x20] sm:$0xff]
    %v7367 = vld [vmem:[%s7361 + $0x28] sm:$0xff]
    %v7368 = vld [vmem:[%s7361 + $0x30] sm:$0xff]
    %v7369 = vld [vmem:[%s7361 + $0x38] sm:$0xff]
    %v7370 = vlaneseq
    %v7371 = vshrl.u32 %v7370, 7
    %v7372 = vsub.s32 3, %v7371
    %v7373 = vrot.slane %v5660, %v7372
    %v7375 = vsel %vm1856, %v7359, 0
    %v7378 = vsel %vm1856, %v7360, 0
    %7380 = vmatprep.subr.mxu0 0.0
    %7381 = vmatpush1.msra.mxu0 0.0
    %7382 = vmatprep.subr.mxu0 0.0
    %7383 = vmatpush1.msra.mxu0 0.0
    %7384 = vmatprep.subr.mxu0 0.0
    %7385 = vmatpush1.msra.mxu0 0.0
    %7386 = vmatprep.subr.mxu0 0.0
    %7387 = vmatpush1.msra.mxu0 0.0
    %7388 = vmatprep.subr.mxu0 0.0
    %7389 = vmatpush1.msra.mxu0 0.0
    %7390 = vmatprep.subr.mxu0 0.0
    %7391 = vmatpush1.msra.mxu0 0.0
    %7392 = vmatprep.subr.mxu0 0.0
    %7393 = vmatpush1.msra.mxu0 0.0
    %7394 = vmatprep.subr.mxu0 0.0
    %7395 = vmatpush1.msra.mxu0 0.0
    %7396 = vmatprep.subr.mxu0 0.0
    %7397 = vmatpush1.msra.mxu0 %v7369
    %7398 = vmatprep.subr.mxu0 0.0
    %7399 = vmatpush1.msra.mxu0 %v7368
    %7400 = vmatprep.subr.mxu0 0.0
    %7401 = vmatpush1.msra.mxu0 %v7367
    %7402 = vmatprep.subr.mxu0 0.0
    %7403 = vmatpush1.msra.mxu0 %v7366
    %7404 = vmatprep.subr.mxu0 0.0
    %7405 = vmatpush1.msra.mxu0 %v7365
    %7406 = vmatprep.subr.mxu0 0.0
    %7407 = vmatpush1.msra.mxu0 %v7364
    %7408 = vmatprep.subr.mxu0 0.0
    %7409 = vmatpush1.msra.mxu0 %v7363
    %7410 = vmatprep.subr.mxu0 0.0
    %7411 = vmatpush1.msra.mxu0 %v7362
    %7412 = vmatprep.subr.mxu0 0.0
    %7413 = vmatpush2.msra.mxu0 0.0
    %7414 = vmatprep.subr.mxu0 0.0
    %7415 = vmatpush2.msra.mxu0 0.0
    %7416 = vmatprep.subr.mxu0 0.0
    %7417 = vmatpush2.msra.mxu0 0.0
    %7418 = vmatprep.subr.mxu0 0.0
    %7419 = vmatpush2.msra.mxu0 0.0
    %7420 = vmatprep.subr.mxu0 0.0
    %7421 = vmatpush2.msra.mxu0 0.0
    %7422 = vmatprep.subr.mxu0 0.0
    %7423 = vmatpush2.msra.mxu0 0.0
    %7424 = vmatprep.subr.mxu0 0.0
    %7425 = vmatpush2.msra.mxu0 0.0
    %7426 = vmatprep.subr.mxu0 0.0
    %7427 = vmatpush2.msra.mxu0 0.0
    %7428 = vmatprep.subr.mxu0 0.0
    %7429 = vmatpush2.msra.mxu0 0.0
    %7430 = vmatprep.subr.mxu0 0.0
    %7431 = vmatpush2.msra.mxu0 0.0
    %7432 = vmatprep.subr.mxu0 0.0
    %7433 = vmatpush2.msra.mxu0 0.0
    %7434 = vmatprep.subr.mxu0 0.0
    %7435 = vmatpush2.msra.mxu0 0.0
    %7436 = vmatprep.subr.mxu0 0.0
    %7437 = vmatpush2.msra.mxu0 0.0
    %7438 = vmatprep.subr.mxu0 0.0
    %7439 = vmatpush2.msra.mxu0 0.0
    %7440 = vmatprep.subr.mxu0 0.0
    %7441 = vmatpush2.msra.mxu0 0.0
    %7442 = vmatprep.subr.mxu0 0.0
    %7443 = vmatpush2.msra.mxu0 0.0
    %7444 = vmatprep.mubr.f32.mxu0 0.0
    %7445 = vmatmul.mubr.f32.gmra.mxu0 %v7375
    %v7446 = vpop.f32.mrf.mxu0
    %v7447 = vadd.f32 %v7373, %v7446
    %v7448 = vpop.f32.mrf.mxu0
    %7449 = vmatprep.mubr.f32.mxu0 0.0
    %7450 = vmatmul.mubr.f32.gmra.mxu0 %v7378
    %v7451 = vpop.f32.mrf.mxu0
    %v7452 = vadd.f32 %v7373, %v7451
    %v7453 = vpop.f32.mrf.mxu0
    %7454 = vdwg.mxu0
    %v7455 = vadd.f32 %v7447, %v7247
    %v7456 = vadd.f32 %v7452, %v7248
    %v7457 = vsel %vm93, %v7455, 0.0
    %7458 = vadd.xlane.f32.xlu0 %v7457
    %v7459 = vpop.xlane.xlu0 %7458
    %v7460 = vsel %vm93, %v7456, 0.0
    %7461 = vadd.xlane.f32.xlu0 %v7460
    %v7462 = vpop.xlane.xlu0 %7461
    %v7463 = vmul.f32 %v7459, %v100
    %v7464 = vmul.f32 %v7462, %v100
    %v7465 = vsub.f32 %v7455, %v7463
    %v7466 = vsub.f32 %v7456, %v7464
    %v7467 = vmul.f32 %v7465, %v7465
    %v7468 = vmul.f32 %v7466, %v7466
    %v7469 = vsel %vm93, %v7467, 0.0
    %7470 = vadd.xlane.f32.xlu0 %v7469
    %v7471 = vpop.xlane.xlu0 %7470
    %v7472 = vsel %vm93, %v7468, 0.0
    %7473 = vadd.xlane.f32.xlu0 %v7472
    %v7474 = vpop.xlane.xlu0 %7473
    %v7475 = vmul.f32 %v7471, %v100
    %v7476 = vmul.f32 %v7474, %v100
    %v7477 = vadd.f32 %v7475, 1e-12
    %v7478 = vadd.f32 %v7476, 1e-12
    %v7479 = vrsqrt.pop %v7477
    %v7480 = vrsqrt.pop %v7478
    %v7481 = vmul.f32 %v7465, %v7479
    %v7482 = vmul.f32 %v7466, %v7480
    %v7483 = vlaneseq
    %v7484 = vshrl.u32 %v7483, 7
    %v7485 = vsub.s32 4, %v7484
    %v7486 = vrot.slane %v5660, %v7485
    %v7487 = vmul.f32 %v7481, %v7486
    %v7488 = vmul.f32 %v7482, %v7486
    %v7489 = vlaneseq
    %v7490 = vshrl.u32 %v7489, 7
    %v7491 = vsub.s32 5, %v7490
    %v7492 = vrot.slane %v5660, %v7491
    %v7493 = vadd.f32 %v7487, %v7492
    %v7494 = vadd.f32 %v7488, %v7492
    %s7495 = scalar_lea.vmem %s13, 64
    %7496 = vst.msk [vmem:[%s7495] sm:$0xff] %vm93, %v7493
    %7497 = vst.msk [vmem:[%s7495 + $0x8] sm:$0xff] %vm93, %v7494
    %v7499 = vrot.slane %v7494, 7
    %vm7501 = vcmask 1040384
    %v7502 = vsel %vm7501, %v7493, %v7499
    %v7503 = vrot.slane %v3816, 7
    %v7505 = vsel %vm7501, %v3815, %v7503
    %7507 = vrot.lane.b32.xlu0 %v7505, 32
    %v7508 = vpop.permute.xlu0 %7507
    %v7510 = vsel %vm93, %v7502, %v7508
    %v7511 = vld [vmem:[%s10] sm:$0xff]
    %v7512 = vld [vmem:[%s10 + $0x8] sm:$0xff]
    %v7513 = vld [vmem:[%s10 + $0x10] sm:$0xff]
    %v7514 = vld [vmem:[%s10 + $0x18] sm:$0xff]
    %v7515 = vld [vmem:[%s10 + $0x20] sm:$0xff]
    %v7516 = vld [vmem:[%s10 + $0x28] sm:$0xff]
    %v7517 = vld [vmem:[%s10 + $0x30] sm:$0xff]
    %v7518 = vld [vmem:[%s10 + $0x38] sm:$0xff]
    %v7519 = vld [vmem:[%s11] sm:$0x1]
    %v7521 = vlaneseq
    %v7522 = vshrl.u32 %v7521, 7
    %v7523 = vsub.s32 0, %v7522
    %v7524 = vrot.slane %v7519, %v7523
    %v7527 = vsel %vm1856, %v7510, 0
    %7529 = vmatprep.subr.mxu0 0.0
    %7530 = vmatpush1.msra.mxu0 0.0
    %7531 = vmatprep.subr.mxu0 0.0
    %7532 = vmatpush1.msra.mxu0 0.0
    %7533 = vmatprep.subr.mxu0 0.0
    %7534 = vmatpush1.msra.mxu0 0.0
    %7535 = vmatprep.subr.mxu0 0.0
    %7536 = vmatpush1.msra.mxu0 0.0
    %7537 = vmatprep.subr.mxu0 0.0
    %7538 = vmatpush1.msra.mxu0 0.0
    %7539 = vmatprep.subr.mxu0 0.0
    %7540 = vmatpush1.msra.mxu0 0.0
    %7541 = vmatprep.subr.mxu0 0.0
    %7542 = vmatpush1.msra.mxu0 0.0
    %7543 = vmatprep.subr.mxu0 0.0
    %7544 = vmatpush1.msra.mxu0 0.0
    %7545 = vmatprep.subr.mxu0 0.0
    %7546 = vmatpush1.msra.mxu0 %v7518
    %7547 = vmatprep.subr.mxu0 0.0
    %7548 = vmatpush1.msra.mxu0 %v7517
    %7549 = vmatprep.subr.mxu0 0.0
    %7550 = vmatpush1.msra.mxu0 %v7516
    %7551 = vmatprep.subr.mxu0 0.0
    %7552 = vmatpush1.msra.mxu0 %v7515
    %7553 = vmatprep.subr.mxu0 0.0
    %7554 = vmatpush1.msra.mxu0 %v7514
    %7555 = vmatprep.subr.mxu0 0.0
    %7556 = vmatpush1.msra.mxu0 %v7513
    %7557 = vmatprep.subr.mxu0 0.0
    %7558 = vmatpush1.msra.mxu0 %v7512
    %7559 = vmatprep.subr.mxu0 0.0
    %7560 = vmatpush1.msra.mxu0 %v7511
    %7561 = vmatprep.subr.mxu0 0.0
    %7562 = vmatpush2.msra.mxu0 0.0
    %7563 = vmatprep.subr.mxu0 0.0
    %7564 = vmatpush2.msra.mxu0 0.0
    %7565 = vmatprep.subr.mxu0 0.0
    %7566 = vmatpush2.msra.mxu0 0.0
    %7567 = vmatprep.subr.mxu0 0.0
    %7568 = vmatpush2.msra.mxu0 0.0
    %7569 = vmatprep.subr.mxu0 0.0
    %7570 = vmatpush2.msra.mxu0 0.0
    %7571 = vmatprep.subr.mxu0 0.0
    %7572 = vmatpush2.msra.mxu0 0.0
    %7573 = vmatprep.subr.mxu0 0.0
    %7574 = vmatpush2.msra.mxu0 0.0
    %7575 = vmatprep.subr.mxu0 0.0
    %7576 = vmatpush2.msra.mxu0 0.0
    %7577 = vmatprep.subr.mxu0 0.0
    %7578 = vmatpush2.msra.mxu0 0.0
    %7579 = vmatprep.subr.mxu0 0.0
    %7580 = vmatpush2.msra.mxu0 0.0
    %7581 = vmatprep.subr.mxu0 0.0
    %7582 = vmatpush2.msra.mxu0 0.0
    %7583 = vmatprep.subr.mxu0 0.0
    %7584 = vmatpush2.msra.mxu0 0.0
    %7585 = vmatprep.subr.mxu0 0.0
    %7586 = vmatpush2.msra.mxu0 0.0
    %7587 = vmatprep.subr.mxu0 0.0
    %7588 = vmatpush2.msra.mxu0 0.0
    %7589 = vmatprep.subr.mxu0 0.0
    %7590 = vmatpush2.msra.mxu0 0.0
    %7591 = vmatprep.subr.mxu0 0.0
    %7592 = vmatpush2.msra.mxu0 0.0
    %7593 = vmatprep.mubr.f32.mxu0 0.0
    %7594 = vmatmul.mubr.f32.gmra.mxu0 %v7527
    %v7595 = vpop.f32.mrf.mxu0
    %v7596 = vadd.f32 %v7524, %v7595
    %v7597 = vpop.f32.mrf.mxu0
    %7598 = vdwg.mxu0
    %vm7599 = vcmask 17408
    %7600 = vst.msk [vmem:[#allocation5] sm:$0x3] %vm7599, %v7596
    %v7601 = vsel %vm7599, %v7596, -inf
    %7602 = vmax.xlane.f32.xlu0 %v7601
    %v7603 = vpop.xlane.xlu0 %7602
    %v7604 = vsub.f32 %v7596, %v7603
    %v7605 = vmul.f32 %v7604, 1.442695
    %v7606 = vpow.pop %v7605
    %v7607 = vsel %vm7599, %v7606, 0.0
    %7608 = vadd.xlane.f32.xlu0 %v7607
    %v7609 = vpop.xlane.xlu0 %7608
    %v7610 = vlog2.pop %v7609
    %v7611 = vmul.f32 %v7610, 0.6931472
    %v7612 = vadd.f32 %v7603, %v7611
    %v7613 = vlaneseq
    %v7614 = vshrl.u32 %v7613, 7
    %v7615 = vlaneseq
    %v7616 = vand.u32 %v7615, 127
    %vm7617 = vcmp.eq.s32.totalorder %v7614, 0
    %s7618 = sld [smem:[#allocation2]]
    %v7619 = vstv %s7618
    %v7620 = vsel %vm7617, %v7619, 0
    %vm7621 = vcmp.eq.s32.totalorder %v7614, 1
    %s7622 = sld [smem:[#allocation2 + $0x1]]
    %v7623 = vstv %s7622
    %v7624 = vsel %vm7621, %v7623, %v7620
    %vm7625 = vcmp.eq.s32.totalorder %v7616, %v7624
    %v7626 = vsel %vm7625, 1, 0
    %v7627 = vcvt.s32.f32 %v7626
    %v7628 = vmul.f32 %v7596, %v7627
    %v7629 = vsel %vm7599, %v7628, 0.0
    %7630 = vadd.xlane.f32.xlu0 %v7629
    %v7631 = vpop.xlane.xlu0 %7630
    %v7632 = vsub.f32 %v7612, %v7631
    %vm7633 = vcmask 1041408
    %v7634 = vsel %vm7633, %v7632, 0.0
    %v7635 = vrot.slane %v7634, 4
    %v7636 = vadd.f32 %v7634, %v7635
    %v7637 = vrot.slane %v7636, 2
    %v7638 = vadd.f32 %v7636, %v7637
    %v7639 = vrot.slane %v7638, 1
    %v7640 = vadd.f32 %v7638, %v7639
    %v7641 = vrcp.pop 2.0
    %v7642 = vmul.f32 %v7640, %v7641
    %vm7643 = vcmask 0
    %7644 = vst.msk [vmem:[#allocation6] sm:$0x1] %vm7643, %v7642
    // Predicated region
    $region58: #{aleph_bert_per_word_forward.1} parent=1 // pred_check
      _
    $region59: #{aleph_bert_per_word_forward.1} parent=1 // pred_check_branch
      %7646 = sbr.rel (0) target = $region61
    $region60: #{aleph_bert_per_word_forward.1} parent=1 // pred_region
      _
    $region61: #{aleph_bert_per_word_forward.1} parent=1 // pred_fallthru
      _
    // Predicated region
    $region62: #{aleph_bert_per_word_forward.1} parent=1 // pred_check
      _
    $region63: #{aleph_bert_per_word_forward.1} parent=1 // pred_check_branch
      %7648 = sbr.rel (0) target = $region65
    $region64: #{aleph_bert_per_word_forward.1} parent=1 // pred_region
      %s7650 = ssub.s32 32, 32
      %7651 = vsyncadd [#allocation3], %s7650
      %s7653 = sshll.u32 [#allocation5], 4
      %s7654 = int_to_ptr.vmem [resolvable:$true] %s7653
      %7656 = dma.vmem_to_hbm [thread:$0]  %s7654, 32, %s14, [#allocation3]
    $region65: #{aleph_bert_per_word_forward.1} parent=1 // pred_fallthru
      _
    // Predicated region
    $region66: #{aleph_bert_per_word_forward.1} parent=1 // pred_check
      _
    $region67: #{aleph_bert_per_word_forward.1} parent=1 // pred_check_branch
      %7658 = sbr.rel (0) target = $region69
    $region68: #{aleph_bert_per_word_forward.1} parent=1 // pred_region
      %s7660 = ssub.s32 16, 16
      %7661 = vsyncadd [#allocation7], %s7660
      %s7663 = sshll.u32 [#allocation6], 4
      %s7664 = int_to_ptr.vmem [resolvable:$true] %s7663
      %7666 = dma.vmem_to_hbm [thread:$0]  %s7664, 16, %s15, [#allocation7]
    $region69: #{aleph_bert_per_word_forward.1} parent=1 // pred_fallthru
      _
    // Predicated region
    $region70: #{aleph_bert_per_word_forward.1} parent=1 // pred_check
      _
    $region71: #{aleph_bert_per_word_forward.1} parent=1 // pred_check_branch
      %7668 = sbr.rel (0) target = $region73
    $region72: #{aleph_bert_per_word_forward.1} parent=1 // pred_region
      _
    $region73: #{aleph_bert_per_word_forward.1} parent=1 // pred_fallthru
      _
    // Predicated region
    $region74: #{aleph_bert_per_word_forward.1} parent=1 // pred_check
      _
    $region75: #{aleph_bert_per_word_forward.1} parent=1 // pred_check_branch
      %7670 = sbr.rel (0) target = $region77
    $region76: #{aleph_bert_per_word_forward.1} parent=1 // pred_region
      %7671 = dma.done [#allocation3], 32
    $region77: #{aleph_bert_per_word_forward.1} parent=1 // pred_fallthru
      _
    // Predicated region
    $region78: #{aleph_bert_per_word_forward.1} parent=1 // pred_check
      _
    $region79: #{aleph_bert_per_word_forward.1} parent=1 // pred_check_branch
      %7673 = sbr.rel (0) target = $region81
    $region80: #{aleph_bert_per_word_forward.1} parent=1 // pred_region
      %7674 = dma.done [#allocation7], 16
    $region81: #{aleph_bert_per_word_forward.1} parent=1 // pred_fallthru
      _
    %7675 = vsyncpa [#allocation3], 1
    %7676 = vsyncpa [#allocation7], 1
    %7677 = vsyncpa [#allocation4], 1

</llo_original>
